<compile_context>
chip_gen: v5e
topology: v5e:2x2
jax: 0.10.0
libtpu: 0.0.40
codegen_flags: <defaults>
</compile_context>

<pallas_src>
import functools

import jax
import jax.numpy as jnp
from jax.experimental import pallas as pl
from jax.experimental.pallas import tpu as pltpu


def _round_up(x, m):
    return (x + m - 1) // m * m


def _vmem_limit_bytes():
    # Generation-aware scoped-VMEM limit: v7x has only 64 MiB per TensorCore (v5e/v6e: 128).
    try:
        cap = int(pltpu.get_tpu_info().vmem_capacity_bytes)
        if cap > 0:
            return min(cap * 3 // 4, 100 * 1024 * 1024)
    except Exception:
        pass
    return 48 * 1024 * 1024


_VMEM_LIMIT = _vmem_limit_bytes()
_TM_CAP, _TK_CAP, _TN_CAP = 1024, 512, 256


# ----------------------------------------------------------------------------
# Fused tiled matmul (conv-as-matmul) with optional bias/activation/BN-stat epilogue
# ----------------------------------------------------------------------------
def matmul_fused(a, b, bias=None, *, activation="none", split_cols=0,
                 need_stats=True, out_dtype=jnp.float32):
    """out = act(a @ b (+ bias)); a:(M,K), b:(K,N) are cast to bf16, accumulation is f32.

    When need_stats, per-column sum / sum-of-squares of the *pre-bias* product are emitted
    from the epilogue (for BatchNorm batch statistics).  Returns
    (out_pad, col_sum, col_ssq, (M, N, M_pad, N_pad, tm)); col_* are None if not requested.
    """
    M, K = a.shape
    K2, N = b.shape
    assert K == K2
    has_bias = bias is not None

    # Tile selection: lane-dense N, big M tiles, but keep >=2 M blocks when M is large so
    # the "parallel" grid axes can be sharded across both v7x TensorCores.
    tm = min(_round_up(M, 16), _TM_CAP)
    if _round_up(M, 16) > 512:
        tm = min(_TM_CAP, _round_up((M + 1) // 2, 16))
    tk = min(_round_up(K, 128), _TK_CAP)
    tn = min(_round_up(N, 128), _TN_CAP)
    M_pad, K_pad, N_pad = _round_up(M, tm), _round_up(K, tk), _round_up(N, tn)
    nm, nn, nk = M_pad // tm, N_pad // tn, K_pad // tk

    accumulate = nk > 1
    if accumulate:                    # accumulate in the resident output tile -> f32
        out_dtype = jnp.float32
    if activation == "tanh_sigmoid":
        assert nn == 1 and 0 < split_cols < tn and split_cols % 128 == 0

    # Single-pass bf16 operand construction (activations are already bf16 inter-layer).
    a_p = a.astype(jnp.bfloat16)
    if (M_pad, K_pad) != (M, K):
        a_p = jnp.pad(a_p, ((0, M_pad - M), (0, K_pad - K)))
    b_p = b.astype(jnp.bfloat16)
    if (K_pad, N_pad) != (K, N):
        b_p = jnp.pad(b_p, ((0, K_pad - K), (0, N_pad - N)))

    def kernel(*refs):
        a_ref, b_ref = refs[0], refs[1]
        pos = 2
        if has_bias:
            bias_ref = refs[pos]
            pos += 1
        o_ref = refs[pos]
        pos += 1
        if need_stats:
            sum_ref, ssq_ref = refs[pos], refs[pos + 1]

        def epilogue(raw, raw_already_stored):
            if need_stats:                       # pre-bias per-column partial stats
                s = jnp.sum(raw, axis=0, keepdims=True)
                sq = jnp.sum(raw * raw, axis=0, keepdims=True)
                sum_ref[...] = jnp.broadcast_to(s, sum_ref.shape)
                ssq_ref[...] = jnp.broadcast_to(sq, ssq_ref.shape)
            out = raw + bias_ref[...] if has_bias else raw
            if activation == "relu":
                out = jnp.maximum(out, 0.0)
            elif activation == "tanh":
                out = jnp.tanh(out)
            elif activation == "sigmoid":
                out = jax.nn.sigmoid(out)
            elif activation == "tanh_sigmoid":
                # Lane-group-aligned head split: tanh on [0, split_cols), sigmoid after.
                o_ref[:, :split_cols] = jnp.tanh(out[:, :split_cols]).astype(o_ref.dtype)
                o_ref[:, split_cols:] = jax.nn.sigmoid(
                    out[:, split_cols:]).astype(o_ref.dtype)
                return
            if not (raw_already_stored and not has_bias and activation == "none"):
                o_ref[...] = out.astype(o_ref.dtype)

        if not accumulate:
            # Single K step: no scratch, no zero-init, dot -> epilogue -> store.
            epilogue(jnp.dot(a_ref[...], b_ref[...],
                             preferred_element_type=jnp.float32), False)
        else:
            # program_id only at kernel top level (interpret-mode safe).
            k = pl.program_id(2)
            prod = jnp.dot(a_ref[...], b_ref[...],
                           preferred_element_type=jnp.float32)

            @pl.when(k == 0)
            def _():
                o_ref[...] = prod

            @pl.when(k > 0)
            def _():
                o_ref[...] += prod

            @pl.when(k == nk - 1)
            def _():
                epilogue(o_ref[...], True)

    in_specs = [pl.BlockSpec((tm, tk), lambda i, j, k: (i, k)),
                pl.BlockSpec((tk, tn), lambda i, j, k: (k, j))]
    args = [a_p, b_p]
    if has_bias:
        in_specs.append(pl.BlockSpec((1, tn), lambda i, j, k: (0, j)))
        args.append(jnp.pad(bias.astype(jnp.float32), (0, N_pad - N)).reshape(1, N_pad))

    out_shape = [jax.ShapeDtypeStruct((M_pad, N_pad), out_dtype)]
    out_specs = [pl.BlockSpec((tm, tn), lambda i, j, k: (i, j))]
    if need_stats:
        out_shape += [jax.ShapeDtypeStruct((nm * 8, N_pad), jnp.float32)] * 2
        out_specs += [pl.BlockSpec((8, tn), lambda i, j, k: (i, j))] * 2

    results = pl.pallas_call(
        kernel,
        grid_spec=pltpu.PrefetchScalarGridSpec(
            num_scalar_prefetch=0,
            grid=(nm, nn, nk),
            in_specs=in_specs,
            out_specs=out_specs,
        ),
        out_shape=tuple(out_shape),
        compiler_params=pltpu.CompilerParams(
            dimension_semantics=("parallel", "parallel", "arbitrary"),
            vmem_limit_bytes=_VMEM_LIMIT,
        ),
    )(*args)

    if need_stats:
        out_pad, s, sq = results
        col_sum = s.reshape(nm, 8, N_pad)[:, 0, :].sum(axis=0)
        col_ssq = sq.reshape(nm, 8, N_pad)[:, 0, :].sum(axis=0)
    else:
        out_pad, col_sum, col_ssq = results[0], None, None
    return out_pad, col_sum, col_ssq, (M, N, M_pad, N_pad, tm)


# ----------------------------------------------------------------------------
# Fused BN-apply (+ residual) (+ ReLU) kernel -> bf16 output
# ----------------------------------------------------------------------------
def _bn_apply_kernel(x_ref, scale_ref, shift_ref, *rest, relu, has_res):
    if has_res:
        res_ref, o_ref = rest
    else:
        (o_ref,) = rest
    y = x_ref[...].astype(jnp.float32) * scale_ref[...] + shift_ref[...]
    if has_res:
        y = y + res_ref[...].astype(jnp.float32)
    if relu:
        y = jnp.maximum(y, 0.0)
    o_ref[...] = y.astype(o_ref.dtype)


def bn_apply(x_pad, scale_p, shift_p, *, rows_block, relu, residual=None,
             out_dtype=jnp.bfloat16):
    M_pad, N_pad = x_pad.shape
    has_res = residual is not None
    kernel = functools.partial(_bn_apply_kernel, relu=relu, has_res=has_res)
    in_specs = [
        pl.BlockSpec((rows_block, N_pad), lambda i: (i, 0)),
        pl.BlockSpec((1, N_pad), lambda i: (0, 0)),
        pl.BlockSpec((1, N_pad), lambda i: (0, 0)),
    ]
    args = [x_pad, scale_p, shift_p]
    if has_res:
        in_specs.append(pl.BlockSpec((rows_block, N_pad), lambda i: (i, 0)))
        args.append(residual)
    return pl.pallas_call(
        kernel,
        grid=(M_pad // rows_block,),
        in_specs=in_specs,
        out_specs=pl.BlockSpec((rows_block, N_pad), lambda i: (i, 0)),
        out_shape=jax.ShapeDtypeStruct((M_pad, N_pad), out_dtype),
        compiler_params=pltpu.CompilerParams(
            dimension_semantics=("parallel",), vmem_limit_bytes=_VMEM_LIMIT),
    )(*args)


# ----------------------------------------------------------------------------
# JAX glue: padding, im2col (bf16), BN finalize
# ----------------------------------------------------------------------------
def reflect_pad(x, p):
    return jnp.pad(x, ((0, 0), (p, p), (p, p), (0, 0)), mode="reflect")


def zero_pad(x, p):
    return jnp.pad(x, ((0, 0), (p, p), (p, p), (0, 0)))


def im2col(x_nhwc, kh, kw, stride):
    """Patches -> (N*Ho*Wo, kh*kw*C), in the input dtype (bf16 inter-layer)."""
    N, H, W, C = x_nhwc.shape
    Ho = (H - kh) // stride + 1
    Wo = (W - kw) // stride + 1
    cols = []
    for di in range(kh):
        for dj in range(kw):
            cols.append(x_nhwc[:, di:di + (Ho - 1) * stride + 1:stride,
                                  dj:dj + (Wo - 1) * stride + 1:stride, :])
    patches = jnp.stack(cols, axis=3)                 # (N,Ho,Wo,kh*kw,C)
    return patches.reshape(N * Ho * Wo, kh * kw * C), (N, Ho, Wo)


def _bn_scale_shift(col_sum, col_ssq, count, gamma, beta):
    # PyTorch BatchNorm2d training-mode forward: biased variance, eps=1e-5.
    mean = col_sum / count
    var = jnp.maximum(col_ssq / count - mean * mean, 0.0)
    scale = gamma * jax.lax.rsqrt(var + 1e-5)
    shift = beta - mean * scale
    return scale, shift


# ----------------------------------------------------------------------------
# Layer-level fused ops
# ----------------------------------------------------------------------------
def conv_bn_act(x_padded, w, gamma, beta, *, stride=1, relu=True, residual_pad=None):
    """Conv (no bias) -> BatchNorm (batch stats) -> [+residual] -> [ReLU], fused.

    Returns (y_nhwc, y_pad): y_pad is the bf16 output in the padded (M_pad, N_pad) matmul
    layout so a later residual add can consume it without slicing/re-padding."""
    kh, kw, cin, cout = w.shape
    a, (N, Ho, Wo) = im2col(x_padded, kh, kw, stride)
    b = w.reshape(kh * kw * cin, cout)
    out_pad, col_sum, col_ssq, (M, _, M_pad, N_pad, tm) = matmul_fused(
        a, b, need_stats=True, out_dtype=jnp.bfloat16)

    scale, shift = _bn_scale_shift(col_sum[:cout], col_ssq[:cout],
                                   jnp.float32(M), gamma, beta)
    scale_p = jnp.pad(scale, (0, N_pad - cout)).reshape(1, N_pad)
    shift_p = jnp.pad(shift, (0, N_pad - cout)).reshape(1, N_pad)

    if residual_pad is not None:
        assert residual_pad.shape == (M_pad, N_pad), (residual_pad.shape, (M_pad, N_pad))

    y_pad = bn_apply(out_pad, scale_p, shift_p, rows_block=tm, relu=relu,
                     residual=residual_pad)
    y = y_pad[:M, :cout].reshape(N, Ho, Wo, cout)
    return y, y_pad


def _build_subpixel_weight(w_eq):
    """w_eq: (3,3,Cin,Cout) equivalent-conv (flipped ConvTranspose2d) kernel ->
    (2,2,Cin,4*Cout) phase weight for the sub-pixel decomposition (phase = 2*r+s)."""
    cin, cout = w_eq.shape[2], w_eq.shape[3]
    wp = jnp.zeros((2, 2, cin, 4, cout), w_eq.dtype)
    wp = wp.at[0, 0, :, 0, :].set(w_eq[1, 1])   # y[2i,   2j  ]
    wp = wp.at[0, 0, :, 1, :].set(w_eq[1, 0])   # y[2i,   2j+1]
    wp = wp.at[0, 1, :, 1, :].set(w_eq[1, 2])
    wp = wp.at[0, 0, :, 2, :].set(w_eq[0, 1])   # y[2i+1, 2j  ]
    wp = wp.at[1, 0, :, 2, :].set(w_eq[2, 1])
    wp = wp.at[0, 0, :, 3, :].set(w_eq[0, 0])   # y[2i+1, 2j+1]
    wp = wp.at[0, 1, :, 3, :].set(w_eq[0, 2])
    wp = wp.at[1, 0, :, 3, :].set(w_eq[2, 0])
    wp = wp.at[1, 1, :, 3, :].set(w_eq[2, 2])
    return wp.reshape(2, 2, cin, 4 * cout)


def convtranspose_bn_relu(x_nhwc, w_eq, gamma, beta):
    """ConvTranspose2d(k3,s2,p1,op1, no bias) -> BN -> ReLU via sub-pixel decomposition."""
    N, H, W, cin = x_nhwc.shape
    cout = w_eq.shape[3]
    wp = _build_subpixel_weight(w_eq)                              # (2,2,cin,4*cout)
    xe = jnp.pad(x_nhwc, ((0, 0), (0, 1), (0, 1), (0, 0)))         # +1 row/col of zeros
    a, _ = im2col(xe, 2, 2, 1)                                     # M = N*H*W
    b = wp.reshape(4 * cin, 4 * cout)
    out_pad, col_sum, col_ssq, (M, _, M_pad, N_pad, tm) = matmul_fused(
        a, b, need_stats=True, out_dtype=jnp.bfloat16)

    # BN stats over the full upsampled map: reduce the 4 phase groups.
    csum = col_sum[:4 * cout].reshape(4, cout).sum(axis=0)
    cssq = col_ssq[:4 * cout].reshape(4, cout).sum(axis=0)
    scale, shift = _bn_scale_shift(csum, cssq, jnp.float32(4 * M), gamma, beta)
    scale_p = jnp.pad(jnp.tile(scale, 4), (0, N_pad - 4 * cout)).reshape(1, N_pad)
    shift_p = jnp.pad(jnp.tile(shift, 4), (0, N_pad - 4 * cout)).reshape(1, N_pad)

    y_pad = bn_apply(out_pad, scale_p, shift_p, rows_block=tm, relu=True)
    y = y_pad[:M, :4 * cout].reshape(N, H, W, 2, 2, cout)
    y = jnp.transpose(y, (0, 1, 3, 2, 4, 5)).reshape(N, 2 * H, 2 * W, cout)  # pixel shuffle
    return y


def heads(h_nhwc, w_sec, b_sec, w_seg, b_seg):
    """Both heads (ReflectionPad3 + 7x7 conv + tanh / sigmoid) in ONE matmul.

    The rec head gets its own 128-lane group and the seg head the next one, so the
    tanh/sigmoid split in the epilogue is a static, lane-aligned slice."""
    kh, kw, cin, cout = w_sec.shape
    assert cout <= 128 and w_seg.shape[3] == 1
    lane = 128
    hp = reflect_pad(h_nhwc, 3)
    a, (N, Ho, Wo) = im2col(hp, kh, kw, 1)
    K = kh * kw * cin
    b = jnp.zeros((K, 2 * lane), jnp.float32)
    b = b.at[:, :cout].set(w_sec.reshape(K, cout))
    b = b.at[:, lane:lane + 1].set(w_seg.reshape(K, 1))
    bias = jnp.zeros((2 * lane,), jnp.float32)
    bias = bias.at[:cout].set(b_sec).at[lane:lane + 1].set(b_seg)
    out_pad, _, _, (M, _, _, _, _) = matmul_fused(
        a, b, bias, activation="tanh_sigmoid", split_cols=lane,
        need_stats=False, out_dtype=jnp.float32)
    rec = out_pad[:M, :cout].reshape(N, Ho, Wo, cout)
    seg = out_pad[:M, lane:lane + 1].reshape(N, Ho, Wo, 1)
    return rec, seg


# ----------------------------------------------------------------------------
# Parameters (deterministic synthetic init — BN: gamma=1, beta=0 like PyTorch)
# ----------------------------------------------------------------------------
def _conv_w(key, kh, kw, cin, cout):
    return jax.random.normal(key, (kh, kw, cin, cout), jnp.float32) / jnp.sqrt(kh * kw * cin)


def init_params(key, input_nc, output_nc, ngf, n_blocks):
    keys = iter(jax.random.split(key, 64))
    p = {}
    p["w0"] = _conv_w(next(keys), 7, 7, input_nc, ngf)
    p["g0"] = jnp.ones((ngf,), jnp.float32)
    p["b0"] = jnp.zeros((ngf,), jnp.float32)
    p["down"] = []
    for i in range(2):
        cin, cout = ngf * 2 ** i, ngf * 2 ** (i + 1)
        p["down"].append({
            "w": _conv_w(next(keys), 3, 3, cin, cout),
            "g": jnp.ones((cout,), jnp.float32),
            "b": jnp.zeros((cout,), jnp.float32),
        })
    dim = ngf * 4
    p["blocks"] = []
    for _ in range(n_blocks):
        p["blocks"].append({
            "w1": _conv_w(next(keys), 3, 3, dim, dim),
            "g1": jnp.ones((dim,), jnp.float32),
            "b1": jnp.zeros((dim,), jnp.float32),
            "w2": _conv_w(next(keys), 3, 3, dim, dim),
            "g2": jnp.ones((dim,), jnp.float32),
            "b2": jnp.zeros((dim,), jnp.float32),
        })
    p["up"] = []
    for i in range(2):
        cin, cout = ngf * 2 ** (2 - i), ngf * 2 ** (2 - i) // 2
        p["up"].append({
            "w": _conv_w(next(keys), 3, 3, cin, cout),   # equivalent-conv kernel
            "g": jnp.ones((cout,), jnp.float32),
            "b": jnp.zeros((cout,), jnp.float32),
        })
    p["sec_w"] = _conv_w(next(keys), 7, 7, ngf, output_nc)
    p["sec_b"] = jnp.zeros((output_nc,), jnp.float32)
    p["seg_w"] = _conv_w(next(keys), 7, 7, ngf, 1)
    p["seg_b"] = jnp.zeros((1,), jnp.float32)
    return p


# ----------------------------------------------------------------------------
# Forward pass (mirrors MultiGenerator.forward; BN in training mode, dropout off)
# ----------------------------------------------------------------------------
def multi_generator_forward(x_nchw, params):
    # NCHW -> NHWC; inter-layer activations are kept in bf16 (matmul operand dtype).
    x = jnp.transpose(x_nchw, (0, 2, 3, 1)).astype(jnp.bfloat16)

    # base: ReflectionPad(3) + c7s1 conv + BN + ReLU
    h, _ = conv_bn_act(reflect_pad(x, 3), params["w0"], params["g0"], params["b0"],
                       relu=True)

    # 2x downsample: conv 3x3 s2 p1 + BN + ReLU
    h_pad = None
    for dp in params["down"]:
        h, h_pad = conv_bn_act(zero_pad(h, 1), dp["w"], dp["g"], dp["b"],
                               stride=2, relu=True)

    # resnet blocks (residual add fused into the 2nd BN-apply; residual stays in the
    # padded matmul layout between blocks)
    for blk in params["blocks"]:
        t, _ = conv_bn_act(reflect_pad(h, 1), blk["w1"], blk["g1"], blk["b1"], relu=True)
        h, h_pad = conv_bn_act(reflect_pad(t, 1), blk["w2"], blk["g2"], blk["b2"],
                               relu=False, residual_pad=h_pad)

    # 2x upsample: ConvTranspose2d k3 s2 p1 op1 + BN + ReLU (sub-pixel decomposition)
    for up in params["up"]:
        h = convtranspose_bn_relu(h, up["w"], up["g"], up["b"])

    # heads: single fused matmul, lane-aligned tanh (rec) / sigmoid (seg) split
    rec, seg = heads(h, params["sec_w"], params["sec_b"], params["seg_w"], params["seg_b"])
    return (jnp.transpose(rec, (0, 3, 1, 2)).astype(jnp.float32),
            jnp.transpose(seg, (0, 3, 1, 2)).astype(jnp.float32))


# ----------------------------------------------------------------------------
if __name__ == "__main__":
    N, input_nc, output_nc, ngf, n_blocks, S = 2, 4, 3, 8, 2, 16

    key = jax.random.PRNGKey(0)
    kx, kp = jax.random.split(key)
    x = jax.random.normal(kx, (N, input_nc, S, S), jnp.float32)
    params = init_params(kp, input_nc, output_nc, ngf, n_blocks)

    rec, seg = jax.jit(multi_generator_forward)(x, params)
    jax.block_until_ready((rec, seg))

    assert rec.shape == (N, output_nc, S, S), rec.shape
    assert seg.shape == (N, 1, S, S), seg.shape
    assert bool(jnp.all(jnp.abs(rec) <= 1.0)) and bool(jnp.all((seg >= 0.0) & (seg <= 1.0)))
    print("KERNEL_OK")
</pallas_src>

<mosaic_0001>
module attributes {stable_mosaic.version = 11 : i64} {
  func.func @kernel(%arg0: i32, %arg1: i32, %arg2: i32, %arg3: memref<512x256xbf16, #tpu.memory_space<vmem>>, %arg4: memref<256x128xbf16, #tpu.memory_space<vmem>>, %arg5: memref<512x128xbf16, #tpu.memory_space<vmem>>, %arg6: memref<8x128xf32, #tpu.memory_space<vmem>>, %arg7: memref<8x128xf32, #tpu.memory_space<vmem>>) attributes {dimension_semantics = [#tpu.dimension_semantics<parallel>, #tpu.dimension_semantics<parallel>, #tpu.dimension_semantics<arbitrary>], iteration_bounds = array<i64: 1, 1, 1>, scalar_prefetch = 0 : i64, scratch_operands = 0 : i64, tpu.core_type = #tpu.core_type<tc>, window_params = [{transform_indices = @transform_0, window_bounds = array<i64: 512, 256>}, {transform_indices = @transform_1, window_bounds = array<i64: 256, 128>}, {transform_indices = @transform_2, window_bounds = array<i64: 512, 128>}, {transform_indices = @transform_3, window_bounds = array<i64: 8, 128>}, {transform_indices = @transform_4, window_bounds = array<i64: 8, 128>}]} {
    %c0 = arith.constant 0 : index
    %c0_0 = arith.constant 0 : index
    %0 = vector.load %arg3[%c0, %c0_0] : memref<512x256xbf16, #tpu.memory_space<vmem>>, vector<512x256xbf16>
    %c0_1 = arith.constant 0 : index
    %c0_2 = arith.constant 0 : index
    %1 = vector.load %arg4[%c0_1, %c0_2] : memref<256x128xbf16, #tpu.memory_space<vmem>>, vector<256x128xbf16>
    %cst = arith.constant dense<0.000000e+00> : vector<512x128xf32>
    %2 = tpu.matmul %0, %1, %cst {dimension_numbers = #tpu.dot_dimension_numbers<[1], [0], [0], [1], [0, 0, 1, 1], [], []>} : vector<512x256xbf16>, vector<256x128xbf16>, vector<512x128xf32> -> vector<512x128xf32>
    %cst_3 = arith.constant dense<0.000000e+00> : vector<128xf32>
    %3 = vector.multi_reduction <add>, %2, %cst_3 [0] : vector<512x128xf32> to vector<128xf32>
    %4 = vector.shape_cast %3 : vector<128xf32> to vector<1x128xf32>
    %5 = arith.mulf %2, %2 : vector<512x128xf32>
    %cst_4 = arith.constant dense<0.000000e+00> : vector<128xf32>
    %6 = vector.multi_reduction <add>, %5, %cst_4 [0] : vector<512x128xf32> to vector<128xf32>
    %7 = vector.shape_cast %6 : vector<128xf32> to vector<1x128xf32>
    %8 = vector.shape_cast %4 : vector<1x128xf32> to vector<1x128xf32>
    %9 = vector.broadcast %8 : vector<1x128xf32> to vector<8x128xf32>
    %c0_5 = arith.constant 0 : index
    %c0_6 = arith.constant 0 : index
    %10 = vector.load %arg6[%c0_5, %c0_6] : memref<8x128xf32, #tpu.memory_space<vmem>>, vector<8x128xf32>
    tpu.vector_store %arg6[%c0_5, %c0_6], %9 {strides = array<i32>} : memref<8x128xf32, #tpu.memory_space<vmem>>, vector<8x128xf32>,
    %11 = vector.shape_cast %7 : vector<1x128xf32> to vector<1x128xf32>
    %12 = vector.broadcast %11 : vector<1x128xf32> to vector<8x128xf32>
    %c0_7 = arith.constant 0 : index
    %c0_8 = arith.constant 0 : index
    %13 = vector.load %arg7[%c0_7, %c0_8] : memref<8x128xf32, #tpu.memory_space<vmem>>, vector<8x128xf32>
    tpu.vector_store %arg7[%c0_7, %c0_8], %12 {strides = array<i32>} : memref<8x128xf32, #tpu.memory_space<vmem>>, vector<8x128xf32>,
    %14 = arith.truncf %2 : vector<512x128xf32> to vector<512x128xbf16>
    %c0_9 = arith.constant 0 : index
    %c0_10 = arith.constant 0 : index
    %15 = vector.load %arg5[%c0_9, %c0_10] : memref<512x128xbf16, #tpu.memory_space<vmem>>, vector<512x128xbf16>
    tpu.vector_store %arg5[%c0_9, %c0_10], %14 {strides = array<i32>} : memref<512x128xbf16, #tpu.memory_space<vmem>>, vector<512x128xbf16>,
    return
  }
  func.func @transform_0(%arg0: i32, %arg1: i32, %arg2: i32) -> (i32, i32) {
    %c0_i32 = arith.constant 0 : i32
    return %arg0, %arg2 : i32, i32
  }
  func.func @transform_1(%arg0: i32, %arg1: i32, %arg2: i32) -> (i32, i32) {
    %c0_i32 = arith.constant 0 : i32
    return %arg2, %arg1 : i32, i32
  }
  func.func @transform_2(%arg0: i32, %arg1: i32, %arg2: i32) -> (i32, i32) {
    %c0_i32 = arith.constant 0 : i32
    return %arg0, %arg1 : i32, i32
  }
  func.func @transform_3(%arg0: i32, %arg1: i32, %arg2: i32) -> (i32, i32) {
    %c0_i32 = arith.constant 0 : i32
    return %arg0, %arg1 : i32, i32
  }
  func.func @transform_4(%arg0: i32, %arg1: i32, %arg2: i32) -> (i32, i32) {
    %c0_i32 = arith.constant 0 : i32
    return %arg0, %arg1 : i32, i32
  }
}

module attributes {stable_mosaic.version = 11 : i64} {
  func.func @_bn_apply_kernel(%arg0: i32, %arg1: memref<512x128xbf16, #tpu.memory_space<vmem>>, %arg2: memref<1x128xf32, #tpu.memory_space<vmem>>, %arg3: memref<1x128xf32, #tpu.memory_space<vmem>>, %arg4: memref<512x128xbf16, #tpu.memory_space<vmem>>) attributes {dimension_semantics = [#tpu.dimension_semantics<parallel>], iteration_bounds = array<i64: 1>, scalar_prefetch = 0 : i64, scratch_operands = 0 : i64, tpu.core_type = #tpu.core_type<tc>, window_params = [{transform_indices = @transform_0, window_bounds = array<i64: 512, 128>}, {pipeline_mode = #tpu.pipeline_mode<synchronous>, transform_indices = @transform_1, window_bounds = array<i64: 1, 128>}, {pipeline_mode = #tpu.pipeline_mode<synchronous>, transform_indices = @transform_2, window_bounds = array<i64: 1, 128>}, {transform_indices = @transform_3, window_bounds = array<i64: 512, 128>}]} {
    %c0 = arith.constant 0 : index
    %c0_0 = arith.constant 0 : index
    %0 = vector.load %arg1[%c0, %c0_0] : memref<512x128xbf16, #tpu.memory_space<vmem>>, vector<512x128xbf16>
    %1 = arith.extf %0 : vector<512x128xbf16> to vector<512x128xf32>
    %c0_1 = arith.constant 0 : index
    %c0_2 = arith.constant 0 : index
    %2 = vector.load %arg2[%c0_1, %c0_2] : memref<1x128xf32, #tpu.memory_space<vmem>>, vector<1x128xf32>
    %3 = vector.broadcast %2 : vector<1x128xf32> to vector<512x128xf32>
    %4 = arith.mulf %1, %3 : vector<512x128xf32>
    %c0_3 = arith.constant 0 : index
    %c0_4 = arith.constant 0 : index
    %5 = vector.load %arg3[%c0_3, %c0_4] : memref<1x128xf32, #tpu.memory_space<vmem>>, vector<1x128xf32>
    %6 = vector.broadcast %5 : vector<1x128xf32> to vector<512x128xf32>
    %7 = arith.addf %4, %6 : vector<512x128xf32>
    %cst = arith.constant 0.000000e+00 : f32
    %8 = vector.broadcast %cst : f32 to vector<512x128xf32>
    %9 = arith.maximumf %7, %8 : vector<512x128xf32>
    %10 = arith.truncf %9 : vector<512x128xf32> to vector<512x128xbf16>
    %c0_5 = arith.constant 0 : index
    %c0_6 = arith.constant 0 : index
    %11 = vector.load %arg4[%c0_5, %c0_6] : memref<512x128xbf16, #tpu.memory_space<vmem>>, vector<512x128xbf16>
    tpu.vector_store %arg4[%c0_5, %c0_6], %10 {strides = array<i32>} : memref<512x128xbf16, #tpu.memory_space<vmem>>, vector<512x128xbf16>,
    return
  }
  func.func @transform_0(%arg0: i32) -> (i32, i32) {
    %c0_i32 = arith.constant 0 : i32
    %c0_i32_0 = arith.constant 0 : i32
    return %arg0, %c0_i32 : i32, i32
  }
  func.func @transform_1(%arg0: i32) -> (i32, i32) {
    %c0_i32 = arith.constant 0 : i32
    %c0_i32_0 = arith.constant 0 : i32
    %c0_i32_1 = arith.constant 0 : i32
    return %c0_i32, %c0_i32_0 : i32, i32
  }
  func.func @transform_2(%arg0: i32) -> (i32, i32) {
    %c0_i32 = arith.constant 0 : i32
    %c0_i32_0 = arith.constant 0 : i32
    %c0_i32_1 = arith.constant 0 : i32
    return %c0_i32, %c0_i32_0 : i32, i32
  }
  func.func @transform_3(%arg0: i32) -> (i32, i32) {
    %c0_i32 = arith.constant 0 : i32
    %c0_i32_0 = arith.constant 0 : i32
    return %arg0, %c0_i32 : i32, i32
  }
}

module attributes {stable_mosaic.version = 11 : i64} {
  func.func @kernel(%arg0: i32, %arg1: i32, %arg2: i32, %arg3: memref<128x128xbf16, #tpu.memory_space<vmem>>, %arg4: memref<128x128xbf16, #tpu.memory_space<vmem>>, %arg5: memref<128x128xbf16, #tpu.memory_space<vmem>>, %arg6: memref<8x128xf32, #tpu.memory_space<vmem>>, %arg7: memref<8x128xf32, #tpu.memory_space<vmem>>) attributes {dimension_semantics = [#tpu.dimension_semantics<parallel>, #tpu.dimension_semantics<parallel>, #tpu.dimension_semantics<arbitrary>], iteration_bounds = array<i64: 1, 1, 1>, scalar_prefetch = 0 : i64, scratch_operands = 0 : i64, tpu.core_type = #tpu.core_type<tc>, window_params = [{transform_indices = @transform_0, window_bounds = array<i64: 128, 128>}, {transform_indices = @transform_1, window_bounds = array<i64: 128, 128>}, {transform_indices = @transform_2, window_bounds = array<i64: 128, 128>}, {transform_indices = @transform_3, window_bounds = array<i64: 8, 128>}, {transform_indices = @transform_4, window_bounds = array<i64: 8, 128>}]} {
    %c0 = arith.constant 0 : index
    %c0_0 = arith.constant 0 : index
    %0 = vector.load %arg3[%c0, %c0_0] : memref<128x128xbf16, #tpu.memory_space<vmem>>, vector<128x128xbf16>
    %c0_1 = arith.constant 0 : index
    %c0_2 = arith.constant 0 : index
    %1 = vector.load %arg4[%c0_1, %c0_2] : memref<128x128xbf16, #tpu.memory_space<vmem>>, vector<128x128xbf16>
    %cst = arith.constant dense<0.000000e+00> : vector<128x128xf32>
    %2 = tpu.matmul %0, %1, %cst {dimension_numbers = #tpu.dot_dimension_numbers<[1], [0], [0], [1], [0, 0, 1, 1], [], []>} : vector<128x128xbf16>, vector<128x128xbf16>, vector<128x128xf32> -> vector<128x128xf32>
    %cst_3 = arith.constant dense<0.000000e+00> : vector<128xf32>
    %3 = vector.multi_reduction <add>, %2, %cst_3 [0] : vector<128x128xf32> to vector<128xf32>
    %4 = vector.shape_cast %3 : vector<128xf32> to vector<1x128xf32>
    %5 = arith.mulf %2, %2 : vector<128x128xf32>
    %cst_4 = arith.constant dense<0.000000e+00> : vector<128xf32>
    %6 = vector.multi_reduction <add>, %5, %cst_4 [0] : vector<128x128xf32> to vector<128xf32>
    %7 = vector.shape_cast %6 : vector<128xf32> to vector<1x128xf32>
    %8 = vector.shape_cast %4 : vector<1x128xf32> to vector<1x128xf32>
    %9 = vector.broadcast %8 : vector<1x128xf32> to vector<8x128xf32>
    %c0_5 = arith.constant 0 : index
    %c0_6 = arith.constant 0 : index
    %10 = vector.load %arg6[%c0_5, %c0_6] : memref<8x128xf32, #tpu.memory_space<vmem>>, vector<8x128xf32>
    tpu.vector_store %arg6[%c0_5, %c0_6], %9 {strides = array<i32>} : memref<8x128xf32, #tpu.memory_space<vmem>>, vector<8x128xf32>,
    %11 = vector.shape_cast %7 : vector<1x128xf32> to vector<1x128xf32>
    %12 = vector.broadcast %11 : vector<1x128xf32> to vector<8x128xf32>
    %c0_7 = arith.constant 0 : index
    %c0_8 = arith.constant 0 : index
    %13 = vector.load %arg7[%c0_7, %c0_8] : memref<8x128xf32, #tpu.memory_space<vmem>>, vector<8x128xf32>
    tpu.vector_store %arg7[%c0_7, %c0_8], %12 {strides = array<i32>} : memref<8x128xf32, #tpu.memory_space<vmem>>, vector<8x128xf32>,
    %14 = arith.truncf %2 : vector<128x128xf32> to vector<128x128xbf16>
    %c0_9 = arith.constant 0 : index
    %c0_10 = arith.constant 0 : index
    %15 = vector.load %arg5[%c0_9, %c0_10] : memref<128x128xbf16, #tpu.memory_space<vmem>>, vector<128x128xbf16>
    tpu.vector_store %arg5[%c0_9, %c0_10], %14 {strides = array<i32>} : memref<128x128xbf16, #tpu.memory_space<vmem>>, vector<128x128xbf16>,
    return
  }
  func.func @transform_0(%arg0: i32, %arg1: i32, %arg2: i32) -> (i32, i32) {
    %c0_i32 = arith.constant 0 : i32
    return %arg0, %arg2 : i32, i32
  }
  func.func @transform_1(%arg0: i32, %arg1: i32, %arg2: i32) -> (i32, i32) {
    %c0_i32 = arith.constant 0 : i32
    return %arg2, %arg1 : i32, i32
  }
  func.func @transform_2(%arg0: i32, %arg1: i32, %arg2: i32) -> (i32, i32) {
    %c0_i32 = arith.constant 0 : i32
    return %arg0, %arg1 : i32, i32
  }
  func.func @transform_3(%arg0: i32, %arg1: i32, %arg2: i32) -> (i32, i32) {
    %c0_i32 = arith.constant 0 : i32
    return %arg0, %arg1 : i32, i32
  }
  func.func @transform_4(%arg0: i32, %arg1: i32, %arg2: i32) -> (i32, i32) {
    %c0_i32 = arith.constant 0 : i32
    return %arg0, %arg1 : i32, i32
  }
}

module attributes {stable_mosaic.version = 11 : i64} {
  func.func @_bn_apply_kernel(%arg0: i32, %arg1: memref<128x128xbf16, #tpu.memory_space<vmem>>, %arg2: memref<1x128xf32, #tpu.memory_space<vmem>>, %arg3: memref<1x128xf32, #tpu.memory_space<vmem>>, %arg4: memref<128x128xbf16, #tpu.memory_space<vmem>>) attributes {dimension_semantics = [#tpu.dimension_semantics<parallel>], iteration_bounds = array<i64: 1>, scalar_prefetch = 0 : i64, scratch_operands = 0 : i64, tpu.core_type = #tpu.core_type<tc>, window_params = [{transform_indices = @transform_0, window_bounds = array<i64: 128, 128>}, {pipeline_mode = #tpu.pipeline_mode<synchronous>, transform_indices = @transform_1, window_bounds = array<i64: 1, 128>}, {pipeline_mode = #tpu.pipeline_mode<synchronous>, transform_indices = @transform_2, window_bounds = array<i64: 1, 128>}, {transform_indices = @transform_3, window_bounds = array<i64: 128, 128>}]} {
    %c0 = arith.constant 0 : index
    %c0_0 = arith.constant 0 : index
    %0 = vector.load %arg1[%c0, %c0_0] : memref<128x128xbf16, #tpu.memory_space<vmem>>, vector<128x128xbf16>
    %1 = arith.extf %0 : vector<128x128xbf16> to vector<128x128xf32>
    %c0_1 = arith.constant 0 : index
    %c0_2 = arith.constant 0 : index
    %2 = vector.load %arg2[%c0_1, %c0_2] : memref<1x128xf32, #tpu.memory_space<vmem>>, vector<1x128xf32>
    %3 = vector.broadcast %2 : vector<1x128xf32> to vector<128x128xf32>
    %4 = arith.mulf %1, %3 : vector<128x128xf32>
    %c0_3 = arith.constant 0 : index
    %c0_4 = arith.constant 0 : index
    %5 = vector.load %arg3[%c0_3, %c0_4] : memref<1x128xf32, #tpu.memory_space<vmem>>, vector<1x128xf32>
    %6 = vector.broadcast %5 : vector<1x128xf32> to vector<128x128xf32>
    %7 = arith.addf %4, %6 : vector<128x128xf32>
    %cst = arith.constant 0.000000e+00 : f32
    %8 = vector.broadcast %cst : f32 to vector<128x128xf32>
    %9 = arith.maximumf %7, %8 : vector<128x128xf32>
    %10 = arith.truncf %9 : vector<128x128xf32> to vector<128x128xbf16>
    %c0_5 = arith.constant 0 : index
    %c0_6 = arith.constant 0 : index
    %11 = vector.load %arg4[%c0_5, %c0_6] : memref<128x128xbf16, #tpu.memory_space<vmem>>, vector<128x128xbf16>
    tpu.vector_store %arg4[%c0_5, %c0_6], %10 {strides = array<i32>} : memref<128x128xbf16, #tpu.memory_space<vmem>>, vector<128x128xbf16>,
    return
  }
  func.func @transform_0(%arg0: i32) -> (i32, i32) {
    %c0_i32 = arith.constant 0 : i32
    %c0_i32_0 = arith.constant 0 : i32
    return %arg0, %c0_i32 : i32, i32
  }
  func.func @transform_1(%arg0: i32) -> (i32, i32) {
    %c0_i32 = arith.constant 0 : i32
    %c0_i32_0 = arith.constant 0 : i32
    %c0_i32_1 = arith.constant 0 : i32
    return %c0_i32, %c0_i32_0 : i32, i32
  }
  func.func @transform_2(%arg0: i32) -> (i32, i32) {
    %c0_i32 = arith.constant 0 : i32
    %c0_i32_0 = arith.constant 0 : i32
    %c0_i32_1 = arith.constant 0 : i32
    return %c0_i32, %c0_i32_0 : i32, i32
  }
  func.func @transform_3(%arg0: i32) -> (i32, i32) {
    %c0_i32 = arith.constant 0 : i32
    %c0_i32_0 = arith.constant 0 : i32
    return %arg0, %c0_i32 : i32, i32
  }
}

module attributes {stable_mosaic.version = 11 : i64} {
  func.func @kernel(%arg0: i32, %arg1: i32, %arg2: i32, %arg3: memref<32x256xbf16, #tpu.memory_space<vmem>>, %arg4: memref<256x128xbf16, #tpu.memory_space<vmem>>, %arg5: memref<32x128xbf16, #tpu.memory_space<vmem>>, %arg6: memref<8x128xf32, #tpu.memory_space<vmem>>, %arg7: memref<8x128xf32, #tpu.memory_space<vmem>>) attributes {dimension_semantics = [#tpu.dimension_semantics<parallel>, #tpu.dimension_semantics<parallel>, #tpu.dimension_semantics<arbitrary>], iteration_bounds = array<i64: 1, 1, 1>, scalar_prefetch = 0 : i64, scratch_operands = 0 : i64, tpu.core_type = #tpu.core_type<tc>, window_params = [{transform_indices = @transform_0, window_bounds = array<i64: 32, 256>}, {transform_indices = @transform_1, window_bounds = array<i64: 256, 128>}, {transform_indices = @transform_2, window_bounds = array<i64: 32, 128>}, {transform_indices = @transform_3, window_bounds = array<i64: 8, 128>}, {transform_indices = @transform_4, window_bounds = array<i64: 8, 128>}]} {
    %c0 = arith.constant 0 : index
    %c0_0 = arith.constant 0 : index
    %0 = vector.load %arg3[%c0, %c0_0] : memref<32x256xbf16, #tpu.memory_space<vmem>>, vector<32x256xbf16>
    %c0_1 = arith.constant 0 : index
    %c0_2 = arith.constant 0 : index
    %1 = vector.load %arg4[%c0_1, %c0_2] : memref<256x128xbf16, #tpu.memory_space<vmem>>, vector<256x128xbf16>
    %cst = arith.constant dense<0.000000e+00> : vector<32x128xf32>
    %2 = tpu.matmul %0, %1, %cst {dimension_numbers = #tpu.dot_dimension_numbers<[1], [0], [0], [1], [0, 0, 1, 1], [], []>} : vector<32x256xbf16>, vector<256x128xbf16>, vector<32x128xf32> -> vector<32x128xf32>
    %cst_3 = arith.constant dense<0.000000e+00> : vector<128xf32>
    %3 = vector.multi_reduction <add>, %2, %cst_3 [0] : vector<32x128xf32> to vector<128xf32>
    %4 = vector.shape_cast %3 : vector<128xf32> to vector<1x128xf32>
    %5 = arith.mulf %2, %2 : vector<32x128xf32>
    %cst_4 = arith.constant dense<0.000000e+00> : vector<128xf32>
    %6 = vector.multi_reduction <add>, %5, %cst_4 [0] : vector<32x128xf32> to vector<128xf32>
    %7 = vector.shape_cast %6 : vector<128xf32> to vector<1x128xf32>
    %8 = vector.shape_cast %4 : vector<1x128xf32> to vector<1x128xf32>
    %9 = vector.broadcast %8 : vector<1x128xf32> to vector<8x128xf32>
    %c0_5 = arith.constant 0 : index
    %c0_6 = arith.constant 0 : index
    %10 = vector.load %arg6[%c0_5, %c0_6] : memref<8x128xf32, #tpu.memory_space<vmem>>, vector<8x128xf32>
    tpu.vector_store %arg6[%c0_5, %c0_6], %9 {strides = array<i32>} : memref<8x128xf32, #tpu.memory_space<vmem>>, vector<8x128xf32>,
    %11 = vector.shape_cast %7 : vector<1x128xf32> to vector<1x128xf32>
    %12 = vector.broadcast %11 : vector<1x128xf32> to vector<8x128xf32>
    %c0_7 = arith.constant 0 : index
    %c0_8 = arith.constant 0 : index
    %13 = vector.load %arg7[%c0_7, %c0_8] : memref<8x128xf32, #tpu.memory_space<vmem>>, vector<8x128xf32>
    tpu.vector_store %arg7[%c0_7, %c0_8], %12 {strides = array<i32>} : memref<8x128xf32, #tpu.memory_space<vmem>>, vector<8x128xf32>,
    %14 = arith.truncf %2 : vector<32x128xf32> to vector<32x128xbf16>
    %c0_9 = arith.constant 0 : index
    %c0_10 = arith.constant 0 : index
    %15 = vector.load %arg5[%c0_9, %c0_10] : memref<32x128xbf16, #tpu.memory_space<vmem>>, vector<32x128xbf16>
    tpu.vector_store %arg5[%c0_9, %c0_10], %14 {strides = array<i32>} : memref<32x128xbf16, #tpu.memory_space<vmem>>, vector<32x128xbf16>,
    return
  }
  func.func @transform_0(%arg0: i32, %arg1: i32, %arg2: i32) -> (i32, i32) {
    %c0_i32 = arith.constant 0 : i32
    return %arg0, %arg2 : i32, i32
  }
  func.func @transform_1(%arg0: i32, %arg1: i32, %arg2: i32) -> (i32, i32) {
    %c0_i32 = arith.constant 0 : i32
    return %arg2, %arg1 : i32, i32
  }
  func.func @transform_2(%arg0: i32, %arg1: i32, %arg2: i32) -> (i32, i32) {
    %c0_i32 = arith.constant 0 : i32
    return %arg0, %arg1 : i32, i32
  }
  func.func @transform_3(%arg0: i32, %arg1: i32, %arg2: i32) -> (i32, i32) {
    %c0_i32 = arith.constant 0 : i32
    return %arg0, %arg1 : i32, i32
  }
  func.func @transform_4(%arg0: i32, %arg1: i32, %arg2: i32) -> (i32, i32) {
    %c0_i32 = arith.constant 0 : i32
    return %arg0, %arg1 : i32, i32
  }
}

module attributes {stable_mosaic.version = 11 : i64} {
  func.func @_bn_apply_kernel(%arg0: i32, %arg1: memref<32x128xbf16, #tpu.memory_space<vmem>>, %arg2: memref<1x128xf32, #tpu.memory_space<vmem>>, %arg3: memref<1x128xf32, #tpu.memory_space<vmem>>, %arg4: memref<32x128xbf16, #tpu.memory_space<vmem>>) attributes {dimension_semantics = [#tpu.dimension_semantics<parallel>], iteration_bounds = array<i64: 1>, scalar_prefetch = 0 : i64, scratch_operands = 0 : i64, tpu.core_type = #tpu.core_type<tc>, window_params = [{transform_indices = @transform_0, window_bounds = array<i64: 32, 128>}, {pipeline_mode = #tpu.pipeline_mode<synchronous>, transform_indices = @transform_1, window_bounds = array<i64: 1, 128>}, {pipeline_mode = #tpu.pipeline_mode<synchronous>, transform_indices = @transform_2, window_bounds = array<i64: 1, 128>}, {transform_indices = @transform_3, window_bounds = array<i64: 32, 128>}]} {
    %c0 = arith.constant 0 : index
    %c0_0 = arith.constant 0 : index
    %0 = vector.load %arg1[%c0, %c0_0] : memref<32x128xbf16, #tpu.memory_space<vmem>>, vector<32x128xbf16>
    %1 = arith.extf %0 : vector<32x128xbf16> to vector<32x128xf32>
    %c0_1 = arith.constant 0 : index
    %c0_2 = arith.constant 0 : index
    %2 = vector.load %arg2[%c0_1, %c0_2] : memref<1x128xf32, #tpu.memory_space<vmem>>, vector<1x128xf32>
    %3 = vector.broadcast %2 : vector<1x128xf32> to vector<32x128xf32>
    %4 = arith.mulf %1, %3 : vector<32x128xf32>
    %c0_3 = arith.constant 0 : index
    %c0_4 = arith.constant 0 : index
    %5 = vector.load %arg3[%c0_3, %c0_4] : memref<1x128xf32, #tpu.memory_space<vmem>>, vector<1x128xf32>
    %6 = vector.broadcast %5 : vector<1x128xf32> to vector<32x128xf32>
    %7 = arith.addf %4, %6 : vector<32x128xf32>
    %cst = arith.constant 0.000000e+00 : f32
    %8 = vector.broadcast %cst : f32 to vector<32x128xf32>
    %9 = arith.maximumf %7, %8 : vector<32x128xf32>
    %10 = arith.truncf %9 : vector<32x128xf32> to vector<32x128xbf16>
    %c0_5 = arith.constant 0 : index
    %c0_6 = arith.constant 0 : index
    %11 = vector.load %arg4[%c0_5, %c0_6] : memref<32x128xbf16, #tpu.memory_space<vmem>>, vector<32x128xbf16>
    tpu.vector_store %arg4[%c0_5, %c0_6], %10 {strides = array<i32>} : memref<32x128xbf16, #tpu.memory_space<vmem>>, vector<32x128xbf16>,
    return
  }
  func.func @transform_0(%arg0: i32) -> (i32, i32) {
    %c0_i32 = arith.constant 0 : i32
    %c0_i32_0 = arith.constant 0 : i32
    return %arg0, %c0_i32 : i32, i32
  }
  func.func @transform_1(%arg0: i32) -> (i32, i32) {
    %c0_i32 = arith.constant 0 : i32
    %c0_i32_0 = arith.constant 0 : i32
    %c0_i32_1 = arith.constant 0 : i32
    return %c0_i32, %c0_i32_0 : i32, i32
  }
  func.func @transform_2(%arg0: i32) -> (i32, i32) {
    %c0_i32 = arith.constant 0 : i32
    %c0_i32_0 = arith.constant 0 : i32
    %c0_i32_1 = arith.constant 0 : i32
    return %c0_i32, %c0_i32_0 : i32, i32
  }
  func.func @transform_3(%arg0: i32) -> (i32, i32) {
    %c0_i32 = arith.constant 0 : i32
    %c0_i32_0 = arith.constant 0 : i32
    return %arg0, %c0_i32 : i32, i32
  }
}

module attributes {stable_mosaic.version = 11 : i64} {
  func.func @kernel(%arg0: i32, %arg1: i32, %arg2: i32, %arg3: memref<32x384xbf16, #tpu.memory_space<vmem>>, %arg4: memref<384x128xbf16, #tpu.memory_space<vmem>>, %arg5: memref<32x128xbf16, #tpu.memory_space<vmem>>, %arg6: memref<8x128xf32, #tpu.memory_space<vmem>>, %arg7: memref<8x128xf32, #tpu.memory_space<vmem>>) attributes {dimension_semantics = [#tpu.dimension_semantics<parallel>, #tpu.dimension_semantics<parallel>, #tpu.dimension_semantics<arbitrary>], iteration_bounds = array<i64: 1, 1, 1>, scalar_prefetch = 0 : i64, scratch_operands = 0 : i64, tpu.core_type = #tpu.core_type<tc>, window_params = [{transform_indices = @transform_0, window_bounds = array<i64: 32, 384>}, {transform_indices = @transform_1, window_bounds = array<i64: 384, 128>}, {transform_indices = @transform_2, window_bounds = array<i64: 32, 128>}, {transform_indices = @transform_3, window_bounds = array<i64: 8, 128>}, {transform_indices = @transform_4, window_bounds = array<i64: 8, 128>}]} {
    %c0 = arith.constant 0 : index
    %c0_0 = arith.constant 0 : index
    %0 = vector.load %arg3[%c0, %c0_0] : memref<32x384xbf16, #tpu.memory_space<vmem>>, vector<32x384xbf16>
    %c0_1 = arith.constant 0 : index
    %c0_2 = arith.constant 0 : index
    %1 = vector.load %arg4[%c0_1, %c0_2] : memref<384x128xbf16, #tpu.memory_space<vmem>>, vector<384x128xbf16>
    %cst = arith.constant dense<0.000000e+00> : vector<32x128xf32>
    %2 = tpu.matmul %0, %1, %cst {dimension_numbers = #tpu.dot_dimension_numbers<[1], [0], [0], [1], [0, 0, 1, 1], [], []>} : vector<32x384xbf16>, vector<384x128xbf16>, vector<32x128xf32> -> vector<32x128xf32>
    %cst_3 = arith.constant dense<0.000000e+00> : vector<128xf32>
    %3 = vector.multi_reduction <add>, %2, %cst_3 [0] : vector<32x128xf32> to vector<128xf32>
    %4 = vector.shape_cast %3 : vector<128xf32> to vector<1x128xf32>
    %5 = arith.mulf %2, %2 : vector<32x128xf32>
    %cst_4 = arith.constant dense<0.000000e+00> : vector<128xf32>
    %6 = vector.multi_reduction <add>, %5, %cst_4 [0] : vector<32x128xf32> to vector<128xf32>
    %7 = vector.shape_cast %6 : vector<128xf32> to vector<1x128xf32>
    %8 = vector.shape_cast %4 : vector<1x128xf32> to vector<1x128xf32>
    %9 = vector.broadcast %8 : vector<1x128xf32> to vector<8x128xf32>
    %c0_5 = arith.constant 0 : index
    %c0_6 = arith.constant 0 : index
    %10 = vector.load %arg6[%c0_5, %c0_6] : memref<8x128xf32, #tpu.memory_space<vmem>>, vector<8x128xf32>
    tpu.vector_store %arg6[%c0_5, %c0_6], %9 {strides = array<i32>} : memref<8x128xf32, #tpu.memory_space<vmem>>, vector<8x128xf32>,
    %11 = vector.shape_cast %7 : vector<1x128xf32> to vector<1x128xf32>
    %12 = vector.broadcast %11 : vector<1x128xf32> to vector<8x128xf32>
    %c0_7 = arith.constant 0 : index
    %c0_8 = arith.constant 0 : index
    %13 = vector.load %arg7[%c0_7, %c0_8] : memref<8x128xf32, #tpu.memory_space<vmem>>, vector<8x128xf32>
    tpu.vector_store %arg7[%c0_7, %c0_8], %12 {strides = array<i32>} : memref<8x128xf32, #tpu.memory_space<vmem>>, vector<8x128xf32>,
    %14 = arith.truncf %2 : vector<32x128xf32> to vector<32x128xbf16>
    %c0_9 = arith.constant 0 : index
    %c0_10 = arith.constant 0 : index
    %15 = vector.load %arg5[%c0_9, %c0_10] : memref<32x128xbf16, #tpu.memory_space<vmem>>, vector<32x128xbf16>
    tpu.vector_store %arg5[%c0_9, %c0_10], %14 {strides = array<i32>} : memref<32x128xbf16, #tpu.memory_space<vmem>>, vector<32x128xbf16>,
    return
  }
  func.func @transform_0(%arg0: i32, %arg1: i32, %arg2: i32) -> (i32, i32) {
    %c0_i32 = arith.constant 0 : i32
    return %arg0, %arg2 : i32, i32
  }
  func.func @transform_1(%arg0: i32, %arg1: i32, %arg2: i32) -> (i32, i32) {
    %c0_i32 = arith.constant 0 : i32
    return %arg2, %arg1 : i32, i32
  }
  func.func @transform_2(%arg0: i32, %arg1: i32, %arg2: i32) -> (i32, i32) {
    %c0_i32 = arith.constant 0 : i32
    return %arg0, %arg1 : i32, i32
  }
  func.func @transform_3(%arg0: i32, %arg1: i32, %arg2: i32) -> (i32, i32) {
    %c0_i32 = arith.constant 0 : i32
    return %arg0, %arg1 : i32, i32
  }
  func.func @transform_4(%arg0: i32, %arg1: i32, %arg2: i32) -> (i32, i32) {
    %c0_i32 = arith.constant 0 : i32
    return %arg0, %arg1 : i32, i32
  }
}

module attributes {stable_mosaic.version = 11 : i64} {
  func.func @_bn_apply_kernel(%arg0: i32, %arg1: memref<32x128xbf16, #tpu.memory_space<vmem>>, %arg2: memref<1x128xf32, #tpu.memory_space<vmem>>, %arg3: memref<1x128xf32, #tpu.memory_space<vmem>>, %arg4: memref<32x128xbf16, #tpu.memory_space<vmem>>, %arg5: memref<32x128xbf16, #tpu.memory_space<vmem>>) attributes {dimension_semantics = [#tpu.dimension_semantics<parallel>], iteration_bounds = array<i64: 1>, scalar_prefetch = 0 : i64, scratch_operands = 0 : i64, tpu.core_type = #tpu.core_type<tc>, window_params = [{transform_indices = @transform_0, window_bounds = array<i64: 32, 128>}, {pipeline_mode = #tpu.pipeline_mode<synchronous>, transform_indices = @transform_1, window_bounds = array<i64: 1, 128>}, {pipeline_mode = #tpu.pipeline_mode<synchronous>, transform_indices = @transform_2, window_bounds = array<i64: 1, 128>}, {transform_indices = @transform_3, window_bounds = array<i64: 32, 128>}, {transform_indices = @transform_4, window_bounds = array<i64: 32, 128>}]} {
    %c0 = arith.constant 0 : index
    %c0_0 = arith.constant 0 : index
    %0 = vector.load %arg1[%c0, %c0_0] : memref<32x128xbf16, #tpu.memory_space<vmem>>, vector<32x128xbf16>
    %1 = arith.extf %0 : vector<32x128xbf16> to vector<32x128xf32>
    %c0_1 = arith.constant 0 : index
    %c0_2 = arith.constant 0 : index
    %2 = vector.load %arg2[%c0_1, %c0_2] : memref<1x128xf32, #tpu.memory_space<vmem>>, vector<1x128xf32>
    %3 = vector.broadcast %2 : vector<1x128xf32> to vector<32x128xf32>
    %4 = arith.mulf %1, %3 : vector<32x128xf32>
    %c0_3 = arith.constant 0 : index
    %c0_4 = arith.constant 0 : index
    %5 = vector.load %arg3[%c0_3, %c0_4] : memref<1x128xf32, #tpu.memory_space<vmem>>, vector<1x128xf32>
    %6 = vector.broadcast %5 : vector<1x128xf32> to vector<32x128xf32>
    %7 = arith.addf %4, %6 : vector<32x128xf32>
    %c0_5 = arith.constant 0 : index
    %c0_6 = arith.constant 0 : index
    %8 = vector.load %arg4[%c0_5, %c0_6] : memref<32x128xbf16, #tpu.memory_space<vmem>>, vector<32x128xbf16>
    %9 = arith.extf %8 : vector<32x128xbf16> to vector<32x128xf32>
    %10 = arith.addf %7, %9 : vector<32x128xf32>
    %11 = arith.truncf %10 : vector<32x128xf32> to vector<32x128xbf16>
    %c0_7 = arith.constant 0 : index
    %c0_8 = arith.constant 0 : index
    %12 = vector.load %arg5[%c0_7, %c0_8] : memref<32x128xbf16, #tpu.memory_space<vmem>>, vector<32x128xbf16>
    tpu.vector_store %arg5[%c0_7, %c0_8], %11 {strides = array<i32>} : memref<32x128xbf16, #tpu.memory_space<vmem>>, vector<32x128xbf16>,
    return
  }
  func.func @transform_0(%arg0: i32) -> (i32, i32) {
    %c0_i32 = arith.constant 0 : i32
    %c0_i32_0 = arith.constant 0 : i32
    return %arg0, %c0_i32 : i32, i32
  }
  func.func @transform_1(%arg0: i32) -> (i32, i32) {
    %c0_i32 = arith.constant 0 : i32
    %c0_i32_0 = arith.constant 0 : i32
    %c0_i32_1 = arith.constant 0 : i32
    return %c0_i32, %c0_i32_0 : i32, i32
  }
  func.func @transform_2(%arg0: i32) -> (i32, i32) {
    %c0_i32 = arith.constant 0 : i32
    %c0_i32_0 = arith.constant 0 : i32
    %c0_i32_1 = arith.constant 0 : i32
    return %c0_i32, %c0_i32_0 : i32, i32
  }
  func.func @transform_3(%arg0: i32) -> (i32, i32) {
    %c0_i32 = arith.constant 0 : i32
    %c0_i32_0 = arith.constant 0 : i32
    return %arg0, %c0_i32 : i32, i32
  }
  func.func @transform_4(%arg0: i32) -> (i32, i32) {
    %c0_i32 = arith.constant 0 : i32
    %c0_i32_0 = arith.constant 0 : i32
    return %arg0, %c0_i32 : i32, i32
  }
}

module attributes {stable_mosaic.version = 11 : i64} {
  func.func @kernel(%arg0: i32, %arg1: i32, %arg2: i32, %arg3: memref<32x128xbf16, #tpu.memory_space<vmem>>, %arg4: memref<128x128xbf16, #tpu.memory_space<vmem>>, %arg5: memref<32x128xbf16, #tpu.memory_space<vmem>>, %arg6: memref<8x128xf32, #tpu.memory_space<vmem>>, %arg7: memref<8x128xf32, #tpu.memory_space<vmem>>) attributes {dimension_semantics = [#tpu.dimension_semantics<parallel>, #tpu.dimension_semantics<parallel>, #tpu.dimension_semantics<arbitrary>], iteration_bounds = array<i64: 1, 1, 1>, scalar_prefetch = 0 : i64, scratch_operands = 0 : i64, tpu.core_type = #tpu.core_type<tc>, window_params = [{transform_indices = @transform_0, window_bounds = array<i64: 32, 128>}, {transform_indices = @transform_1, window_bounds = array<i64: 128, 128>}, {transform_indices = @transform_2, window_bounds = array<i64: 32, 128>}, {transform_indices = @transform_3, window_bounds = array<i64: 8, 128>}, {transform_indices = @transform_4, window_bounds = array<i64: 8, 128>}]} {
    %c0 = arith.constant 0 : index
    %c0_0 = arith.constant 0 : index
    %0 = vector.load %arg3[%c0, %c0_0] : memref<32x128xbf16, #tpu.memory_space<vmem>>, vector<32x128xbf16>
    %c0_1 = arith.constant 0 : index
    %c0_2 = arith.constant 0 : index
    %1 = vector.load %arg4[%c0_1, %c0_2] : memref<128x128xbf16, #tpu.memory_space<vmem>>, vector<128x128xbf16>
    %cst = arith.constant dense<0.000000e+00> : vector<32x128xf32>
    %2 = tpu.matmul %0, %1, %cst {dimension_numbers = #tpu.dot_dimension_numbers<[1], [0], [0], [1], [0, 0, 1, 1], [], []>} : vector<32x128xbf16>, vector<128x128xbf16>, vector<32x128xf32> -> vector<32x128xf32>
    %cst_3 = arith.constant dense<0.000000e+00> : vector<128xf32>
    %3 = vector.multi_reduction <add>, %2, %cst_3 [0] : vector<32x128xf32> to vector<128xf32>
    %4 = vector.shape_cast %3 : vector<128xf32> to vector<1x128xf32>
    %5 = arith.mulf %2, %2 : vector<32x128xf32>
    %cst_4 = arith.constant dense<0.000000e+00> : vector<128xf32>
    %6 = vector.multi_reduction <add>, %5, %cst_4 [0] : vector<32x128xf32> to vector<128xf32>
    %7 = vector.shape_cast %6 : vector<128xf32> to vector<1x128xf32>
    %8 = vector.shape_cast %4 : vector<1x128xf32> to vector<1x128xf32>
    %9 = vector.broadcast %8 : vector<1x128xf32> to vector<8x128xf32>
    %c0_5 = arith.constant 0 : index
    %c0_6 = arith.constant 0 : index
    %10 = vector.load %arg6[%c0_5, %c0_6] : memref<8x128xf32, #tpu.memory_space<vmem>>, vector<8x128xf32>
    tpu.vector_store %arg6[%c0_5, %c0_6], %9 {strides = array<i32>} : memref<8x128xf32, #tpu.memory_space<vmem>>, vector<8x128xf32>,
    %11 = vector.shape_cast %7 : vector<1x128xf32> to vector<1x128xf32>
    %12 = vector.broadcast %11 : vector<1x128xf32> to vector<8x128xf32>
    %c0_7 = arith.constant 0 : index
    %c0_8 = arith.constant 0 : index
    %13 = vector.load %arg7[%c0_7, %c0_8] : memref<8x128xf32, #tpu.memory_space<vmem>>, vector<8x128xf32>
    tpu.vector_store %arg7[%c0_7, %c0_8], %12 {strides = array<i32>} : memref<8x128xf32, #tpu.memory_space<vmem>>, vector<8x128xf32>,
    %14 = arith.truncf %2 : vector<32x128xf32> to vector<32x128xbf16>
    %c0_9 = arith.constant 0 : index
    %c0_10 = arith.constant 0 : index
    %15 = vector.load %arg5[%c0_9, %c0_10] : memref<32x128xbf16, #tpu.memory_space<vmem>>, vector<32x128xbf16>
    tpu.vector_store %arg5[%c0_9, %c0_10], %14 {strides = array<i32>} : memref<32x128xbf16, #tpu.memory_space<vmem>>, vector<32x128xbf16>,
    return
  }
  func.func @transform_0(%arg0: i32, %arg1: i32, %arg2: i32) -> (i32, i32) {
    %c0_i32 = arith.constant 0 : i32
    return %arg0, %arg2 : i32, i32
  }
  func.func @transform_1(%arg0: i32, %arg1: i32, %arg2: i32) -> (i32, i32) {
    %c0_i32 = arith.constant 0 : i32
    return %arg2, %arg1 : i32, i32
  }
  func.func @transform_2(%arg0: i32, %arg1: i32, %arg2: i32) -> (i32, i32) {
    %c0_i32 = arith.constant 0 : i32
    return %arg0, %arg1 : i32, i32
  }
  func.func @transform_3(%arg0: i32, %arg1: i32, %arg2: i32) -> (i32, i32) {
    %c0_i32 = arith.constant 0 : i32
    return %arg0, %arg1 : i32, i32
  }
  func.func @transform_4(%arg0: i32, %arg1: i32, %arg2: i32) -> (i32, i32) {
    %c0_i32 = arith.constant 0 : i32
    return %arg0, %arg1 : i32, i32
  }
}

module attributes {stable_mosaic.version = 11 : i64} {
  func.func @kernel(%arg0: i32, %arg1: i32, %arg2: i32, %arg3: memref<512x512xbf16, #tpu.memory_space<vmem>>, %arg4: memref<512x256xbf16, #tpu.memory_space<vmem>>, %arg5: memref<1x256xf32, #tpu.memory_space<vmem>>, %arg6: memref<512x256xf32, #tpu.memory_space<vmem>>) attributes {dimension_semantics = [#tpu.dimension_semantics<parallel>, #tpu.dimension_semantics<parallel>, #tpu.dimension_semantics<arbitrary>], iteration_bounds = array<i64: 1, 1, 1>, scalar_prefetch = 0 : i64, scratch_operands = 0 : i64, tpu.core_type = #tpu.core_type<tc>, window_params = [{transform_indices = @transform_0, window_bounds = array<i64: 512, 512>}, {transform_indices = @transform_1, window_bounds = array<i64: 512, 256>}, {transform_indices = @transform_2, window_bounds = array<i64: 1, 256>}, {transform_indices = @transform_3, window_bounds = array<i64: 512, 256>}]} {
    %c0 = arith.constant 0 : index
    %c0_0 = arith.constant 0 : index
    %0 = vector.load %arg3[%c0, %c0_0] : memref<512x512xbf16, #tpu.memory_space<vmem>>, vector<512x512xbf16>
    %c0_1 = arith.constant 0 : index
    %c0_2 = arith.constant 0 : index
    %1 = vector.load %arg4[%c0_1, %c0_2] : memref<512x256xbf16, #tpu.memory_space<vmem>>, vector<512x256xbf16>
    %cst = arith.constant dense<0.000000e+00> : vector<512x256xf32>
    %2 = tpu.matmul %0, %1, %cst {dimension_numbers = #tpu.dot_dimension_numbers<[1], [0], [0], [1], [0, 0, 1, 1], [], []>} : vector<512x512xbf16>, vector<512x256xbf16>, vector<512x256xf32> -> vector<512x256xf32>
    %c0_3 = arith.constant 0 : index
    %c0_4 = arith.constant 0 : index
    %3 = vector.load %arg5[%c0_3, %c0_4] : memref<1x256xf32, #tpu.memory_space<vmem>>, vector<1x256xf32>
    %4 = vector.broadcast %3 : vector<1x256xf32> to vector<512x256xf32>
    %5 = arith.addf %2, %4 : vector<512x256xf32>
    %6 = vector.extract_strided_slice %5 {offsets = [0, 0], sizes = [512, 128], strides = [1, 1]} : vector<512x256xf32> to vector<512x128xf32>
    %7 = math.tanh %6 : vector<512x128xf32>
    %c0_5 = arith.constant 0 : index
    %c0_6 = arith.constant 0 : index
    %8 = vector.load %arg6[%c0_5, %c0_6] : memref<512x256xf32, #tpu.memory_space<vmem>>, vector<512x128xf32>
    tpu.vector_store %arg6[%c0_5, %c0_6], %7 {strides = array<i32>} : memref<512x256xf32, #tpu.memory_space<vmem>>, vector<512x128xf32>,
    %9 = vector.extract_strided_slice %5 {offsets = [0, 128], sizes = [512, 128], strides = [1, 1]} : vector<512x256xf32> to vector<512x128xf32>
    %10 = arith.negf %9 : vector<512x128xf32>
    %11 = math.exp %10 : vector<512x128xf32>
    %cst_7 = arith.constant 1.000000e+00 : f32
    %12 = vector.broadcast %cst_7 : f32 to vector<512x128xf32>
    %13 = arith.addf %12, %11 : vector<512x128xf32>
    %14 = arith.divf %12, %13 : vector<512x128xf32>
    %c0_8 = arith.constant 0 : index
    %c128 = arith.constant 128 : index
    %15 = vector.load %arg6[%c0_8, %c128] : memref<512x256xf32, #tpu.memory_space<vmem>>, vector<512x128xf32>
    tpu.vector_store %arg6[%c0_8, %c128], %14 {strides = array<i32>} : memref<512x256xf32, #tpu.memory_space<vmem>>, vector<512x128xf32>,
    return
  }
  func.func @transform_0(%arg0: i32, %arg1: i32, %arg2: i32) -> (i32, i32) {
    %c0_i32 = arith.constant 0 : i32
    return %arg0, %arg2 : i32, i32
  }
  func.func @transform_1(%arg0: i32, %arg1: i32, %arg2: i32) -> (i32, i32) {
    %c0_i32 = arith.constant 0 : i32
    return %arg2, %arg1 : i32, i32
  }
  func.func @transform_2(%arg0: i32, %arg1: i32, %arg2: i32) -> (i32, i32) {
    %c0_i32 = arith.constant 0 : i32
    %c0_i32_0 = arith.constant 0 : i32
    return %c0_i32, %arg1 : i32, i32
  }
  func.func @transform_3(%arg0: i32, %arg1: i32, %arg2: i32) -> (i32, i32) {
    %c0_i32 = arith.constant 0 : i32
    return %arg0, %arg1 : i32, i32
  }
}

</mosaic_0001>

<llo_original>
// kernel: multi_generator_forward.20
$region0: #{multi_generator_forward.20}
  #allocation0 [shape = 'u32[]', space=smem, size = 0x4, offset = 0x4, fixed_abs, tag = 'smem constant byte address 0x4 - core index']
  #allocation1 [shape = 'u32[72,128]{1,0:T(1,128)}', space=vmem, size = 0x9000, scoped, tag = 'internal scratch']
  %s0 = inlined_call_operand.vmem [shape: bf16[512,128], index: 0, kind: input, shape index: {}]
  %s1 = inlined_call_operand.vmem [shape: f32[1,128], index: 1, kind: input, shape index: {}]
  %s2 = inlined_call_operand.vmem [shape: f32[1,128], index: 2, kind: input, shape index: {}]
  %s3 = inlined_call_operand.vmem [shape: bf16[512,128], index: 3, kind: output, shape index: {}]
  %s4 = sld [smem:[#allocation0]]
  $region22: #{multi_generator_forward.20} parent=0
    _
  %s6 = ssub.s32 1, %s4
  %s7 = scalar_select 0, %s6, %s4
  // Predicated region
  $region2: #{multi_generator_forward.20} parent=0 // pred_check
    _
  $region3: #{multi_generator_forward.20} parent=0 // pred_check_branch
    %9 = sbr.rel (0) target = $region5
  $region4: #{multi_generator_forward.20} parent=0 // pred_region
    _
  $region5: #{multi_generator_forward.20} parent=0 // pred_fallthru
    _
  // Predicated region
  $region6: #{multi_generator_forward.20} parent=0 // pred_check
    _
  $region7: #{multi_generator_forward.20} parent=0 // pred_check_branch
    %11 = sbr.rel (0) target = $region9
  $region8: #{multi_generator_forward.20} parent=0 // pred_region
    _
  $region9: #{multi_generator_forward.20} parent=0 // pred_fallthru
    _
  // Predicated region
  $region10: #{multi_generator_forward.20} parent=0 // pred_check
    _
  $region11: #{multi_generator_forward.20} parent=0 // pred_check_branch
    %13 = sbr.rel (0) target = $region13
  $region12: #{multi_generator_forward.20} parent=0 // pred_region
    _
  $region13: #{multi_generator_forward.20} parent=0 // pred_fallthru
    _
  %v14 = vld [vmem:[%s0] sm:$0xf]
  %v15 = vld [vmem:[%s0 + $0x4] sm:$0xf]
  %v16 = vld [vmem:[%s0 + $0x8] sm:$0xf]
  %v17 = vld [vmem:[%s0 + $0xc] sm:$0xf]
  %v18 = vld [vmem:[%s0 + $0x10] sm:$0xf]
  %v19 = vld [vmem:[%s0 + $0x14] sm:$0xf]
  %v20 = vld [vmem:[%s0 + $0x18] sm:$0xf]
  %v21 = vld [vmem:[%s0 + $0x1c] sm:$0xf]
  %v22 = vld [vmem:[%s0 + $0x20] sm:$0xf]
  %v23 = vld [vmem:[%s0 + $0x24] sm:$0xf]
  %v24 = vld [vmem:[%s0 + $0x28] sm:$0xf]
  %v25 = vld [vmem:[%s0 + $0x2c] sm:$0xf]
  %v26 = vld [vmem:[%s0 + $0x30] sm:$0xf]
  %v27 = vld [vmem:[%s0 + $0x34] sm:$0xf]
  %v28 = vld [vmem:[%s0 + $0x38] sm:$0xf]
  %v29 = vld [vmem:[%s0 + $0x3c] sm:$0xf]
  %v30 = vld [vmem:[%s0 + $0x40] sm:$0xf]
  %v31 = vld [vmem:[%s0 + $0x44] sm:$0xf]
  %v32 = vld [vmem:[%s0 + $0x48] sm:$0xf]
  %v33 = vld [vmem:[%s0 + $0x4c] sm:$0xf]
  %v34 = vld [vmem:[%s0 + $0x50] sm:$0xf]
  %v35 = vld [vmem:[%s0 + $0x54] sm:$0xf]
  %v36 = vld [vmem:[%s0 + $0x58] sm:$0xf]
  %v37 = vld [vmem:[%s0 + $0x5c] sm:$0xf]
  %v38 = vld [vmem:[%s0 + $0x60] sm:$0xf]
  %v39 = vld [vmem:[%s0 + $0x64] sm:$0xf]
  %v40 = vld [vmem:[%s0 + $0x68] sm:$0xf]
  %v41 = vld [vmem:[%s0 + $0x6c] sm:$0xf]
  %v42 = vld [vmem:[%s0 + $0x70] sm:$0xf]
  %v43 = vld [vmem:[%s0 + $0x74] sm:$0xf]
  %v44 = vld [vmem:[%s0 + $0x78] sm:$0xf]
  %v45 = vld [vmem:[%s0 + $0x7c] sm:$0xf]
  %v46 = vld [vmem:[%s0 + $0x80] sm:$0xf]
  %v47 = vld [vmem:[%s0 + $0x84] sm:$0xf]
  %v48 = vld [vmem:[%s0 + $0x88] sm:$0xf]
  %v49 = vld [vmem:[%s0 + $0x8c] sm:$0xf]
  %v50 = vld [vmem:[%s0 + $0x90] sm:$0xf]
  %v51 = vld [vmem:[%s0 + $0x94] sm:$0xf]
  %v52 = vld [vmem:[%s0 + $0x98] sm:$0xf]
  %v53 = vld [vmem:[%s0 + $0x9c] sm:$0xf]
  %v54 = vld [vmem:[%s0 + $0xa0] sm:$0xf]
  %v55 = vld [vmem:[%s0 + $0xa4] sm:$0xf]
  %v56 = vld [vmem:[%s0 + $0xa8] sm:$0xf]
  %v57 = vld [vmem:[%s0 + $0xac] sm:$0xf]
  %v58 = vld [vmem:[%s0 + $0xb0] sm:$0xf]
  %v59 = vld [vmem:[%s0 + $0xb4] sm:$0xf]
  %v60 = vld [vmem:[%s0 + $0xb8] sm:$0xf]
  %v61 = vld [vmem:[%s0 + $0xbc] sm:$0xf]
  %v62 = vld [vmem:[%s0 + $0xc0] sm:$0xf]
  %v63 = vld [vmem:[%s0 + $0xc4] sm:$0xf]
  %v64 = vld [vmem:[%s0 + $0xc8] sm:$0xf]
  %v65 = vld [vmem:[%s0 + $0xcc] sm:$0xf]
  %v66 = vld [vmem:[%s0 + $0xd0] sm:$0xf]
  %v67 = vld [vmem:[%s0 + $0xd4] sm:$0xf]
  %v68 = vld [vmem:[%s0 + $0xd8] sm:$0xf]
  %v69 = vld [vmem:[%s0 + $0xdc] sm:$0xf]
  %v70 = vld [vmem:[%s0 + $0xe0] sm:$0xf]
  %v71 = vld [vmem:[%s0 + $0xe4] sm:$0xf]
  %v72 = vld [vmem:[%s0 + $0xe8] sm:$0xf]
  %v73 = vld [vmem:[%s0 + $0xec] sm:$0xf]
  %v74 = vld [vmem:[%s0 + $0xf0] sm:$0xf]
  %v75 = vld [vmem:[%s0 + $0xf4] sm:$0xf]
  %v76 = vld [vmem:[%s0 + $0xf8] sm:$0xf]
  %v77 = vld [vmem:[%s0 + $0xfc] sm:$0xf]
  %v78 = vunpack.c.l.bf16 %v14
  %v79 = vunpack.c.l.bf16 %v15
  %v80 = vunpack.c.l.bf16 %v16
  %v81 = vunpack.c.l.bf16 %v17
  %v82 = vunpack.c.l.bf16 %v18
  %v83 = vunpack.c.l.bf16 %v19
  %v84 = vunpack.c.l.bf16 %v20
  %v85 = vunpack.c.l.bf16 %v21
  %v86 = vunpack.c.l.bf16 %v22
  %v87 = vunpack.c.l.bf16 %v23
  %v88 = vunpack.c.l.bf16 %v24
  %v89 = vunpack.c.l.bf16 %v25
  %v90 = vunpack.c.l.bf16 %v26
  %v91 = vunpack.c.l.bf16 %v27
  %v92 = vunpack.c.l.bf16 %v28
  %v93 = vunpack.c.l.bf16 %v29
  %v94 = vunpack.c.l.bf16 %v30
  %v95 = vunpack.c.l.bf16 %v31
  %v96 = vunpack.c.l.bf16 %v32
  %v97 = vunpack.c.l.bf16 %v33
  %v98 = vunpack.c.l.bf16 %v34
  %v99 = vunpack.c.l.bf16 %v35
  %v100 = vunpack.c.l.bf16 %v36
  %v101 = vunpack.c.l.bf16 %v37
  %v102 = vunpack.c.l.bf16 %v38
  %v103 = vunpack.c.l.bf16 %v39
  %v104 = vunpack.c.l.bf16 %v40
  %v105 = vunpack.c.l.bf16 %v41
  %v106 = vunpack.c.l.bf16 %v42
  %v107 = vunpack.c.l.bf16 %v43
  %v108 = vunpack.c.l.bf16 %v44
  %v109 = vunpack.c.l.bf16 %v45
  %v110 = vunpack.c.l.bf16 %v46
  %v111 = vunpack.c.l.bf16 %v47
  %v112 = vunpack.c.l.bf16 %v48
  %v113 = vunpack.c.l.bf16 %v49
  %v114 = vunpack.c.l.bf16 %v50
  %v115 = vunpack.c.l.bf16 %v51
  %v116 = vunpack.c.l.bf16 %v52
  %v117 = vunpack.c.l.bf16 %v53
  %v118 = vunpack.c.l.bf16 %v54
  %v119 = vunpack.c.l.bf16 %v55
  %v120 = vunpack.c.l.bf16 %v56
  %v121 = vunpack.c.l.bf16 %v57
  %v122 = vunpack.c.l.bf16 %v58
  %v123 = vunpack.c.l.bf16 %v59
  %v124 = vunpack.c.l.bf16 %v60
  %v125 = vunpack.c.l.bf16 %v61
  %v126 = vunpack.c.l.bf16 %v62
  %v127 = vunpack.c.l.bf16 %v63
  %v128 = vunpack.c.l.bf16 %v64
  %v129 = vunpack.c.l.bf16 %v65
  %v130 = vunpack.c.l.bf16 %v66
  %v131 = vunpack.c.l.bf16 %v67
  %v132 = vunpack.c.l.bf16 %v68
  %v133 = vunpack.c.l.bf16 %v69
  %v134 = vunpack.c.l.bf16 %v70
  %v135 = vunpack.c.l.bf16 %v71
  %v136 = vunpack.c.l.bf16 %v72
  %v137 = vunpack.c.l.bf16 %v73
  %v138 = vunpack.c.l.bf16 %v74
  %v139 = vunpack.c.l.bf16 %v75
  %v140 = vunpack.c.l.bf16 %v76
  %v141 = vunpack.c.l.bf16 %v77
  %v142 = vld [vmem:[%s1] sm:$0x1]
  %v144 = vperm.slane %v142, 0
  %v146 = vmul.f32 %v78, %v144
  %v147 = vmul.f32 %v79, %v144
  %v148 = vmul.f32 %v80, %v144
  %v149 = vmul.f32 %v81, %v144
  %v150 = vmul.f32 %v82, %v144
  %v151 = vmul.f32 %v83, %v144
  %v152 = vmul.f32 %v84, %v144
  %v153 = vmul.f32 %v85, %v144
  %v154 = vmul.f32 %v86, %v144
  %v155 = vmul.f32 %v87, %v144
  %v156 = vmul.f32 %v88, %v144
  %v157 = vmul.f32 %v89, %v144
  %v158 = vmul.f32 %v90, %v144
  %v159 = vmul.f32 %v91, %v144
  %v160 = vmul.f32 %v92, %v144
  %v161 = vmul.f32 %v93, %v144
  %v162 = vmul.f32 %v94, %v144
  %v163 = vmul.f32 %v95, %v144
  %v164 = vmul.f32 %v96, %v144
  %v165 = vmul.f32 %v97, %v144
  %v166 = vmul.f32 %v98, %v144
  %v167 = vmul.f32 %v99, %v144
  %v168 = vmul.f32 %v100, %v144
  %v169 = vmul.f32 %v101, %v144
  %v170 = vmul.f32 %v102, %v144
  %v171 = vmul.f32 %v103, %v144
  %v172 = vmul.f32 %v104, %v144
  %v173 = vmul.f32 %v105, %v144
  %v174 = vmul.f32 %v106, %v144
  %v175 = vmul.f32 %v107, %v144
  %v176 = vmul.f32 %v108, %v144
  %v177 = vmul.f32 %v109, %v144
  %v178 = vmul.f32 %v110, %v144
  %v179 = vmul.f32 %v111, %v144
  %v180 = vmul.f32 %v112, %v144
  %v181 = vmul.f32 %v113, %v144
  %v182 = vmul.f32 %v114, %v144
  %v183 = vmul.f32 %v115, %v144
  %v184 = vmul.f32 %v116, %v144
  %v185 = vmul.f32 %v117, %v144
  %v186 = vmul.f32 %v118, %v144
  %v187 = vmul.f32 %v119, %v144
  %v188 = vmul.f32 %v120, %v144
  %v189 = vmul.f32 %v121, %v144
  %v190 = vmul.f32 %v122, %v144
  %v191 = vmul.f32 %v123, %v144
  %v192 = vmul.f32 %v124, %v144
  %v193 = vmul.f32 %v125, %v144
  %v194 = vmul.f32 %v126, %v144
  %v195 = vmul.f32 %v127, %v144
  %v196 = vmul.f32 %v128, %v144
  %v197 = vmul.f32 %v129, %v144
  %v198 = vmul.f32 %v130, %v144
  %v199 = vmul.f32 %v131, %v144
  %v200 = vmul.f32 %v132, %v144
  %v201 = vmul.f32 %v133, %v144
  %v202 = vmul.f32 %v134, %v144
  %v203 = vmul.f32 %v135, %v144
  %v204 = vmul.f32 %v136, %v144
  %v205 = vmul.f32 %v137, %v144
  %v206 = vmul.f32 %v138, %v144
  %v207 = vmul.f32 %v139, %v144
  %v208 = vmul.f32 %v140, %v144
  %v209 = vmul.f32 %v141, %v144
  %v210 = vld [vmem:[%s2] sm:$0x1]
  %v212 = vperm.slane %v210, 0
  %v214 = vadd.f32 %v146, %v212
  %v215 = vadd.f32 %v147, %v212
  %v216 = vadd.f32 %v148, %v212
  %v217 = vadd.f32 %v149, %v212
  %v218 = vadd.f32 %v150, %v212
  %v219 = vadd.f32 %v151, %v212
  %v220 = vadd.f32 %v152, %v212
  %v221 = vadd.f32 %v153, %v212
  %v222 = vadd.f32 %v154, %v212
  %v223 = vadd.f32 %v155, %v212
  %v224 = vadd.f32 %v156, %v212
  %v225 = vadd.f32 %v157, %v212
  %v226 = vadd.f32 %v158, %v212
  %v227 = vadd.f32 %v159, %v212
  %v228 = vadd.f32 %v160, %v212
  %v229 = vadd.f32 %v161, %v212
  %v230 = vadd.f32 %v162, %v212
  %v231 = vadd.f32 %v163, %v212
  %v232 = vadd.f32 %v164, %v212
  %v233 = vadd.f32 %v165, %v212
  %v234 = vadd.f32 %v166, %v212
  %v235 = vadd.f32 %v167, %v212
  %v236 = vadd.f32 %v168, %v212
  %v237 = vadd.f32 %v169, %v212
  %v238 = vadd.f32 %v170, %v212
  %v239 = vadd.f32 %v171, %v212
  %v240 = vadd.f32 %v172, %v212
  %v241 = vadd.f32 %v173, %v212
  %v242 = vadd.f32 %v174, %v212
  %v243 = vadd.f32 %v175, %v212
  %v244 = vadd.f32 %v176, %v212
  %v245 = vadd.f32 %v177, %v212
  %v246 = vadd.f32 %v178, %v212
  %v247 = vadd.f32 %v179, %v212
  %v248 = vadd.f32 %v180, %v212
  %v249 = vadd.f32 %v181, %v212
  %v250 = vadd.f32 %v182, %v212
  %v251 = vadd.f32 %v183, %v212
  %v252 = vadd.f32 %v184, %v212
  %v253 = vadd.f32 %v185, %v212
  %v254 = vadd.f32 %v186, %v212
  %v255 = vadd.f32 %v187, %v212
  %v256 = vadd.f32 %v188, %v212
  %v257 = vadd.f32 %v189, %v212
  %v258 = vadd.f32 %v190, %v212
  %v259 = vadd.f32 %v191, %v212
  %v260 = vadd.f32 %v192, %v212
  %v261 = vadd.f32 %v193, %v212
  %v262 = vadd.f32 %v194, %v212
  %v263 = vadd.f32 %v195, %v212
  %v264 = vadd.f32 %v196, %v212
  %v265 = vadd.f32 %v197, %v212
  %v266 = vadd.f32 %v198, %v212
  %v267 = vadd.f32 %v199, %v212
  %v268 = vadd.f32 %v200, %v212
  %v269 = vadd.f32 %v201, %v212
  %v270 = vadd.f32 %v202, %v212
  %v271 = vadd.f32 %v203, %v212
  %v272 = vadd.f32 %v204, %v212
  %v273 = vadd.f32 %v205, %v212
  %v274 = vadd.f32 %v206, %v212
  %v275 = vadd.f32 %v207, %v212
  %v276 = vadd.f32 %v208, %v212
  %v277 = vadd.f32 %v209, %v212
  %v278 = vmax.f32 %v214, 0.0
  %v279 = vmax.f32 %v215, 0.0
  %v280 = vmax.f32 %v216, 0.0
  %v281 = vmax.f32 %v217, 0.0
  %v282 = vmax.f32 %v218, 0.0
  %v283 = vmax.f32 %v219, 0.0
  %v284 = vmax.f32 %v220, 0.0
  %v285 = vmax.f32 %v221, 0.0
  %v286 = vmax.f32 %v222, 0.0
  %v287 = vmax.f32 %v223, 0.0
  %v288 = vmax.f32 %v224, 0.0
  %v289 = vmax.f32 %v225, 0.0
  %v290 = vmax.f32 %v226, 0.0
  %v291 = vmax.f32 %v227, 0.0
  %v292 = vmax.f32 %v228, 0.0
  %v293 = vmax.f32 %v229, 0.0
  %v294 = vmax.f32 %v230, 0.0
  %v295 = vmax.f32 %v231, 0.0
  %v296 = vmax.f32 %v232, 0.0
  %v297 = vmax.f32 %v233, 0.0
  %v298 = vmax.f32 %v234, 0.0
  %v299 = vmax.f32 %v235, 0.0
  %v300 = vmax.f32 %v236, 0.0
  %v301 = vmax.f32 %v237, 0.0
  %v302 = vmax.f32 %v238, 0.0
  %v303 = vmax.f32 %v239, 0.0
  %v304 = vmax.f32 %v240, 0.0
  %v305 = vmax.f32 %v241, 0.0
  %v306 = vmax.f32 %v242, 0.0
  %v307 = vmax.f32 %v243, 0.0
  %v308 = vmax.f32 %v244, 0.0
  %v309 = vmax.f32 %v245, 0.0
  %v310 = vmax.f32 %v246, 0.0
  %v311 = vmax.f32 %v247, 0.0
  %v312 = vmax.f32 %v248, 0.0
  %v313 = vmax.f32 %v249, 0.0
  %v314 = vmax.f32 %v250, 0.0
  %v315 = vmax.f32 %v251, 0.0
  %v316 = vmax.f32 %v252, 0.0
  %v317 = vmax.f32 %v253, 0.0
  %v318 = vmax.f32 %v254, 0.0
  %v319 = vmax.f32 %v255, 0.0
  %v320 = vmax.f32 %v256, 0.0
  %v321 = vmax.f32 %v257, 0.0
  %v322 = vmax.f32 %v258, 0.0
  %v323 = vmax.f32 %v259, 0.0
  %v324 = vmax.f32 %v260, 0.0
  %v325 = vmax.f32 %v261, 0.0
  %v326 = vmax.f32 %v262, 0.0
  %v327 = vmax.f32 %v263, 0.0
  %v328 = vmax.f32 %v264, 0.0
  %v329 = vmax.f32 %v265, 0.0
  %v330 = vmax.f32 %v266, 0.0
  %v331 = vmax.f32 %v267, 0.0
  %v332 = vmax.f32 %v268, 0.0
  %v333 = vmax.f32 %v269, 0.0
  %v334 = vmax.f32 %v270, 0.0
  %v335 = vmax.f32 %v271, 0.0
  %v336 = vmax.f32 %v272, 0.0
  %v337 = vmax.f32 %v273, 0.0
  %v338 = vmax.f32 %v274, 0.0
  %v339 = vmax.f32 %v275, 0.0
  %v340 = vmax.f32 %v276, 0.0
  %v341 = vmax.f32 %v277, 0.0
  %v342 = vpack.c.bf16 %v278, %v278
  %v343 = vpack.c.bf16 %v279, %v279
  %v344 = vpack.c.bf16 %v280, %v280
  %v345 = vpack.c.bf16 %v281, %v281
  %v346 = vpack.c.bf16 %v282, %v282
  %v347 = vpack.c.bf16 %v283, %v283
  %v348 = vpack.c.bf16 %v284, %v284
  %v349 = vpack.c.bf16 %v285, %v285
  %v350 = vpack.c.bf16 %v286, %v286
  %v351 = vpack.c.bf16 %v287, %v287
  %v352 = vpack.c.bf16 %v288, %v288
  %v353 = vpack.c.bf16 %v289, %v289
  %v354 = vpack.c.bf16 %v290, %v290
  %v355 = vpack.c.bf16 %v291, %v291
  %v356 = vpack.c.bf16 %v292, %v292
  %v357 = vpack.c.bf16 %v293, %v293
  %v358 = vpack.c.bf16 %v294, %v294
  %v359 = vpack.c.bf16 %v295, %v295
  %v360 = vpack.c.bf16 %v296, %v296
  %v361 = vpack.c.bf16 %v297, %v297
  %v362 = vpack.c.bf16 %v298, %v298
  %v363 = vpack.c.bf16 %v299, %v299
  %v364 = vpack.c.bf16 %v300, %v300
  %v365 = vpack.c.bf16 %v301, %v301
  %v366 = vpack.c.bf16 %v302, %v302
  %v367 = vpack.c.bf16 %v303, %v303
  %v368 = vpack.c.bf16 %v304, %v304
  %v369 = vpack.c.bf16 %v305, %v305
  %v370 = vpack.c.bf16 %v306, %v306
  %v371 = vpack.c.bf16 %v307, %v307
  %v372 = vpack.c.bf16 %v308, %v308
  %v373 = vpack.c.bf16 %v309, %v309
  %v374 = vpack.c.bf16 %v310, %v310
  %v375 = vpack.c.bf16 %v311, %v311
  %v376 = vpack.c.bf16 %v312, %v312
  %v377 = vpack.c.bf16 %v313, %v313
  %v378 = vpack.c.bf16 %v314, %v314
  %v379 = vpack.c.bf16 %v315, %v315
  %v380 = vpack.c.bf16 %v316, %v316
  %v381 = vpack.c.bf16 %v317, %v317
  %v382 = vpack.c.bf16 %v318, %v318
  %v383 = vpack.c.bf16 %v319, %v319
  %v384 = vpack.c.bf16 %v320, %v320
  %v385 = vpack.c.bf16 %v321, %v321
  %v386 = vpack.c.bf16 %v322, %v322
  %v387 = vpack.c.bf16 %v323, %v323
  %v388 = vpack.c.bf16 %v324, %v324
  %v389 = vpack.c.bf16 %v325, %v325
  %v390 = vpack.c.bf16 %v326, %v326
  %v391 = vpack.c.bf16 %v327, %v327
  %v392 = vpack.c.bf16 %v328, %v328
  %v393 = vpack.c.bf16 %v329, %v329
  %v394 = vpack.c.bf16 %v330, %v330
  %v395 = vpack.c.bf16 %v331, %v331
  %v396 = vpack.c.bf16 %v332, %v332
  %v397 = vpack.c.bf16 %v333, %v333
  %v398 = vpack.c.bf16 %v334, %v334
  %v399 = vpack.c.bf16 %v335, %v335
  %v400 = vpack.c.bf16 %v336, %v336
  %v401 = vpack.c.bf16 %v337, %v337
  %v402 = vpack.c.bf16 %v338, %v338
  %v403 = vpack.c.bf16 %v339, %v339
  %v404 = vpack.c.bf16 %v340, %v340
  %v405 = vpack.c.bf16 %v341, %v341
  %406 = vst [vmem:[%s3] sm:$0xf] %v342
  %407 = vst [vmem:[%s3 + $0x4] sm:$0xf] %v343
  %408 = vst [vmem:[%s3 + $0x8] sm:$0xf] %v344
  %409 = vst [vmem:[%s3 + $0xc] sm:$0xf] %v345
  %410 = vst [vmem:[%s3 + $0x10] sm:$0xf] %v346
  %411 = vst [vmem:[%s3 + $0x14] sm:$0xf] %v347
  %412 = vst [vmem:[%s3 + $0x18] sm:$0xf] %v348
  %413 = vst [vmem:[%s3 + $0x1c] sm:$0xf] %v349
  %414 = vst [vmem:[%s3 + $0x20] sm:$0xf] %v350
  %415 = vst [vmem:[%s3 + $0x24] sm:$0xf] %v351
  %416 = vst [vmem:[%s3 + $0x28] sm:$0xf] %v352
  %417 = vst [vmem:[%s3 + $0x2c] sm:$0xf] %v353
  %418 = vst [vmem:[%s3 + $0x30] sm:$0xf] %v354
  %419 = vst [vmem:[%s3 + $0x34] sm:$0xf] %v355
  %420 = vst [vmem:[%s3 + $0x38] sm:$0xf] %v356
  %421 = vst [vmem:[%s3 + $0x3c] sm:$0xf] %v357
  %422 = vst [vmem:[%s3 + $0x40] sm:$0xf] %v358
  %423 = vst [vmem:[%s3 + $0x44] sm:$0xf] %v359
  %424 = vst [vmem:[%s3 + $0x48] sm:$0xf] %v360
  %425 = vst [vmem:[%s3 + $0x4c] sm:$0xf] %v361
  %426 = vst [vmem:[%s3 + $0x50] sm:$0xf] %v362
  %427 = vst [vmem:[%s3 + $0x54] sm:$0xf] %v363
  %428 = vst [vmem:[%s3 + $0x58] sm:$0xf] %v364
  %429 = vst [vmem:[%s3 + $0x5c] sm:$0xf] %v365
  %430 = vst [vmem:[%s3 + $0x60] sm:$0xf] %v366
  %431 = vst [vmem:[%s3 + $0x64] sm:$0xf] %v367
  %432 = vst [vmem:[%s3 + $0x68] sm:$0xf] %v368
  %433 = vst [vmem:[%s3 + $0x6c] sm:$0xf] %v369
  %434 = vst [vmem:[%s3 + $0x70] sm:$0xf] %v370
  %435 = vst [vmem:[%s3 + $0x74] sm:$0xf] %v371
  %436 = vst [vmem:[%s3 + $0x78] sm:$0xf] %v372
  %437 = vst [vmem:[%s3 + $0x7c] sm:$0xf] %v373
  %438 = vst [vmem:[%s3 + $0x80] sm:$0xf] %v374
  %439 = vst [vmem:[%s3 + $0x84] sm:$0xf] %v375
  %440 = vst [vmem:[%s3 + $0x88] sm:$0xf] %v376
  %441 = vst [vmem:[%s3 + $0x8c] sm:$0xf] %v377
  %442 = vst [vmem:[%s3 + $0x90] sm:$0xf] %v378
  %443 = vst [vmem:[%s3 + $0x94] sm:$0xf] %v379
  %444 = vst [vmem:[%s3 + $0x98] sm:$0xf] %v380
  %445 = vst [vmem:[%s3 + $0x9c] sm:$0xf] %v381
  %446 = vst [vmem:[%s3 + $0xa0] sm:$0xf] %v382
  %447 = vst [vmem:[%s3 + $0xa4] sm:$0xf] %v383
  %448 = vst [vmem:[%s3 + $0xa8] sm:$0xf] %v384
  %449 = vst [vmem:[%s3 + $0xac] sm:$0xf] %v385
  %450 = vst [vmem:[%s3 + $0xb0] sm:$0xf] %v386
  %451 = vst [vmem:[%s3 + $0xb4] sm:$0xf] %v387
  %452 = vst [vmem:[%s3 + $0xb8] sm:$0xf] %v388
  %453 = vst [vmem:[%s3 + $0xbc] sm:$0xf] %v389
  %454 = vst [vmem:[%s3 + $0xc0] sm:$0xf] %v390
  %455 = vst [vmem:[%s3 + $0xc4] sm:$0xf] %v391
  %456 = vst [vmem:[%s3 + $0xc8] sm:$0xf] %v392
  %457 = vst [vmem:[%s3 + $0xcc] sm:$0xf] %v393
  %458 = vst [vmem:[%s3 + $0xd0] sm:$0xf] %v394
  %459 = vst [vmem:[%s3 + $0xd4] sm:$0xf] %v395
  %460 = vst [vmem:[%s3 + $0xd8] sm:$0xf] %v396
  %461 = vst [vmem:[%s3 + $0xdc] sm:$0xf] %v397
  %462 = vst [vmem:[%s3 + $0xe0] sm:$0xf] %v398
  %463 = vst [vmem:[%s3 + $0xe4] sm:$0xf] %v399
  %464 = vst [vmem:[%s3 + $0xe8] sm:$0xf] %v400
  %465 = vst [vmem:[%s3 + $0xec] sm:$0xf] %v401
  %466 = vst [vmem:[%s3 + $0xf0] sm:$0xf] %v402
  %467 = vst [vmem:[%s3 + $0xf4] sm:$0xf] %v403
  %468 = vst [vmem:[%s3 + $0xf8] sm:$0xf] %v404
  %469 = vst [vmem:[%s3 + $0xfc] sm:$0xf] %v405
  // Predicated region
  $region14: #{multi_generator_forward.20} parent=0 // pred_check
    _
  $region15: #{multi_generator_forward.20} parent=0 // pred_check_branch
    %471 = sbr.rel (0) target = $region17
  $region16: #{multi_generator_forward.20} parent=0 // pred_region
    _
  $region17: #{multi_generator_forward.20} parent=0 // pred_fallthru
    _
  // Predicated region
  $region18: #{multi_generator_forward.20} parent=0 // pred_check
    _
  $region19: #{multi_generator_forward.20} parent=0 // pred_check_branch
    %473 = sbr.rel (0) target = $region21
  $region20: #{multi_generator_forward.20} parent=0 // pred_region
    _
  $region21: #{multi_generator_forward.20} parent=0 // pred_fallthru
    _

// kernel: multi_generator_forward.19
$region0: #{multi_generator_forward.19}
  #allocation0 [shape = 'u32[]', space=smem, size = 0x4, offset = 0x4, fixed_abs, tag = 'smem constant byte address 0x4 - core index']
  #allocation1 [shape = 'u32[72,128]{1,0:T(1,128)}', space=vmem, size = 0x9000, scoped, tag = 'internal scratch']
  %s0 = inlined_call_operand.vmem [shape: bf16[512,256], index: 0, kind: input, shape index: {}]
  %s1 = inlined_call_operand.vmem [shape: bf16[256,128], index: 1, kind: input, shape index: {}]
  %s2 = inlined_call_operand.vmem [shape: bf16[512,128], index: 2, kind: output, shape index: {0}]
  %s3 = inlined_call_operand.vmem [shape: f32[8,128], index: 3, kind: output, shape index: {1}]
  %s4 = inlined_call_operand.vmem [shape: f32[8,128], index: 4, kind: output, shape index: {2}]
  %5 = xla_tuple %s2, %s3, %s4
  %s6 = sld [smem:[#allocation0]]
  $region34: #{multi_generator_forward.19} parent=0
    _
  %s8 = ssub.s32 1, %s6
  %s9 = scalar_select 0, %s8, %s6
  // Predicated region
  $region2: #{multi_generator_forward.19} parent=0 // pred_check
    _
  $region3: #{multi_generator_forward.19} parent=0 // pred_check_branch
    %11 = sbr.rel (0) target = $region5
  $region4: #{multi_generator_forward.19} parent=0 // pred_region
    _
  $region5: #{multi_generator_forward.19} parent=0 // pred_fallthru
    _
  // Predicated region
  $region6: #{multi_generator_forward.19} parent=0 // pred_check
    _
  $region7: #{multi_generator_forward.19} parent=0 // pred_check_branch
    %13 = sbr.rel (0) target = $region9
  $region8: #{multi_generator_forward.19} parent=0 // pred_region
    _
  $region9: #{multi_generator_forward.19} parent=0 // pred_fallthru
    _
  %v14 = vld [vmem:[%s0] sm:$0xff]
  %v15 = vld [vmem:[%s0 + $0x8] sm:$0xff]
  %v16 = vld [vmem:[%s0 + $0x10] sm:$0xff]
  %v17 = vld [vmem:[%s0 + $0x18] sm:$0xff]
  %v18 = vld [vmem:[%s0 + $0x20] sm:$0xff]
  %v19 = vld [vmem:[%s0 + $0x28] sm:$0xff]
  %v20 = vld [vmem:[%s0 + $0x30] sm:$0xff]
  %v21 = vld [vmem:[%s0 + $0x38] sm:$0xff]
  %v22 = vld [vmem:[%s0 + $0x40] sm:$0xff]
  %v23 = vld [vmem:[%s0 + $0x48] sm:$0xff]
  %v24 = vld [vmem:[%s0 + $0x50] sm:$0xff]
  %v25 = vld [vmem:[%s0 + $0x58] sm:$0xff]
  %v26 = vld [vmem:[%s0 + $0x60] sm:$0xff]
  %v27 = vld [vmem:[%s0 + $0x68] sm:$0xff]
  %v28 = vld [vmem:[%s0 + $0x70] sm:$0xff]
  %v29 = vld [vmem:[%s0 + $0x78] sm:$0xff]
  %v30 = vld [vmem:[%s0 + $0x80] sm:$0xff]
  %v31 = vld [vmem:[%s0 + $0x88] sm:$0xff]
  %v32 = vld [vmem:[%s0 + $0x90] sm:$0xff]
  %v33 = vld [vmem:[%s0 + $0x98] sm:$0xff]
  %v34 = vld [vmem:[%s0 + $0xa0] sm:$0xff]
  %v35 = vld [vmem:[%s0 + $0xa8] sm:$0xff]
  %v36 = vld [vmem:[%s0 + $0xb0] sm:$0xff]
  %v37 = vld [vmem:[%s0 + $0xb8] sm:$0xff]
  %v38 = vld [vmem:[%s0 + $0xc0] sm:$0xff]
  %v39 = vld [vmem:[%s0 + $0xc8] sm:$0xff]
  %v40 = vld [vmem:[%s0 + $0xd0] sm:$0xff]
  %v41 = vld [vmem:[%s0 + $0xd8] sm:$0xff]
  %v42 = vld [vmem:[%s0 + $0xe0] sm:$0xff]
  %v43 = vld [vmem:[%s0 + $0xe8] sm:$0xff]
  %v44 = vld [vmem:[%s0 + $0xf0] sm:$0xff]
  %v45 = vld [vmem:[%s0 + $0xf8] sm:$0xff]
  %v46 = vld [vmem:[%s0 + $0x100] sm:$0xff]
  %v47 = vld [vmem:[%s0 + $0x108] sm:$0xff]
  %v48 = vld [vmem:[%s0 + $0x110] sm:$0xff]
  %v49 = vld [vmem:[%s0 + $0x118] sm:$0xff]
  %v50 = vld [vmem:[%s0 + $0x120] sm:$0xff]
  %v51 = vld [vmem:[%s0 + $0x128] sm:$0xff]
  %v52 = vld [vmem:[%s0 + $0x130] sm:$0xff]
  %v53 = vld [vmem:[%s0 + $0x138] sm:$0xff]
  %v54 = vld [vmem:[%s0 + $0x140] sm:$0xff]
  %v55 = vld [vmem:[%s0 + $0x148] sm:$0xff]
  %v56 = vld [vmem:[%s0 + $0x150] sm:$0xff]
  %v57 = vld [vmem:[%s0 + $0x158] sm:$0xff]
  %v58 = vld [vmem:[%s0 + $0x160] sm:$0xff]
  %v59 = vld [vmem:[%s0 + $0x168] sm:$0xff]
  %v60 = vld [vmem:[%s0 + $0x170] sm:$0xff]
  %v61 = vld [vmem:[%s0 + $0x178] sm:$0xff]
  %v62 = vld [vmem:[%s0 + $0x180] sm:$0xff]
  %v63 = vld [vmem:[%s0 + $0x188] sm:$0xff]
  %v64 = vld [vmem:[%s0 + $0x190] sm:$0xff]
  %v65 = vld [vmem:[%s0 + $0x198] sm:$0xff]
  %v66 = vld [vmem:[%s0 + $0x1a0] sm:$0xff]
  %v67 = vld [vmem:[%s0 + $0x1a8] sm:$0xff]
  %v68 = vld [vmem:[%s0 + $0x1b0] sm:$0xff]
  %v69 = vld [vmem:[%s0 + $0x1b8] sm:$0xff]
  %v70 = vld [vmem:[%s0 + $0x1c0] sm:$0xff]
  %v71 = vld [vmem:[%s0 + $0x1c8] sm:$0xff]
  %v72 = vld [vmem:[%s0 + $0x1d0] sm:$0xff]
  %v73 = vld [vmem:[%s0 + $0x1d8] sm:$0xff]
  %v74 = vld [vmem:[%s0 + $0x1e0] sm:$0xff]
  %v75 = vld [vmem:[%s0 + $0x1e8] sm:$0xff]
  %v76 = vld [vmem:[%s0 + $0x1f0] sm:$0xff]
  %v77 = vld [vmem:[%s0 + $0x1f8] sm:$0xff]
  %v78 = vld [vmem:[%s1] sm:$0xf]
  %v79 = vld [vmem:[%s1 + $0x4] sm:$0xf]
  %v80 = vld [vmem:[%s1 + $0x8] sm:$0xf]
  %v81 = vld [vmem:[%s1 + $0xc] sm:$0xf]
  %v82 = vld [vmem:[%s1 + $0x10] sm:$0xf]
  %v83 = vld [vmem:[%s1 + $0x14] sm:$0xf]
  %v84 = vld [vmem:[%s1 + $0x18] sm:$0xf]
  %v85 = vld [vmem:[%s1 + $0x1c] sm:$0xf]
  %v86 = vld [vmem:[%s1 + $0x20] sm:$0xf]
  %v87 = vld [vmem:[%s1 + $0x24] sm:$0xf]
  %v88 = vld [vmem:[%s1 + $0x28] sm:$0xf]
  %v89 = vld [vmem:[%s1 + $0x2c] sm:$0xf]
  %v90 = vld [vmem:[%s1 + $0x30] sm:$0xf]
  %v91 = vld [vmem:[%s1 + $0x34] sm:$0xf]
  %v92 = vld [vmem:[%s1 + $0x38] sm:$0xf]
  %v93 = vld [vmem:[%s1 + $0x3c] sm:$0xf]
  %v94 = vld [vmem:[%s1 + $0x40] sm:$0xf]
  %v95 = vld [vmem:[%s1 + $0x44] sm:$0xf]
  %v96 = vld [vmem:[%s1 + $0x48] sm:$0xf]
  %v97 = vld [vmem:[%s1 + $0x4c] sm:$0xf]
  %v98 = vld [vmem:[%s1 + $0x50] sm:$0xf]
  %v99 = vld [vmem:[%s1 + $0x54] sm:$0xf]
  %v100 = vld [vmem:[%s1 + $0x58] sm:$0xf]
  %v101 = vld [vmem:[%s1 + $0x5c] sm:$0xf]
  %v102 = vld [vmem:[%s1 + $0x60] sm:$0xf]
  %v103 = vld [vmem:[%s1 + $0x64] sm:$0xf]
  %v104 = vld [vmem:[%s1 + $0x68] sm:$0xf]
  %v105 = vld [vmem:[%s1 + $0x6c] sm:$0xf]
  %v106 = vld [vmem:[%s1 + $0x70] sm:$0xf]
  %v107 = vld [vmem:[%s1 + $0x74] sm:$0xf]
  %v108 = vld [vmem:[%s1 + $0x78] sm:$0xf]
  %v109 = vld [vmem:[%s1 + $0x7c] sm:$0xf]
  %v174 = vunpack.c.l.b16 %v14
  %v175 = vunpack.c.h.b16 %v14
  %v176 = vunpack.c.l.b16 %v15
  %v177 = vunpack.c.h.b16 %v15
  %v178 = vunpack.c.l.b16 %v16
  %v179 = vunpack.c.h.b16 %v16
  %v180 = vunpack.c.l.b16 %v17
  %v181 = vunpack.c.h.b16 %v17
  %v182 = vunpack.c.l.b16 %v18
  %v183 = vunpack.c.h.b16 %v18
  %v184 = vunpack.c.l.b16 %v19
  %v185 = vunpack.c.h.b16 %v19
  %v186 = vunpack.c.l.b16 %v20
  %v187 = vunpack.c.h.b16 %v20
  %v188 = vunpack.c.l.b16 %v21
  %v189 = vunpack.c.h.b16 %v21
  %v190 = vunpack.c.l.b16 %v22
  %v191 = vunpack.c.h.b16 %v22
  %v192 = vunpack.c.l.b16 %v23
  %v193 = vunpack.c.h.b16 %v23
  %v194 = vunpack.c.l.b16 %v24
  %v195 = vunpack.c.h.b16 %v24
  %v196 = vunpack.c.l.b16 %v25
  %v197 = vunpack.c.h.b16 %v25
  %v198 = vunpack.c.l.b16 %v26
  %v199 = vunpack.c.h.b16 %v26
  %v200 = vunpack.c.l.b16 %v27
  %v201 = vunpack.c.h.b16 %v27
  %v202 = vunpack.c.l.b16 %v28
  %v203 = vunpack.c.h.b16 %v28
  %v204 = vunpack.c.l.b16 %v29
  %v205 = vunpack.c.h.b16 %v29
  %v206 = vunpack.c.l.b16 %v30
  %v207 = vunpack.c.h.b16 %v30
  %v208 = vunpack.c.l.b16 %v31
  %v209 = vunpack.c.h.b16 %v31
  %v210 = vunpack.c.l.b16 %v32
  %v211 = vunpack.c.h.b16 %v32
  %v212 = vunpack.c.l.b16 %v33
  %v213 = vunpack.c.h.b16 %v33
  %v214 = vunpack.c.l.b16 %v34
  %v215 = vunpack.c.h.b16 %v34
  %v216 = vunpack.c.l.b16 %v35
  %v217 = vunpack.c.h.b16 %v35
  %v218 = vunpack.c.l.b16 %v36
  %v219 = vunpack.c.h.b16 %v36
  %v220 = vunpack.c.l.b16 %v37
  %v221 = vunpack.c.h.b16 %v37
  %v222 = vunpack.c.l.b16 %v38
  %v223 = vunpack.c.h.b16 %v38
  %v224 = vunpack.c.l.b16 %v39
  %v225 = vunpack.c.h.b16 %v39
  %v226 = vunpack.c.l.b16 %v40
  %v227 = vunpack.c.h.b16 %v40
  %v228 = vunpack.c.l.b16 %v41
  %v229 = vunpack.c.h.b16 %v41
  %v230 = vunpack.c.l.b16 %v42
  %v231 = vunpack.c.h.b16 %v42
  %v232 = vunpack.c.l.b16 %v43
  %v233 = vunpack.c.h.b16 %v43
  %v234 = vunpack.c.l.b16 %v44
  %v235 = vunpack.c.h.b16 %v44
  %v236 = vunpack.c.l.b16 %v45
  %v237 = vunpack.c.h.b16 %v45
  %v238 = vunpack.c.l.b16 %v46
  %v239 = vunpack.c.h.b16 %v46
  %v240 = vunpack.c.l.b16 %v47
  %v241 = vunpack.c.h.b16 %v47
  %v242 = vunpack.c.l.b16 %v48
  %v243 = vunpack.c.h.b16 %v48
  %v244 = vunpack.c.l.b16 %v49
  %v245 = vunpack.c.h.b16 %v49
  %v246 = vunpack.c.l.b16 %v50
  %v247 = vunpack.c.h.b16 %v50
  %v248 = vunpack.c.l.b16 %v51
  %v249 = vunpack.c.h.b16 %v51
  %v250 = vunpack.c.l.b16 %v52
  %v251 = vunpack.c.h.b16 %v52
  %v252 = vunpack.c.l.b16 %v53
  %v253 = vunpack.c.h.b16 %v53
  %v254 = vunpack.c.l.b16 %v54
  %v255 = vunpack.c.h.b16 %v54
  %v256 = vunpack.c.l.b16 %v55
  %v257 = vunpack.c.h.b16 %v55
  %v258 = vunpack.c.l.b16 %v56
  %v259 = vunpack.c.h.b16 %v56
  %v260 = vunpack.c.l.b16 %v57
  %v261 = vunpack.c.h.b16 %v57
  %v262 = vunpack.c.l.b16 %v58
  %v263 = vunpack.c.h.b16 %v58
  %v264 = vunpack.c.l.b16 %v59
  %v265 = vunpack.c.h.b16 %v59
  %v266 = vunpack.c.l.b16 %v60
  %v267 = vunpack.c.h.b16 %v60
  %v268 = vunpack.c.l.b16 %v61
  %v269 = vunpack.c.h.b16 %v61
  %v270 = vunpack.c.l.b16 %v62
  %v271 = vunpack.c.h.b16 %v62
  %v272 = vunpack.c.l.b16 %v63
  %v273 = vunpack.c.h.b16 %v63
  %v274 = vunpack.c.l.b16 %v64
  %v275 = vunpack.c.h.b16 %v64
  %v276 = vunpack.c.l.b16 %v65
  %v277 = vunpack.c.h.b16 %v65
  %v278 = vunpack.c.l.b16 %v66
  %v279 = vunpack.c.h.b16 %v66
  %v280 = vunpack.c.l.b16 %v67
  %v281 = vunpack.c.h.b16 %v67
  %v282 = vunpack.c.l.b16 %v68
  %v283 = vunpack.c.h.b16 %v68
  %v284 = vunpack.c.l.b16 %v69
  %v285 = vunpack.c.h.b16 %v69
  %v286 = vunpack.c.l.b16 %v70
  %v287 = vunpack.c.h.b16 %v70
  %v288 = vunpack.c.l.b16 %v71
  %v289 = vunpack.c.h.b16 %v71
  %v290 = vunpack.c.l.b16 %v72
  %v291 = vunpack.c.h.b16 %v72
  %v292 = vunpack.c.l.b16 %v73
  %v293 = vunpack.c.h.b16 %v73
  %v294 = vunpack.c.l.b16 %v74
  %v295 = vunpack.c.h.b16 %v74
  %v296 = vunpack.c.l.b16 %v75
  %v297 = vunpack.c.h.b16 %v75
  %v298 = vunpack.c.l.b16 %v76
  %v299 = vunpack.c.h.b16 %v76
  %v300 = vunpack.c.l.b16 %v77
  %v301 = vunpack.c.h.b16 %v77
  %v302 = vpack.c.b16 %v176, %v174
  %v303 = vpack.c.b16 %v177, %v175
  %v304 = vpack.c.b16 %v180, %v178
  %v305 = vpack.c.b16 %v181, %v179
  %v306 = vpack.c.b16 %v184, %v182
  %v307 = vpack.c.b16 %v185, %v183
  %v308 = vpack.c.b16 %v188, %v186
  %v309 = vpack.c.b16 %v189, %v187
  %v310 = vpack.c.b16 %v192, %v190
  %v311 = vpack.c.b16 %v193, %v191
  %v312 = vpack.c.b16 %v196, %v194
  %v313 = vpack.c.b16 %v197, %v195
  %v314 = vpack.c.b16 %v200, %v198
  %v315 = vpack.c.b16 %v201, %v199
  %v316 = vpack.c.b16 %v204, %v202
  %v317 = vpack.c.b16 %v205, %v203
  %v318 = vpack.c.b16 %v208, %v206
  %v319 = vpack.c.b16 %v209, %v207
  %v320 = vpack.c.b16 %v212, %v210
  %v321 = vpack.c.b16 %v213, %v211
  %v322 = vpack.c.b16 %v216, %v214
  %v323 = vpack.c.b16 %v217, %v215
  %v324 = vpack.c.b16 %v220, %v218
  %v325 = vpack.c.b16 %v221, %v219
  %v326 = vpack.c.b16 %v224, %v222
  %v327 = vpack.c.b16 %v225, %v223
  %v328 = vpack.c.b16 %v228, %v226
  %v329 = vpack.c.b16 %v229, %v227
  %v330 = vpack.c.b16 %v232, %v230
  %v331 = vpack.c.b16 %v233, %v231
  %v332 = vpack.c.b16 %v236, %v234
  %v333 = vpack.c.b16 %v237, %v235
  %v334 = vpack.c.b16 %v240, %v238
  %v335 = vpack.c.b16 %v241, %v239
  %v336 = vpack.c.b16 %v244, %v242
  %v337 = vpack.c.b16 %v245, %v243
  %v338 = vpack.c.b16 %v248, %v246
  %v339 = vpack.c.b16 %v249, %v247
  %v340 = vpack.c.b16 %v252, %v250
  %v341 = vpack.c.b16 %v253, %v251
  %v342 = vpack.c.b16 %v256, %v254
  %v343 = vpack.c.b16 %v257, %v255
  %v344 = vpack.c.b16 %v260, %v258
  %v345 = vpack.c.b16 %v261, %v259
  %v346 = vpack.c.b16 %v264, %v262
  %v347 = vpack.c.b16 %v265, %v263
  %v348 = vpack.c.b16 %v268, %v266
  %v349 = vpack.c.b16 %v269, %v267
  %v350 = vpack.c.b16 %v272, %v270
  %v351 = vpack.c.b16 %v273, %v271
  %v352 = vpack.c.b16 %v276, %v274
  %v353 = vpack.c.b16 %v277, %v275
  %v354 = vpack.c.b16 %v280, %v278
  %v355 = vpack.c.b16 %v281, %v279
  %v356 = vpack.c.b16 %v284, %v282
  %v357 = vpack.c.b16 %v285, %v283
  %v358 = vpack.c.b16 %v288, %v286
  %v359 = vpack.c.b16 %v289, %v287
  %v360 = vpack.c.b16 %v292, %v290
  %v361 = vpack.c.b16 %v293, %v291
  %v362 = vpack.c.b16 %v296, %v294
  %v363 = vpack.c.b16 %v297, %v295
  %v364 = vpack.c.b16 %v300, %v298
  %v365 = vpack.c.b16 %v301, %v299
  %v462 = vunpack.c.l.b16 %v78
  %v463 = vunpack.c.l.b16 %v79
  %v464 = vunpack.c.l.b16 %v80
  %v465 = vunpack.c.l.b16 %v81
  %v466 = vunpack.c.l.b16 %v82
  %v467 = vunpack.c.l.b16 %v83
  %v468 = vunpack.c.l.b16 %v84
  %v469 = vunpack.c.l.b16 %v85
  %v470 = vunpack.c.l.b16 %v86
  %v471 = vunpack.c.l.b16 %v87
  %v472 = vunpack.c.l.b16 %v88
  %v473 = vunpack.c.l.b16 %v89
  %v474 = vunpack.c.l.b16 %v90
  %v475 = vunpack.c.l.b16 %v91
  %v476 = vunpack.c.l.b16 %v92
  %v477 = vunpack.c.l.b16 %v93
  %v478 = vunpack.c.l.b16 %v94
  %v479 = vunpack.c.l.b16 %v95
  %v480 = vunpack.c.l.b16 %v96
  %v481 = vunpack.c.l.b16 %v97
  %v482 = vunpack.c.l.b16 %v98
  %v483 = vunpack.c.l.b16 %v99
  %v484 = vunpack.c.l.b16 %v100
  %v485 = vunpack.c.l.b16 %v101
  %v486 = vunpack.c.l.b16 %v102
  %v487 = vunpack.c.l.b16 %v103
  %v488 = vunpack.c.l.b16 %v104
  %v489 = vunpack.c.l.b16 %v105
  %v490 = vunpack.c.l.b16 %v106
  %v491 = vunpack.c.l.b16 %v107
  %v492 = vunpack.c.l.b16 %v108
  %v493 = vunpack.c.l.b16 %v109
  %v494 = vpack.c.b16 %v463, %v462
  %v495 = vpack.c.b16 %v465, %v464
  %v496 = vpack.c.b16 %v467, %v466
  %v497 = vpack.c.b16 %v469, %v468
  %v498 = vpack.c.b16 %v471, %v470
  %v499 = vpack.c.b16 %v473, %v472
  %v500 = vpack.c.b16 %v475, %v474
  %v501 = vpack.c.b16 %v477, %v476
  %v502 = vpack.c.b16 %v479, %v478
  %v503 = vpack.c.b16 %v481, %v480
  %v504 = vpack.c.b16 %v483, %v482
  %v505 = vpack.c.b16 %v485, %v484
  %v506 = vpack.c.b16 %v487, %v486
  %v507 = vpack.c.b16 %v489, %v488
  %v508 = vpack.c.b16 %v491, %v490
  %v509 = vpack.c.b16 %v493, %v492
  %526 = vmatpush.bf16.msra.mxu0 %v501
  %527 = vmatpush.bf16.msra.mxu0 %v500
  %528 = vmatpush.bf16.msra.mxu0 %v499
  %529 = vmatpush.bf16.msra.mxu0 %v498
  %530 = vmatpush.bf16.msra.mxu0 %v497
  %531 = vmatpush.bf16.msra.mxu0 %v496
  %532 = vmatpush.bf16.msra.mxu0 %v495
  %533 = vmatpush.bf16.msra.mxu0 %v494
  %534 = vmatmul.bf16.gmra.mxu0 %v302
  %v535 = vpop.f32.mrf.mxu0
  %v536 = vadd.f32 0.0, %v535
  %v537 = vpop.f32.mrf.mxu0
  %v538 = vadd.f32 0.0, %v537
  %539 = vmatmul.bf16.gmra.mxu0 %v304
  %v540 = vpop.f32.mrf.mxu0
  %v541 = vadd.f32 0.0, %v540
  %v542 = vpop.f32.mrf.mxu0
  %v543 = vadd.f32 0.0, %v542
  %544 = vmatmul.bf16.gmra.mxu0 %v306
  %v545 = vpop.f32.mrf.mxu0
  %v546 = vadd.f32 0.0, %v545
  %v547 = vpop.f32.mrf.mxu0
  %v548 = vadd.f32 0.0, %v547
  %549 = vmatmul.bf16.gmra.mxu0 %v308
  %v550 = vpop.f32.mrf.mxu0
  %v551 = vadd.f32 0.0, %v550
  %v552 = vpop.f32.mrf.mxu0
  %v553 = vadd.f32 0.0, %v552
  %554 = vmatmul.bf16.gmra.mxu0 %v310
  %v555 = vpop.f32.mrf.mxu0
  %v556 = vadd.f32 0.0, %v555
  %v557 = vpop.f32.mrf.mxu0
  %v558 = vadd.f32 0.0, %v557
  %559 = vmatmul.bf16.gmra.mxu0 %v312
  %v560 = vpop.f32.mrf.mxu0
  %v561 = vadd.f32 0.0, %v560
  %v562 = vpop.f32.mrf.mxu0
  %v563 = vadd.f32 0.0, %v562
  %564 = vmatmul.bf16.gmra.mxu0 %v314
  %v565 = vpop.f32.mrf.mxu0
  %v566 = vadd.f32 0.0, %v565
  %v567 = vpop.f32.mrf.mxu0
  %v568 = vadd.f32 0.0, %v567
  %569 = vmatmul.bf16.gmra.mxu0 %v316
  %v570 = vpop.f32.mrf.mxu0
  %v571 = vadd.f32 0.0, %v570
  %v572 = vpop.f32.mrf.mxu0
  %v573 = vadd.f32 0.0, %v572
  %574 = vmatmul.bf16.gmra.mxu0 %v318
  %v575 = vpop.f32.mrf.mxu0
  %v576 = vadd.f32 0.0, %v575
  %v577 = vpop.f32.mrf.mxu0
  %v578 = vadd.f32 0.0, %v577
  %579 = vmatmul.bf16.gmra.mxu0 %v320
  %v580 = vpop.f32.mrf.mxu0
  %v581 = vadd.f32 0.0, %v580
  %v582 = vpop.f32.mrf.mxu0
  %v583 = vadd.f32 0.0, %v582
  %584 = vmatmul.bf16.gmra.mxu0 %v322
  %v585 = vpop.f32.mrf.mxu0
  %v586 = vadd.f32 0.0, %v585
  %v587 = vpop.f32.mrf.mxu0
  %v588 = vadd.f32 0.0, %v587
  %589 = vmatmul.bf16.gmra.mxu0 %v324
  %v590 = vpop.f32.mrf.mxu0
  %v591 = vadd.f32 0.0, %v590
  %v592 = vpop.f32.mrf.mxu0
  %v593 = vadd.f32 0.0, %v592
  %594 = vmatmul.bf16.gmra.mxu0 %v326
  %v595 = vpop.f32.mrf.mxu0
  %v596 = vadd.f32 0.0, %v595
  %v597 = vpop.f32.mrf.mxu0
  %v598 = vadd.f32 0.0, %v597
  %599 = vmatmul.bf16.gmra.mxu0 %v328
  %v600 = vpop.f32.mrf.mxu0
  %v601 = vadd.f32 0.0, %v600
  %v602 = vpop.f32.mrf.mxu0
  %v603 = vadd.f32 0.0, %v602
  %604 = vmatmul.bf16.gmra.mxu0 %v330
  %v605 = vpop.f32.mrf.mxu0
  %v606 = vadd.f32 0.0, %v605
  %v607 = vpop.f32.mrf.mxu0
  %v608 = vadd.f32 0.0, %v607
  %609 = vmatmul.bf16.gmra.mxu0 %v332
  %v610 = vpop.f32.mrf.mxu0
  %v611 = vadd.f32 0.0, %v610
  %v612 = vpop.f32.mrf.mxu0
  %v613 = vadd.f32 0.0, %v612
  %614 = vmatmul.bf16.gmra.mxu0 %v334
  %v615 = vpop.f32.mrf.mxu0
  %v616 = vadd.f32 0.0, %v615
  %v617 = vpop.f32.mrf.mxu0
  %v618 = vadd.f32 0.0, %v617
  %619 = vmatmul.bf16.gmra.mxu0 %v336
  %v620 = vpop.f32.mrf.mxu0
  %v621 = vadd.f32 0.0, %v620
  %v622 = vpop.f32.mrf.mxu0
  %v623 = vadd.f32 0.0, %v622
  %624 = vmatmul.bf16.gmra.mxu0 %v338
  %v625 = vpop.f32.mrf.mxu0
  %v626 = vadd.f32 0.0, %v625
  %v627 = vpop.f32.mrf.mxu0
  %v628 = vadd.f32 0.0, %v627
  %629 = vmatmul.bf16.gmra.mxu0 %v340
  %v630 = vpop.f32.mrf.mxu0
  %v631 = vadd.f32 0.0, %v630
  %v632 = vpop.f32.mrf.mxu0
  %v633 = vadd.f32 0.0, %v632
  %634 = vmatmul.bf16.gmra.mxu0 %v342
  %v635 = vpop.f32.mrf.mxu0
  %v636 = vadd.f32 0.0, %v635
  %v637 = vpop.f32.mrf.mxu0
  %v638 = vadd.f32 0.0, %v637
  %639 = vmatmul.bf16.gmra.mxu0 %v344
  %v640 = vpop.f32.mrf.mxu0
  %v641 = vadd.f32 0.0, %v640
  %v642 = vpop.f32.mrf.mxu0
  %v643 = vadd.f32 0.0, %v642
  %644 = vmatmul.bf16.gmra.mxu0 %v346
  %v645 = vpop.f32.mrf.mxu0
  %v646 = vadd.f32 0.0, %v645
  %v647 = vpop.f32.mrf.mxu0
  %v648 = vadd.f32 0.0, %v647
  %649 = vmatmul.bf16.gmra.mxu0 %v348
  %v650 = vpop.f32.mrf.mxu0
  %v651 = vadd.f32 0.0, %v650
  %v652 = vpop.f32.mrf.mxu0
  %v653 = vadd.f32 0.0, %v652
  %654 = vmatmul.bf16.gmra.mxu0 %v350
  %v655 = vpop.f32.mrf.mxu0
  %v656 = vadd.f32 0.0, %v655
  %v657 = vpop.f32.mrf.mxu0
  %v658 = vadd.f32 0.0, %v657
  %659 = vmatmul.bf16.gmra.mxu0 %v352
  %v660 = vpop.f32.mrf.mxu0
  %v661 = vadd.f32 0.0, %v660
  %v662 = vpop.f32.mrf.mxu0
  %v663 = vadd.f32 0.0, %v662
  %664 = vmatmul.bf16.gmra.mxu0 %v354
  %v665 = vpop.f32.mrf.mxu0
  %v666 = vadd.f32 0.0, %v665
  %v667 = vpop.f32.mrf.mxu0
  %v668 = vadd.f32 0.0, %v667
  %669 = vmatmul.bf16.gmra.mxu0 %v356
  %v670 = vpop.f32.mrf.mxu0
  %v671 = vadd.f32 0.0, %v670
  %v672 = vpop.f32.mrf.mxu0
  %v673 = vadd.f32 0.0, %v672
  %674 = vmatmul.bf16.gmra.mxu0 %v358
  %v675 = vpop.f32.mrf.mxu0
  %v676 = vadd.f32 0.0, %v675
  %v677 = vpop.f32.mrf.mxu0
  %v678 = vadd.f32 0.0, %v677
  %679 = vmatmul.bf16.gmra.mxu0 %v360
  %v680 = vpop.f32.mrf.mxu0
  %v681 = vadd.f32 0.0, %v680
  %v682 = vpop.f32.mrf.mxu0
  %v683 = vadd.f32 0.0, %v682
  %684 = vmatmul.bf16.gmra.mxu0 %v362
  %v685 = vpop.f32.mrf.mxu0
  %v686 = vadd.f32 0.0, %v685
  %v687 = vpop.f32.mrf.mxu0
  %v688 = vadd.f32 0.0, %v687
  %689 = vmatmul.bf16.gmra.mxu0 %v364
  %v690 = vpop.f32.mrf.mxu0
  %v691 = vadd.f32 0.0, %v690
  %v692 = vpop.f32.mrf.mxu0
  %v693 = vadd.f32 0.0, %v692
  %694 = vdwg.mxu0
  %695 = vmatpush.bf16.msra.mxu0 %v509
  %696 = vmatpush.bf16.msra.mxu0 %v508
  %697 = vmatpush.bf16.msra.mxu0 %v507
  %698 = vmatpush.bf16.msra.mxu0 %v506
  %699 = vmatpush.bf16.msra.mxu0 %v505
  %700 = vmatpush.bf16.msra.mxu0 %v504
  %701 = vmatpush.bf16.msra.mxu0 %v503
  %702 = vmatpush.bf16.msra.mxu0 %v502
  %703 = vmatmul.bf16.gmra.mxu0 %v303
  %v704 = vpop.f32.mrf.mxu0
  %v705 = vadd.f32 %v536, %v704
  %v706 = vpop.f32.mrf.mxu0
  %v707 = vadd.f32 %v538, %v706
  %708 = vmatmul.bf16.gmra.mxu0 %v305
  %v709 = vpop.f32.mrf.mxu0
  %v710 = vadd.f32 %v541, %v709
  %v711 = vpop.f32.mrf.mxu0
  %v712 = vadd.f32 %v543, %v711
  %713 = vmatmul.bf16.gmra.mxu0 %v307
  %v714 = vpop.f32.mrf.mxu0
  %v715 = vadd.f32 %v546, %v714
  %v716 = vpop.f32.mrf.mxu0
  %v717 = vadd.f32 %v548, %v716
  %718 = vmatmul.bf16.gmra.mxu0 %v309
  %v719 = vpop.f32.mrf.mxu0
  %v720 = vadd.f32 %v551, %v719
  %v721 = vpop.f32.mrf.mxu0
  %v722 = vadd.f32 %v553, %v721
  %723 = vmatmul.bf16.gmra.mxu0 %v311
  %v724 = vpop.f32.mrf.mxu0
  %v725 = vadd.f32 %v556, %v724
  %v726 = vpop.f32.mrf.mxu0
  %v727 = vadd.f32 %v558, %v726
  %728 = vmatmul.bf16.gmra.mxu0 %v313
  %v729 = vpop.f32.mrf.mxu0
  %v730 = vadd.f32 %v561, %v729
  %v731 = vpop.f32.mrf.mxu0
  %v732 = vadd.f32 %v563, %v731
  %733 = vmatmul.bf16.gmra.mxu0 %v315
  %v734 = vpop.f32.mrf.mxu0
  %v735 = vadd.f32 %v566, %v734
  %v736 = vpop.f32.mrf.mxu0
  %v737 = vadd.f32 %v568, %v736
  %738 = vmatmul.bf16.gmra.mxu0 %v317
  %v739 = vpop.f32.mrf.mxu0
  %v740 = vadd.f32 %v571, %v739
  %v741 = vpop.f32.mrf.mxu0
  %v742 = vadd.f32 %v573, %v741
  %743 = vmatmul.bf16.gmra.mxu0 %v319
  %v744 = vpop.f32.mrf.mxu0
  %v745 = vadd.f32 %v576, %v744
  %v746 = vpop.f32.mrf.mxu0
  %v747 = vadd.f32 %v578, %v746
  %748 = vmatmul.bf16.gmra.mxu0 %v321
  %v749 = vpop.f32.mrf.mxu0
  %v750 = vadd.f32 %v581, %v749
  %v751 = vpop.f32.mrf.mxu0
  %v752 = vadd.f32 %v583, %v751
  %753 = vmatmul.bf16.gmra.mxu0 %v323
  %v754 = vpop.f32.mrf.mxu0
  %v755 = vadd.f32 %v586, %v754
  %v756 = vpop.f32.mrf.mxu0
  %v757 = vadd.f32 %v588, %v756
  %758 = vmatmul.bf16.gmra.mxu0 %v325
  %v759 = vpop.f32.mrf.mxu0
  %v760 = vadd.f32 %v591, %v759
  %v761 = vpop.f32.mrf.mxu0
  %v762 = vadd.f32 %v593, %v761
  %763 = vmatmul.bf16.gmra.mxu0 %v327
  %v764 = vpop.f32.mrf.mxu0
  %v765 = vadd.f32 %v596, %v764
  %v766 = vpop.f32.mrf.mxu0
  %v767 = vadd.f32 %v598, %v766
  %768 = vmatmul.bf16.gmra.mxu0 %v329
  %v769 = vpop.f32.mrf.mxu0
  %v770 = vadd.f32 %v601, %v769
  %v771 = vpop.f32.mrf.mxu0
  %v772 = vadd.f32 %v603, %v771
  %773 = vmatmul.bf16.gmra.mxu0 %v331
  %v774 = vpop.f32.mrf.mxu0
  %v775 = vadd.f32 %v606, %v774
  %v776 = vpop.f32.mrf.mxu0
  %v777 = vadd.f32 %v608, %v776
  %778 = vmatmul.bf16.gmra.mxu0 %v333
  %v779 = vpop.f32.mrf.mxu0
  %v780 = vadd.f32 %v611, %v779
  %v781 = vpop.f32.mrf.mxu0
  %v782 = vadd.f32 %v613, %v781
  %783 = vmatmul.bf16.gmra.mxu0 %v335
  %v784 = vpop.f32.mrf.mxu0
  %v785 = vadd.f32 %v616, %v784
  %v786 = vpop.f32.mrf.mxu0
  %v787 = vadd.f32 %v618, %v786
  %788 = vmatmul.bf16.gmra.mxu0 %v337
  %v789 = vpop.f32.mrf.mxu0
  %v790 = vadd.f32 %v621, %v789
  %v791 = vpop.f32.mrf.mxu0
  %v792 = vadd.f32 %v623, %v791
  %793 = vmatmul.bf16.gmra.mxu0 %v339
  %v794 = vpop.f32.mrf.mxu0
  %v795 = vadd.f32 %v626, %v794
  %v796 = vpop.f32.mrf.mxu0
  %v797 = vadd.f32 %v628, %v796
  %798 = vmatmul.bf16.gmra.mxu0 %v341
  %v799 = vpop.f32.mrf.mxu0
  %v800 = vadd.f32 %v631, %v799
  %v801 = vpop.f32.mrf.mxu0
  %v802 = vadd.f32 %v633, %v801
  %803 = vmatmul.bf16.gmra.mxu0 %v343
  %v804 = vpop.f32.mrf.mxu0
  %v805 = vadd.f32 %v636, %v804
  %v806 = vpop.f32.mrf.mxu0
  %v807 = vadd.f32 %v638, %v806
  %808 = vmatmul.bf16.gmra.mxu0 %v345
  %v809 = vpop.f32.mrf.mxu0
  %v810 = vadd.f32 %v641, %v809
  %v811 = vpop.f32.mrf.mxu0
  %v812 = vadd.f32 %v643, %v811
  %813 = vmatmul.bf16.gmra.mxu0 %v347
  %v814 = vpop.f32.mrf.mxu0
  %v815 = vadd.f32 %v646, %v814
  %v816 = vpop.f32.mrf.mxu0
  %v817 = vadd.f32 %v648, %v816
  %818 = vmatmul.bf16.gmra.mxu0 %v349
  %v819 = vpop.f32.mrf.mxu0
  %v820 = vadd.f32 %v651, %v819
  %v821 = vpop.f32.mrf.mxu0
  %v822 = vadd.f32 %v653, %v821
  %823 = vmatmul.bf16.gmra.mxu0 %v351
  %v824 = vpop.f32.mrf.mxu0
  %v825 = vadd.f32 %v656, %v824
  %v826 = vpop.f32.mrf.mxu0
  %v827 = vadd.f32 %v658, %v826
  %828 = vmatmul.bf16.gmra.mxu0 %v353
  %v829 = vpop.f32.mrf.mxu0
  %v830 = vadd.f32 %v661, %v829
  %v831 = vpop.f32.mrf.mxu0
  %v832 = vadd.f32 %v663, %v831
  %833 = vmatmul.bf16.gmra.mxu0 %v355
  %v834 = vpop.f32.mrf.mxu0
  %v835 = vadd.f32 %v666, %v834
  %v836 = vpop.f32.mrf.mxu0
  %v837 = vadd.f32 %v668, %v836
  %838 = vmatmul.bf16.gmra.mxu0 %v357
  %v839 = vpop.f32.mrf.mxu0
  %v840 = vadd.f32 %v671, %v839
  %v841 = vpop.f32.mrf.mxu0
  %v842 = vadd.f32 %v673, %v841
  %843 = vmatmul.bf16.gmra.mxu0 %v359
  %v844 = vpop.f32.mrf.mxu0
  %v845 = vadd.f32 %v676, %v844
  %v846 = vpop.f32.mrf.mxu0
  %v847 = vadd.f32 %v678, %v846
  %848 = vmatmul.bf16.gmra.mxu0 %v361
  %v849 = vpop.f32.mrf.mxu0
  %v850 = vadd.f32 %v681, %v849
  %v851 = vpop.f32.mrf.mxu0
  %v852 = vadd.f32 %v683, %v851
  %853 = vmatmul.bf16.gmra.mxu0 %v363
  %v854 = vpop.f32.mrf.mxu0
  %v855 = vadd.f32 %v686, %v854
  %v856 = vpop.f32.mrf.mxu0
  %v857 = vadd.f32 %v688, %v856
  %858 = vmatmul.bf16.gmra.mxu0 %v365
  %v859 = vpop.f32.mrf.mxu0
  %v860 = vadd.f32 %v691, %v859
  %v861 = vpop.f32.mrf.mxu0
  %v862 = vadd.f32 %v693, %v861
  %863 = vdwg.mxu0
  %v864 = vadd.f32 %v705, %v707
  %v865 = vadd.f32 %v864, %v710
  %v866 = vadd.f32 %v865, %v712
  %v867 = vadd.f32 %v866, %v715
  %v868 = vadd.f32 %v867, %v717
  %v869 = vadd.f32 %v868, %v720
  %v870 = vadd.f32 %v869, %v722
  %v871 = vadd.f32 %v870, %v725
  %v872 = vadd.f32 %v871, %v727
  %v873 = vadd.f32 %v872, %v730
  %v874 = vadd.f32 %v873, %v732
  %v875 = vadd.f32 %v874, %v735
  %v876 = vadd.f32 %v875, %v737
  %v877 = vadd.f32 %v876, %v740
  %v878 = vadd.f32 %v877, %v742
  %v879 = vadd.f32 %v878, %v745
  %v880 = vadd.f32 %v879, %v747
  %v881 = vadd.f32 %v880, %v750
  %v882 = vadd.f32 %v881, %v752
  %v883 = vadd.f32 %v882, %v755
  %v884 = vadd.f32 %v883, %v757
  %v885 = vadd.f32 %v884, %v760
  %v886 = vadd.f32 %v885, %v762
  %v887 = vadd.f32 %v886, %v765
  %v888 = vadd.f32 %v887, %v767
  %v889 = vadd.f32 %v888, %v770
  %v890 = vadd.f32 %v889, %v772
  %v891 = vadd.f32 %v890, %v775
  %v892 = vadd.f32 %v891, %v777
  %v893 = vadd.f32 %v892, %v780
  %v894 = vadd.f32 %v893, %v782
  %v895 = vadd.f32 %v894, %v785
  %v896 = vadd.f32 %v895, %v787
  %v897 = vadd.f32 %v896, %v790
  %v898 = vadd.f32 %v897, %v792
  %v899 = vadd.f32 %v898, %v795
  %v900 = vadd.f32 %v899, %v797
  %v901 = vadd.f32 %v900, %v800
  %v902 = vadd.f32 %v901, %v802
  %v903 = vadd.f32 %v902, %v805
  %v904 = vadd.f32 %v903, %v807
  %v905 = vadd.f32 %v904, %v810
  %v906 = vadd.f32 %v905, %v812
  %v907 = vadd.f32 %v906, %v815
  %v908 = vadd.f32 %v907, %v817
  %v909 = vadd.f32 %v908, %v820
  %v910 = vadd.f32 %v909, %v822
  %v911 = vadd.f32 %v910, %v825
  %v912 = vadd.f32 %v911, %v827
  %v913 = vadd.f32 %v912, %v830
  %v914 = vadd.f32 %v913, %v832
  %v915 = vadd.f32 %v914, %v835
  %v916 = vadd.f32 %v915, %v837
  %v917 = vadd.f32 %v916, %v840
  %v918 = vadd.f32 %v917, %v842
  %v919 = vadd.f32 %v918, %v845
  %v920 = vadd.f32 %v919, %v847
  %v921 = vadd.f32 %v920, %v850
  %v922 = vadd.f32 %v921, %v852
  %v923 = vadd.f32 %v922, %v855
  %v924 = vadd.f32 %v923, %v857
  %v925 = vadd.f32 %v924, %v860
  %v926 = vadd.f32 %v925, %v862
  %v927 = vrot.slane %v926, 4
  %v928 = vadd.f32 %v926, %v927
  %v929 = vrot.slane %v928, 2
  %v930 = vadd.f32 %v928, %v929
  %v931 = vrot.slane %v930, 1
  %v932 = vadd.f32 %v930, %v931
  %v933 = vmul.f32 %v705, %v705
  %v934 = vmul.f32 %v707, %v707
  %v935 = vmul.f32 %v710, %v710
  %v936 = vmul.f32 %v712, %v712
  %v937 = vmul.f32 %v715, %v715
  %v938 = vmul.f32 %v717, %v717
  %v939 = vmul.f32 %v720, %v720
  %v940 = vmul.f32 %v722, %v722
  %v941 = vmul.f32 %v725, %v725
  %v942 = vmul.f32 %v727, %v727
  %v943 = vmul.f32 %v730, %v730
  %v944 = vmul.f32 %v732, %v732
  %v945 = vmul.f32 %v735, %v735
  %v946 = vmul.f32 %v737, %v737
  %v947 = vmul.f32 %v740, %v740
  %v948 = vmul.f32 %v742, %v742
  %v949 = vmul.f32 %v745, %v745
  %v950 = vmul.f32 %v747, %v747
  %v951 = vmul.f32 %v750, %v750
  %v952 = vmul.f32 %v752, %v752
  %v953 = vmul.f32 %v755, %v755
  %v954 = vmul.f32 %v757, %v757
  %v955 = vmul.f32 %v760, %v760
  %v956 = vmul.f32 %v762, %v762
  %v957 = vmul.f32 %v765, %v765
  %v958 = vmul.f32 %v767, %v767
  %v959 = vmul.f32 %v770, %v770
  %v960 = vmul.f32 %v772, %v772
  %v961 = vmul.f32 %v775, %v775
  %v962 = vmul.f32 %v777, %v777
  %v963 = vmul.f32 %v780, %v780
  %v964 = vmul.f32 %v782, %v782
  %v965 = vmul.f32 %v785, %v785
  %v966 = vmul.f32 %v787, %v787
  %v967 = vmul.f32 %v790, %v790
  %v968 = vmul.f32 %v792, %v792
  %v969 = vmul.f32 %v795, %v795
  %v970 = vmul.f32 %v797, %v797
  %v971 = vmul.f32 %v800, %v800
  %v972 = vmul.f32 %v802, %v802
  %v973 = vmul.f32 %v805, %v805
  %v974 = vmul.f32 %v807, %v807
  %v975 = vmul.f32 %v810, %v810
  %v976 = vmul.f32 %v812, %v812
  %v977 = vmul.f32 %v815, %v815
  %v978 = vmul.f32 %v817, %v817
  %v979 = vmul.f32 %v820, %v820
  %v980 = vmul.f32 %v822, %v822
  %v981 = vmul.f32 %v825, %v825
  %v982 = vmul.f32 %v827, %v827
  %v983 = vmul.f32 %v830, %v830
  %v984 = vmul.f32 %v832, %v832
  %v985 = vmul.f32 %v835, %v835
  %v986 = vmul.f32 %v837, %v837
  %v987 = vmul.f32 %v840, %v840
  %v988 = vmul.f32 %v842, %v842
  %v989 = vmul.f32 %v845, %v845
  %v990 = vmul.f32 %v847, %v847
  %v991 = vmul.f32 %v850, %v850
  %v992 = vmul.f32 %v852, %v852
  %v993 = vmul.f32 %v855, %v855
  %v994 = vmul.f32 %v857, %v857
  %v995 = vmul.f32 %v860, %v860
  %v996 = vmul.f32 %v862, %v862
  %v997 = vadd.f32 %v933, %v934
  %v998 = vadd.f32 %v997, %v935
  %v999 = vadd.f32 %v998, %v936
  %v1000 = vadd.f32 %v999, %v937
  %v1001 = vadd.f32 %v1000, %v938
  %v1002 = vadd.f32 %v1001, %v939
  %v1003 = vadd.f32 %v1002, %v940
  %v1004 = vadd.f32 %v1003, %v941
  %v1005 = vadd.f32 %v1004, %v942
  %v1006 = vadd.f32 %v1005, %v943
  %v1007 = vadd.f32 %v1006, %v944
  %v1008 = vadd.f32 %v1007, %v945
  %v1009 = vadd.f32 %v1008, %v946
  %v1010 = vadd.f32 %v1009, %v947
  %v1011 = vadd.f32 %v1010, %v948
  %v1012 = vadd.f32 %v1011, %v949
  %v1013 = vadd.f32 %v1012, %v950
  %v1014 = vadd.f32 %v1013, %v951
  %v1015 = vadd.f32 %v1014, %v952
  %v1016 = vadd.f32 %v1015, %v953
  %v1017 = vadd.f32 %v1016, %v954
  %v1018 = vadd.f32 %v1017, %v955
  %v1019 = vadd.f32 %v1018, %v956
  %v1020 = vadd.f32 %v1019, %v957
  %v1021 = vadd.f32 %v1020, %v958
  %v1022 = vadd.f32 %v1021, %v959
  %v1023 = vadd.f32 %v1022, %v960
  %v1024 = vadd.f32 %v1023, %v961
  %v1025 = vadd.f32 %v1024, %v962
  %v1026 = vadd.f32 %v1025, %v963
  %v1027 = vadd.f32 %v1026, %v964
  %v1028 = vadd.f32 %v1027, %v965
  %v1029 = vadd.f32 %v1028, %v966
  %v1030 = vadd.f32 %v1029, %v967
  %v1031 = vadd.f32 %v1030, %v968
  %v1032 = vadd.f32 %v1031, %v969
  %v1033 = vadd.f32 %v1032, %v970
  %v1034 = vadd.f32 %v1033, %v971
  %v1035 = vadd.f32 %v1034, %v972
  %v1036 = vadd.f32 %v1035, %v973
  %v1037 = vadd.f32 %v1036, %v974
  %v1038 = vadd.f32 %v1037, %v975
  %v1039 = vadd.f32 %v1038, %v976
  %v1040 = vadd.f32 %v1039, %v977
  %v1041 = vadd.f32 %v1040, %v978
  %v1042 = vadd.f32 %v1041, %v979
  %v1043 = vadd.f32 %v1042, %v980
  %v1044 = vadd.f32 %v1043, %v981
  %v1045 = vadd.f32 %v1044, %v982
  %v1046 = vadd.f32 %v1045, %v983
  %v1047 = vadd.f32 %v1046, %v984
  %v1048 = vadd.f32 %v1047, %v985
  %v1049 = vadd.f32 %v1048, %v986
  %v1050 = vadd.f32 %v1049, %v987
  %v1051 = vadd.f32 %v1050, %v988
  %v1052 = vadd.f32 %v1051, %v989
  %v1053 = vadd.f32 %v1052, %v990
  %v1054 = vadd.f32 %v1053, %v991
  %v1055 = vadd.f32 %v1054, %v992
  %v1056 = vadd.f32 %v1055, %v993
  %v1057 = vadd.f32 %v1056, %v994
  %v1058 = vadd.f32 %v1057, %v995
  %v1059 = vadd.f32 %v1058, %v996
  %v1060 = vrot.slane %v1059, 4
  %v1061 = vadd.f32 %v1059, %v1060
  %v1062 = vrot.slane %v1061, 2
  %v1063 = vadd.f32 %v1061, %v1062
  %v1064 = vrot.slane %v1063, 1
  %v1065 = vadd.f32 %v1063, %v1064
  %1066 = vst [vmem:[%s3] sm:$0xff] %v932
  %1067 = vst [vmem:[%s4] sm:$0xff] %v1065
  %v1068 = vpack.c.bf16 %v705, %v705
  %v1069 = vpack.c.bf16 %v707, %v707
  %v1070 = vpack.c.bf16 %v710, %v710
  %v1071 = vpack.c.bf16 %v712, %v712
  %v1072 = vpack.c.bf16 %v715, %v715
  %v1073 = vpack.c.bf16 %v717, %v717
  %v1074 = vpack.c.bf16 %v720, %v720
  %v1075 = vpack.c.bf16 %v722, %v722
  %v1076 = vpack.c.bf16 %v725, %v725
  %v1077 = vpack.c.bf16 %v727, %v727
  %v1078 = vpack.c.bf16 %v730, %v730
  %v1079 = vpack.c.bf16 %v732, %v732
  %v1080 = vpack.c.bf16 %v735, %v735
  %v1081 = vpack.c.bf16 %v737, %v737
  %v1082 = vpack.c.bf16 %v740, %v740
  %v1083 = vpack.c.bf16 %v742, %v742
  %v1084 = vpack.c.bf16 %v745, %v745
  %v1085 = vpack.c.bf16 %v747, %v747
  %v1086 = vpack.c.bf16 %v750, %v750
  %v1087 = vpack.c.bf16 %v752, %v752
  %v1088 = vpack.c.bf16 %v755, %v755
  %v1089 = vpack.c.bf16 %v757, %v757
  %v1090 = vpack.c.bf16 %v760, %v760
  %v1091 = vpack.c.bf16 %v762, %v762
  %v1092 = vpack.c.bf16 %v765, %v765
  %v1093 = vpack.c.bf16 %v767, %v767
  %v1094 = vpack.c.bf16 %v770, %v770
  %v1095 = vpack.c.bf16 %v772, %v772
  %v1096 = vpack.c.bf16 %v775, %v775
  %v1097 = vpack.c.bf16 %v777, %v777
  %v1098 = vpack.c.bf16 %v780, %v780
  %v1099 = vpack.c.bf16 %v782, %v782
  %v1100 = vpack.c.bf16 %v785, %v785
  %v1101 = vpack.c.bf16 %v787, %v787
  %v1102 = vpack.c.bf16 %v790, %v790
  %v1103 = vpack.c.bf16 %v792, %v792
  %v1104 = vpack.c.bf16 %v795, %v795
  %v1105 = vpack.c.bf16 %v797, %v797
  %v1106 = vpack.c.bf16 %v800, %v800
  %v1107 = vpack.c.bf16 %v802, %v802
  %v1108 = vpack.c.bf16 %v805, %v805
  %v1109 = vpack.c.bf16 %v807, %v807
  %v1110 = vpack.c.bf16 %v810, %v810
  %v1111 = vpack.c.bf16 %v812, %v812
  %v1112 = vpack.c.bf16 %v815, %v815
  %v1113 = vpack.c.bf16 %v817, %v817
  %v1114 = vpack.c.bf16 %v820, %v820
  %v1115 = vpack.c.bf16 %v822, %v822
  %v1116 = vpack.c.bf16 %v825, %v825
  %v1117 = vpack.c.bf16 %v827, %v827
  %v1118 = vpack.c.bf16 %v830, %v830
  %v1119 = vpack.c.bf16 %v832, %v832
  %v1120 = vpack.c.bf16 %v835, %v835
  %v1121 = vpack.c.bf16 %v837, %v837
  %v1122 = vpack.c.bf16 %v840, %v840
  %v1123 = vpack.c.bf16 %v842, %v842
  %v1124 = vpack.c.bf16 %v845, %v845
  %v1125 = vpack.c.bf16 %v847, %v847
  %v1126 = vpack.c.bf16 %v850, %v850
  %v1127 = vpack.c.bf16 %v852, %v852
  %v1128 = vpack.c.bf16 %v855, %v855
  %v1129 = vpack.c.bf16 %v857, %v857
  %v1130 = vpack.c.bf16 %v860, %v860
  %v1131 = vpack.c.bf16 %v862, %v862
  %1132 = vst [vmem:[%s2] sm:$0xf] %v1068
  %1133 = vst [vmem:[%s2 + $0x4] sm:$0xf] %v1069
  %1134 = vst [vmem:[%s2 + $0x8] sm:$0xf] %v1070
  %1135 = vst [vmem:[%s2 + $0xc] sm:$0xf] %v1071
  %1136 = vst [vmem:[%s2 + $0x10] sm:$0xf] %v1072
  %1137 = vst [vmem:[%s2 + $0x14] sm:$0xf] %v1073
  %1138 = vst [vmem:[%s2 + $0x18] sm:$0xf] %v1074
  %1139 = vst [vmem:[%s2 + $0x1c] sm:$0xf] %v1075
  %1140 = vst [vmem:[%s2 + $0x20] sm:$0xf] %v1076
  %1141 = vst [vmem:[%s2 + $0x24] sm:$0xf] %v1077
  %1142 = vst [vmem:[%s2 + $0x28] sm:$0xf] %v1078
  %1143 = vst [vmem:[%s2 + $0x2c] sm:$0xf] %v1079
  %1144 = vst [vmem:[%s2 + $0x30] sm:$0xf] %v1080
  %1145 = vst [vmem:[%s2 + $0x34] sm:$0xf] %v1081
  %1146 = vst [vmem:[%s2 + $0x38] sm:$0xf] %v1082
  %1147 = vst [vmem:[%s2 + $0x3c] sm:$0xf] %v1083
  %1148 = vst [vmem:[%s2 + $0x40] sm:$0xf] %v1084
  %1149 = vst [vmem:[%s2 + $0x44] sm:$0xf] %v1085
  %1150 = vst [vmem:[%s2 + $0x48] sm:$0xf] %v1086
  %1151 = vst [vmem:[%s2 + $0x4c] sm:$0xf] %v1087
  %1152 = vst [vmem:[%s2 + $0x50] sm:$0xf] %v1088
  %1153 = vst [vmem:[%s2 + $0x54] sm:$0xf] %v1089
  %1154 = vst [vmem:[%s2 + $0x58] sm:$0xf] %v1090
  %1155 = vst [vmem:[%s2 + $0x5c] sm:$0xf] %v1091
  %1156 = vst [vmem:[%s2 + $0x60] sm:$0xf] %v1092
  %1157 = vst [vmem:[%s2 + $0x64] sm:$0xf] %v1093
  %1158 = vst [vmem:[%s2 + $0x68] sm:$0xf] %v1094
  %1159 = vst [vmem:[%s2 + $0x6c] sm:$0xf] %v1095
  %1160 = vst [vmem:[%s2 + $0x70] sm:$0xf] %v1096
  %1161 = vst [vmem:[%s2 + $0x74] sm:$0xf] %v1097
  %1162 = vst [vmem:[%s2 + $0x78] sm:$0xf] %v1098
  %1163 = vst [vmem:[%s2 + $0x7c] sm:$0xf] %v1099
  %1164 = vst [vmem:[%s2 + $0x80] sm:$0xf] %v1100
  %1165 = vst [vmem:[%s2 + $0x84] sm:$0xf] %v1101
  %1166 = vst [vmem:[%s2 + $0x88] sm:$0xf] %v1102
  %1167 = vst [vmem:[%s2 + $0x8c] sm:$0xf] %v1103
  %1168 = vst [vmem:[%s2 + $0x90] sm:$0xf] %v1104
  %1169 = vst [vmem:[%s2 + $0x94] sm:$0xf] %v1105
  %1170 = vst [vmem:[%s2 + $0x98] sm:$0xf] %v1106
  %1171 = vst [vmem:[%s2 + $0x9c] sm:$0xf] %v1107
  %1172 = vst [vmem:[%s2 + $0xa0] sm:$0xf] %v1108
  %1173 = vst [vmem:[%s2 + $0xa4] sm:$0xf] %v1109
  %1174 = vst [vmem:[%s2 + $0xa8] sm:$0xf] %v1110
  %1175 = vst [vmem:[%s2 + $0xac] sm:$0xf] %v1111
  %1176 = vst [vmem:[%s2 + $0xb0] sm:$0xf] %v1112
  %1177 = vst [vmem:[%s2 + $0xb4] sm:$0xf] %v1113
  %1178 = vst [vmem:[%s2 + $0xb8] sm:$0xf] %v1114
  %1179 = vst [vmem:[%s2 + $0xbc] sm:$0xf] %v1115
  %1180 = vst [vmem:[%s2 + $0xc0] sm:$0xf] %v1116
  %1181 = vst [vmem:[%s2 + $0xc4] sm:$0xf] %v1117
  %1182 = vst [vmem:[%s2 + $0xc8] sm:$0xf] %v1118
  %1183 = vst [vmem:[%s2 + $0xcc] sm:$0xf] %v1119
  %1184 = vst [vmem:[%s2 + $0xd0] sm:$0xf] %v1120
  %1185 = vst [vmem:[%s2 + $0xd4] sm:$0xf] %v1121
  %1186 = vst [vmem:[%s2 + $0xd8] sm:$0xf] %v1122
  %1187 = vst [vmem:[%s2 + $0xdc] sm:$0xf] %v1123
  %1188 = vst [vmem:[%s2 + $0xe0] sm:$0xf] %v1124
  %1189 = vst [vmem:[%s2 + $0xe4] sm:$0xf] %v1125
  %1190 = vst [vmem:[%s2 + $0xe8] sm:$0xf] %v1126
  %1191 = vst [vmem:[%s2 + $0xec] sm:$0xf] %v1127
  %1192 = vst [vmem:[%s2 + $0xf0] sm:$0xf] %v1128
  %1193 = vst [vmem:[%s2 + $0xf4] sm:$0xf] %v1129
  %1194 = vst [vmem:[%s2 + $0xf8] sm:$0xf] %v1130
  %1195 = vst [vmem:[%s2 + $0xfc] sm:$0xf] %v1131
  // Predicated region
  $region10: #{multi_generator_forward.19} parent=0 // pred_check
    _
  $region11: #{multi_generator_forward.19} parent=0 // pred_check_branch
    %1197 = sbr.rel (0) target = $region13
  $region12: #{multi_generator_forward.19} parent=0 // pred_region
    _
  $region13: #{multi_generator_forward.19} parent=0 // pred_fallthru
    _
  // Predicated region
  $region14: #{multi_generator_forward.19} parent=0 // pred_check
    _
  $region15: #{multi_generator_forward.19} parent=0 // pred_check_branch
    %1199 = sbr.rel (0) target = $region17
  $region16: #{multi_generator_forward.19} parent=0 // pred_region
    _
  $region17: #{multi_generator_forward.19} parent=0 // pred_fallthru
    _
  // Predicated region
  $region18: #{multi_generator_forward.19} parent=0 // pred_check
    _
  $region19: #{multi_generator_forward.19} parent=0 // pred_check_branch
    %1201 = sbr.rel (0) target = $region21
  $region20: #{multi_generator_forward.19} parent=0 // pred_region
    _
  $region21: #{multi_generator_forward.19} parent=0 // pred_fallthru
    _
  // Predicated region
  $region22: #{multi_generator_forward.19} parent=0 // pred_check
    _
  $region23: #{multi_generator_forward.19} parent=0 // pred_check_branch
    %1203 = sbr.rel (0) target = $region25
  $region24: #{multi_generator_forward.19} parent=0 // pred_region
    _
  $region25: #{multi_generator_forward.19} parent=0 // pred_fallthru
    _
  // Predicated region
  $region26: #{multi_generator_forward.19} parent=0 // pred_check
    _
  $region27: #{multi_generator_forward.19} parent=0 // pred_check_branch
    %1205 = sbr.rel (0) target = $region29
  $region28: #{multi_generator_forward.19} parent=0 // pred_region
    _
  $region29: #{multi_generator_forward.19} parent=0 // pred_fallthru
    _
  // Predicated region
  $region30: #{multi_generator_forward.19} parent=0 // pred_check
    _
  $region31: #{multi_generator_forward.19} parent=0 // pred_check_branch
    %1207 = sbr.rel (0) target = $region33
  $region32: #{multi_generator_forward.19} parent=0 // pred_region
    _
  $region33: #{multi_generator_forward.19} parent=0 // pred_fallthru
    _

// kernel: multi_generator_forward.21
$region0: #{multi_generator_forward.21}
  #allocation0 [shape = 'u32[]', space=smem, size = 0x4, offset = 0x4, fixed_abs, tag = 'smem constant byte address 0x4 - core index']
  #allocation1 [shape = 'u32[72,128]{1,0:T(1,128)}', space=vmem, size = 0x9000, scoped, tag = 'internal scratch']
  %s0 = inlined_call_operand.vmem [shape: bf16[128,128], index: 0, kind: input, shape index: {}]
  %s1 = inlined_call_operand.vmem [shape: bf16[128,128], index: 1, kind: input, shape index: {}]
  %s2 = inlined_call_operand.vmem [shape: bf16[128,128], index: 2, kind: output, shape index: {0}]
  %s3 = inlined_call_operand.vmem [shape: f32[8,128], index: 3, kind: output, shape index: {1}]
  %s4 = inlined_call_operand.vmem [shape: f32[8,128], index: 4, kind: output, shape index: {2}]
  %5 = xla_tuple %s2, %s3, %s4
  %s6 = sld [smem:[#allocation0]]
  $region34: #{multi_generator_forward.21} parent=0
    _
  %s8 = ssub.s32 1, %s6
  %s9 = scalar_select 0, %s8, %s6
  // Predicated region
  $region2: #{multi_generator_forward.21} parent=0 // pred_check
    _
  $region3: #{multi_generator_forward.21} parent=0 // pred_check_branch
    %11 = sbr.rel (0) target = $region5
  $region4: #{multi_generator_forward.21} parent=0 // pred_region
    _
  $region5: #{multi_generator_forward.21} parent=0 // pred_fallthru
    _
  // Predicated region
  $region6: #{multi_generator_forward.21} parent=0 // pred_check
    _
  $region7: #{multi_generator_forward.21} parent=0 // pred_check_branch
    %13 = sbr.rel (0) target = $region9
  $region8: #{multi_generator_forward.21} parent=0 // pred_region
    _
  $region9: #{multi_generator_forward.21} parent=0 // pred_fallthru
    _
  %v14 = vld [vmem:[%s0] sm:$0xf]
  %v15 = vld [vmem:[%s0 + $0x4] sm:$0xf]
  %v16 = vld [vmem:[%s0 + $0x8] sm:$0xf]
  %v17 = vld [vmem:[%s0 + $0xc] sm:$0xf]
  %v18 = vld [vmem:[%s0 + $0x10] sm:$0xf]
  %v19 = vld [vmem:[%s0 + $0x14] sm:$0xf]
  %v20 = vld [vmem:[%s0 + $0x18] sm:$0xf]
  %v21 = vld [vmem:[%s0 + $0x1c] sm:$0xf]
  %v22 = vld [vmem:[%s0 + $0x20] sm:$0xf]
  %v23 = vld [vmem:[%s0 + $0x24] sm:$0xf]
  %v24 = vld [vmem:[%s0 + $0x28] sm:$0xf]
  %v25 = vld [vmem:[%s0 + $0x2c] sm:$0xf]
  %v26 = vld [vmem:[%s0 + $0x30] sm:$0xf]
  %v27 = vld [vmem:[%s0 + $0x34] sm:$0xf]
  %v28 = vld [vmem:[%s0 + $0x38] sm:$0xf]
  %v29 = vld [vmem:[%s0 + $0x3c] sm:$0xf]
  %v30 = vld [vmem:[%s1] sm:$0xf]
  %v31 = vld [vmem:[%s1 + $0x4] sm:$0xf]
  %v32 = vld [vmem:[%s1 + $0x8] sm:$0xf]
  %v33 = vld [vmem:[%s1 + $0xc] sm:$0xf]
  %v34 = vld [vmem:[%s1 + $0x10] sm:$0xf]
  %v35 = vld [vmem:[%s1 + $0x14] sm:$0xf]
  %v36 = vld [vmem:[%s1 + $0x18] sm:$0xf]
  %v37 = vld [vmem:[%s1 + $0x1c] sm:$0xf]
  %v38 = vld [vmem:[%s1 + $0x20] sm:$0xf]
  %v39 = vld [vmem:[%s1 + $0x24] sm:$0xf]
  %v40 = vld [vmem:[%s1 + $0x28] sm:$0xf]
  %v41 = vld [vmem:[%s1 + $0x2c] sm:$0xf]
  %v42 = vld [vmem:[%s1 + $0x30] sm:$0xf]
  %v43 = vld [vmem:[%s1 + $0x34] sm:$0xf]
  %v44 = vld [vmem:[%s1 + $0x38] sm:$0xf]
  %v45 = vld [vmem:[%s1 + $0x3c] sm:$0xf]
  %v62 = vunpack.c.l.b16 %v14
  %v63 = vunpack.c.l.b16 %v15
  %v64 = vunpack.c.l.b16 %v16
  %v65 = vunpack.c.l.b16 %v17
  %v66 = vunpack.c.l.b16 %v18
  %v67 = vunpack.c.l.b16 %v19
  %v68 = vunpack.c.l.b16 %v20
  %v69 = vunpack.c.l.b16 %v21
  %v70 = vunpack.c.l.b16 %v22
  %v71 = vunpack.c.l.b16 %v23
  %v72 = vunpack.c.l.b16 %v24
  %v73 = vunpack.c.l.b16 %v25
  %v74 = vunpack.c.l.b16 %v26
  %v75 = vunpack.c.l.b16 %v27
  %v76 = vunpack.c.l.b16 %v28
  %v77 = vunpack.c.l.b16 %v29
  %v78 = vpack.c.b16 %v63, %v62
  %v79 = vpack.c.b16 %v65, %v64
  %v80 = vpack.c.b16 %v67, %v66
  %v81 = vpack.c.b16 %v69, %v68
  %v82 = vpack.c.b16 %v71, %v70
  %v83 = vpack.c.b16 %v73, %v72
  %v84 = vpack.c.b16 %v75, %v74
  %v85 = vpack.c.b16 %v77, %v76
  %v110 = vunpack.c.l.b16 %v30
  %v111 = vunpack.c.l.b16 %v31
  %v112 = vunpack.c.l.b16 %v32
  %v113 = vunpack.c.l.b16 %v33
  %v114 = vunpack.c.l.b16 %v34
  %v115 = vunpack.c.l.b16 %v35
  %v116 = vunpack.c.l.b16 %v36
  %v117 = vunpack.c.l.b16 %v37
  %v118 = vunpack.c.l.b16 %v38
  %v119 = vunpack.c.l.b16 %v39
  %v120 = vunpack.c.l.b16 %v40
  %v121 = vunpack.c.l.b16 %v41
  %v122 = vunpack.c.l.b16 %v42
  %v123 = vunpack.c.l.b16 %v43
  %v124 = vunpack.c.l.b16 %v44
  %v125 = vunpack.c.l.b16 %v45
  %v126 = vpack.c.b16 %v111, %v110
  %v127 = vpack.c.b16 %v113, %v112
  %v128 = vpack.c.b16 %v115, %v114
  %v129 = vpack.c.b16 %v117, %v116
  %v130 = vpack.c.b16 %v119, %v118
  %v131 = vpack.c.b16 %v121, %v120
  %v132 = vpack.c.b16 %v123, %v122
  %v133 = vpack.c.b16 %v125, %v124
  %142 = vmatpush.bf16.msra.mxu0 %v133
  %143 = vmatpush.bf16.msra.mxu0 %v132
  %144 = vmatpush.bf16.msra.mxu0 %v131
  %145 = vmatpush.bf16.msra.mxu0 %v130
  %146 = vmatpush.bf16.msra.mxu0 %v129
  %147 = vmatpush.bf16.msra.mxu0 %v128
  %148 = vmatpush.bf16.msra.mxu0 %v127
  %149 = vmatpush.bf16.msra.mxu0 %v126
  %150 = vmatmul.bf16.gmra.mxu0 %v78
  %v151 = vpop.f32.mrf.mxu0
  %v152 = vadd.f32 0.0, %v151
  %v153 = vpop.f32.mrf.mxu0
  %v154 = vadd.f32 0.0, %v153
  %155 = vmatmul.bf16.gmra.mxu0 %v79
  %v156 = vpop.f32.mrf.mxu0
  %v157 = vadd.f32 0.0, %v156
  %v158 = vpop.f32.mrf.mxu0
  %v159 = vadd.f32 0.0, %v158
  %160 = vmatmul.bf16.gmra.mxu0 %v80
  %v161 = vpop.f32.mrf.mxu0
  %v162 = vadd.f32 0.0, %v161
  %v163 = vpop.f32.mrf.mxu0
  %v164 = vadd.f32 0.0, %v163
  %165 = vmatmul.bf16.gmra.mxu0 %v81
  %v166 = vpop.f32.mrf.mxu0
  %v167 = vadd.f32 0.0, %v166
  %v168 = vpop.f32.mrf.mxu0
  %v169 = vadd.f32 0.0, %v168
  %170 = vmatmul.bf16.gmra.mxu0 %v82
  %v171 = vpop.f32.mrf.mxu0
  %v172 = vadd.f32 0.0, %v171
  %v173 = vpop.f32.mrf.mxu0
  %v174 = vadd.f32 0.0, %v173
  %175 = vmatmul.bf16.gmra.mxu0 %v83
  %v176 = vpop.f32.mrf.mxu0
  %v177 = vadd.f32 0.0, %v176
  %v178 = vpop.f32.mrf.mxu0
  %v179 = vadd.f32 0.0, %v178
  %180 = vmatmul.bf16.gmra.mxu0 %v84
  %v181 = vpop.f32.mrf.mxu0
  %v182 = vadd.f32 0.0, %v181
  %v183 = vpop.f32.mrf.mxu0
  %v184 = vadd.f32 0.0, %v183
  %185 = vmatmul.bf16.gmra.mxu0 %v85
  %v186 = vpop.f32.mrf.mxu0
  %v187 = vadd.f32 0.0, %v186
  %v188 = vpop.f32.mrf.mxu0
  %v189 = vadd.f32 0.0, %v188
  %190 = vdwg.mxu0
  %v191 = vadd.f32 %v152, %v154
  %v192 = vadd.f32 %v191, %v157
  %v193 = vadd.f32 %v192, %v159
  %v194 = vadd.f32 %v193, %v162
  %v195 = vadd.f32 %v194, %v164
  %v196 = vadd.f32 %v195, %v167
  %v197 = vadd.f32 %v196, %v169
  %v198 = vadd.f32 %v197, %v172
  %v199 = vadd.f32 %v198, %v174
  %v200 = vadd.f32 %v199, %v177
  %v201 = vadd.f32 %v200, %v179
  %v202 = vadd.f32 %v201, %v182
  %v203 = vadd.f32 %v202, %v184
  %v204 = vadd.f32 %v203, %v187
  %v205 = vadd.f32 %v204, %v189
  %v206 = vrot.slane %v205, 4
  %v207 = vadd.f32 %v205, %v206
  %v208 = vrot.slane %v207, 2
  %v209 = vadd.f32 %v207, %v208
  %v210 = vrot.slane %v209, 1
  %v211 = vadd.f32 %v209, %v210
  %v212 = vmul.f32 %v152, %v152
  %v213 = vmul.f32 %v154, %v154
  %v214 = vmul.f32 %v157, %v157
  %v215 = vmul.f32 %v159, %v159
  %v216 = vmul.f32 %v162, %v162
  %v217 = vmul.f32 %v164, %v164
  %v218 = vmul.f32 %v167, %v167
  %v219 = vmul.f32 %v169, %v169
  %v220 = vmul.f32 %v172, %v172
  %v221 = vmul.f32 %v174, %v174
  %v222 = vmul.f32 %v177, %v177
  %v223 = vmul.f32 %v179, %v179
  %v224 = vmul.f32 %v182, %v182
  %v225 = vmul.f32 %v184, %v184
  %v226 = vmul.f32 %v187, %v187
  %v227 = vmul.f32 %v189, %v189
  %v228 = vadd.f32 %v212, %v213
  %v229 = vadd.f32 %v228, %v214
  %v230 = vadd.f32 %v229, %v215
  %v231 = vadd.f32 %v230, %v216
  %v232 = vadd.f32 %v231, %v217
  %v233 = vadd.f32 %v232, %v218
  %v234 = vadd.f32 %v233, %v219
  %v235 = vadd.f32 %v234, %v220
  %v236 = vadd.f32 %v235, %v221
  %v237 = vadd.f32 %v236, %v222
  %v238 = vadd.f32 %v237, %v223
  %v239 = vadd.f32 %v238, %v224
  %v240 = vadd.f32 %v239, %v225
  %v241 = vadd.f32 %v240, %v226
  %v242 = vadd.f32 %v241, %v227
  %v243 = vrot.slane %v242, 4
  %v244 = vadd.f32 %v242, %v243
  %v245 = vrot.slane %v244, 2
  %v246 = vadd.f32 %v244, %v245
  %v247 = vrot.slane %v246, 1
  %v248 = vadd.f32 %v246, %v247
  %249 = vst [vmem:[%s3] sm:$0xff] %v211
  %250 = vst [vmem:[%s4] sm:$0xff] %v248
  %v251 = vpack.c.bf16 %v152, %v152
  %v252 = vpack.c.bf16 %v154, %v154
  %v253 = vpack.c.bf16 %v157, %v157
  %v254 = vpack.c.bf16 %v159, %v159
  %v255 = vpack.c.bf16 %v162, %v162
  %v256 = vpack.c.bf16 %v164, %v164
  %v257 = vpack.c.bf16 %v167, %v167
  %v258 = vpack.c.bf16 %v169, %v169
  %v259 = vpack.c.bf16 %v172, %v172
  %v260 = vpack.c.bf16 %v174, %v174
  %v261 = vpack.c.bf16 %v177, %v177
  %v262 = vpack.c.bf16 %v179, %v179
  %v263 = vpack.c.bf16 %v182, %v182
  %v264 = vpack.c.bf16 %v184, %v184
  %v265 = vpack.c.bf16 %v187, %v187
  %v266 = vpack.c.bf16 %v189, %v189
  %267 = vst [vmem:[%s2] sm:$0xf] %v251
  %268 = vst [vmem:[%s2 + $0x4] sm:$0xf] %v252
  %269 = vst [vmem:[%s2 + $0x8] sm:$0xf] %v253
  %270 = vst [vmem:[%s2 + $0xc] sm:$0xf] %v254
  %271 = vst [vmem:[%s2 + $0x10] sm:$0xf] %v255
  %272 = vst [vmem:[%s2 + $0x14] sm:$0xf] %v256
  %273 = vst [vmem:[%s2 + $0x18] sm:$0xf] %v257
  %274 = vst [vmem:[%s2 + $0x1c] sm:$0xf] %v258
  %275 = vst [vmem:[%s2 + $0x20] sm:$0xf] %v259
  %276 = vst [vmem:[%s2 + $0x24] sm:$0xf] %v260
  %277 = vst [vmem:[%s2 + $0x28] sm:$0xf] %v261
  %278 = vst [vmem:[%s2 + $0x2c] sm:$0xf] %v262
  %279 = vst [vmem:[%s2 + $0x30] sm:$0xf] %v263
  %280 = vst [vmem:[%s2 + $0x34] sm:$0xf] %v264
  %281 = vst [vmem:[%s2 + $0x38] sm:$0xf] %v265
  %282 = vst [vmem:[%s2 + $0x3c] sm:$0xf] %v266
  // Predicated region
  $region10: #{multi_generator_forward.21} parent=0 // pred_check
    _
  $region11: #{multi_generator_forward.21} parent=0 // pred_check_branch
    %284 = sbr.rel (0) target = $region13
  $region12: #{multi_generator_forward.21} parent=0 // pred_region
    _
  $region13: #{multi_generator_forward.21} parent=0 // pred_fallthru
    _
  // Predicated region
  $region14: #{multi_generator_forward.21} parent=0 // pred_check
    _
  $region15: #{multi_generator_forward.21} parent=0 // pred_check_branch
    %286 = sbr.rel (0) target = $region17
  $region16: #{multi_generator_forward.21} parent=0 // pred_region
    _
  $region17: #{multi_generator_forward.21} parent=0 // pred_fallthru
    _
  // Predicated region
  $region18: #{multi_generator_forward.21} parent=0 // pred_check
    _
  $region19: #{multi_generator_forward.21} parent=0 // pred_check_branch
    %288 = sbr.rel (0) target = $region21
  $region20: #{multi_generator_forward.21} parent=0 // pred_region
    _
  $region21: #{multi_generator_forward.21} parent=0 // pred_fallthru
    _
  // Predicated region
  $region22: #{multi_generator_forward.21} parent=0 // pred_check
    _
  $region23: #{multi_generator_forward.21} parent=0 // pred_check_branch
    %290 = sbr.rel (0) target = $region25
  $region24: #{multi_generator_forward.21} parent=0 // pred_region
    _
  $region25: #{multi_generator_forward.21} parent=0 // pred_fallthru
    _
  // Predicated region
  $region26: #{multi_generator_forward.21} parent=0 // pred_check
    _
  $region27: #{multi_generator_forward.21} parent=0 // pred_check_branch
    %292 = sbr.rel (0) target = $region29
  $region28: #{multi_generator_forward.21} parent=0 // pred_region
    _
  $region29: #{multi_generator_forward.21} parent=0 // pred_fallthru
    _
  // Predicated region
  $region30: #{multi_generator_forward.21} parent=0 // pred_check
    _
  $region31: #{multi_generator_forward.21} parent=0 // pred_check_branch
    %294 = sbr.rel (0) target = $region33
  $region32: #{multi_generator_forward.21} parent=0 // pred_region
    _
  $region33: #{multi_generator_forward.21} parent=0 // pred_fallthru
    _

// kernel: multi_generator_forward.22
$region0: #{multi_generator_forward.22}
  #allocation0 [shape = 'u32[]', space=smem, size = 0x4, offset = 0x4, fixed_abs, tag = 'smem constant byte address 0x4 - core index']
  #allocation1 [shape = 'u32[72,128]{1,0:T(1,128)}', space=vmem, size = 0x9000, scoped, tag = 'internal scratch']
  %s0 = inlined_call_operand.vmem [shape: bf16[128,128], index: 0, kind: input, shape index: {}]
  %s1 = inlined_call_operand.vmem [shape: f32[1,128], index: 1, kind: input, shape index: {}]
  %s2 = inlined_call_operand.vmem [shape: f32[1,128], index: 2, kind: input, shape index: {}]
  %s3 = inlined_call_operand.vmem [shape: bf16[128,128], index: 3, kind: output, shape index: {}]
  %s4 = sld [smem:[#allocation0]]
  $region22: #{multi_generator_forward.22} parent=0
    _
  %s6 = ssub.s32 1, %s4
  %s7 = scalar_select 0, %s6, %s4
  // Predicated region
  $region2: #{multi_generator_forward.22} parent=0 // pred_check
    _
  $region3: #{multi_generator_forward.22} parent=0 // pred_check_branch
    %9 = sbr.rel (0) target = $region5
  $region4: #{multi_generator_forward.22} parent=0 // pred_region
    _
  $region5: #{multi_generator_forward.22} parent=0 // pred_fallthru
    _
  // Predicated region
  $region6: #{multi_generator_forward.22} parent=0 // pred_check
    _
  $region7: #{multi_generator_forward.22} parent=0 // pred_check_branch
    %11 = sbr.rel (0) target = $region9
  $region8: #{multi_generator_forward.22} parent=0 // pred_region
    _
  $region9: #{multi_generator_forward.22} parent=0 // pred_fallthru
    _
  // Predicated region
  $region10: #{multi_generator_forward.22} parent=0 // pred_check
    _
  $region11: #{multi_generator_forward.22} parent=0 // pred_check_branch
    %13 = sbr.rel (0) target = $region13
  $region12: #{multi_generator_forward.22} parent=0 // pred_region
    _
  $region13: #{multi_generator_forward.22} parent=0 // pred_fallthru
    _
  %v14 = vld [vmem:[%s0] sm:$0xf]
  %v15 = vld [vmem:[%s0 + $0x4] sm:$0xf]
  %v16 = vld [vmem:[%s0 + $0x8] sm:$0xf]
  %v17 = vld [vmem:[%s0 + $0xc] sm:$0xf]
  %v18 = vld [vmem:[%s0 + $0x10] sm:$0xf]
  %v19 = vld [vmem:[%s0 + $0x14] sm:$0xf]
  %v20 = vld [vmem:[%s0 + $0x18] sm:$0xf]
  %v21 = vld [vmem:[%s0 + $0x1c] sm:$0xf]
  %v22 = vld [vmem:[%s0 + $0x20] sm:$0xf]
  %v23 = vld [vmem:[%s0 + $0x24] sm:$0xf]
  %v24 = vld [vmem:[%s0 + $0x28] sm:$0xf]
  %v25 = vld [vmem:[%s0 + $0x2c] sm:$0xf]
  %v26 = vld [vmem:[%s0 + $0x30] sm:$0xf]
  %v27 = vld [vmem:[%s0 + $0x34] sm:$0xf]
  %v28 = vld [vmem:[%s0 + $0x38] sm:$0xf]
  %v29 = vld [vmem:[%s0 + $0x3c] sm:$0xf]
  %v30 = vunpack.c.l.bf16 %v14
  %v31 = vunpack.c.l.bf16 %v15
  %v32 = vunpack.c.l.bf16 %v16
  %v33 = vunpack.c.l.bf16 %v17
  %v34 = vunpack.c.l.bf16 %v18
  %v35 = vunpack.c.l.bf16 %v19
  %v36 = vunpack.c.l.bf16 %v20
  %v37 = vunpack.c.l.bf16 %v21
  %v38 = vunpack.c.l.bf16 %v22
  %v39 = vunpack.c.l.bf16 %v23
  %v40 = vunpack.c.l.bf16 %v24
  %v41 = vunpack.c.l.bf16 %v25
  %v42 = vunpack.c.l.bf16 %v26
  %v43 = vunpack.c.l.bf16 %v27
  %v44 = vunpack.c.l.bf16 %v28
  %v45 = vunpack.c.l.bf16 %v29
  %v46 = vld [vmem:[%s1] sm:$0x1]
  %v48 = vperm.slane %v46, 0
  %v50 = vmul.f32 %v30, %v48
  %v51 = vmul.f32 %v31, %v48
  %v52 = vmul.f32 %v32, %v48
  %v53 = vmul.f32 %v33, %v48
  %v54 = vmul.f32 %v34, %v48
  %v55 = vmul.f32 %v35, %v48
  %v56 = vmul.f32 %v36, %v48
  %v57 = vmul.f32 %v37, %v48
  %v58 = vmul.f32 %v38, %v48
  %v59 = vmul.f32 %v39, %v48
  %v60 = vmul.f32 %v40, %v48
  %v61 = vmul.f32 %v41, %v48
  %v62 = vmul.f32 %v42, %v48
  %v63 = vmul.f32 %v43, %v48
  %v64 = vmul.f32 %v44, %v48
  %v65 = vmul.f32 %v45, %v48
  %v66 = vld [vmem:[%s2] sm:$0x1]
  %v68 = vperm.slane %v66, 0
  %v70 = vadd.f32 %v50, %v68
  %v71 = vadd.f32 %v51, %v68
  %v72 = vadd.f32 %v52, %v68
  %v73 = vadd.f32 %v53, %v68
  %v74 = vadd.f32 %v54, %v68
  %v75 = vadd.f32 %v55, %v68
  %v76 = vadd.f32 %v56, %v68
  %v77 = vadd.f32 %v57, %v68
  %v78 = vadd.f32 %v58, %v68
  %v79 = vadd.f32 %v59, %v68
  %v80 = vadd.f32 %v60, %v68
  %v81 = vadd.f32 %v61, %v68
  %v82 = vadd.f32 %v62, %v68
  %v83 = vadd.f32 %v63, %v68
  %v84 = vadd.f32 %v64, %v68
  %v85 = vadd.f32 %v65, %v68
  %v86 = vmax.f32 %v70, 0.0
  %v87 = vmax.f32 %v71, 0.0
  %v88 = vmax.f32 %v72, 0.0
  %v89 = vmax.f32 %v73, 0.0
  %v90 = vmax.f32 %v74, 0.0
  %v91 = vmax.f32 %v75, 0.0
  %v92 = vmax.f32 %v76, 0.0
  %v93 = vmax.f32 %v77, 0.0
  %v94 = vmax.f32 %v78, 0.0
  %v95 = vmax.f32 %v79, 0.0
  %v96 = vmax.f32 %v80, 0.0
  %v97 = vmax.f32 %v81, 0.0
  %v98 = vmax.f32 %v82, 0.0
  %v99 = vmax.f32 %v83, 0.0
  %v100 = vmax.f32 %v84, 0.0
  %v101 = vmax.f32 %v85, 0.0
  %v102 = vpack.c.bf16 %v86, %v86
  %v103 = vpack.c.bf16 %v87, %v87
  %v104 = vpack.c.bf16 %v88, %v88
  %v105 = vpack.c.bf16 %v89, %v89
  %v106 = vpack.c.bf16 %v90, %v90
  %v107 = vpack.c.bf16 %v91, %v91
  %v108 = vpack.c.bf16 %v92, %v92
  %v109 = vpack.c.bf16 %v93, %v93
  %v110 = vpack.c.bf16 %v94, %v94
  %v111 = vpack.c.bf16 %v95, %v95
  %v112 = vpack.c.bf16 %v96, %v96
  %v113 = vpack.c.bf16 %v97, %v97
  %v114 = vpack.c.bf16 %v98, %v98
  %v115 = vpack.c.bf16 %v99, %v99
  %v116 = vpack.c.bf16 %v100, %v100
  %v117 = vpack.c.bf16 %v101, %v101
  %118 = vst [vmem:[%s3] sm:$0xf] %v102
  %119 = vst [vmem:[%s3 + $0x4] sm:$0xf] %v103
  %120 = vst [vmem:[%s3 + $0x8] sm:$0xf] %v104
  %121 = vst [vmem:[%s3 + $0xc] sm:$0xf] %v105
  %122 = vst [vmem:[%s3 + $0x10] sm:$0xf] %v106
  %123 = vst [vmem:[%s3 + $0x14] sm:$0xf] %v107
  %124 = vst [vmem:[%s3 + $0x18] sm:$0xf] %v108
  %125 = vst [vmem:[%s3 + $0x1c] sm:$0xf] %v109
  %126 = vst [vmem:[%s3 + $0x20] sm:$0xf] %v110
  %127 = vst [vmem:[%s3 + $0x24] sm:$0xf] %v111
  %128 = vst [vmem:[%s3 + $0x28] sm:$0xf] %v112
  %129 = vst [vmem:[%s3 + $0x2c] sm:$0xf] %v113
  %130 = vst [vmem:[%s3 + $0x30] sm:$0xf] %v114
  %131 = vst [vmem:[%s3 + $0x34] sm:$0xf] %v115
  %132 = vst [vmem:[%s3 + $0x38] sm:$0xf] %v116
  %133 = vst [vmem:[%s3 + $0x3c] sm:$0xf] %v117
  // Predicated region
  $region14: #{multi_generator_forward.22} parent=0 // pred_check
    _
  $region15: #{multi_generator_forward.22} parent=0 // pred_check_branch
    %135 = sbr.rel (0) target = $region17
  $region16: #{multi_generator_forward.22} parent=0 // pred_region
    _
  $region17: #{multi_generator_forward.22} parent=0 // pred_fallthru
    _
  // Predicated region
  $region18: #{multi_generator_forward.22} parent=0 // pred_check
    _
  $region19: #{multi_generator_forward.22} parent=0 // pred_check_branch
    %137 = sbr.rel (0) target = $region21
  $region20: #{multi_generator_forward.22} parent=0 // pred_region
    _
  $region21: #{multi_generator_forward.22} parent=0 // pred_fallthru
    _

// kernel: multi_generator_forward.24
$region0: #{multi_generator_forward.24}
  #allocation0 [shape = 'u32[]', space=smem, size = 0x4, offset = 0x4, fixed_abs, tag = 'smem constant byte address 0x4 - core index']
  #allocation1 [shape = 'u32[72,128]{1,0:T(1,128)}', space=vmem, size = 0x9000, scoped, tag = 'internal scratch']
  %s0 = inlined_call_operand.vmem [shape: bf16[32,128], index: 0, kind: input, shape index: {}]
  %s1 = inlined_call_operand.vmem [shape: f32[1,128], index: 1, kind: input, shape index: {}]
  %s2 = inlined_call_operand.vmem [shape: f32[1,128], index: 2, kind: input, shape index: {}]
  %s3 = inlined_call_operand.vmem [shape: bf16[32,128], index: 3, kind: output, shape index: {}]
  %s4 = sld [smem:[#allocation0]]
  $region22: #{multi_generator_forward.24} parent=0
    _
  %s6 = ssub.s32 1, %s4
  %s7 = scalar_select 0, %s6, %s4
  // Predicated region
  $region2: #{multi_generator_forward.24} parent=0 // pred_check
    _
  $region3: #{multi_generator_forward.24} parent=0 // pred_check_branch
    %9 = sbr.rel (0) target = $region5
  $region4: #{multi_generator_forward.24} parent=0 // pred_region
    _
  $region5: #{multi_generator_forward.24} parent=0 // pred_fallthru
    _
  // Predicated region
  $region6: #{multi_generator_forward.24} parent=0 // pred_check
    _
  $region7: #{multi_generator_forward.24} parent=0 // pred_check_branch
    %11 = sbr.rel (0) target = $region9
  $region8: #{multi_generator_forward.24} parent=0 // pred_region
    _
  $region9: #{multi_generator_forward.24} parent=0 // pred_fallthru
    _
  // Predicated region
  $region10: #{multi_generator_forward.24} parent=0 // pred_check
    _
  $region11: #{multi_generator_forward.24} parent=0 // pred_check_branch
    %13 = sbr.rel (0) target = $region13
  $region12: #{multi_generator_forward.24} parent=0 // pred_region
    _
  $region13: #{multi_generator_forward.24} parent=0 // pred_fallthru
    _
  %v14 = vld [vmem:[%s0] sm:$0xf]
  %v15 = vld [vmem:[%s0 + $0x4] sm:$0xf]
  %v16 = vld [vmem:[%s0 + $0x8] sm:$0xf]
  %v17 = vld [vmem:[%s0 + $0xc] sm:$0xf]
  %v18 = vunpack.c.l.bf16 %v14
  %v19 = vunpack.c.l.bf16 %v15
  %v20 = vunpack.c.l.bf16 %v16
  %v21 = vunpack.c.l.bf16 %v17
  %v22 = vld [vmem:[%s1] sm:$0x1]
  %v24 = vperm.slane %v22, 0
  %v26 = vmul.f32 %v18, %v24
  %v27 = vmul.f32 %v19, %v24
  %v28 = vmul.f32 %v20, %v24
  %v29 = vmul.f32 %v21, %v24
  %v30 = vld [vmem:[%s2] sm:$0x1]
  %v32 = vperm.slane %v30, 0
  %v34 = vadd.f32 %v26, %v32
  %v35 = vadd.f32 %v27, %v32
  %v36 = vadd.f32 %v28, %v32
  %v37 = vadd.f32 %v29, %v32
  %v38 = vmax.f32 %v34, 0.0
  %v39 = vmax.f32 %v35, 0.0
  %v40 = vmax.f32 %v36, 0.0
  %v41 = vmax.f32 %v37, 0.0
  %v42 = vpack.c.bf16 %v38, %v38
  %v43 = vpack.c.bf16 %v39, %v39
  %v44 = vpack.c.bf16 %v40, %v40
  %v45 = vpack.c.bf16 %v41, %v41
  %46 = vst [vmem:[%s3] sm:$0xf] %v42
  %47 = vst [vmem:[%s3 + $0x4] sm:$0xf] %v43
  %48 = vst [vmem:[%s3 + $0x8] sm:$0xf] %v44
  %49 = vst [vmem:[%s3 + $0xc] sm:$0xf] %v45
  // Predicated region
  $region14: #{multi_generator_forward.24} parent=0 // pred_check
    _
  $region15: #{multi_generator_forward.24} parent=0 // pred_check_branch
    %51 = sbr.rel (0) target = $region17
  $region16: #{multi_generator_forward.24} parent=0 // pred_region
    _
  $region17: #{multi_generator_forward.24} parent=0 // pred_fallthru
    _
  // Predicated region
  $region18: #{multi_generator_forward.24} parent=0 // pred_check
    _
  $region19: #{multi_generator_forward.24} parent=0 // pred_check_branch
    %53 = sbr.rel (0) target = $region21
  $region20: #{multi_generator_forward.24} parent=0 // pred_region
    _
  $region21: #{multi_generator_forward.24} parent=0 // pred_fallthru
    _

// kernel: multi_generator_forward.23
$region0: #{multi_generator_forward.23}
  #allocation0 [shape = 'u32[]', space=smem, size = 0x4, offset = 0x4, fixed_abs, tag = 'smem constant byte address 0x4 - core index']
  #allocation1 [shape = 'u32[72,128]{1,0:T(1,128)}', space=vmem, size = 0x9000, scoped, tag = 'internal scratch']
  %s0 = inlined_call_operand.vmem [shape: bf16[32,256], index: 0, kind: input, shape index: {}]
  %s1 = inlined_call_operand.vmem [shape: bf16[256,128], index: 1, kind: input, shape index: {}]
  %s2 = inlined_call_operand.vmem [shape: bf16[32,128], index: 2, kind: output, shape index: {0}]
  %s3 = inlined_call_operand.vmem [shape: f32[8,128], index: 3, kind: output, shape index: {1}]
  %s4 = inlined_call_operand.vmem [shape: f32[8,128], index: 4, kind: output, shape index: {2}]
  %5 = xla_tuple %s2, %s3, %s4
  %s6 = sld [smem:[#allocation0]]
  $region34: #{multi_generator_forward.23} parent=0
    _
  %s8 = ssub.s32 1, %s6
  %s9 = scalar_select 0, %s8, %s6
  // Predicated region
  $region2: #{multi_generator_forward.23} parent=0 // pred_check
    _
  $region3: #{multi_generator_forward.23} parent=0 // pred_check_branch
    %11 = sbr.rel (0) target = $region5
  $region4: #{multi_generator_forward.23} parent=0 // pred_region
    _
  $region5: #{multi_generator_forward.23} parent=0 // pred_fallthru
    _
  // Predicated region
  $region6: #{multi_generator_forward.23} parent=0 // pred_check
    _
  $region7: #{multi_generator_forward.23} parent=0 // pred_check_branch
    %13 = sbr.rel (0) target = $region9
  $region8: #{multi_generator_forward.23} parent=0 // pred_region
    _
  $region9: #{multi_generator_forward.23} parent=0 // pred_fallthru
    _
  %v14 = vld [vmem:[%s0] sm:$0xff]
  %v15 = vld [vmem:[%s0 + $0x8] sm:$0xff]
  %v16 = vld [vmem:[%s0 + $0x10] sm:$0xff]
  %v17 = vld [vmem:[%s0 + $0x18] sm:$0xff]
  %v18 = vld [vmem:[%s1] sm:$0xf]
  %v19 = vld [vmem:[%s1 + $0x4] sm:$0xf]
  %v20 = vld [vmem:[%s1 + $0x8] sm:$0xf]
  %v21 = vld [vmem:[%s1 + $0xc] sm:$0xf]
  %v22 = vld [vmem:[%s1 + $0x10] sm:$0xf]
  %v23 = vld [vmem:[%s1 + $0x14] sm:$0xf]
  %v24 = vld [vmem:[%s1 + $0x18] sm:$0xf]
  %v25 = vld [vmem:[%s1 + $0x1c] sm:$0xf]
  %v26 = vld [vmem:[%s1 + $0x20] sm:$0xf]
  %v27 = vld [vmem:[%s1 + $0x24] sm:$0xf]
  %v28 = vld [vmem:[%s1 + $0x28] sm:$0xf]
  %v29 = vld [vmem:[%s1 + $0x2c] sm:$0xf]
  %v30 = vld [vmem:[%s1 + $0x30] sm:$0xf]
  %v31 = vld [vmem:[%s1 + $0x34] sm:$0xf]
  %v32 = vld [vmem:[%s1 + $0x38] sm:$0xf]
  %v33 = vld [vmem:[%s1 + $0x3c] sm:$0xf]
  %v34 = vld [vmem:[%s1 + $0x40] sm:$0xf]
  %v35 = vld [vmem:[%s1 + $0x44] sm:$0xf]
  %v36 = vld [vmem:[%s1 + $0x48] sm:$0xf]
  %v37 = vld [vmem:[%s1 + $0x4c] sm:$0xf]
  %v38 = vld [vmem:[%s1 + $0x50] sm:$0xf]
  %v39 = vld [vmem:[%s1 + $0x54] sm:$0xf]
  %v40 = vld [vmem:[%s1 + $0x58] sm:$0xf]
  %v41 = vld [vmem:[%s1 + $0x5c] sm:$0xf]
  %v42 = vld [vmem:[%s1 + $0x60] sm:$0xf]
  %v43 = vld [vmem:[%s1 + $0x64] sm:$0xf]
  %v44 = vld [vmem:[%s1 + $0x68] sm:$0xf]
  %v45 = vld [vmem:[%s1 + $0x6c] sm:$0xf]
  %v46 = vld [vmem:[%s1 + $0x70] sm:$0xf]
  %v47 = vld [vmem:[%s1 + $0x74] sm:$0xf]
  %v48 = vld [vmem:[%s1 + $0x78] sm:$0xf]
  %v49 = vld [vmem:[%s1 + $0x7c] sm:$0xf]
  %v54 = vunpack.c.l.b16 %v14
  %v55 = vunpack.c.h.b16 %v14
  %v56 = vunpack.c.l.b16 %v15
  %v57 = vunpack.c.h.b16 %v15
  %v58 = vunpack.c.l.b16 %v16
  %v59 = vunpack.c.h.b16 %v16
  %v60 = vunpack.c.l.b16 %v17
  %v61 = vunpack.c.h.b16 %v17
  %v62 = vpack.c.b16 %v56, %v54
  %v63 = vpack.c.b16 %v57, %v55
  %v64 = vpack.c.b16 %v60, %v58
  %v65 = vpack.c.b16 %v61, %v59
  %v102 = vunpack.c.l.b16 %v18
  %v103 = vunpack.c.l.b16 %v19
  %v104 = vunpack.c.l.b16 %v20
  %v105 = vunpack.c.l.b16 %v21
  %v106 = vunpack.c.l.b16 %v22
  %v107 = vunpack.c.l.b16 %v23
  %v108 = vunpack.c.l.b16 %v24
  %v109 = vunpack.c.l.b16 %v25
  %v110 = vunpack.c.l.b16 %v26
  %v111 = vunpack.c.l.b16 %v27
  %v112 = vunpack.c.l.b16 %v28
  %v113 = vunpack.c.l.b16 %v29
  %v114 = vunpack.c.l.b16 %v30
  %v115 = vunpack.c.l.b16 %v31
  %v116 = vunpack.c.l.b16 %v32
  %v117 = vunpack.c.l.b16 %v33
  %v118 = vunpack.c.l.b16 %v34
  %v119 = vunpack.c.l.b16 %v35
  %v120 = vunpack.c.l.b16 %v36
  %v121 = vunpack.c.l.b16 %v37
  %v122 = vunpack.c.l.b16 %v38
  %v123 = vunpack.c.l.b16 %v39
  %v124 = vunpack.c.l.b16 %v40
  %v125 = vunpack.c.l.b16 %v41
  %v126 = vunpack.c.l.b16 %v42
  %v127 = vunpack.c.l.b16 %v43
  %v128 = vunpack.c.l.b16 %v44
  %v129 = vunpack.c.l.b16 %v45
  %v130 = vunpack.c.l.b16 %v46
  %v131 = vunpack.c.l.b16 %v47
  %v132 = vunpack.c.l.b16 %v48
  %v133 = vunpack.c.l.b16 %v49
  %v134 = vpack.c.b16 %v103, %v102
  %v135 = vpack.c.b16 %v105, %v104
  %v136 = vpack.c.b16 %v107, %v106
  %v137 = vpack.c.b16 %v109, %v108
  %v138 = vpack.c.b16 %v111, %v110
  %v139 = vpack.c.b16 %v113, %v112
  %v140 = vpack.c.b16 %v115, %v114
  %v141 = vpack.c.b16 %v117, %v116
  %v142 = vpack.c.b16 %v119, %v118
  %v143 = vpack.c.b16 %v121, %v120
  %v144 = vpack.c.b16 %v123, %v122
  %v145 = vpack.c.b16 %v125, %v124
  %v146 = vpack.c.b16 %v127, %v126
  %v147 = vpack.c.b16 %v129, %v128
  %v148 = vpack.c.b16 %v131, %v130
  %v149 = vpack.c.b16 %v133, %v132
  %166 = vmatpush.bf16.msra.mxu0 %v141
  %167 = vmatpush.bf16.msra.mxu0 %v140
  %168 = vmatpush.bf16.msra.mxu0 %v139
  %169 = vmatpush.bf16.msra.mxu0 %v138
  %170 = vmatpush.bf16.msra.mxu0 %v137
  %171 = vmatpush.bf16.msra.mxu0 %v136
  %172 = vmatpush.bf16.msra.mxu0 %v135
  %173 = vmatpush.bf16.msra.mxu0 %v134
  %174 = vmatmul.bf16.gmra.mxu0 %v62
  %v175 = vpop.f32.mrf.mxu0
  %v176 = vadd.f32 0.0, %v175
  %v177 = vpop.f32.mrf.mxu0
  %v178 = vadd.f32 0.0, %v177
  %179 = vmatmul.bf16.gmra.mxu0 %v64
  %v180 = vpop.f32.mrf.mxu0
  %v181 = vadd.f32 0.0, %v180
  %v182 = vpop.f32.mrf.mxu0
  %v183 = vadd.f32 0.0, %v182
  %184 = vdwg.mxu0
  %185 = vmatpush.bf16.msra.mxu0 %v149
  %186 = vmatpush.bf16.msra.mxu0 %v148
  %187 = vmatpush.bf16.msra.mxu0 %v147
  %188 = vmatpush.bf16.msra.mxu0 %v146
  %189 = vmatpush.bf16.msra.mxu0 %v145
  %190 = vmatpush.bf16.msra.mxu0 %v144
  %191 = vmatpush.bf16.msra.mxu0 %v143
  %192 = vmatpush.bf16.msra.mxu0 %v142
  %193 = vmatmul.bf16.gmra.mxu0 %v63
  %v194 = vpop.f32.mrf.mxu0
  %v195 = vadd.f32 %v176, %v194
  %v196 = vpop.f32.mrf.mxu0
  %v197 = vadd.f32 %v178, %v196
  %198 = vmatmul.bf16.gmra.mxu0 %v65
  %v199 = vpop.f32.mrf.mxu0
  %v200 = vadd.f32 %v181, %v199
  %v201 = vpop.f32.mrf.mxu0
  %v202 = vadd.f32 %v183, %v201
  %203 = vdwg.mxu0
  %v204 = vadd.f32 %v195, %v197
  %v205 = vadd.f32 %v204, %v200
  %v206 = vadd.f32 %v205, %v202
  %v207 = vrot.slane %v206, 4
  %v208 = vadd.f32 %v206, %v207
  %v209 = vrot.slane %v208, 2
  %v210 = vadd.f32 %v208, %v209
  %v211 = vrot.slane %v210, 1
  %v212 = vadd.f32 %v210, %v211
  %v213 = vmul.f32 %v195, %v195
  %v214 = vmul.f32 %v197, %v197
  %v215 = vmul.f32 %v200, %v200
  %v216 = vmul.f32 %v202, %v202
  %v217 = vadd.f32 %v213, %v214
  %v218 = vadd.f32 %v217, %v215
  %v219 = vadd.f32 %v218, %v216
  %v220 = vrot.slane %v219, 4
  %v221 = vadd.f32 %v219, %v220
  %v222 = vrot.slane %v221, 2
  %v223 = vadd.f32 %v221, %v222
  %v224 = vrot.slane %v223, 1
  %v225 = vadd.f32 %v223, %v224
  %226 = vst [vmem:[%s3] sm:$0xff] %v212
  %227 = vst [vmem:[%s4] sm:$0xff] %v225
  %v228 = vpack.c.bf16 %v195, %v195
  %v229 = vpack.c.bf16 %v197, %v197
  %v230 = vpack.c.bf16 %v200, %v200
  %v231 = vpack.c.bf16 %v202, %v202
  %232 = vst [vmem:[%s2] sm:$0xf] %v228
  %233 = vst [vmem:[%s2 + $0x4] sm:$0xf] %v229
  %234 = vst [vmem:[%s2 + $0x8] sm:$0xf] %v230
  %235 = vst [vmem:[%s2 + $0xc] sm:$0xf] %v231
  // Predicated region
  $region10: #{multi_generator_forward.23} parent=0 // pred_check
    _
  $region11: #{multi_generator_forward.23} parent=0 // pred_check_branch
    %237 = sbr.rel (0) target = $region13
  $region12: #{multi_generator_forward.23} parent=0 // pred_region
    _
  $region13: #{multi_generator_forward.23} parent=0 // pred_fallthru
    _
  // Predicated region
  $region14: #{multi_generator_forward.23} parent=0 // pred_check
    _
  $region15: #{multi_generator_forward.23} parent=0 // pred_check_branch
    %239 = sbr.rel (0) target = $region17
  $region16: #{multi_generator_forward.23} parent=0 // pred_region
    _
  $region17: #{multi_generator_forward.23} parent=0 // pred_fallthru
    _
  // Predicated region
  $region18: #{multi_generator_forward.23} parent=0 // pred_check
    _
  $region19: #{multi_generator_forward.23} parent=0 // pred_check_branch
    %241 = sbr.rel (0) target = $region21
  $region20: #{multi_generator_forward.23} parent=0 // pred_region
    _
  $region21: #{multi_generator_forward.23} parent=0 // pred_fallthru
    _
  // Predicated region
  $region22: #{multi_generator_forward.23} parent=0 // pred_check
    _
  $region23: #{multi_generator_forward.23} parent=0 // pred_check_branch
    %243 = sbr.rel (0) target = $region25
  $region24: #{multi_generator_forward.23} parent=0 // pred_region
    _
  $region25: #{multi_generator_forward.23} parent=0 // pred_fallthru
    _
  // Predicated region
  $region26: #{multi_generator_forward.23} parent=0 // pred_check
    _
  $region27: #{multi_generator_forward.23} parent=0 // pred_check_branch
    %245 = sbr.rel (0) target = $region29
  $region28: #{multi_generator_forward.23} parent=0 // pred_region
    _
  $region29: #{multi_generator_forward.23} parent=0 // pred_fallthru
    _
  // Predicated region
  $region30: #{multi_generator_forward.23} parent=0 // pred_check
    _
  $region31: #{multi_generator_forward.23} parent=0 // pred_check_branch
    %247 = sbr.rel (0) target = $region33
  $region32: #{multi_generator_forward.23} parent=0 // pred_region
    _
  $region33: #{multi_generator_forward.23} parent=0 // pred_fallthru
    _

// kernel: multi_generator_forward.28
$region0: #{multi_generator_forward.28}
  #allocation0 [shape = 'u32[]', space=smem, size = 0x4, offset = 0x4, fixed_abs, tag = 'smem constant byte address 0x4 - core index']
  #allocation1 [shape = 'u32[72,128]{1,0:T(1,128)}', space=vmem, size = 0x9000, scoped, tag = 'internal scratch']
  %s0 = inlined_call_operand.vmem [shape: bf16[32,128], index: 0, kind: input, shape index: {}]
  %s1 = inlined_call_operand.vmem [shape: f32[1,128], index: 1, kind: input, shape index: {}]
  %s2 = inlined_call_operand.vmem [shape: f32[1,128], index: 2, kind: input, shape index: {}]
  %s3 = inlined_call_operand.vmem [shape: bf16[32,128], index: 3, kind: input, shape index: {}]
  %s4 = inlined_call_operand.vmem [shape: bf16[32,128], index: 4, kind: output, shape index: {}]
  %s5 = sld [smem:[#allocation0]]
  $region26: #{multi_generator_forward.28} parent=0
    _
  %s7 = ssub.s32 1, %s5
  %s8 = scalar_select 0, %s7, %s5
  // Predicated region
  $region2: #{multi_generator_forward.28} parent=0 // pred_check
    _
  $region3: #{multi_generator_forward.28} parent=0 // pred_check_branch
    %10 = sbr.rel (0) target = $region5
  $region4: #{multi_generator_forward.28} parent=0 // pred_region
    _
  $region5: #{multi_generator_forward.28} parent=0 // pred_fallthru
    _
  // Predicated region
  $region6: #{multi_generator_forward.28} parent=0 // pred_check
    _
  $region7: #{multi_generator_forward.28} parent=0 // pred_check_branch
    %12 = sbr.rel (0) target = $region9
  $region8: #{multi_generator_forward.28} parent=0 // pred_region
    _
  $region9: #{multi_generator_forward.28} parent=0 // pred_fallthru
    _
  // Predicated region
  $region10: #{multi_generator_forward.28} parent=0 // pred_check
    _
  $region11: #{multi_generator_forward.28} parent=0 // pred_check_branch
    %14 = sbr.rel (0) target = $region13
  $region12: #{multi_generator_forward.28} parent=0 // pred_region
    _
  $region13: #{multi_generator_forward.28} parent=0 // pred_fallthru
    _
  // Predicated region
  $region14: #{multi_generator_forward.28} parent=0 // pred_check
    _
  $region15: #{multi_generator_forward.28} parent=0 // pred_check_branch
    %16 = sbr.rel (0) target = $region17
  $region16: #{multi_generator_forward.28} parent=0 // pred_region
    _
  $region17: #{multi_generator_forward.28} parent=0 // pred_fallthru
    _
  %v17 = vld [vmem:[%s0] sm:$0xf]
  %v18 = vld [vmem:[%s0 + $0x4] sm:$0xf]
  %v19 = vld [vmem:[%s0 + $0x8] sm:$0xf]
  %v20 = vld [vmem:[%s0 + $0xc] sm:$0xf]
  %v21 = vunpack.c.l.bf16 %v17
  %v22 = vunpack.c.l.bf16 %v18
  %v23 = vunpack.c.l.bf16 %v19
  %v24 = vunpack.c.l.bf16 %v20
  %v25 = vld [vmem:[%s1] sm:$0x1]
  %v27 = vperm.slane %v25, 0
  %v29 = vmul.f32 %v21, %v27
  %v30 = vmul.f32 %v22, %v27
  %v31 = vmul.f32 %v23, %v27
  %v32 = vmul.f32 %v24, %v27
  %v33 = vld [vmem:[%s2] sm:$0x1]
  %v35 = vperm.slane %v33, 0
  %v37 = vadd.f32 %v29, %v35
  %v38 = vadd.f32 %v30, %v35
  %v39 = vadd.f32 %v31, %v35
  %v40 = vadd.f32 %v32, %v35
  %v41 = vld [vmem:[%s3] sm:$0xf]
  %v42 = vld [vmem:[%s3 + $0x4] sm:$0xf]
  %v43 = vld [vmem:[%s3 + $0x8] sm:$0xf]
  %v44 = vld [vmem:[%s3 + $0xc] sm:$0xf]
  %v45 = vunpack.c.l.bf16 %v41
  %v46 = vunpack.c.l.bf16 %v42
  %v47 = vunpack.c.l.bf16 %v43
  %v48 = vunpack.c.l.bf16 %v44
  %v49 = vadd.f32 %v37, %v45
  %v50 = vadd.f32 %v38, %v46
  %v51 = vadd.f32 %v39, %v47
  %v52 = vadd.f32 %v40, %v48
  %v53 = vpack.c.bf16 %v49, %v49
  %v54 = vpack.c.bf16 %v50, %v50
  %v55 = vpack.c.bf16 %v51, %v51
  %v56 = vpack.c.bf16 %v52, %v52
  %57 = vst [vmem:[%s4] sm:$0xf] %v53
  %58 = vst [vmem:[%s4 + $0x4] sm:$0xf] %v54
  %59 = vst [vmem:[%s4 + $0x8] sm:$0xf] %v55
  %60 = vst [vmem:[%s4 + $0xc] sm:$0xf] %v56
  // Predicated region
  $region18: #{multi_generator_forward.28} parent=0 // pred_check
    _
  $region19: #{multi_generator_forward.28} parent=0 // pred_check_branch
    %62 = sbr.rel (0) target = $region21
  $region20: #{multi_generator_forward.28} parent=0 // pred_region
    _
  $region21: #{multi_generator_forward.28} parent=0 // pred_fallthru
    _
  // Predicated region
  $region22: #{multi_generator_forward.28} parent=0 // pred_check
    _
  $region23: #{multi_generator_forward.28} parent=0 // pred_check_branch
    %64 = sbr.rel (0) target = $region25
  $region24: #{multi_generator_forward.28} parent=0 // pred_region
    _
  $region25: #{multi_generator_forward.28} parent=0 // pred_fallthru
    _

// kernel: multi_generator_forward.25
$region0: #{multi_generator_forward.25}
  #allocation0 [shape = 'u32[]', space=smem, size = 0x4, offset = 0x4, fixed_abs, tag = 'smem constant byte address 0x4 - core index']
  #allocation1 [shape = 'u32[72,128]{1,0:T(1,128)}', space=vmem, size = 0x9000, scoped, tag = 'internal scratch']
  %s0 = inlined_call_operand.vmem [shape: bf16[32,384], index: 0, kind: input, shape index: {}]
  %s1 = inlined_call_operand.vmem [shape: bf16[384,128], index: 1, kind: input, shape index: {}]
  %s2 = inlined_call_operand.vmem [shape: bf16[32,128], index: 2, kind: output, shape index: {0}]
  %s3 = inlined_call_operand.vmem [shape: f32[8,128], index: 3, kind: output, shape index: {1}]
  %s4 = inlined_call_operand.vmem [shape: f32[8,128], index: 4, kind: output, shape index: {2}]
  %5 = xla_tuple %s2, %s3, %s4
  %s6 = sld [smem:[#allocation0]]
  $region34: #{multi_generator_forward.25} parent=0
    _
  %s8 = ssub.s32 1, %s6
  %s9 = scalar_select 0, %s8, %s6
  // Predicated region
  $region2: #{multi_generator_forward.25} parent=0 // pred_check
    _
  $region3: #{multi_generator_forward.25} parent=0 // pred_check_branch
    %11 = sbr.rel (0) target = $region5
  $region4: #{multi_generator_forward.25} parent=0 // pred_region
    _
  $region5: #{multi_generator_forward.25} parent=0 // pred_fallthru
    _
  // Predicated region
  $region6: #{multi_generator_forward.25} parent=0 // pred_check
    _
  $region7: #{multi_generator_forward.25} parent=0 // pred_check_branch
    %13 = sbr.rel (0) target = $region9
  $region8: #{multi_generator_forward.25} parent=0 // pred_region
    _
  $region9: #{multi_generator_forward.25} parent=0 // pred_fallthru
    _
  %v14 = vld [vmem:[%s0] sm:$0xff]
  %v15 = vld [vmem:[%s0 + $0x8] sm:$0xf]
  %v16 = vld [vmem:[%s0 + $0xc] sm:$0xff]
  %v17 = vld [vmem:[%s0 + $0x14] sm:$0xf]
  %v18 = vld [vmem:[%s0 + $0x18] sm:$0xff]
  %v19 = vld [vmem:[%s0 + $0x20] sm:$0xf]
  %v20 = vld [vmem:[%s0 + $0x24] sm:$0xff]
  %v21 = vld [vmem:[%s0 + $0x2c] sm:$0xf]
  %v22 = vld [vmem:[%s1] sm:$0xf]
  %v23 = vld [vmem:[%s1 + $0x4] sm:$0xf]
  %v24 = vld [vmem:[%s1 + $0x8] sm:$0xf]
  %v25 = vld [vmem:[%s1 + $0xc] sm:$0xf]
  %v26 = vld [vmem:[%s1 + $0x10] sm:$0xf]
  %v27 = vld [vmem:[%s1 + $0x14] sm:$0xf]
  %v28 = vld [vmem:[%s1 + $0x18] sm:$0xf]
  %v29 = vld [vmem:[%s1 + $0x1c] sm:$0xf]
  %v30 = vld [vmem:[%s1 + $0x20] sm:$0xf]
  %v31 = vld [vmem:[%s1 + $0x24] sm:$0xf]
  %v32 = vld [vmem:[%s1 + $0x28] sm:$0xf]
  %v33 = vld [vmem:[%s1 + $0x2c] sm:$0xf]
  %v34 = vld [vmem:[%s1 + $0x30] sm:$0xf]
  %v35 = vld [vmem:[%s1 + $0x34] sm:$0xf]
  %v36 = vld [vmem:[%s1 + $0x38] sm:$0xf]
  %v37 = vld [vmem:[%s1 + $0x3c] sm:$0xf]
  %v38 = vld [vmem:[%s1 + $0x40] sm:$0xf]
  %v39 = vld [vmem:[%s1 + $0x44] sm:$0xf]
  %v40 = vld [vmem:[%s1 + $0x48] sm:$0xf]
  %v41 = vld [vmem:[%s1 + $0x4c] sm:$0xf]
  %v42 = vld [vmem:[%s1 + $0x50] sm:$0xf]
  %v43 = vld [vmem:[%s1 + $0x54] sm:$0xf]
  %v44 = vld [vmem:[%s1 + $0x58] sm:$0xf]
  %v45 = vld [vmem:[%s1 + $0x5c] sm:$0xf]
  %v46 = vld [vmem:[%s1 + $0x60] sm:$0xf]
  %v47 = vld [vmem:[%s1 + $0x64] sm:$0xf]
  %v48 = vld [vmem:[%s1 + $0x68] sm:$0xf]
  %v49 = vld [vmem:[%s1 + $0x6c] sm:$0xf]
  %v50 = vld [vmem:[%s1 + $0x70] sm:$0xf]
  %v51 = vld [vmem:[%s1 + $0x74] sm:$0xf]
  %v52 = vld [vmem:[%s1 + $0x78] sm:$0xf]
  %v53 = vld [vmem:[%s1 + $0x7c] sm:$0xf]
  %v54 = vld [vmem:[%s1 + $0x80] sm:$0xf]
  %v55 = vld [vmem:[%s1 + $0x84] sm:$0xf]
  %v56 = vld [vmem:[%s1 + $0x88] sm:$0xf]
  %v57 = vld [vmem:[%s1 + $0x8c] sm:$0xf]
  %v58 = vld [vmem:[%s1 + $0x90] sm:$0xf]
  %v59 = vld [vmem:[%s1 + $0x94] sm:$0xf]
  %v60 = vld [vmem:[%s1 + $0x98] sm:$0xf]
  %v61 = vld [vmem:[%s1 + $0x9c] sm:$0xf]
  %v62 = vld [vmem:[%s1 + $0xa0] sm:$0xf]
  %v63 = vld [vmem:[%s1 + $0xa4] sm:$0xf]
  %v64 = vld [vmem:[%s1 + $0xa8] sm:$0xf]
  %v65 = vld [vmem:[%s1 + $0xac] sm:$0xf]
  %v66 = vld [vmem:[%s1 + $0xb0] sm:$0xf]
  %v67 = vld [vmem:[%s1 + $0xb4] sm:$0xf]
  %v68 = vld [vmem:[%s1 + $0xb8] sm:$0xf]
  %v69 = vld [vmem:[%s1 + $0xbc] sm:$0xf]
  %v78 = vunpack.c.l.b16 %v14
  %v79 = vunpack.c.h.b16 %v14
  %v80 = vunpack.c.l.b16 %v15
  %v81 = vunpack.c.l.b16 %v16
  %v82 = vunpack.c.h.b16 %v16
  %v83 = vunpack.c.l.b16 %v17
  %v84 = vunpack.c.l.b16 %v18
  %v85 = vunpack.c.h.b16 %v18
  %v86 = vunpack.c.l.b16 %v19
  %v87 = vunpack.c.l.b16 %v20
  %v88 = vunpack.c.h.b16 %v20
  %v89 = vunpack.c.l.b16 %v21
  %v90 = vpack.c.b16 %v81, %v78
  %v91 = vpack.c.b16 %v82, %v79
  %v92 = vpack.c.b16 %v83, %v80
  %v93 = vpack.c.b16 %v87, %v84
  %v94 = vpack.c.b16 %v88, %v85
  %v95 = vpack.c.b16 %v89, %v86
  %v150 = vunpack.c.l.b16 %v22
  %v151 = vunpack.c.l.b16 %v23
  %v152 = vunpack.c.l.b16 %v24
  %v153 = vunpack.c.l.b16 %v25
  %v154 = vunpack.c.l.b16 %v26
  %v155 = vunpack.c.l.b16 %v27
  %v156 = vunpack.c.l.b16 %v28
  %v157 = vunpack.c.l.b16 %v29
  %v158 = vunpack.c.l.b16 %v30
  %v159 = vunpack.c.l.b16 %v31
  %v160 = vunpack.c.l.b16 %v32
  %v161 = vunpack.c.l.b16 %v33
  %v162 = vunpack.c.l.b16 %v34
  %v163 = vunpack.c.l.b16 %v35
  %v164 = vunpack.c.l.b16 %v36
  %v165 = vunpack.c.l.b16 %v37
  %v166 = vunpack.c.l.b16 %v38
  %v167 = vunpack.c.l.b16 %v39
  %v168 = vunpack.c.l.b16 %v40
  %v169 = vunpack.c.l.b16 %v41
  %v170 = vunpack.c.l.b16 %v42
  %v171 = vunpack.c.l.b16 %v43
  %v172 = vunpack.c.l.b16 %v44
  %v173 = vunpack.c.l.b16 %v45
  %v174 = vunpack.c.l.b16 %v46
  %v175 = vunpack.c.l.b16 %v47
  %v176 = vunpack.c.l.b16 %v48
  %v177 = vunpack.c.l.b16 %v49
  %v178 = vunpack.c.l.b16 %v50
  %v179 = vunpack.c.l.b16 %v51
  %v180 = vunpack.c.l.b16 %v52
  %v181 = vunpack.c.l.b16 %v53
  %v182 = vunpack.c.l.b16 %v54
  %v183 = vunpack.c.l.b16 %v55
  %v184 = vunpack.c.l.b16 %v56
  %v185 = vunpack.c.l.b16 %v57
  %v186 = vunpack.c.l.b16 %v58
  %v187 = vunpack.c.l.b16 %v59
  %v188 = vunpack.c.l.b16 %v60
  %v189 = vunpack.c.l.b16 %v61
  %v190 = vunpack.c.l.b16 %v62
  %v191 = vunpack.c.l.b16 %v63
  %v192 = vunpack.c.l.b16 %v64
  %v193 = vunpack.c.l.b16 %v65
  %v194 = vunpack.c.l.b16 %v66
  %v195 = vunpack.c.l.b16 %v67
  %v196 = vunpack.c.l.b16 %v68
  %v197 = vunpack.c.l.b16 %v69
  %v198 = vpack.c.b16 %v151, %v150
  %v199 = vpack.c.b16 %v153, %v152
  %v200 = vpack.c.b16 %v155, %v154
  %v201 = vpack.c.b16 %v157, %v156
  %v202 = vpack.c.b16 %v159, %v158
  %v203 = vpack.c.b16 %v161, %v160
  %v204 = vpack.c.b16 %v163, %v162
  %v205 = vpack.c.b16 %v165, %v164
  %v206 = vpack.c.b16 %v167, %v166
  %v207 = vpack.c.b16 %v169, %v168
  %v208 = vpack.c.b16 %v171, %v170
  %v209 = vpack.c.b16 %v173, %v172
  %v210 = vpack.c.b16 %v175, %v174
  %v211 = vpack.c.b16 %v177, %v176
  %v212 = vpack.c.b16 %v179, %v178
  %v213 = vpack.c.b16 %v181, %v180
  %v214 = vpack.c.b16 %v183, %v182
  %v215 = vpack.c.b16 %v185, %v184
  %v216 = vpack.c.b16 %v187, %v186
  %v217 = vpack.c.b16 %v189, %v188
  %v218 = vpack.c.b16 %v191, %v190
  %v219 = vpack.c.b16 %v193, %v192
  %v220 = vpack.c.b16 %v195, %v194
  %v221 = vpack.c.b16 %v197, %v196
  %246 = vmatpush.bf16.msra.mxu0 %v205
  %247 = vmatpush.bf16.msra.mxu0 %v204
  %248 = vmatpush.bf16.msra.mxu0 %v203
  %249 = vmatpush.bf16.msra.mxu0 %v202
  %250 = vmatpush.bf16.msra.mxu0 %v201
  %251 = vmatpush.bf16.msra.mxu0 %v200
  %252 = vmatpush.bf16.msra.mxu0 %v199
  %253 = vmatpush.bf16.msra.mxu0 %v198
  %254 = vmatmul.bf16.gmra.mxu0 %v90
  %v255 = vpop.f32.mrf.mxu0
  %v256 = vadd.f32 0.0, %v255
  %v257 = vpop.f32.mrf.mxu0
  %v258 = vadd.f32 0.0, %v257
  %259 = vmatmul.bf16.gmra.mxu0 %v93
  %v260 = vpop.f32.mrf.mxu0
  %v261 = vadd.f32 0.0, %v260
  %v262 = vpop.f32.mrf.mxu0
  %v263 = vadd.f32 0.0, %v262
  %264 = vdwg.mxu0
  %265 = vmatpush.bf16.msra.mxu0 %v213
  %266 = vmatpush.bf16.msra.mxu0 %v212
  %267 = vmatpush.bf16.msra.mxu0 %v211
  %268 = vmatpush.bf16.msra.mxu0 %v210
  %269 = vmatpush.bf16.msra.mxu0 %v209
  %270 = vmatpush.bf16.msra.mxu0 %v208
  %271 = vmatpush.bf16.msra.mxu0 %v207
  %272 = vmatpush.bf16.msra.mxu0 %v206
  %273 = vmatmul.bf16.gmra.mxu0 %v91
  %v274 = vpop.f32.mrf.mxu0
  %v275 = vadd.f32 %v256, %v274
  %v276 = vpop.f32.mrf.mxu0
  %v277 = vadd.f32 %v258, %v276
  %278 = vmatmul.bf16.gmra.mxu0 %v94
  %v279 = vpop.f32.mrf.mxu0
  %v280 = vadd.f32 %v261, %v279
  %v281 = vpop.f32.mrf.mxu0
  %v282 = vadd.f32 %v263, %v281
  %283 = vdwg.mxu0
  %284 = vmatpush.bf16.msra.mxu0 %v221
  %285 = vmatpush.bf16.msra.mxu0 %v220
  %286 = vmatpush.bf16.msra.mxu0 %v219
  %287 = vmatpush.bf16.msra.mxu0 %v218
  %288 = vmatpush.bf16.msra.mxu0 %v217
  %289 = vmatpush.bf16.msra.mxu0 %v216
  %290 = vmatpush.bf16.msra.mxu0 %v215
  %291 = vmatpush.bf16.msra.mxu0 %v214
  %292 = vmatmul.bf16.gmra.mxu0 %v92
  %v293 = vpop.f32.mrf.mxu0
  %v294 = vadd.f32 %v275, %v293
  %v295 = vpop.f32.mrf.mxu0
  %v296 = vadd.f32 %v277, %v295
  %297 = vmatmul.bf16.gmra.mxu0 %v95
  %v298 = vpop.f32.mrf.mxu0
  %v299 = vadd.f32 %v280, %v298
  %v300 = vpop.f32.mrf.mxu0
  %v301 = vadd.f32 %v282, %v300
  %302 = vdwg.mxu0
  %v303 = vadd.f32 %v294, %v296
  %v304 = vadd.f32 %v303, %v299
  %v305 = vadd.f32 %v304, %v301
  %v306 = vrot.slane %v305, 4
  %v307 = vadd.f32 %v305, %v306
  %v308 = vrot.slane %v307, 2
  %v309 = vadd.f32 %v307, %v308
  %v310 = vrot.slane %v309, 1
  %v311 = vadd.f32 %v309, %v310
  %v312 = vmul.f32 %v294, %v294
  %v313 = vmul.f32 %v296, %v296
  %v314 = vmul.f32 %v299, %v299
  %v315 = vmul.f32 %v301, %v301
  %v316 = vadd.f32 %v312, %v313
  %v317 = vadd.f32 %v316, %v314
  %v318 = vadd.f32 %v317, %v315
  %v319 = vrot.slane %v318, 4
  %v320 = vadd.f32 %v318, %v319
  %v321 = vrot.slane %v320, 2
  %v322 = vadd.f32 %v320, %v321
  %v323 = vrot.slane %v322, 1
  %v324 = vadd.f32 %v322, %v323
  %325 = vst [vmem:[%s3] sm:$0xff] %v311
  %326 = vst [vmem:[%s4] sm:$0xff] %v324
  %v327 = vpack.c.bf16 %v294, %v294
  %v328 = vpack.c.bf16 %v296, %v296
  %v329 = vpack.c.bf16 %v299, %v299
  %v330 = vpack.c.bf16 %v301, %v301
  %331 = vst [vmem:[%s2] sm:$0xf] %v327
  %332 = vst [vmem:[%s2 + $0x4] sm:$0xf] %v328
  %333 = vst [vmem:[%s2 + $0x8] sm:$0xf] %v329
  %334 = vst [vmem:[%s2 + $0xc] sm:$0xf] %v330
  // Predicated region
  $region10: #{multi_generator_forward.25} parent=0 // pred_check
    _
  $region11: #{multi_generator_forward.25} parent=0 // pred_check_branch
    %336 = sbr.rel (0) target = $region13
  $region12: #{multi_generator_forward.25} parent=0 // pred_region
    _
  $region13: #{multi_generator_forward.25} parent=0 // pred_fallthru
    _
  // Predicated region
  $region14: #{multi_generator_forward.25} parent=0 // pred_check
    _
  $region15: #{multi_generator_forward.25} parent=0 // pred_check_branch
    %338 = sbr.rel (0) target = $region17
  $region16: #{multi_generator_forward.25} parent=0 // pred_region
    _
  $region17: #{multi_generator_forward.25} parent=0 // pred_fallthru
    _
  // Predicated region
  $region18: #{multi_generator_forward.25} parent=0 // pred_check
    _
  $region19: #{multi_generator_forward.25} parent=0 // pred_check_branch
    %340 = sbr.rel (0) target = $region21
  $region20: #{multi_generator_forward.25} parent=0 // pred_region
    _
  $region21: #{multi_generator_forward.25} parent=0 // pred_fallthru
    _
  // Predicated region
  $region22: #{multi_generator_forward.25} parent=0 // pred_check
    _
  $region23: #{multi_generator_forward.25} parent=0 // pred_check_branch
    %342 = sbr.rel (0) target = $region25
  $region24: #{multi_generator_forward.25} parent=0 // pred_region
    _
  $region25: #{multi_generator_forward.25} parent=0 // pred_fallthru
    _
  // Predicated region
  $region26: #{multi_generator_forward.25} parent=0 // pred_check
    _
  $region27: #{multi_generator_forward.25} parent=0 // pred_check_branch
    %344 = sbr.rel (0) target = $region29
  $region28: #{multi_generator_forward.25} parent=0 // pred_region
    _
  $region29: #{multi_generator_forward.25} parent=0 // pred_fallthru
    _
  // Predicated region
  $region30: #{multi_generator_forward.25} parent=0 // pred_check
    _
  $region31: #{multi_generator_forward.25} parent=0 // pred_check_branch
    %346 = sbr.rel (0) target = $region33
  $region32: #{multi_generator_forward.25} parent=0 // pred_region
    _
  $region33: #{multi_generator_forward.25} parent=0 // pred_fallthru
    _

// kernel: tile.28
$region0: #{tile.28}
  #allocation0 [shape = 's32[1]{0}', space=sflag, size = 0x4, scoped, tag = 'scoped memory for tile.28']
  %s0 = inlined_call_operand.vmem [shape: f32[16], index: 0, kind: input, shape index: {}]
  %s1 = inlined_call_operand.vmem [shape: f32[4,16], index: 1, kind: output, shape index: {}]
  // Predicated region
  $region2: #{tile.28} parent=0 // pred_check
    _
  $region3: #{tile.28} parent=0 // pred_check_branch
    %3 = sbr.rel (0) target = $region5
  $region4: #{tile.28} parent=0 // pred_region
    _
  $region5: #{tile.28} parent=0 // pred_fallthru
    _
  %v4 = vld [vmem:[%s0] ss:$0 sm:$0xff]
  %5 = vst [vmem:[%s1] sm:$0xf] %v4

// kernel: tile.29
$region0: #{tile.29}
  %s0 = inlined_call_operand.vmem [shape: f32[4,16], index: 0, kind: input, shape index: {}]
  %s1 = inlined_call_operand.vmem [shape: f32[64], index: 1, kind: output, shape index: {}]
  $region1: #{tile.29} parent=0
    #allocation0 [shape = 'u8[4096]{0}', space=vmem, size = 0x1000, scoped, tag = 'scoped mem for output reshape']
    #allocation1 [shape = 'u8[4096]{0}', space=vmem, size = 0x1000, scoped, tag = 'scoped mem for input reshape']
    %s3 = ssub.s32 16, 1
    %v4 = vld [vmem:[%s0] sm:%s3]
    %5 = vst [vmem:[#allocation1] sm:%s3] %v4
    %v6 = vld [vmem:[#allocation1] sm:$0x1]
    %vm7 = vcmask 130048
    %8 = vst.msk [vmem:[#allocation0] sm:$0x1] %vm7, %v6
    %s9 = scalar_lea.vmem [#allocation1], 3
    %v10 = vld [vmem:[%s9] sm:$0x1]
    %11 = vrot.lane.b32.xlu0 %v10, 48
    %v12 = vpop.permute.xlu0 %11
    %vm13 = vcmask 523648
    %14 = vst.msk [vmem:[#allocation0] sm:$0x1] %vm13, %v12
    %s15 = scalar_lea.vmem [#allocation1], 2
    %v16 = vld [vmem:[%s15] sm:$0x1]
    %17 = vrot.lane.b32.xlu0 %v16, 32
    %v18 = vpop.permute.xlu0 %17
    %vm19 = vcmask 392448
    %20 = vst.msk [vmem:[#allocation0] sm:$0x1] %vm19, %v18
    %s21 = scalar_lea.vmem [#allocation1], 1
    %v22 = vld [vmem:[%s21] sm:$0x1]
    %23 = vrot.lane.b32.xlu0 %v22, 16
    %v24 = vpop.permute.xlu0 %23
    %vm25 = vcmask 261248
    %26 = vst.msk [vmem:[#allocation0] sm:$0x1] %vm25, %v24
    %s28 = ssub.s32 2, 1
    %v29 = vld [vmem:[#allocation0] sm:%s28]
    %s31 = ssub.s32 2, 1
    %32 = vst [vmem:[%s1] sm:%s31] %v29

// kernel: multi_generator_forward.33
$region0: #{multi_generator_forward.33}
  #allocation0 [shape = 'u32[]', space=smem, size = 0x4, offset = 0x4, fixed_abs, tag = 'smem constant byte address 0x4 - core index']
  #allocation1 [shape = 'u32[72,128]{1,0:T(1,128)}', space=vmem, size = 0x9000, scoped, tag = 'internal scratch']
  %s0 = inlined_call_operand.vmem [shape: bf16[32,128], index: 0, kind: input, shape index: {}]
  %s1 = inlined_call_operand.vmem [shape: bf16[128,128], index: 1, kind: input, shape index: {}]
  %s2 = inlined_call_operand.vmem [shape: bf16[32,128], index: 2, kind: output, shape index: {0}]
  %s3 = inlined_call_operand.vmem [shape: f32[8,128], index: 3, kind: output, shape index: {1}]
  %s4 = inlined_call_operand.vmem [shape: f32[8,128], index: 4, kind: output, shape index: {2}]
  %5 = xla_tuple %s2, %s3, %s4
  %s6 = sld [smem:[#allocation0]]
  $region34: #{multi_generator_forward.33} parent=0
    _
  %s8 = ssub.s32 1, %s6
  %s9 = scalar_select 0, %s8, %s6
  // Predicated region
  $region2: #{multi_generator_forward.33} parent=0 // pred_check
    _
  $region3: #{multi_generator_forward.33} parent=0 // pred_check_branch
    %11 = sbr.rel (0) target = $region5
  $region4: #{multi_generator_forward.33} parent=0 // pred_region
    _
  $region5: #{multi_generator_forward.33} parent=0 // pred_fallthru
    _
  // Predicated region
  $region6: #{multi_generator_forward.33} parent=0 // pred_check
    _
  $region7: #{multi_generator_forward.33} parent=0 // pred_check_branch
    %13 = sbr.rel (0) target = $region9
  $region8: #{multi_generator_forward.33} parent=0 // pred_region
    _
  $region9: #{multi_generator_forward.33} parent=0 // pred_fallthru
    _
  %v14 = vld [vmem:[%s0] sm:$0xf]
  %v15 = vld [vmem:[%s0 + $0x4] sm:$0xf]
  %v16 = vld [vmem:[%s0 + $0x8] sm:$0xf]
  %v17 = vld [vmem:[%s0 + $0xc] sm:$0xf]
  %v18 = vld [vmem:[%s1] sm:$0xf]
  %v19 = vld [vmem:[%s1 + $0x4] sm:$0xf]
  %v20 = vld [vmem:[%s1 + $0x8] sm:$0xf]
  %v21 = vld [vmem:[%s1 + $0xc] sm:$0xf]
  %v22 = vld [vmem:[%s1 + $0x10] sm:$0xf]
  %v23 = vld [vmem:[%s1 + $0x14] sm:$0xf]
  %v24 = vld [vmem:[%s1 + $0x18] sm:$0xf]
  %v25 = vld [vmem:[%s1 + $0x1c] sm:$0xf]
  %v26 = vld [vmem:[%s1 + $0x20] sm:$0xf]
  %v27 = vld [vmem:[%s1 + $0x24] sm:$0xf]
  %v28 = vld [vmem:[%s1 + $0x28] sm:$0xf]
  %v29 = vld [vmem:[%s1 + $0x2c] sm:$0xf]
  %v30 = vld [vmem:[%s1 + $0x30] sm:$0xf]
  %v31 = vld [vmem:[%s1 + $0x34] sm:$0xf]
  %v32 = vld [vmem:[%s1 + $0x38] sm:$0xf]
  %v33 = vld [vmem:[%s1 + $0x3c] sm:$0xf]
  %v38 = vunpack.c.l.b16 %v14
  %v39 = vunpack.c.l.b16 %v15
  %v40 = vunpack.c.l.b16 %v16
  %v41 = vunpack.c.l.b16 %v17
  %v42 = vpack.c.b16 %v39, %v38
  %v43 = vpack.c.b16 %v41, %v40
  %v62 = vunpack.c.l.b16 %v18
  %v63 = vunpack.c.l.b16 %v19
  %v64 = vunpack.c.l.b16 %v20
  %v65 = vunpack.c.l.b16 %v21
  %v66 = vunpack.c.l.b16 %v22
  %v67 = vunpack.c.l.b16 %v23
  %v68 = vunpack.c.l.b16 %v24
  %v69 = vunpack.c.l.b16 %v25
  %v70 = vunpack.c.l.b16 %v26
  %v71 = vunpack.c.l.b16 %v27
  %v72 = vunpack.c.l.b16 %v28
  %v73 = vunpack.c.l.b16 %v29
  %v74 = vunpack.c.l.b16 %v30
  %v75 = vunpack.c.l.b16 %v31
  %v76 = vunpack.c.l.b16 %v32
  %v77 = vunpack.c.l.b16 %v33
  %v78 = vpack.c.b16 %v63, %v62
  %v79 = vpack.c.b16 %v65, %v64
  %v80 = vpack.c.b16 %v67, %v66
  %v81 = vpack.c.b16 %v69, %v68
  %v82 = vpack.c.b16 %v71, %v70
  %v83 = vpack.c.b16 %v73, %v72
  %v84 = vpack.c.b16 %v75, %v74
  %v85 = vpack.c.b16 %v77, %v76
  %94 = vmatpush.bf16.msra.mxu0 %v85
  %95 = vmatpush.bf16.msra.mxu0 %v84
  %96 = vmatpush.bf16.msra.mxu0 %v83
  %97 = vmatpush.bf16.msra.mxu0 %v82
  %98 = vmatpush.bf16.msra.mxu0 %v81
  %99 = vmatpush.bf16.msra.mxu0 %v80
  %100 = vmatpush.bf16.msra.mxu0 %v79
  %101 = vmatpush.bf16.msra.mxu0 %v78
  %102 = vmatmul.bf16.gmra.mxu0 %v42
  %v103 = vpop.f32.mrf.mxu0
  %v104 = vadd.f32 0.0, %v103
  %v105 = vpop.f32.mrf.mxu0
  %v106 = vadd.f32 0.0, %v105
  %107 = vmatmul.bf16.gmra.mxu0 %v43
  %v108 = vpop.f32.mrf.mxu0
  %v109 = vadd.f32 0.0, %v108
  %v110 = vpop.f32.mrf.mxu0
  %v111 = vadd.f32 0.0, %v110
  %112 = vdwg.mxu0
  %v113 = vadd.f32 %v104, %v106
  %v114 = vadd.f32 %v113, %v109
  %v115 = vadd.f32 %v114, %v111
  %v116 = vrot.slane %v115, 4
  %v117 = vadd.f32 %v115, %v116
  %v118 = vrot.slane %v117, 2
  %v119 = vadd.f32 %v117, %v118
  %v120 = vrot.slane %v119, 1
  %v121 = vadd.f32 %v119, %v120
  %v122 = vmul.f32 %v104, %v104
  %v123 = vmul.f32 %v106, %v106
  %v124 = vmul.f32 %v109, %v109
  %v125 = vmul.f32 %v111, %v111
  %v126 = vadd.f32 %v122, %v123
  %v127 = vadd.f32 %v126, %v124
  %v128 = vadd.f32 %v127, %v125
  %v129 = vrot.slane %v128, 4
  %v130 = vadd.f32 %v128, %v129
  %v131 = vrot.slane %v130, 2
  %v132 = vadd.f32 %v130, %v131
  %v133 = vrot.slane %v132, 1
  %v134 = vadd.f32 %v132, %v133
  %135 = vst [vmem:[%s3] sm:$0xff] %v121
  %136 = vst [vmem:[%s4] sm:$0xff] %v134
  %v137 = vpack.c.bf16 %v104, %v104
  %v138 = vpack.c.bf16 %v106, %v106
  %v139 = vpack.c.bf16 %v109, %v109
  %v140 = vpack.c.bf16 %v111, %v111
  %141 = vst [vmem:[%s2] sm:$0xf] %v137
  %142 = vst [vmem:[%s2 + $0x4] sm:$0xf] %v138
  %143 = vst [vmem:[%s2 + $0x8] sm:$0xf] %v139
  %144 = vst [vmem:[%s2 + $0xc] sm:$0xf] %v140
  // Predicated region
  $region10: #{multi_generator_forward.33} parent=0 // pred_check
    _
  $region11: #{multi_generator_forward.33} parent=0 // pred_check_branch
    %146 = sbr.rel (0) target = $region13
  $region12: #{multi_generator_forward.33} parent=0 // pred_region
    _
  $region13: #{multi_generator_forward.33} parent=0 // pred_fallthru
    _
  // Predicated region
  $region14: #{multi_generator_forward.33} parent=0 // pred_check
    _
  $region15: #{multi_generator_forward.33} parent=0 // pred_check_branch
    %148 = sbr.rel (0) target = $region17
  $region16: #{multi_generator_forward.33} parent=0 // pred_region
    _
  $region17: #{multi_generator_forward.33} parent=0 // pred_fallthru
    _
  // Predicated region
  $region18: #{multi_generator_forward.33} parent=0 // pred_check
    _
  $region19: #{multi_generator_forward.33} parent=0 // pred_check_branch
    %150 = sbr.rel (0) target = $region21
  $region20: #{multi_generator_forward.33} parent=0 // pred_region
    _
  $region21: #{multi_generator_forward.33} parent=0 // pred_fallthru
    _
  // Predicated region
  $region22: #{multi_generator_forward.33} parent=0 // pred_check
    _
  $region23: #{multi_generator_forward.33} parent=0 // pred_check_branch
    %152 = sbr.rel (0) target = $region25
  $region24: #{multi_generator_forward.33} parent=0 // pred_region
    _
  $region25: #{multi_generator_forward.33} parent=0 // pred_fallthru
    _
  // Predicated region
  $region26: #{multi_generator_forward.33} parent=0 // pred_check
    _
  $region27: #{multi_generator_forward.33} parent=0 // pred_check_branch
    %154 = sbr.rel (0) target = $region29
  $region28: #{multi_generator_forward.33} parent=0 // pred_region
    _
  $region29: #{multi_generator_forward.33} parent=0 // pred_fallthru
    _
  // Predicated region
  $region30: #{multi_generator_forward.33} parent=0 // pred_check
    _
  $region31: #{multi_generator_forward.33} parent=0 // pred_check_branch
    %156 = sbr.rel (0) target = $region33
  $region32: #{multi_generator_forward.33} parent=0 // pred_region
    _
  $region33: #{multi_generator_forward.33} parent=0 // pred_fallthru
    _

// kernel: tile.38
$region0: #{tile.38}
  #allocation0 [shape = 's32[1]{0}', space=sflag, size = 0x4, scoped, tag = 'scoped memory for tile.38']
  %s0 = inlined_call_operand.vmem [shape: f32[8], index: 0, kind: input, shape index: {}]
  %s1 = inlined_call_operand.vmem [shape: f32[4,8], index: 1, kind: output, shape index: {}]
  // Predicated region
  $region2: #{tile.38} parent=0 // pred_check
    _
  $region3: #{tile.38} parent=0 // pred_check_branch
    %3 = sbr.rel (0) target = $region5
  $region4: #{tile.38} parent=0 // pred_region
    _
  $region5: #{tile.38} parent=0 // pred_fallthru
    _
  %v4 = vld [vmem:[%s0] ss:$0 sm:$0xff]
  %5 = vst [vmem:[%s1] sm:$0xf] %v4

// kernel: tile.39
$region0: #{tile.39}
  %s0 = inlined_call_operand.vmem [shape: f32[4,8], index: 0, kind: input, shape index: {}]
  %s1 = inlined_call_operand.vmem [shape: f32[32], index: 1, kind: output, shape index: {}]
  $region1: #{tile.39} parent=0
    #allocation0 [shape = 'u8[4096]{0}', space=vmem, size = 0x1000, scoped, tag = 'scoped mem for output reshape']
    #allocation1 [shape = 'u8[4096]{0}', space=vmem, size = 0x1000, scoped, tag = 'scoped mem for input reshape']
    %s3 = ssub.s32 16, 1
    %v4 = vld [vmem:[%s0] sm:%s3]
    %5 = vst [vmem:[#allocation1] sm:%s3] %v4
    %v6 = vld [vmem:[#allocation1] sm:$0x1]
    %vm7 = vcmask 64512
    %8 = vst.msk [vmem:[#allocation0] sm:$0x1] %vm7, %v6
    %s9 = scalar_lea.vmem [#allocation1], 3
    %v10 = vld [vmem:[%s9] sm:$0x1]
    %11 = vrot.lane.b32.xlu0 %v10, 24
    %v12 = vpop.permute.xlu0 %11
    %vm13 = vcmask 261312
    %14 = vst.msk [vmem:[#allocation0] sm:$0x1] %vm13, %v12
    %s15 = scalar_lea.vmem [#allocation1], 2
    %v16 = vld [vmem:[%s15] sm:$0x1]
    %17 = vrot.lane.b32.xlu0 %v16, 16
    %v18 = vpop.permute.xlu0 %17
    %vm19 = vcmask 195712
    %20 = vst.msk [vmem:[#allocation0] sm:$0x1] %vm19, %v18
    %s21 = scalar_lea.vmem [#allocation1], 1
    %v22 = vld [vmem:[%s21] sm:$0x1]
    %23 = vrot.lane.b32.xlu0 %v22, 8
    %v24 = vpop.permute.xlu0 %23
    %vm25 = vcmask 130112
    %26 = vst.msk [vmem:[#allocation0] sm:$0x1] %vm25, %v24
    %s28 = ssub.s32 2, 1
    %v29 = vld [vmem:[#allocation0] sm:%s28]
    %s31 = ssub.s32 2, 1
    %32 = vst [vmem:[%s1] sm:%s31] %v29

// kernel: multi_generator_forward.37
$region0: #{multi_generator_forward.37}
  #allocation0 [shape = 'u32[]', space=smem, size = 0x4, offset = 0x4, fixed_abs, tag = 'smem constant byte address 0x4 - core index']
  #allocation1 [shape = 'u32[72,128]{1,0:T(1,128)}', space=vmem, size = 0x9000, scoped, tag = 'internal scratch']
  %s0 = inlined_call_operand.vmem [shape: bf16[512,512], index: 0, kind: input, shape index: {}]
  %s1 = inlined_call_operand.vmem [shape: bf16[512,256], index: 1, kind: input, shape index: {}]
  %s2 = inlined_call_operand.vmem [shape: f32[1,256], index: 2, kind: input, shape index: {}]
  %s3 = inlined_call_operand.vmem [shape: f32[512,256], index: 3, kind: output, shape index: {}]
  %s4 = sld [smem:[#allocation0]]
  $region22: #{multi_generator_forward.37} parent=0
    _
  %s6 = ssub.s32 1, %s4
  %s7 = scalar_select 0, %s6, %s4
  // Predicated region
  $region2: #{multi_generator_forward.37} parent=0 // pred_check
    _
  $region3: #{multi_generator_forward.37} parent=0 // pred_check_branch
    %9 = sbr.rel (0) target = $region5
  $region4: #{multi_generator_forward.37} parent=0 // pred_region
    _
  $region5: #{multi_generator_forward.37} parent=0 // pred_fallthru
    _
  // Predicated region
  $region6: #{multi_generator_forward.37} parent=0 // pred_check
    _
  $region7: #{multi_generator_forward.37} parent=0 // pred_check_branch
    %11 = sbr.rel (0) target = $region9
  $region8: #{multi_generator_forward.37} parent=0 // pred_region
    _
  $region9: #{multi_generator_forward.37} parent=0 // pred_fallthru
    _
  // Predicated region
  $region10: #{multi_generator_forward.37} parent=0 // pred_check
    _
  $region11: #{multi_generator_forward.37} parent=0 // pred_check_branch
    %13 = sbr.rel (0) target = $region13
  $region12: #{multi_generator_forward.37} parent=0 // pred_region
    _
  $region13: #{multi_generator_forward.37} parent=0 // pred_fallthru
    _
  %v14 = vld [vmem:[%s0] sm:$0xff]
  %v15 = vld [vmem:[%s0 + $0x8] sm:$0xff]
  %v16 = vld [vmem:[%s0 + $0x10] sm:$0xff]
  %v17 = vld [vmem:[%s0 + $0x18] sm:$0xff]
  %v18 = vld [vmem:[%s0 + $0x20] sm:$0xff]
  %v19 = vld [vmem:[%s0 + $0x28] sm:$0xff]
  %v20 = vld [vmem:[%s0 + $0x30] sm:$0xff]
  %v21 = vld [vmem:[%s0 + $0x38] sm:$0xff]
  %v22 = vld [vmem:[%s0 + $0x40] sm:$0xff]
  %v23 = vld [vmem:[%s0 + $0x48] sm:$0xff]
  %v24 = vld [vmem:[%s0 + $0x50] sm:$0xff]
  %v25 = vld [vmem:[%s0 + $0x58] sm:$0xff]
  %v26 = vld [vmem:[%s0 + $0x60] sm:$0xff]
  %v27 = vld [vmem:[%s0 + $0x68] sm:$0xff]
  %v28 = vld [vmem:[%s0 + $0x70] sm:$0xff]
  %v29 = vld [vmem:[%s0 + $0x78] sm:$0xff]
  %v30 = vld [vmem:[%s0 + $0x80] sm:$0xff]
  %v31 = vld [vmem:[%s0 + $0x88] sm:$0xff]
  %v32 = vld [vmem:[%s0 + $0x90] sm:$0xff]
  %v33 = vld [vmem:[%s0 + $0x98] sm:$0xff]
  %v34 = vld [vmem:[%s0 + $0xa0] sm:$0xff]
  %v35 = vld [vmem:[%s0 + $0xa8] sm:$0xff]
  %v36 = vld [vmem:[%s0 + $0xb0] sm:$0xff]
  %v37 = vld [vmem:[%s0 + $0xb8] sm:$0xff]
  %v38 = vld [vmem:[%s0 + $0xc0] sm:$0xff]
  %v39 = vld [vmem:[%s0 + $0xc8] sm:$0xff]
  %v40 = vld [vmem:[%s0 + $0xd0] sm:$0xff]
  %v41 = vld [vmem:[%s0 + $0xd8] sm:$0xff]
  %v42 = vld [vmem:[%s0 + $0xe0] sm:$0xff]
  %v43 = vld [vmem:[%s0 + $0xe8] sm:$0xff]
  %v44 = vld [vmem:[%s0 + $0xf0] sm:$0xff]
  %v45 = vld [vmem:[%s0 + $0xf8] sm:$0xff]
  %v46 = vld [vmem:[%s0 + $0x100] sm:$0xff]
  %v47 = vld [vmem:[%s0 + $0x108] sm:$0xff]
  %v48 = vld [vmem:[%s0 + $0x110] sm:$0xff]
  %v49 = vld [vmem:[%s0 + $0x118] sm:$0xff]
  %v50 = vld [vmem:[%s0 + $0x120] sm:$0xff]
  %v51 = vld [vmem:[%s0 + $0x128] sm:$0xff]
  %v52 = vld [vmem:[%s0 + $0x130] sm:$0xff]
  %v53 = vld [vmem:[%s0 + $0x138] sm:$0xff]
  %v54 = vld [vmem:[%s0 + $0x140] sm:$0xff]
  %v55 = vld [vmem:[%s0 + $0x148] sm:$0xff]
  %v56 = vld [vmem:[%s0 + $0x150] sm:$0xff]
  %v57 = vld [vmem:[%s0 + $0x158] sm:$0xff]
  %v58 = vld [vmem:[%s0 + $0x160] sm:$0xff]
  %v59 = vld [vmem:[%s0 + $0x168] sm:$0xff]
  %v60 = vld [vmem:[%s0 + $0x170] sm:$0xff]
  %v61 = vld [vmem:[%s0 + $0x178] sm:$0xff]
  %v62 = vld [vmem:[%s0 + $0x180] sm:$0xff]
  %v63 = vld [vmem:[%s0 + $0x188] sm:$0xff]
  %v64 = vld [vmem:[%s0 + $0x190] sm:$0xff]
  %v65 = vld [vmem:[%s0 + $0x198] sm:$0xff]
  %v66 = vld [vmem:[%s0 + $0x1a0] sm:$0xff]
  %v67 = vld [vmem:[%s0 + $0x1a8] sm:$0xff]
  %v68 = vld [vmem:[%s0 + $0x1b0] sm:$0xff]
  %v69 = vld [vmem:[%s0 + $0x1b8] sm:$0xff]
  %v70 = vld [vmem:[%s0 + $0x1c0] sm:$0xff]
  %v71 = vld [vmem:[%s0 + $0x1c8] sm:$0xff]
  %v72 = vld [vmem:[%s0 + $0x1d0] sm:$0xff]
  %v73 = vld [vmem:[%s0 + $0x1d8] sm:$0xff]
  %v74 = vld [vmem:[%s0 + $0x1e0] sm:$0xff]
  %v75 = vld [vmem:[%s0 + $0x1e8] sm:$0xff]
  %v76 = vld [vmem:[%s0 + $0x1f0] sm:$0xff]
  %v77 = vld [vmem:[%s0 + $0x1f8] sm:$0xff]
  %v78 = vld [vmem:[%s0 + $0x200] sm:$0xff]
  %v79 = vld [vmem:[%s0 + $0x208] sm:$0xff]
  %v80 = vld [vmem:[%s0 + $0x210] sm:$0xff]
  %v81 = vld [vmem:[%s0 + $0x218] sm:$0xff]
  %v82 = vld [vmem:[%s0 + $0x220] sm:$0xff]
  %v83 = vld [vmem:[%s0 + $0x228] sm:$0xff]
  %v84 = vld [vmem:[%s0 + $0x230] sm:$0xff]
  %v85 = vld [vmem:[%s0 + $0x238] sm:$0xff]
  %v86 = vld [vmem:[%s0 + $0x240] sm:$0xff]
  %v87 = vld [vmem:[%s0 + $0x248] sm:$0xff]
  %v88 = vld [vmem:[%s0 + $0x250] sm:$0xff]
  %v89 = vld [vmem:[%s0 + $0x258] sm:$0xff]
  %v90 = vld [vmem:[%s0 + $0x260] sm:$0xff]
  %v91 = vld [vmem:[%s0 + $0x268] sm:$0xff]
  %v92 = vld [vmem:[%s0 + $0x270] sm:$0xff]
  %v93 = vld [vmem:[%s0 + $0x278] sm:$0xff]
  %v94 = vld [vmem:[%s0 + $0x280] sm:$0xff]
  %v95 = vld [vmem:[%s0 + $0x288] sm:$0xff]
  %v96 = vld [vmem:[%s0 + $0x290] sm:$0xff]
  %v97 = vld [vmem:[%s0 + $0x298] sm:$0xff]
  %v98 = vld [vmem:[%s0 + $0x2a0] sm:$0xff]
  %v99 = vld [vmem:[%s0 + $0x2a8] sm:$0xff]
  %v100 = vld [vmem:[%s0 + $0x2b0] sm:$0xff]
  %v101 = vld [vmem:[%s0 + $0x2b8] sm:$0xff]
  %v102 = vld [vmem:[%s0 + $0x2c0] sm:$0xff]
  %v103 = vld [vmem:[%s0 + $0x2c8] sm:$0xff]
  %v104 = vld [vmem:[%s0 + $0x2d0] sm:$0xff]
  %v105 = vld [vmem:[%s0 + $0x2d8] sm:$0xff]
  %v106 = vld [vmem:[%s0 + $0x2e0] sm:$0xff]
  %v107 = vld [vmem:[%s0 + $0x2e8] sm:$0xff]
  %v108 = vld [vmem:[%s0 + $0x2f0] sm:$0xff]
  %v109 = vld [vmem:[%s0 + $0x2f8] sm:$0xff]
  %v110 = vld [vmem:[%s0 + $0x300] sm:$0xff]
  %v111 = vld [vmem:[%s0 + $0x308] sm:$0xff]
  %v112 = vld [vmem:[%s0 + $0x310] sm:$0xff]
  %v113 = vld [vmem:[%s0 + $0x318] sm:$0xff]
  %v114 = vld [vmem:[%s0 + $0x320] sm:$0xff]
  %v115 = vld [vmem:[%s0 + $0x328] sm:$0xff]
  %v116 = vld [vmem:[%s0 + $0x330] sm:$0xff]
  %v117 = vld [vmem:[%s0 + $0x338] sm:$0xff]
  %v118 = vld [vmem:[%s0 + $0x340] sm:$0xff]
  %v119 = vld [vmem:[%s0 + $0x348] sm:$0xff]
  %v120 = vld [vmem:[%s0 + $0x350] sm:$0xff]
  %v121 = vld [vmem:[%s0 + $0x358] sm:$0xff]
  %v122 = vld [vmem:[%s0 + $0x360] sm:$0xff]
  %v123 = vld [vmem:[%s0 + $0x368] sm:$0xff]
  %v124 = vld [vmem:[%s0 + $0x370] sm:$0xff]
  %v125 = vld [vmem:[%s0 + $0x378] sm:$0xff]
  %v126 = vld [vmem:[%s0 + $0x380] sm:$0xff]
  %v127 = vld [vmem:[%s0 + $0x388] sm:$0xff]
  %v128 = vld [vmem:[%s0 + $0x390] sm:$0xff]
  %v129 = vld [vmem:[%s0 + $0x398] sm:$0xff]
  %v130 = vld [vmem:[%s0 + $0x3a0] sm:$0xff]
  %v131 = vld [vmem:[%s0 + $0x3a8] sm:$0xff]
  %v132 = vld [vmem:[%s0 + $0x3b0] sm:$0xff]
  %v133 = vld [vmem:[%s0 + $0x3b8] sm:$0xff]
  %v134 = vld [vmem:[%s0 + $0x3c0] sm:$0xff]
  %v135 = vld [vmem:[%s0 + $0x3c8] sm:$0xff]
  %v136 = vld [vmem:[%s0 + $0x3d0] sm:$0xff]
  %v137 = vld [vmem:[%s0 + $0x3d8] sm:$0xff]
  %v138 = vld [vmem:[%s0 + $0x3e0] sm:$0xff]
  %v139 = vld [vmem:[%s0 + $0x3e8] sm:$0xff]
  %v140 = vld [vmem:[%s0 + $0x3f0] sm:$0xff]
  %v141 = vld [vmem:[%s0 + $0x3f8] sm:$0xff]
  %v142 = vld [vmem:[%s1] sm:$0xff]
  %v143 = vld [vmem:[%s1 + $0x8] sm:$0xff]
  %v144 = vld [vmem:[%s1 + $0x10] sm:$0xff]
  %v145 = vld [vmem:[%s1 + $0x18] sm:$0xff]
  %v146 = vld [vmem:[%s1 + $0x20] sm:$0xff]
  %v147 = vld [vmem:[%s1 + $0x28] sm:$0xff]
  %v148 = vld [vmem:[%s1 + $0x30] sm:$0xff]
  %v149 = vld [vmem:[%s1 + $0x38] sm:$0xff]
  %v150 = vld [vmem:[%s1 + $0x40] sm:$0xff]
  %v151 = vld [vmem:[%s1 + $0x48] sm:$0xff]
  %v152 = vld [vmem:[%s1 + $0x50] sm:$0xff]
  %v153 = vld [vmem:[%s1 + $0x58] sm:$0xff]
  %v154 = vld [vmem:[%s1 + $0x60] sm:$0xff]
  %v155 = vld [vmem:[%s1 + $0x68] sm:$0xff]
  %v156 = vld [vmem:[%s1 + $0x70] sm:$0xff]
  %v157 = vld [vmem:[%s1 + $0x78] sm:$0xff]
  %v158 = vld [vmem:[%s1 + $0x80] sm:$0xff]
  %v159 = vld [vmem:[%s1 + $0x88] sm:$0xff]
  %v160 = vld [vmem:[%s1 + $0x90] sm:$0xff]
  %v161 = vld [vmem:[%s1 + $0x98] sm:$0xff]
  %v162 = vld [vmem:[%s1 + $0xa0] sm:$0xff]
  %v163 = vld [vmem:[%s1 + $0xa8] sm:$0xff]
  %v164 = vld [vmem:[%s1 + $0xb0] sm:$0xff]
  %v165 = vld [vmem:[%s1 + $0xb8] sm:$0xff]
  %v166 = vld [vmem:[%s1 + $0xc0] sm:$0xff]
  %v167 = vld [vmem:[%s1 + $0xc8] sm:$0xff]
  %v168 = vld [vmem:[%s1 + $0xd0] sm:$0xff]
  %v169 = vld [vmem:[%s1 + $0xd8] sm:$0xff]
  %v170 = vld [vmem:[%s1 + $0xe0] sm:$0xff]
  %v171 = vld [vmem:[%s1 + $0xe8] sm:$0xff]
  %v172 = vld [vmem:[%s1 + $0xf0] sm:$0xff]
  %v173 = vld [vmem:[%s1 + $0xf8] sm:$0xff]
  %v174 = vld [vmem:[%s1 + $0x100] sm:$0xff]
  %v175 = vld [vmem:[%s1 + $0x108] sm:$0xff]
  %v176 = vld [vmem:[%s1 + $0x110] sm:$0xff]
  %v177 = vld [vmem:[%s1 + $0x118] sm:$0xff]
  %v178 = vld [vmem:[%s1 + $0x120] sm:$0xff]
  %v179 = vld [vmem:[%s1 + $0x128] sm:$0xff]
  %v180 = vld [vmem:[%s1 + $0x130] sm:$0xff]
  %v181 = vld [vmem:[%s1 + $0x138] sm:$0xff]
  %v182 = vld [vmem:[%s1 + $0x140] sm:$0xff]
  %v183 = vld [vmem:[%s1 + $0x148] sm:$0xff]
  %v184 = vld [vmem:[%s1 + $0x150] sm:$0xff]
  %v185 = vld [vmem:[%s1 + $0x158] sm:$0xff]
  %v186 = vld [vmem:[%s1 + $0x160] sm:$0xff]
  %v187 = vld [vmem:[%s1 + $0x168] sm:$0xff]
  %v188 = vld [vmem:[%s1 + $0x170] sm:$0xff]
  %v189 = vld [vmem:[%s1 + $0x178] sm:$0xff]
  %v190 = vld [vmem:[%s1 + $0x180] sm:$0xff]
  %v191 = vld [vmem:[%s1 + $0x188] sm:$0xff]
  %v192 = vld [vmem:[%s1 + $0x190] sm:$0xff]
  %v193 = vld [vmem:[%s1 + $0x198] sm:$0xff]
  %v194 = vld [vmem:[%s1 + $0x1a0] sm:$0xff]
  %v195 = vld [vmem:[%s1 + $0x1a8] sm:$0xff]
  %v196 = vld [vmem:[%s1 + $0x1b0] sm:$0xff]
  %v197 = vld [vmem:[%s1 + $0x1b8] sm:$0xff]
  %v198 = vld [vmem:[%s1 + $0x1c0] sm:$0xff]
  %v199 = vld [vmem:[%s1 + $0x1c8] sm:$0xff]
  %v200 = vld [vmem:[%s1 + $0x1d0] sm:$0xff]
  %v201 = vld [vmem:[%s1 + $0x1d8] sm:$0xff]
  %v202 = vld [vmem:[%s1 + $0x1e0] sm:$0xff]
  %v203 = vld [vmem:[%s1 + $0x1e8] sm:$0xff]
  %v204 = vld [vmem:[%s1 + $0x1f0] sm:$0xff]
  %v205 = vld [vmem:[%s1 + $0x1f8] sm:$0xff]
  %v206 = vld [vmem:[%s2] sm:$0x3]
  %v208 = vperm.slane %v206, 0
  %v209 = vperm.slane %v206, 1
  %v340 = vunpack.c.l.b16 %v14
  %v341 = vunpack.c.h.b16 %v14
  %v342 = vunpack.c.l.b16 %v15
  %v343 = vunpack.c.h.b16 %v15
  %v344 = vunpack.c.l.b16 %v16
  %v345 = vunpack.c.h.b16 %v16
  %v346 = vunpack.c.l.b16 %v17
  %v347 = vunpack.c.h.b16 %v17
  %v348 = vunpack.c.l.b16 %v18
  %v349 = vunpack.c.h.b16 %v18
  %v350 = vunpack.c.l.b16 %v19
  %v351 = vunpack.c.h.b16 %v19
  %v352 = vunpack.c.l.b16 %v20
  %v353 = vunpack.c.h.b16 %v20
  %v354 = vunpack.c.l.b16 %v21
  %v355 = vunpack.c.h.b16 %v21
  %v356 = vunpack.c.l.b16 %v22
  %v357 = vunpack.c.h.b16 %v22
  %v358 = vunpack.c.l.b16 %v23
  %v359 = vunpack.c.h.b16 %v23
  %v360 = vunpack.c.l.b16 %v24
  %v361 = vunpack.c.h.b16 %v24
  %v362 = vunpack.c.l.b16 %v25
  %v363 = vunpack.c.h.b16 %v25
  %v364 = vunpack.c.l.b16 %v26
  %v365 = vunpack.c.h.b16 %v26
  %v366 = vunpack.c.l.b16 %v27
  %v367 = vunpack.c.h.b16 %v27
  %v368 = vunpack.c.l.b16 %v28
  %v369 = vunpack.c.h.b16 %v28
  %v370 = vunpack.c.l.b16 %v29
  %v371 = vunpack.c.h.b16 %v29
  %v372 = vunpack.c.l.b16 %v30
  %v373 = vunpack.c.h.b16 %v30
  %v374 = vunpack.c.l.b16 %v31
  %v375 = vunpack.c.h.b16 %v31
  %v376 = vunpack.c.l.b16 %v32
  %v377 = vunpack.c.h.b16 %v32
  %v378 = vunpack.c.l.b16 %v33
  %v379 = vunpack.c.h.b16 %v33
  %v380 = vunpack.c.l.b16 %v34
  %v381 = vunpack.c.h.b16 %v34
  %v382 = vunpack.c.l.b16 %v35
  %v383 = vunpack.c.h.b16 %v35
  %v384 = vunpack.c.l.b16 %v36
  %v385 = vunpack.c.h.b16 %v36
  %v386 = vunpack.c.l.b16 %v37
  %v387 = vunpack.c.h.b16 %v37
  %v388 = vunpack.c.l.b16 %v38
  %v389 = vunpack.c.h.b16 %v38
  %v390 = vunpack.c.l.b16 %v39
  %v391 = vunpack.c.h.b16 %v39
  %v392 = vunpack.c.l.b16 %v40
  %v393 = vunpack.c.h.b16 %v40
  %v394 = vunpack.c.l.b16 %v41
  %v395 = vunpack.c.h.b16 %v41
  %v396 = vunpack.c.l.b16 %v42
  %v397 = vunpack.c.h.b16 %v42
  %v398 = vunpack.c.l.b16 %v43
  %v399 = vunpack.c.h.b16 %v43
  %v400 = vunpack.c.l.b16 %v44
  %v401 = vunpack.c.h.b16 %v44
  %v402 = vunpack.c.l.b16 %v45
  %v403 = vunpack.c.h.b16 %v45
  %v404 = vunpack.c.l.b16 %v46
  %v405 = vunpack.c.h.b16 %v46
  %v406 = vunpack.c.l.b16 %v47
  %v407 = vunpack.c.h.b16 %v47
  %v408 = vunpack.c.l.b16 %v48
  %v409 = vunpack.c.h.b16 %v48
  %v410 = vunpack.c.l.b16 %v49
  %v411 = vunpack.c.h.b16 %v49
  %v412 = vunpack.c.l.b16 %v50
  %v413 = vunpack.c.h.b16 %v50
  %v414 = vunpack.c.l.b16 %v51
  %v415 = vunpack.c.h.b16 %v51
  %v416 = vunpack.c.l.b16 %v52
  %v417 = vunpack.c.h.b16 %v52
  %v418 = vunpack.c.l.b16 %v53
  %v419 = vunpack.c.h.b16 %v53
  %v420 = vunpack.c.l.b16 %v54
  %v421 = vunpack.c.h.b16 %v54
  %v422 = vunpack.c.l.b16 %v55
  %v423 = vunpack.c.h.b16 %v55
  %v424 = vunpack.c.l.b16 %v56
  %v425 = vunpack.c.h.b16 %v56
  %v426 = vunpack.c.l.b16 %v57
  %v427 = vunpack.c.h.b16 %v57
  %v428 = vunpack.c.l.b16 %v58
  %v429 = vunpack.c.h.b16 %v58
  %v430 = vunpack.c.l.b16 %v59
  %v431 = vunpack.c.h.b16 %v59
  %v432 = vunpack.c.l.b16 %v60
  %v433 = vunpack.c.h.b16 %v60
  %v434 = vunpack.c.l.b16 %v61
  %v435 = vunpack.c.h.b16 %v61
  %v436 = vunpack.c.l.b16 %v62
  %v437 = vunpack.c.h.b16 %v62
  %v438 = vunpack.c.l.b16 %v63
  %v439 = vunpack.c.h.b16 %v63
  %v440 = vunpack.c.l.b16 %v64
  %v441 = vunpack.c.h.b16 %v64
  %v442 = vunpack.c.l.b16 %v65
  %v443 = vunpack.c.h.b16 %v65
  %v444 = vunpack.c.l.b16 %v66
  %v445 = vunpack.c.h.b16 %v66
  %v446 = vunpack.c.l.b16 %v67
  %v447 = vunpack.c.h.b16 %v67
  %v448 = vunpack.c.l.b16 %v68
  %v449 = vunpack.c.h.b16 %v68
  %v450 = vunpack.c.l.b16 %v69
  %v451 = vunpack.c.h.b16 %v69
  %v452 = vunpack.c.l.b16 %v70
  %v453 = vunpack.c.h.b16 %v70
  %v454 = vunpack.c.l.b16 %v71
  %v455 = vunpack.c.h.b16 %v71
  %v456 = vunpack.c.l.b16 %v72
  %v457 = vunpack.c.h.b16 %v72
  %v458 = vunpack.c.l.b16 %v73
  %v459 = vunpack.c.h.b16 %v73
  %v460 = vunpack.c.l.b16 %v74
  %v461 = vunpack.c.h.b16 %v74
  %v462 = vunpack.c.l.b16 %v75
  %v463 = vunpack.c.h.b16 %v75
  %v464 = vunpack.c.l.b16 %v76
  %v465 = vunpack.c.h.b16 %v76
  %v466 = vunpack.c.l.b16 %v77
  %v467 = vunpack.c.h.b16 %v77
  %v468 = vunpack.c.l.b16 %v78
  %v469 = vunpack.c.h.b16 %v78
  %v470 = vunpack.c.l.b16 %v79
  %v471 = vunpack.c.h.b16 %v79
  %v472 = vunpack.c.l.b16 %v80
  %v473 = vunpack.c.h.b16 %v80
  %v474 = vunpack.c.l.b16 %v81
  %v475 = vunpack.c.h.b16 %v81
  %v476 = vunpack.c.l.b16 %v82
  %v477 = vunpack.c.h.b16 %v82
  %v478 = vunpack.c.l.b16 %v83
  %v479 = vunpack.c.h.b16 %v83
  %v480 = vunpack.c.l.b16 %v84
  %v481 = vunpack.c.h.b16 %v84
  %v482 = vunpack.c.l.b16 %v85
  %v483 = vunpack.c.h.b16 %v85
  %v484 = vunpack.c.l.b16 %v86
  %v485 = vunpack.c.h.b16 %v86
  %v486 = vunpack.c.l.b16 %v87
  %v487 = vunpack.c.h.b16 %v87
  %v488 = vunpack.c.l.b16 %v88
  %v489 = vunpack.c.h.b16 %v88
  %v490 = vunpack.c.l.b16 %v89
  %v491 = vunpack.c.h.b16 %v89
  %v492 = vunpack.c.l.b16 %v90
  %v493 = vunpack.c.h.b16 %v90
  %v494 = vunpack.c.l.b16 %v91
  %v495 = vunpack.c.h.b16 %v91
  %v496 = vunpack.c.l.b16 %v92
  %v497 = vunpack.c.h.b16 %v92
  %v498 = vunpack.c.l.b16 %v93
  %v499 = vunpack.c.h.b16 %v93
  %v500 = vunpack.c.l.b16 %v94
  %v501 = vunpack.c.h.b16 %v94
  %v502 = vunpack.c.l.b16 %v95
  %v503 = vunpack.c.h.b16 %v95
  %v504 = vunpack.c.l.b16 %v96
  %v505 = vunpack.c.h.b16 %v96
  %v506 = vunpack.c.l.b16 %v97
  %v507 = vunpack.c.h.b16 %v97
  %v508 = vunpack.c.l.b16 %v98
  %v509 = vunpack.c.h.b16 %v98
  %v510 = vunpack.c.l.b16 %v99
  %v511 = vunpack.c.h.b16 %v99
  %v512 = vunpack.c.l.b16 %v100
  %v513 = vunpack.c.h.b16 %v100
  %v514 = vunpack.c.l.b16 %v101
  %v515 = vunpack.c.h.b16 %v101
  %v516 = vunpack.c.l.b16 %v102
  %v517 = vunpack.c.h.b16 %v102
  %v518 = vunpack.c.l.b16 %v103
  %v519 = vunpack.c.h.b16 %v103
  %v520 = vunpack.c.l.b16 %v104
  %v521 = vunpack.c.h.b16 %v104
  %v522 = vunpack.c.l.b16 %v105
  %v523 = vunpack.c.h.b16 %v105
  %v524 = vunpack.c.l.b16 %v106
  %v525 = vunpack.c.h.b16 %v106
  %v526 = vunpack.c.l.b16 %v107
  %v527 = vunpack.c.h.b16 %v107
  %v528 = vunpack.c.l.b16 %v108
  %v529 = vunpack.c.h.b16 %v108
  %v530 = vunpack.c.l.b16 %v109
  %v531 = vunpack.c.h.b16 %v109
  %v532 = vunpack.c.l.b16 %v110
  %v533 = vunpack.c.h.b16 %v110
  %v534 = vunpack.c.l.b16 %v111
  %v535 = vunpack.c.h.b16 %v111
  %v536 = vunpack.c.l.b16 %v112
  %v537 = vunpack.c.h.b16 %v112
  %v538 = vunpack.c.l.b16 %v113
  %v539 = vunpack.c.h.b16 %v113
  %v540 = vunpack.c.l.b16 %v114
  %v541 = vunpack.c.h.b16 %v114
  %v542 = vunpack.c.l.b16 %v115
  %v543 = vunpack.c.h.b16 %v115
  %v544 = vunpack.c.l.b16 %v116
  %v545 = vunpack.c.h.b16 %v116
  %v546 = vunpack.c.l.b16 %v117
  %v547 = vunpack.c.h.b16 %v117
  %v548 = vunpack.c.l.b16 %v118
  %v549 = vunpack.c.h.b16 %v118
  %v550 = vunpack.c.l.b16 %v119
  %v551 = vunpack.c.h.b16 %v119
  %v552 = vunpack.c.l.b16 %v120
  %v553 = vunpack.c.h.b16 %v120
  %v554 = vunpack.c.l.b16 %v121
  %v555 = vunpack.c.h.b16 %v121
  %v556 = vunpack.c.l.b16 %v122
  %v557 = vunpack.c.h.b16 %v122
  %v558 = vunpack.c.l.b16 %v123
  %v559 = vunpack.c.h.b16 %v123
  %v560 = vunpack.c.l.b16 %v124
  %v561 = vunpack.c.h.b16 %v124
  %v562 = vunpack.c.l.b16 %v125
  %v563 = vunpack.c.h.b16 %v125
  %v564 = vunpack.c.l.b16 %v126
  %v565 = vunpack.c.h.b16 %v126
  %v566 = vunpack.c.l.b16 %v127
  %v567 = vunpack.c.h.b16 %v127
  %v568 = vunpack.c.l.b16 %v128
  %v569 = vunpack.c.h.b16 %v128
  %v570 = vunpack.c.l.b16 %v129
  %v571 = vunpack.c.h.b16 %v129
  %v572 = vunpack.c.l.b16 %v130
  %v573 = vunpack.c.h.b16 %v130
  %v574 = vunpack.c.l.b16 %v131
  %v575 = vunpack.c.h.b16 %v131
  %v576 = vunpack.c.l.b16 %v132
  %v577 = vunpack.c.h.b16 %v132
  %v578 = vunpack.c.l.b16 %v133
  %v579 = vunpack.c.h.b16 %v133
  %v580 = vunpack.c.l.b16 %v134
  %v581 = vunpack.c.h.b16 %v134
  %v582 = vunpack.c.l.b16 %v135
  %v583 = vunpack.c.h.b16 %v135
  %v584 = vunpack.c.l.b16 %v136
  %v585 = vunpack.c.h.b16 %v136
  %v586 = vunpack.c.l.b16 %v137
  %v587 = vunpack.c.h.b16 %v137
  %v588 = vunpack.c.l.b16 %v138
  %v589 = vunpack.c.h.b16 %v138
  %v590 = vunpack.c.l.b16 %v139
  %v591 = vunpack.c.h.b16 %v139
  %v592 = vunpack.c.l.b16 %v140
  %v593 = vunpack.c.h.b16 %v140
  %v594 = vunpack.c.l.b16 %v141
  %v595 = vunpack.c.h.b16 %v141
  %v596 = vpack.c.b16 %v344, %v340
  %v597 = vpack.c.b16 %v345, %v341
  %v598 = vpack.c.b16 %v346, %v342
  %v599 = vpack.c.b16 %v347, %v343
  %v600 = vpack.c.b16 %v352, %v348
  %v601 = vpack.c.b16 %v353, %v349
  %v602 = vpack.c.b16 %v354, %v350
  %v603 = vpack.c.b16 %v355, %v351
  %v604 = vpack.c.b16 %v360, %v356
  %v605 = vpack.c.b16 %v361, %v357
  %v606 = vpack.c.b16 %v362, %v358
  %v607 = vpack.c.b16 %v363, %v359
  %v608 = vpack.c.b16 %v368, %v364
  %v609 = vpack.c.b16 %v369, %v365
  %v610 = vpack.c.b16 %v370, %v366
  %v611 = vpack.c.b16 %v371, %v367
  %v612 = vpack.c.b16 %v376, %v372
  %v613 = vpack.c.b16 %v377, %v373
  %v614 = vpack.c.b16 %v378, %v374
  %v615 = vpack.c.b16 %v379, %v375
  %v616 = vpack.c.b16 %v384, %v380
  %v617 = vpack.c.b16 %v385, %v381
  %v618 = vpack.c.b16 %v386, %v382
  %v619 = vpack.c.b16 %v387, %v383
  %v620 = vpack.c.b16 %v392, %v388
  %v621 = vpack.c.b16 %v393, %v389
  %v622 = vpack.c.b16 %v394, %v390
  %v623 = vpack.c.b16 %v395, %v391
  %v624 = vpack.c.b16 %v400, %v396
  %v625 = vpack.c.b16 %v401, %v397
  %v626 = vpack.c.b16 %v402, %v398
  %v627 = vpack.c.b16 %v403, %v399
  %v628 = vpack.c.b16 %v408, %v404
  %v629 = vpack.c.b16 %v409, %v405
  %v630 = vpack.c.b16 %v410, %v406
  %v631 = vpack.c.b16 %v411, %v407
  %v632 = vpack.c.b16 %v416, %v412
  %v633 = vpack.c.b16 %v417, %v413
  %v634 = vpack.c.b16 %v418, %v414
  %v635 = vpack.c.b16 %v419, %v415
  %v636 = vpack.c.b16 %v424, %v420
  %v637 = vpack.c.b16 %v425, %v421
  %v638 = vpack.c.b16 %v426, %v422
  %v639 = vpack.c.b16 %v427, %v423
  %v640 = vpack.c.b16 %v432, %v428
  %v641 = vpack.c.b16 %v433, %v429
  %v642 = vpack.c.b16 %v434, %v430
  %v643 = vpack.c.b16 %v435, %v431
  %v644 = vpack.c.b16 %v440, %v436
  %v645 = vpack.c.b16 %v441, %v437
  %v646 = vpack.c.b16 %v442, %v438
  %v647 = vpack.c.b16 %v443, %v439
  %v648 = vpack.c.b16 %v448, %v444
  %v649 = vpack.c.b16 %v449, %v445
  %v650 = vpack.c.b16 %v450, %v446
  %v651 = vpack.c.b16 %v451, %v447
  %v652 = vpack.c.b16 %v456, %v452
  %v653 = vpack.c.b16 %v457, %v453
  %v654 = vpack.c.b16 %v458, %v454
  %v655 = vpack.c.b16 %v459, %v455
  %v656 = vpack.c.b16 %v464, %v460
  %v657 = vpack.c.b16 %v465, %v461
  %v658 = vpack.c.b16 %v466, %v462
  %v659 = vpack.c.b16 %v467, %v463
  %v660 = vpack.c.b16 %v472, %v468
  %v661 = vpack.c.b16 %v473, %v469
  %v662 = vpack.c.b16 %v474, %v470
  %v663 = vpack.c.b16 %v475, %v471
  %v664 = vpack.c.b16 %v480, %v476
  %v665 = vpack.c.b16 %v481, %v477
  %v666 = vpack.c.b16 %v482, %v478
  %v667 = vpack.c.b16 %v483, %v479
  %v668 = vpack.c.b16 %v488, %v484
  %v669 = vpack.c.b16 %v489, %v485
  %v670 = vpack.c.b16 %v490, %v486
  %v671 = vpack.c.b16 %v491, %v487
  %v672 = vpack.c.b16 %v496, %v492
  %v673 = vpack.c.b16 %v497, %v493
  %v674 = vpack.c.b16 %v498, %v494
  %v675 = vpack.c.b16 %v499, %v495
  %v676 = vpack.c.b16 %v504, %v500
  %v677 = vpack.c.b16 %v505, %v501
  %v678 = vpack.c.b16 %v506, %v502
  %v679 = vpack.c.b16 %v507, %v503
  %v680 = vpack.c.b16 %v512, %v508
  %v681 = vpack.c.b16 %v513, %v509
  %v682 = vpack.c.b16 %v514, %v510
  %v683 = vpack.c.b16 %v515, %v511
  %v684 = vpack.c.b16 %v520, %v516
  %v685 = vpack.c.b16 %v521, %v517
  %v686 = vpack.c.b16 %v522, %v518
  %v687 = vpack.c.b16 %v523, %v519
  %v688 = vpack.c.b16 %v528, %v524
  %v689 = vpack.c.b16 %v529, %v525
  %v690 = vpack.c.b16 %v530, %v526
  %v691 = vpack.c.b16 %v531, %v527
  %v692 = vpack.c.b16 %v536, %v532
  %v693 = vpack.c.b16 %v537, %v533
  %v694 = vpack.c.b16 %v538, %v534
  %v695 = vpack.c.b16 %v539, %v535
  %v696 = vpack.c.b16 %v544, %v540
  %v697 = vpack.c.b16 %v545, %v541
  %v698 = vpack.c.b16 %v546, %v542
  %v699 = vpack.c.b16 %v547, %v543
  %v700 = vpack.c.b16 %v552, %v548
  %v701 = vpack.c.b16 %v553, %v549
  %v702 = vpack.c.b16 %v554, %v550
  %v703 = vpack.c.b16 %v555, %v551
  %v704 = vpack.c.b16 %v560, %v556
  %v705 = vpack.c.b16 %v561, %v557
  %v706 = vpack.c.b16 %v562, %v558
  %v707 = vpack.c.b16 %v563, %v559
  %v708 = vpack.c.b16 %v568, %v564
  %v709 = vpack.c.b16 %v569, %v565
  %v710 = vpack.c.b16 %v570, %v566
  %v711 = vpack.c.b16 %v571, %v567
  %v712 = vpack.c.b16 %v576, %v572
  %v713 = vpack.c.b16 %v577, %v573
  %v714 = vpack.c.b16 %v578, %v574
  %v715 = vpack.c.b16 %v579, %v575
  %v716 = vpack.c.b16 %v584, %v580
  %v717 = vpack.c.b16 %v585, %v581
  %v718 = vpack.c.b16 %v586, %v582
  %v719 = vpack.c.b16 %v587, %v583
  %v720 = vpack.c.b16 %v592, %v588
  %v721 = vpack.c.b16 %v593, %v589
  %v722 = vpack.c.b16 %v594, %v590
  %v723 = vpack.c.b16 %v595, %v591
  %v916 = vunpack.c.l.b16 %v142
  %v917 = vunpack.c.h.b16 %v142
  %v918 = vunpack.c.l.b16 %v143
  %v919 = vunpack.c.h.b16 %v143
  %v920 = vunpack.c.l.b16 %v144
  %v921 = vunpack.c.h.b16 %v144
  %v922 = vunpack.c.l.b16 %v145
  %v923 = vunpack.c.h.b16 %v145
  %v924 = vunpack.c.l.b16 %v146
  %v925 = vunpack.c.h.b16 %v146
  %v926 = vunpack.c.l.b16 %v147
  %v927 = vunpack.c.h.b16 %v147
  %v928 = vunpack.c.l.b16 %v148
  %v929 = vunpack.c.h.b16 %v148
  %v930 = vunpack.c.l.b16 %v149
  %v931 = vunpack.c.h.b16 %v149
  %v932 = vunpack.c.l.b16 %v150
  %v933 = vunpack.c.h.b16 %v150
  %v934 = vunpack.c.l.b16 %v151
  %v935 = vunpack.c.h.b16 %v151
  %v936 = vunpack.c.l.b16 %v152
  %v937 = vunpack.c.h.b16 %v152
  %v938 = vunpack.c.l.b16 %v153
  %v939 = vunpack.c.h.b16 %v153
  %v940 = vunpack.c.l.b16 %v154
  %v941 = vunpack.c.h.b16 %v154
  %v942 = vunpack.c.l.b16 %v155
  %v943 = vunpack.c.h.b16 %v155
  %v944 = vunpack.c.l.b16 %v156
  %v945 = vunpack.c.h.b16 %v156
  %v946 = vunpack.c.l.b16 %v157
  %v947 = vunpack.c.h.b16 %v157
  %v948 = vunpack.c.l.b16 %v158
  %v949 = vunpack.c.h.b16 %v158
  %v950 = vunpack.c.l.b16 %v159
  %v951 = vunpack.c.h.b16 %v159
  %v952 = vunpack.c.l.b16 %v160
  %v953 = vunpack.c.h.b16 %v160
  %v954 = vunpack.c.l.b16 %v161
  %v955 = vunpack.c.h.b16 %v161
  %v956 = vunpack.c.l.b16 %v162
  %v957 = vunpack.c.h.b16 %v162
  %v958 = vunpack.c.l.b16 %v163
  %v959 = vunpack.c.h.b16 %v163
  %v960 = vunpack.c.l.b16 %v164
  %v961 = vunpack.c.h.b16 %v164
  %v962 = vunpack.c.l.b16 %v165
  %v963 = vunpack.c.h.b16 %v165
  %v964 = vunpack.c.l.b16 %v166
  %v965 = vunpack.c.h.b16 %v166
  %v966 = vunpack.c.l.b16 %v167
  %v967 = vunpack.c.h.b16 %v167
  %v968 = vunpack.c.l.b16 %v168
  %v969 = vunpack.c.h.b16 %v168
  %v970 = vunpack.c.l.b16 %v169
  %v971 = vunpack.c.h.b16 %v169
  %v972 = vunpack.c.l.b16 %v170
  %v973 = vunpack.c.h.b16 %v170
  %v974 = vunpack.c.l.b16 %v171
  %v975 = vunpack.c.h.b16 %v171
  %v976 = vunpack.c.l.b16 %v172
  %v977 = vunpack.c.h.b16 %v172
  %v978 = vunpack.c.l.b16 %v173
  %v979 = vunpack.c.h.b16 %v173
  %v980 = vunpack.c.l.b16 %v174
  %v981 = vunpack.c.h.b16 %v174
  %v982 = vunpack.c.l.b16 %v175
  %v983 = vunpack.c.h.b16 %v175
  %v984 = vunpack.c.l.b16 %v176
  %v985 = vunpack.c.h.b16 %v176
  %v986 = vunpack.c.l.b16 %v177
  %v987 = vunpack.c.h.b16 %v177
  %v988 = vunpack.c.l.b16 %v178
  %v989 = vunpack.c.h.b16 %v178
  %v990 = vunpack.c.l.b16 %v179
  %v991 = vunpack.c.h.b16 %v179
  %v992 = vunpack.c.l.b16 %v180
  %v993 = vunpack.c.h.b16 %v180
  %v994 = vunpack.c.l.b16 %v181
  %v995 = vunpack.c.h.b16 %v181
  %v996 = vunpack.c.l.b16 %v182
  %v997 = vunpack.c.h.b16 %v182
  %v998 = vunpack.c.l.b16 %v183
  %v999 = vunpack.c.h.b16 %v183
  %v1000 = vunpack.c.l.b16 %v184
  %v1001 = vunpack.c.h.b16 %v184
  %v1002 = vunpack.c.l.b16 %v185
  %v1003 = vunpack.c.h.b16 %v185
  %v1004 = vunpack.c.l.b16 %v186
  %v1005 = vunpack.c.h.b16 %v186
  %v1006 = vunpack.c.l.b16 %v187
  %v1007 = vunpack.c.h.b16 %v187
  %v1008 = vunpack.c.l.b16 %v188
  %v1009 = vunpack.c.h.b16 %v188
  %v1010 = vunpack.c.l.b16 %v189
  %v1011 = vunpack.c.h.b16 %v189
  %v1012 = vunpack.c.l.b16 %v190
  %v1013 = vunpack.c.h.b16 %v190
  %v1014 = vunpack.c.l.b16 %v191
  %v1015 = vunpack.c.h.b16 %v191
  %v1016 = vunpack.c.l.b16 %v192
  %v1017 = vunpack.c.h.b16 %v192
  %v1018 = vunpack.c.l.b16 %v193
  %v1019 = vunpack.c.h.b16 %v193
  %v1020 = vunpack.c.l.b16 %v194
  %v1021 = vunpack.c.h.b16 %v194
  %v1022 = vunpack.c.l.b16 %v195
  %v1023 = vunpack.c.h.b16 %v195
  %v1024 = vunpack.c.l.b16 %v196
  %v1025 = vunpack.c.h.b16 %v196
  %v1026 = vunpack.c.l.b16 %v197
  %v1027 = vunpack.c.h.b16 %v197
  %v1028 = vunpack.c.l.b16 %v198
  %v1029 = vunpack.c.h.b16 %v198
  %v1030 = vunpack.c.l.b16 %v199
  %v1031 = vunpack.c.h.b16 %v199
  %v1032 = vunpack.c.l.b16 %v200
  %v1033 = vunpack.c.h.b16 %v200
  %v1034 = vunpack.c.l.b16 %v201
  %v1035 = vunpack.c.h.b16 %v201
  %v1036 = vunpack.c.l.b16 %v202
  %v1037 = vunpack.c.h.b16 %v202
  %v1038 = vunpack.c.l.b16 %v203
  %v1039 = vunpack.c.h.b16 %v203
  %v1040 = vunpack.c.l.b16 %v204
  %v1041 = vunpack.c.h.b16 %v204
  %v1042 = vunpack.c.l.b16 %v205
  %v1043 = vunpack.c.h.b16 %v205
  %v1044 = vpack.c.b16 %v918, %v916
  %v1045 = vpack.c.b16 %v919, %v917
  %v1046 = vpack.c.b16 %v922, %v920
  %v1047 = vpack.c.b16 %v923, %v921
  %v1048 = vpack.c.b16 %v926, %v924
  %v1049 = vpack.c.b16 %v927, %v925
  %v1050 = vpack.c.b16 %v930, %v928
  %v1051 = vpack.c.b16 %v931, %v929
  %v1052 = vpack.c.b16 %v934, %v932
  %v1053 = vpack.c.b16 %v935, %v933
  %v1054 = vpack.c.b16 %v938, %v936
  %v1055 = vpack.c.b16 %v939, %v937
  %v1056 = vpack.c.b16 %v942, %v940
  %v1057 = vpack.c.b16 %v943, %v941
  %v1058 = vpack.c.b16 %v946, %v944
  %v1059 = vpack.c.b16 %v947, %v945
  %v1060 = vpack.c.b16 %v950, %v948
  %v1061 = vpack.c.b16 %v951, %v949
  %v1062 = vpack.c.b16 %v954, %v952
  %v1063 = vpack.c.b16 %v955, %v953
  %v1064 = vpack.c.b16 %v958, %v956
  %v1065 = vpack.c.b16 %v959, %v957
  %v1066 = vpack.c.b16 %v962, %v960
  %v1067 = vpack.c.b16 %v963, %v961
  %v1068 = vpack.c.b16 %v966, %v964
  %v1069 = vpack.c.b16 %v967, %v965
  %v1070 = vpack.c.b16 %v970, %v968
  %v1071 = vpack.c.b16 %v971, %v969
  %v1072 = vpack.c.b16 %v974, %v972
  %v1073 = vpack.c.b16 %v975, %v973
  %v1074 = vpack.c.b16 %v978, %v976
  %v1075 = vpack.c.b16 %v979, %v977
  %v1076 = vpack.c.b16 %v982, %v980
  %v1077 = vpack.c.b16 %v983, %v981
  %v1078 = vpack.c.b16 %v986, %v984
  %v1079 = vpack.c.b16 %v987, %v985
  %v1080 = vpack.c.b16 %v990, %v988
  %v1081 = vpack.c.b16 %v991, %v989
  %v1082 = vpack.c.b16 %v994, %v992
  %v1083 = vpack.c.b16 %v995, %v993
  %v1084 = vpack.c.b16 %v998, %v996
  %v1085 = vpack.c.b16 %v999, %v997
  %v1086 = vpack.c.b16 %v1002, %v1000
  %v1087 = vpack.c.b16 %v1003, %v1001
  %v1088 = vpack.c.b16 %v1006, %v1004
  %v1089 = vpack.c.b16 %v1007, %v1005
  %v1090 = vpack.c.b16 %v1010, %v1008
  %v1091 = vpack.c.b16 %v1011, %v1009
  %v1092 = vpack.c.b16 %v1014, %v1012
  %v1093 = vpack.c.b16 %v1015, %v1013
  %v1094 = vpack.c.b16 %v1018, %v1016
  %v1095 = vpack.c.b16 %v1019, %v1017
  %v1096 = vpack.c.b16 %v1022, %v1020
  %v1097 = vpack.c.b16 %v1023, %v1021
  %v1098 = vpack.c.b16 %v1026, %v1024
  %v1099 = vpack.c.b16 %v1027, %v1025
  %v1100 = vpack.c.b16 %v1030, %v1028
  %v1101 = vpack.c.b16 %v1031, %v1029
  %v1102 = vpack.c.b16 %v1034, %v1032
  %v1103 = vpack.c.b16 %v1035, %v1033
  %v1104 = vpack.c.b16 %v1038, %v1036
  %v1105 = vpack.c.b16 %v1039, %v1037
  %v1106 = vpack.c.b16 %v1042, %v1040
  %v1107 = vpack.c.b16 %v1043, %v1041
  %1172 = vmatpush.bf16.msra.mxu0 %v1058
  %1173 = vmatpush.bf16.msra.mxu0 %v1056
  %1174 = vmatpush.bf16.msra.mxu0 %v1054
  %1175 = vmatpush.bf16.msra.mxu0 %v1052
  %1176 = vmatpush.bf16.msra.mxu0 %v1050
  %1177 = vmatpush.bf16.msra.mxu0 %v1048
  %1178 = vmatpush.bf16.msra.mxu0 %v1046
  %1179 = vmatpush.bf16.msra.mxu0 %v1044
  %1180 = vmatmul.bf16.gmra.mxu0 %v596
  %v1181 = vpop.f32.mrf.mxu0
  %v1182 = vadd.f32 %v208, %v1181
  %v1183 = vpop.f32.mrf.mxu0
  %v1184 = vadd.f32 %v208, %v1183
  %1185 = vmatmul.bf16.gmra.mxu0 %v600
  %v1186 = vpop.f32.mrf.mxu0
  %v1187 = vadd.f32 %v208, %v1186
  %v1188 = vpop.f32.mrf.mxu0
  %v1189 = vadd.f32 %v208, %v1188
  %1190 = vmatmul.bf16.gmra.mxu0 %v604
  %v1191 = vpop.f32.mrf.mxu0
  %v1192 = vadd.f32 %v208, %v1191
  %v1193 = vpop.f32.mrf.mxu0
  %v1194 = vadd.f32 %v208, %v1193
  %1195 = vmatmul.bf16.gmra.mxu0 %v608
  %v1196 = vpop.f32.mrf.mxu0
  %v1197 = vadd.f32 %v208, %v1196
  %v1198 = vpop.f32.mrf.mxu0
  %v1199 = vadd.f32 %v208, %v1198
  %1200 = vmatmul.bf16.gmra.mxu0 %v612
  %v1201 = vpop.f32.mrf.mxu0
  %v1202 = vadd.f32 %v208, %v1201
  %v1203 = vpop.f32.mrf.mxu0
  %v1204 = vadd.f32 %v208, %v1203
  %1205 = vmatmul.bf16.gmra.mxu0 %v616
  %v1206 = vpop.f32.mrf.mxu0
  %v1207 = vadd.f32 %v208, %v1206
  %v1208 = vpop.f32.mrf.mxu0
  %v1209 = vadd.f32 %v208, %v1208
  %1210 = vmatmul.bf16.gmra.mxu0 %v620
  %v1211 = vpop.f32.mrf.mxu0
  %v1212 = vadd.f32 %v208, %v1211
  %v1213 = vpop.f32.mrf.mxu0
  %v1214 = vadd.f32 %v208, %v1213
  %1215 = vmatmul.bf16.gmra.mxu0 %v624
  %v1216 = vpop.f32.mrf.mxu0
  %v1217 = vadd.f32 %v208, %v1216
  %v1218 = vpop.f32.mrf.mxu0
  %v1219 = vadd.f32 %v208, %v1218
  %1220 = vmatmul.bf16.gmra.mxu0 %v628
  %v1221 = vpop.f32.mrf.mxu0
  %v1222 = vadd.f32 %v208, %v1221
  %v1223 = vpop.f32.mrf.mxu0
  %v1224 = vadd.f32 %v208, %v1223
  %1225 = vmatmul.bf16.gmra.mxu0 %v632
  %v1226 = vpop.f32.mrf.mxu0
  %v1227 = vadd.f32 %v208, %v1226
  %v1228 = vpop.f32.mrf.mxu0
  %v1229 = vadd.f32 %v208, %v1228
  %1230 = vmatmul.bf16.gmra.mxu0 %v636
  %v1231 = vpop.f32.mrf.mxu0
  %v1232 = vadd.f32 %v208, %v1231
  %v1233 = vpop.f32.mrf.mxu0
  %v1234 = vadd.f32 %v208, %v1233
  %1235 = vmatmul.bf16.gmra.mxu0 %v640
  %v1236 = vpop.f32.mrf.mxu0
  %v1237 = vadd.f32 %v208, %v1236
  %v1238 = vpop.f32.mrf.mxu0
  %v1239 = vadd.f32 %v208, %v1238
  %1240 = vmatmul.bf16.gmra.mxu0 %v644
  %v1241 = vpop.f32.mrf.mxu0
  %v1242 = vadd.f32 %v208, %v1241
  %v1243 = vpop.f32.mrf.mxu0
  %v1244 = vadd.f32 %v208, %v1243
  %1245 = vmatmul.bf16.gmra.mxu0 %v648
  %v1246 = vpop.f32.mrf.mxu0
  %v1247 = vadd.f32 %v208, %v1246
  %v1248 = vpop.f32.mrf.mxu0
  %v1249 = vadd.f32 %v208, %v1248
  %1250 = vmatmul.bf16.gmra.mxu0 %v652
  %v1251 = vpop.f32.mrf.mxu0
  %v1252 = vadd.f32 %v208, %v1251
  %v1253 = vpop.f32.mrf.mxu0
  %v1254 = vadd.f32 %v208, %v1253
  %1255 = vmatmul.bf16.gmra.mxu0 %v656
  %v1256 = vpop.f32.mrf.mxu0
  %v1257 = vadd.f32 %v208, %v1256
  %v1258 = vpop.f32.mrf.mxu0
  %v1259 = vadd.f32 %v208, %v1258
  %1260 = vmatmul.bf16.gmra.mxu0 %v660
  %v1261 = vpop.f32.mrf.mxu0
  %v1262 = vadd.f32 %v208, %v1261
  %v1263 = vpop.f32.mrf.mxu0
  %v1264 = vadd.f32 %v208, %v1263
  %1265 = vmatmul.bf16.gmra.mxu0 %v664
  %v1266 = vpop.f32.mrf.mxu0
  %v1267 = vadd.f32 %v208, %v1266
  %v1268 = vpop.f32.mrf.mxu0
  %v1269 = vadd.f32 %v208, %v1268
  %1270 = vmatmul.bf16.gmra.mxu0 %v668
  %v1271 = vpop.f32.mrf.mxu0
  %v1272 = vadd.f32 %v208, %v1271
  %v1273 = vpop.f32.mrf.mxu0
  %v1274 = vadd.f32 %v208, %v1273
  %1275 = vmatmul.bf16.gmra.mxu0 %v672
  %v1276 = vpop.f32.mrf.mxu0
  %v1277 = vadd.f32 %v208, %v1276
  %v1278 = vpop.f32.mrf.mxu0
  %v1279 = vadd.f32 %v208, %v1278
  %1280 = vmatmul.bf16.gmra.mxu0 %v676
  %v1281 = vpop.f32.mrf.mxu0
  %v1282 = vadd.f32 %v208, %v1281
  %v1283 = vpop.f32.mrf.mxu0
  %v1284 = vadd.f32 %v208, %v1283
  %1285 = vmatmul.bf16.gmra.mxu0 %v680
  %v1286 = vpop.f32.mrf.mxu0
  %v1287 = vadd.f32 %v208, %v1286
  %v1288 = vpop.f32.mrf.mxu0
  %v1289 = vadd.f32 %v208, %v1288
  %1290 = vmatmul.bf16.gmra.mxu0 %v684
  %v1291 = vpop.f32.mrf.mxu0
  %v1292 = vadd.f32 %v208, %v1291
  %v1293 = vpop.f32.mrf.mxu0
  %v1294 = vadd.f32 %v208, %v1293
  %1295 = vmatmul.bf16.gmra.mxu0 %v688
  %v1296 = vpop.f32.mrf.mxu0
  %v1297 = vadd.f32 %v208, %v1296
  %v1298 = vpop.f32.mrf.mxu0
  %v1299 = vadd.f32 %v208, %v1298
  %1300 = vmatmul.bf16.gmra.mxu0 %v692
  %v1301 = vpop.f32.mrf.mxu0
  %v1302 = vadd.f32 %v208, %v1301
  %v1303 = vpop.f32.mrf.mxu0
  %v1304 = vadd.f32 %v208, %v1303
  %1305 = vmatmul.bf16.gmra.mxu0 %v696
  %v1306 = vpop.f32.mrf.mxu0
  %v1307 = vadd.f32 %v208, %v1306
  %v1308 = vpop.f32.mrf.mxu0
  %v1309 = vadd.f32 %v208, %v1308
  %1310 = vmatmul.bf16.gmra.mxu0 %v700
  %v1311 = vpop.f32.mrf.mxu0
  %v1312 = vadd.f32 %v208, %v1311
  %v1313 = vpop.f32.mrf.mxu0
  %v1314 = vadd.f32 %v208, %v1313
  %1315 = vmatmul.bf16.gmra.mxu0 %v704
  %v1316 = vpop.f32.mrf.mxu0
  %v1317 = vadd.f32 %v208, %v1316
  %v1318 = vpop.f32.mrf.mxu0
  %v1319 = vadd.f32 %v208, %v1318
  %1320 = vmatmul.bf16.gmra.mxu0 %v708
  %v1321 = vpop.f32.mrf.mxu0
  %v1322 = vadd.f32 %v208, %v1321
  %v1323 = vpop.f32.mrf.mxu0
  %v1324 = vadd.f32 %v208, %v1323
  %1325 = vmatmul.bf16.gmra.mxu0 %v712
  %v1326 = vpop.f32.mrf.mxu0
  %v1327 = vadd.f32 %v208, %v1326
  %v1328 = vpop.f32.mrf.mxu0
  %v1329 = vadd.f32 %v208, %v1328
  %1330 = vmatmul.bf16.gmra.mxu0 %v716
  %v1331 = vpop.f32.mrf.mxu0
  %v1332 = vadd.f32 %v208, %v1331
  %v1333 = vpop.f32.mrf.mxu0
  %v1334 = vadd.f32 %v208, %v1333
  %1335 = vmatmul.bf16.gmra.mxu0 %v720
  %v1336 = vpop.f32.mrf.mxu0
  %v1337 = vadd.f32 %v208, %v1336
  %v1338 = vpop.f32.mrf.mxu0
  %v1339 = vadd.f32 %v208, %v1338
  %1340 = vdwg.mxu0
  %1341 = vmatpush.bf16.msra.mxu0 %v1074
  %1342 = vmatpush.bf16.msra.mxu0 %v1072
  %1343 = vmatpush.bf16.msra.mxu0 %v1070
  %1344 = vmatpush.bf16.msra.mxu0 %v1068
  %1345 = vmatpush.bf16.msra.mxu0 %v1066
  %1346 = vmatpush.bf16.msra.mxu0 %v1064
  %1347 = vmatpush.bf16.msra.mxu0 %v1062
  %1348 = vmatpush.bf16.msra.mxu0 %v1060
  %1349 = vmatmul.bf16.gmra.mxu0 %v597
  %v1350 = vpop.f32.mrf.mxu0
  %v1351 = vadd.f32 %v1182, %v1350
  %v1352 = vpop.f32.mrf.mxu0
  %v1353 = vadd.f32 %v1184, %v1352
  %1354 = vmatmul.bf16.gmra.mxu0 %v601
  %v1355 = vpop.f32.mrf.mxu0
  %v1356 = vadd.f32 %v1187, %v1355
  %v1357 = vpop.f32.mrf.mxu0
  %v1358 = vadd.f32 %v1189, %v1357
  %1359 = vmatmul.bf16.gmra.mxu0 %v605
  %v1360 = vpop.f32.mrf.mxu0
  %v1361 = vadd.f32 %v1192, %v1360
  %v1362 = vpop.f32.mrf.mxu0
  %v1363 = vadd.f32 %v1194, %v1362
  %1364 = vmatmul.bf16.gmra.mxu0 %v609
  %v1365 = vpop.f32.mrf.mxu0
  %v1366 = vadd.f32 %v1197, %v1365
  %v1367 = vpop.f32.mrf.mxu0
  %v1368 = vadd.f32 %v1199, %v1367
  %1369 = vmatmul.bf16.gmra.mxu0 %v613
  %v1370 = vpop.f32.mrf.mxu0
  %v1371 = vadd.f32 %v1202, %v1370
  %v1372 = vpop.f32.mrf.mxu0
  %v1373 = vadd.f32 %v1204, %v1372
  %1374 = vmatmul.bf16.gmra.mxu0 %v617
  %v1375 = vpop.f32.mrf.mxu0
  %v1376 = vadd.f32 %v1207, %v1375
  %v1377 = vpop.f32.mrf.mxu0
  %v1378 = vadd.f32 %v1209, %v1377
  %1379 = vmatmul.bf16.gmra.mxu0 %v621
  %v1380 = vpop.f32.mrf.mxu0
  %v1381 = vadd.f32 %v1212, %v1380
  %v1382 = vpop.f32.mrf.mxu0
  %v1383 = vadd.f32 %v1214, %v1382
  %1384 = vmatmul.bf16.gmra.mxu0 %v625
  %v1385 = vpop.f32.mrf.mxu0
  %v1386 = vadd.f32 %v1217, %v1385
  %v1387 = vpop.f32.mrf.mxu0
  %v1388 = vadd.f32 %v1219, %v1387
  %1389 = vmatmul.bf16.gmra.mxu0 %v629
  %v1390 = vpop.f32.mrf.mxu0
  %v1391 = vadd.f32 %v1222, %v1390
  %v1392 = vpop.f32.mrf.mxu0
  %v1393 = vadd.f32 %v1224, %v1392
  %1394 = vmatmul.bf16.gmra.mxu0 %v633
  %v1395 = vpop.f32.mrf.mxu0
  %v1396 = vadd.f32 %v1227, %v1395
  %v1397 = vpop.f32.mrf.mxu0
  %v1398 = vadd.f32 %v1229, %v1397
  %1399 = vmatmul.bf16.gmra.mxu0 %v637
  %v1400 = vpop.f32.mrf.mxu0
  %v1401 = vadd.f32 %v1232, %v1400
  %v1402 = vpop.f32.mrf.mxu0
  %v1403 = vadd.f32 %v1234, %v1402
  %1404 = vmatmul.bf16.gmra.mxu0 %v641
  %v1405 = vpop.f32.mrf.mxu0
  %v1406 = vadd.f32 %v1237, %v1405
  %v1407 = vpop.f32.mrf.mxu0
  %v1408 = vadd.f32 %v1239, %v1407
  %1409 = vmatmul.bf16.gmra.mxu0 %v645
  %v1410 = vpop.f32.mrf.mxu0
  %v1411 = vadd.f32 %v1242, %v1410
  %v1412 = vpop.f32.mrf.mxu0
  %v1413 = vadd.f32 %v1244, %v1412
  %1414 = vmatmul.bf16.gmra.mxu0 %v649
  %v1415 = vpop.f32.mrf.mxu0
  %v1416 = vadd.f32 %v1247, %v1415
  %v1417 = vpop.f32.mrf.mxu0
  %v1418 = vadd.f32 %v1249, %v1417
  %1419 = vmatmul.bf16.gmra.mxu0 %v653
  %v1420 = vpop.f32.mrf.mxu0
  %v1421 = vadd.f32 %v1252, %v1420
  %v1422 = vpop.f32.mrf.mxu0
  %v1423 = vadd.f32 %v1254, %v1422
  %1424 = vmatmul.bf16.gmra.mxu0 %v657
  %v1425 = vpop.f32.mrf.mxu0
  %v1426 = vadd.f32 %v1257, %v1425
  %v1427 = vpop.f32.mrf.mxu0
  %v1428 = vadd.f32 %v1259, %v1427
  %1429 = vmatmul.bf16.gmra.mxu0 %v661
  %v1430 = vpop.f32.mrf.mxu0
  %v1431 = vadd.f32 %v1262, %v1430
  %v1432 = vpop.f32.mrf.mxu0
  %v1433 = vadd.f32 %v1264, %v1432
  %1434 = vmatmul.bf16.gmra.mxu0 %v665
  %v1435 = vpop.f32.mrf.mxu0
  %v1436 = vadd.f32 %v1267, %v1435
  %v1437 = vpop.f32.mrf.mxu0
  %v1438 = vadd.f32 %v1269, %v1437
  %1439 = vmatmul.bf16.gmra.mxu0 %v669
  %v1440 = vpop.f32.mrf.mxu0
  %v1441 = vadd.f32 %v1272, %v1440
  %v1442 = vpop.f32.mrf.mxu0
  %v1443 = vadd.f32 %v1274, %v1442
  %1444 = vmatmul.bf16.gmra.mxu0 %v673
  %v1445 = vpop.f32.mrf.mxu0
  %v1446 = vadd.f32 %v1277, %v1445
  %v1447 = vpop.f32.mrf.mxu0
  %v1448 = vadd.f32 %v1279, %v1447
  %1449 = vmatmul.bf16.gmra.mxu0 %v677
  %v1450 = vpop.f32.mrf.mxu0
  %v1451 = vadd.f32 %v1282, %v1450
  %v1452 = vpop.f32.mrf.mxu0
  %v1453 = vadd.f32 %v1284, %v1452
  %1454 = vmatmul.bf16.gmra.mxu0 %v681
  %v1455 = vpop.f32.mrf.mxu0
  %v1456 = vadd.f32 %v1287, %v1455
  %v1457 = vpop.f32.mrf.mxu0
  %v1458 = vadd.f32 %v1289, %v1457
  %1459 = vmatmul.bf16.gmra.mxu0 %v685
  %v1460 = vpop.f32.mrf.mxu0
  %v1461 = vadd.f32 %v1292, %v1460
  %v1462 = vpop.f32.mrf.mxu0
  %v1463 = vadd.f32 %v1294, %v1462
  %1464 = vmatmul.bf16.gmra.mxu0 %v689
  %v1465 = vpop.f32.mrf.mxu0
  %v1466 = vadd.f32 %v1297, %v1465
  %v1467 = vpop.f32.mrf.mxu0
  %v1468 = vadd.f32 %v1299, %v1467
  %1469 = vmatmul.bf16.gmra.mxu0 %v693
  %v1470 = vpop.f32.mrf.mxu0
  %v1471 = vadd.f32 %v1302, %v1470
  %v1472 = vpop.f32.mrf.mxu0
  %v1473 = vadd.f32 %v1304, %v1472
  %1474 = vmatmul.bf16.gmra.mxu0 %v697
  %v1475 = vpop.f32.mrf.mxu0
  %v1476 = vadd.f32 %v1307, %v1475
  %v1477 = vpop.f32.mrf.mxu0
  %v1478 = vadd.f32 %v1309, %v1477
  %1479 = vmatmul.bf16.gmra.mxu0 %v701
  %v1480 = vpop.f32.mrf.mxu0
  %v1481 = vadd.f32 %v1312, %v1480
  %v1482 = vpop.f32.mrf.mxu0
  %v1483 = vadd.f32 %v1314, %v1482
  %1484 = vmatmul.bf16.gmra.mxu0 %v705
  %v1485 = vpop.f32.mrf.mxu0
  %v1486 = vadd.f32 %v1317, %v1485
  %v1487 = vpop.f32.mrf.mxu0
  %v1488 = vadd.f32 %v1319, %v1487
  %1489 = vmatmul.bf16.gmra.mxu0 %v709
  %v1490 = vpop.f32.mrf.mxu0
  %v1491 = vadd.f32 %v1322, %v1490
  %v1492 = vpop.f32.mrf.mxu0
  %v1493 = vadd.f32 %v1324, %v1492
  %1494 = vmatmul.bf16.gmra.mxu0 %v713
  %v1495 = vpop.f32.mrf.mxu0
  %v1496 = vadd.f32 %v1327, %v1495
  %v1497 = vpop.f32.mrf.mxu0
  %v1498 = vadd.f32 %v1329, %v1497
  %1499 = vmatmul.bf16.gmra.mxu0 %v717
  %v1500 = vpop.f32.mrf.mxu0
  %v1501 = vadd.f32 %v1332, %v1500
  %v1502 = vpop.f32.mrf.mxu0
  %v1503 = vadd.f32 %v1334, %v1502
  %1504 = vmatmul.bf16.gmra.mxu0 %v721
  %v1505 = vpop.f32.mrf.mxu0
  %v1506 = vadd.f32 %v1337, %v1505
  %v1507 = vpop.f32.mrf.mxu0
  %v1508 = vadd.f32 %v1339, %v1507
  %1509 = vdwg.mxu0
  %1510 = vmatpush.bf16.msra.mxu0 %v1090
  %1511 = vmatpush.bf16.msra.mxu0 %v1088
  %1512 = vmatpush.bf16.msra.mxu0 %v1086
  %1513 = vmatpush.bf16.msra.mxu0 %v1084
  %1514 = vmatpush.bf16.msra.mxu0 %v1082
  %1515 = vmatpush.bf16.msra.mxu0 %v1080
  %1516 = vmatpush.bf16.msra.mxu0 %v1078
  %1517 = vmatpush.bf16.msra.mxu0 %v1076
  %1518 = vmatmul.bf16.gmra.mxu0 %v598
  %v1519 = vpop.f32.mrf.mxu0
  %v1520 = vadd.f32 %v1351, %v1519
  %v1521 = vpop.f32.mrf.mxu0
  %v1522 = vadd.f32 %v1353, %v1521
  %1523 = vmatmul.bf16.gmra.mxu0 %v602
  %v1524 = vpop.f32.mrf.mxu0
  %v1525 = vadd.f32 %v1356, %v1524
  %v1526 = vpop.f32.mrf.mxu0
  %v1527 = vadd.f32 %v1358, %v1526
  %1528 = vmatmul.bf16.gmra.mxu0 %v606
  %v1529 = vpop.f32.mrf.mxu0
  %v1530 = vadd.f32 %v1361, %v1529
  %v1531 = vpop.f32.mrf.mxu0
  %v1532 = vadd.f32 %v1363, %v1531
  %1533 = vmatmul.bf16.gmra.mxu0 %v610
  %v1534 = vpop.f32.mrf.mxu0
  %v1535 = vadd.f32 %v1366, %v1534
  %v1536 = vpop.f32.mrf.mxu0
  %v1537 = vadd.f32 %v1368, %v1536
  %1538 = vmatmul.bf16.gmra.mxu0 %v614
  %v1539 = vpop.f32.mrf.mxu0
  %v1540 = vadd.f32 %v1371, %v1539
  %v1541 = vpop.f32.mrf.mxu0
  %v1542 = vadd.f32 %v1373, %v1541
  %1543 = vmatmul.bf16.gmra.mxu0 %v618
  %v1544 = vpop.f32.mrf.mxu0
  %v1545 = vadd.f32 %v1376, %v1544
  %v1546 = vpop.f32.mrf.mxu0
  %v1547 = vadd.f32 %v1378, %v1546
  %1548 = vmatmul.bf16.gmra.mxu0 %v622
  %v1549 = vpop.f32.mrf.mxu0
  %v1550 = vadd.f32 %v1381, %v1549
  %v1551 = vpop.f32.mrf.mxu0
  %v1552 = vadd.f32 %v1383, %v1551
  %1553 = vmatmul.bf16.gmra.mxu0 %v626
  %v1554 = vpop.f32.mrf.mxu0
  %v1555 = vadd.f32 %v1386, %v1554
  %v1556 = vpop.f32.mrf.mxu0
  %v1557 = vadd.f32 %v1388, %v1556
  %1558 = vmatmul.bf16.gmra.mxu0 %v630
  %v1559 = vpop.f32.mrf.mxu0
  %v1560 = vadd.f32 %v1391, %v1559
  %v1561 = vpop.f32.mrf.mxu0
  %v1562 = vadd.f32 %v1393, %v1561
  %1563 = vmatmul.bf16.gmra.mxu0 %v634
  %v1564 = vpop.f32.mrf.mxu0
  %v1565 = vadd.f32 %v1396, %v1564
  %v1566 = vpop.f32.mrf.mxu0
  %v1567 = vadd.f32 %v1398, %v1566
  %1568 = vmatmul.bf16.gmra.mxu0 %v638
  %v1569 = vpop.f32.mrf.mxu0
  %v1570 = vadd.f32 %v1401, %v1569
  %v1571 = vpop.f32.mrf.mxu0
  %v1572 = vadd.f32 %v1403, %v1571
  %1573 = vmatmul.bf16.gmra.mxu0 %v642
  %v1574 = vpop.f32.mrf.mxu0
  %v1575 = vadd.f32 %v1406, %v1574
  %v1576 = vpop.f32.mrf.mxu0
  %v1577 = vadd.f32 %v1408, %v1576
  %1578 = vmatmul.bf16.gmra.mxu0 %v646
  %v1579 = vpop.f32.mrf.mxu0
  %v1580 = vadd.f32 %v1411, %v1579
  %v1581 = vpop.f32.mrf.mxu0
  %v1582 = vadd.f32 %v1413, %v1581
  %1583 = vmatmul.bf16.gmra.mxu0 %v650
  %v1584 = vpop.f32.mrf.mxu0
  %v1585 = vadd.f32 %v1416, %v1584
  %v1586 = vpop.f32.mrf.mxu0
  %v1587 = vadd.f32 %v1418, %v1586
  %1588 = vmatmul.bf16.gmra.mxu0 %v654
  %v1589 = vpop.f32.mrf.mxu0
  %v1590 = vadd.f32 %v1421, %v1589
  %v1591 = vpop.f32.mrf.mxu0
  %v1592 = vadd.f32 %v1423, %v1591
  %1593 = vmatmul.bf16.gmra.mxu0 %v658
  %v1594 = vpop.f32.mrf.mxu0
  %v1595 = vadd.f32 %v1426, %v1594
  %v1596 = vpop.f32.mrf.mxu0
  %v1597 = vadd.f32 %v1428, %v1596
  %1598 = vmatmul.bf16.gmra.mxu0 %v662
  %v1599 = vpop.f32.mrf.mxu0
  %v1600 = vadd.f32 %v1431, %v1599
  %v1601 = vpop.f32.mrf.mxu0
  %v1602 = vadd.f32 %v1433, %v1601
  %1603 = vmatmul.bf16.gmra.mxu0 %v666
  %v1604 = vpop.f32.mrf.mxu0
  %v1605 = vadd.f32 %v1436, %v1604
  %v1606 = vpop.f32.mrf.mxu0
  %v1607 = vadd.f32 %v1438, %v1606
  %1608 = vmatmul.bf16.gmra.mxu0 %v670
  %v1609 = vpop.f32.mrf.mxu0
  %v1610 = vadd.f32 %v1441, %v1609
  %v1611 = vpop.f32.mrf.mxu0
  %v1612 = vadd.f32 %v1443, %v1611
  %1613 = vmatmul.bf16.gmra.mxu0 %v674
  %v1614 = vpop.f32.mrf.mxu0
  %v1615 = vadd.f32 %v1446, %v1614
  %v1616 = vpop.f32.mrf.mxu0
  %v1617 = vadd.f32 %v1448, %v1616
  %1618 = vmatmul.bf16.gmra.mxu0 %v678
  %v1619 = vpop.f32.mrf.mxu0
  %v1620 = vadd.f32 %v1451, %v1619
  %v1621 = vpop.f32.mrf.mxu0
  %v1622 = vadd.f32 %v1453, %v1621
  %1623 = vmatmul.bf16.gmra.mxu0 %v682
  %v1624 = vpop.f32.mrf.mxu0
  %v1625 = vadd.f32 %v1456, %v1624
  %v1626 = vpop.f32.mrf.mxu0
  %v1627 = vadd.f32 %v1458, %v1626
  %1628 = vmatmul.bf16.gmra.mxu0 %v686
  %v1629 = vpop.f32.mrf.mxu0
  %v1630 = vadd.f32 %v1461, %v1629
  %v1631 = vpop.f32.mrf.mxu0
  %v1632 = vadd.f32 %v1463, %v1631
  %1633 = vmatmul.bf16.gmra.mxu0 %v690
  %v1634 = vpop.f32.mrf.mxu0
  %v1635 = vadd.f32 %v1466, %v1634
  %v1636 = vpop.f32.mrf.mxu0
  %v1637 = vadd.f32 %v1468, %v1636
  %1638 = vmatmul.bf16.gmra.mxu0 %v694
  %v1639 = vpop.f32.mrf.mxu0
  %v1640 = vadd.f32 %v1471, %v1639
  %v1641 = vpop.f32.mrf.mxu0
  %v1642 = vadd.f32 %v1473, %v1641
  %1643 = vmatmul.bf16.gmra.mxu0 %v698
  %v1644 = vpop.f32.mrf.mxu0
  %v1645 = vadd.f32 %v1476, %v1644
  %v1646 = vpop.f32.mrf.mxu0
  %v1647 = vadd.f32 %v1478, %v1646
  %1648 = vmatmul.bf16.gmra.mxu0 %v702
  %v1649 = vpop.f32.mrf.mxu0
  %v1650 = vadd.f32 %v1481, %v1649
  %v1651 = vpop.f32.mrf.mxu0
  %v1652 = vadd.f32 %v1483, %v1651
  %1653 = vmatmul.bf16.gmra.mxu0 %v706
  %v1654 = vpop.f32.mrf.mxu0
  %v1655 = vadd.f32 %v1486, %v1654
  %v1656 = vpop.f32.mrf.mxu0
  %v1657 = vadd.f32 %v1488, %v1656
  %1658 = vmatmul.bf16.gmra.mxu0 %v710
  %v1659 = vpop.f32.mrf.mxu0
  %v1660 = vadd.f32 %v1491, %v1659
  %v1661 = vpop.f32.mrf.mxu0
  %v1662 = vadd.f32 %v1493, %v1661
  %1663 = vmatmul.bf16.gmra.mxu0 %v714
  %v1664 = vpop.f32.mrf.mxu0
  %v1665 = vadd.f32 %v1496, %v1664
  %v1666 = vpop.f32.mrf.mxu0
  %v1667 = vadd.f32 %v1498, %v1666
  %1668 = vmatmul.bf16.gmra.mxu0 %v718
  %v1669 = vpop.f32.mrf.mxu0
  %v1670 = vadd.f32 %v1501, %v1669
  %v1671 = vpop.f32.mrf.mxu0
  %v1672 = vadd.f32 %v1503, %v1671
  %1673 = vmatmul.bf16.gmra.mxu0 %v722
  %v1674 = vpop.f32.mrf.mxu0
  %v1675 = vadd.f32 %v1506, %v1674
  %v1676 = vpop.f32.mrf.mxu0
  %v1677 = vadd.f32 %v1508, %v1676
  %1678 = vdwg.mxu0
  %1679 = vmatpush.bf16.msra.mxu0 %v1106
  %1680 = vmatpush.bf16.msra.mxu0 %v1104
  %1681 = vmatpush.bf16.msra.mxu0 %v1102
  %1682 = vmatpush.bf16.msra.mxu0 %v1100
  %1683 = vmatpush.bf16.msra.mxu0 %v1098
  %1684 = vmatpush.bf16.msra.mxu0 %v1096
  %1685 = vmatpush.bf16.msra.mxu0 %v1094
  %1686 = vmatpush.bf16.msra.mxu0 %v1092
  %1687 = vmatmul.bf16.gmra.mxu0 %v599
  %v1688 = vpop.f32.mrf.mxu0
  %v1689 = vadd.f32 %v1520, %v1688
  %v1690 = vpop.f32.mrf.mxu0
  %v1691 = vadd.f32 %v1522, %v1690
  %1692 = vmatmul.bf16.gmra.mxu0 %v603
  %v1693 = vpop.f32.mrf.mxu0
  %v1694 = vadd.f32 %v1525, %v1693
  %v1695 = vpop.f32.mrf.mxu0
  %v1696 = vadd.f32 %v1527, %v1695
  %1697 = vmatmul.bf16.gmra.mxu0 %v607
  %v1698 = vpop.f32.mrf.mxu0
  %v1699 = vadd.f32 %v1530, %v1698
  %v1700 = vpop.f32.mrf.mxu0
  %v1701 = vadd.f32 %v1532, %v1700
  %1702 = vmatmul.bf16.gmra.mxu0 %v611
  %v1703 = vpop.f32.mrf.mxu0
  %v1704 = vadd.f32 %v1535, %v1703
  %v1705 = vpop.f32.mrf.mxu0
  %v1706 = vadd.f32 %v1537, %v1705
  %1707 = vmatmul.bf16.gmra.mxu0 %v615
  %v1708 = vpop.f32.mrf.mxu0
  %v1709 = vadd.f32 %v1540, %v1708
  %v1710 = vpop.f32.mrf.mxu0
  %v1711 = vadd.f32 %v1542, %v1710
  %1712 = vmatmul.bf16.gmra.mxu0 %v619
  %v1713 = vpop.f32.mrf.mxu0
  %v1714 = vadd.f32 %v1545, %v1713
  %v1715 = vpop.f32.mrf.mxu0
  %v1716 = vadd.f32 %v1547, %v1715
  %1717 = vmatmul.bf16.gmra.mxu0 %v623
  %v1718 = vpop.f32.mrf.mxu0
  %v1719 = vadd.f32 %v1550, %v1718
  %v1720 = vpop.f32.mrf.mxu0
  %v1721 = vadd.f32 %v1552, %v1720
  %1722 = vmatmul.bf16.gmra.mxu0 %v627
  %v1723 = vpop.f32.mrf.mxu0
  %v1724 = vadd.f32 %v1555, %v1723
  %v1725 = vpop.f32.mrf.mxu0
  %v1726 = vadd.f32 %v1557, %v1725
  %1727 = vmatmul.bf16.gmra.mxu0 %v631
  %v1728 = vpop.f32.mrf.mxu0
  %v1729 = vadd.f32 %v1560, %v1728
  %v1730 = vpop.f32.mrf.mxu0
  %v1731 = vadd.f32 %v1562, %v1730
  %1732 = vmatmul.bf16.gmra.mxu0 %v635
  %v1733 = vpop.f32.mrf.mxu0
  %v1734 = vadd.f32 %v1565, %v1733
  %v1735 = vpop.f32.mrf.mxu0
  %v1736 = vadd.f32 %v1567, %v1735
  %1737 = vmatmul.bf16.gmra.mxu0 %v639
  %v1738 = vpop.f32.mrf.mxu0
  %v1739 = vadd.f32 %v1570, %v1738
  %v1740 = vpop.f32.mrf.mxu0
  %v1741 = vadd.f32 %v1572, %v1740
  %1742 = vmatmul.bf16.gmra.mxu0 %v643
  %v1743 = vpop.f32.mrf.mxu0
  %v1744 = vadd.f32 %v1575, %v1743
  %v1745 = vpop.f32.mrf.mxu0
  %v1746 = vadd.f32 %v1577, %v1745
  %1747 = vmatmul.bf16.gmra.mxu0 %v647
  %v1748 = vpop.f32.mrf.mxu0
  %v1749 = vadd.f32 %v1580, %v1748
  %v1750 = vpop.f32.mrf.mxu0
  %v1751 = vadd.f32 %v1582, %v1750
  %1752 = vmatmul.bf16.gmra.mxu0 %v651
  %v1753 = vpop.f32.mrf.mxu0
  %v1754 = vadd.f32 %v1585, %v1753
  %v1755 = vpop.f32.mrf.mxu0
  %v1756 = vadd.f32 %v1587, %v1755
  %1757 = vmatmul.bf16.gmra.mxu0 %v655
  %v1758 = vpop.f32.mrf.mxu0
  %v1759 = vadd.f32 %v1590, %v1758
  %v1760 = vpop.f32.mrf.mxu0
  %v1761 = vadd.f32 %v1592, %v1760
  %1762 = vmatmul.bf16.gmra.mxu0 %v659
  %v1763 = vpop.f32.mrf.mxu0
  %v1764 = vadd.f32 %v1595, %v1763
  %v1765 = vpop.f32.mrf.mxu0
  %v1766 = vadd.f32 %v1597, %v1765
  %1767 = vmatmul.bf16.gmra.mxu0 %v663
  %v1768 = vpop.f32.mrf.mxu0
  %v1769 = vadd.f32 %v1600, %v1768
  %v1770 = vpop.f32.mrf.mxu0
  %v1771 = vadd.f32 %v1602, %v1770
  %1772 = vmatmul.bf16.gmra.mxu0 %v667
  %v1773 = vpop.f32.mrf.mxu0
  %v1774 = vadd.f32 %v1605, %v1773
  %v1775 = vpop.f32.mrf.mxu0
  %v1776 = vadd.f32 %v1607, %v1775
  %1777 = vmatmul.bf16.gmra.mxu0 %v671
  %v1778 = vpop.f32.mrf.mxu0
  %v1779 = vadd.f32 %v1610, %v1778
  %v1780 = vpop.f32.mrf.mxu0
  %v1781 = vadd.f32 %v1612, %v1780
  %1782 = vmatmul.bf16.gmra.mxu0 %v675
  %v1783 = vpop.f32.mrf.mxu0
  %v1784 = vadd.f32 %v1615, %v1783
  %v1785 = vpop.f32.mrf.mxu0
  %v1786 = vadd.f32 %v1617, %v1785
  %1787 = vmatmul.bf16.gmra.mxu0 %v679
  %v1788 = vpop.f32.mrf.mxu0
  %v1789 = vadd.f32 %v1620, %v1788
  %v1790 = vpop.f32.mrf.mxu0
  %v1791 = vadd.f32 %v1622, %v1790
  %1792 = vmatmul.bf16.gmra.mxu0 %v683
  %v1793 = vpop.f32.mrf.mxu0
  %v1794 = vadd.f32 %v1625, %v1793
  %v1795 = vpop.f32.mrf.mxu0
  %v1796 = vadd.f32 %v1627, %v1795
  %1797 = vmatmul.bf16.gmra.mxu0 %v687
  %v1798 = vpop.f32.mrf.mxu0
  %v1799 = vadd.f32 %v1630, %v1798
  %v1800 = vpop.f32.mrf.mxu0
  %v1801 = vadd.f32 %v1632, %v1800
  %1802 = vmatmul.bf16.gmra.mxu0 %v691
  %v1803 = vpop.f32.mrf.mxu0
  %v1804 = vadd.f32 %v1635, %v1803
  %v1805 = vpop.f32.mrf.mxu0
  %v1806 = vadd.f32 %v1637, %v1805
  %1807 = vmatmul.bf16.gmra.mxu0 %v695
  %v1808 = vpop.f32.mrf.mxu0
  %v1809 = vadd.f32 %v1640, %v1808
  %v1810 = vpop.f32.mrf.mxu0
  %v1811 = vadd.f32 %v1642, %v1810
  %1812 = vmatmul.bf16.gmra.mxu0 %v699
  %v1813 = vpop.f32.mrf.mxu0
  %v1814 = vadd.f32 %v1645, %v1813
  %v1815 = vpop.f32.mrf.mxu0
  %v1816 = vadd.f32 %v1647, %v1815
  %1817 = vmatmul.bf16.gmra.mxu0 %v703
  %v1818 = vpop.f32.mrf.mxu0
  %v1819 = vadd.f32 %v1650, %v1818
  %v1820 = vpop.f32.mrf.mxu0
  %v1821 = vadd.f32 %v1652, %v1820
  %1822 = vmatmul.bf16.gmra.mxu0 %v707
  %v1823 = vpop.f32.mrf.mxu0
  %v1824 = vadd.f32 %v1655, %v1823
  %v1825 = vpop.f32.mrf.mxu0
  %v1826 = vadd.f32 %v1657, %v1825
  %1827 = vmatmul.bf16.gmra.mxu0 %v711
  %v1828 = vpop.f32.mrf.mxu0
  %v1829 = vadd.f32 %v1660, %v1828
  %v1830 = vpop.f32.mrf.mxu0
  %v1831 = vadd.f32 %v1662, %v1830
  %1832 = vmatmul.bf16.gmra.mxu0 %v715
  %v1833 = vpop.f32.mrf.mxu0
  %v1834 = vadd.f32 %v1665, %v1833
  %v1835 = vpop.f32.mrf.mxu0
  %v1836 = vadd.f32 %v1667, %v1835
  %1837 = vmatmul.bf16.gmra.mxu0 %v719
  %v1838 = vpop.f32.mrf.mxu0
  %v1839 = vadd.f32 %v1670, %v1838
  %v1840 = vpop.f32.mrf.mxu0
  %v1841 = vadd.f32 %v1672, %v1840
  %1842 = vmatmul.bf16.gmra.mxu0 %v723
  %v1843 = vpop.f32.mrf.mxu0
  %v1844 = vadd.f32 %v1675, %v1843
  %v1845 = vpop.f32.mrf.mxu0
  %v1846 = vadd.f32 %v1677, %v1845
  %1847 = vdwg.mxu0
  %1848 = vmatpush.bf16.msra.mxu0 %v1059
  %1849 = vmatpush.bf16.msra.mxu0 %v1057
  %1850 = vmatpush.bf16.msra.mxu0 %v1055
  %1851 = vmatpush.bf16.msra.mxu0 %v1053
  %1852 = vmatpush.bf16.msra.mxu0 %v1051
  %1853 = vmatpush.bf16.msra.mxu0 %v1049
  %1854 = vmatpush.bf16.msra.mxu0 %v1047
  %1855 = vmatpush.bf16.msra.mxu0 %v1045
  %1856 = vmatmul.bf16.gmra.mxu0 %v596
  %v1857 = vpop.f32.mrf.mxu0
  %v1858 = vadd.f32 %v209, %v1857
  %v1859 = vpop.f32.mrf.mxu0
  %v1860 = vadd.f32 %v209, %v1859
  %1861 = vmatmul.bf16.gmra.mxu0 %v600
  %v1862 = vpop.f32.mrf.mxu0
  %v1863 = vadd.f32 %v209, %v1862
  %v1864 = vpop.f32.mrf.mxu0
  %v1865 = vadd.f32 %v209, %v1864
  %1866 = vmatmul.bf16.gmra.mxu0 %v604
  %v1867 = vpop.f32.mrf.mxu0
  %v1868 = vadd.f32 %v209, %v1867
  %v1869 = vpop.f32.mrf.mxu0
  %v1870 = vadd.f32 %v209, %v1869
  %1871 = vmatmul.bf16.gmra.mxu0 %v608
  %v1872 = vpop.f32.mrf.mxu0
  %v1873 = vadd.f32 %v209, %v1872
  %v1874 = vpop.f32.mrf.mxu0
  %v1875 = vadd.f32 %v209, %v1874
  %1876 = vmatmul.bf16.gmra.mxu0 %v612
  %v1877 = vpop.f32.mrf.mxu0
  %v1878 = vadd.f32 %v209, %v1877
  %v1879 = vpop.f32.mrf.mxu0
  %v1880 = vadd.f32 %v209, %v1879
  %1881 = vmatmul.bf16.gmra.mxu0 %v616
  %v1882 = vpop.f32.mrf.mxu0
  %v1883 = vadd.f32 %v209, %v1882
  %v1884 = vpop.f32.mrf.mxu0
  %v1885 = vadd.f32 %v209, %v1884
  %1886 = vmatmul.bf16.gmra.mxu0 %v620
  %v1887 = vpop.f32.mrf.mxu0
  %v1888 = vadd.f32 %v209, %v1887
  %v1889 = vpop.f32.mrf.mxu0
  %v1890 = vadd.f32 %v209, %v1889
  %1891 = vmatmul.bf16.gmra.mxu0 %v624
  %v1892 = vpop.f32.mrf.mxu0
  %v1893 = vadd.f32 %v209, %v1892
  %v1894 = vpop.f32.mrf.mxu0
  %v1895 = vadd.f32 %v209, %v1894
  %1896 = vmatmul.bf16.gmra.mxu0 %v628
  %v1897 = vpop.f32.mrf.mxu0
  %v1898 = vadd.f32 %v209, %v1897
  %v1899 = vpop.f32.mrf.mxu0
  %v1900 = vadd.f32 %v209, %v1899
  %1901 = vmatmul.bf16.gmra.mxu0 %v632
  %v1902 = vpop.f32.mrf.mxu0
  %v1903 = vadd.f32 %v209, %v1902
  %v1904 = vpop.f32.mrf.mxu0
  %v1905 = vadd.f32 %v209, %v1904
  %1906 = vmatmul.bf16.gmra.mxu0 %v636
  %v1907 = vpop.f32.mrf.mxu0
  %v1908 = vadd.f32 %v209, %v1907
  %v1909 = vpop.f32.mrf.mxu0
  %v1910 = vadd.f32 %v209, %v1909
  %1911 = vmatmul.bf16.gmra.mxu0 %v640
  %v1912 = vpop.f32.mrf.mxu0
  %v1913 = vadd.f32 %v209, %v1912
  %v1914 = vpop.f32.mrf.mxu0
  %v1915 = vadd.f32 %v209, %v1914
  %1916 = vmatmul.bf16.gmra.mxu0 %v644
  %v1917 = vpop.f32.mrf.mxu0
  %v1918 = vadd.f32 %v209, %v1917
  %v1919 = vpop.f32.mrf.mxu0
  %v1920 = vadd.f32 %v209, %v1919
  %1921 = vmatmul.bf16.gmra.mxu0 %v648
  %v1922 = vpop.f32.mrf.mxu0
  %v1923 = vadd.f32 %v209, %v1922
  %v1924 = vpop.f32.mrf.mxu0
  %v1925 = vadd.f32 %v209, %v1924
  %1926 = vmatmul.bf16.gmra.mxu0 %v652
  %v1927 = vpop.f32.mrf.mxu0
  %v1928 = vadd.f32 %v209, %v1927
  %v1929 = vpop.f32.mrf.mxu0
  %v1930 = vadd.f32 %v209, %v1929
  %1931 = vmatmul.bf16.gmra.mxu0 %v656
  %v1932 = vpop.f32.mrf.mxu0
  %v1933 = vadd.f32 %v209, %v1932
  %v1934 = vpop.f32.mrf.mxu0
  %v1935 = vadd.f32 %v209, %v1934
  %1936 = vmatmul.bf16.gmra.mxu0 %v660
  %v1937 = vpop.f32.mrf.mxu0
  %v1938 = vadd.f32 %v209, %v1937
  %v1939 = vpop.f32.mrf.mxu0
  %v1940 = vadd.f32 %v209, %v1939
  %1941 = vmatmul.bf16.gmra.mxu0 %v664
  %v1942 = vpop.f32.mrf.mxu0
  %v1943 = vadd.f32 %v209, %v1942
  %v1944 = vpop.f32.mrf.mxu0
  %v1945 = vadd.f32 %v209, %v1944
  %1946 = vmatmul.bf16.gmra.mxu0 %v668
  %v1947 = vpop.f32.mrf.mxu0
  %v1948 = vadd.f32 %v209, %v1947
  %v1949 = vpop.f32.mrf.mxu0
  %v1950 = vadd.f32 %v209, %v1949
  %1951 = vmatmul.bf16.gmra.mxu0 %v672
  %v1952 = vpop.f32.mrf.mxu0
  %v1953 = vadd.f32 %v209, %v1952
  %v1954 = vpop.f32.mrf.mxu0
  %v1955 = vadd.f32 %v209, %v1954
  %1956 = vmatmul.bf16.gmra.mxu0 %v676
  %v1957 = vpop.f32.mrf.mxu0
  %v1958 = vadd.f32 %v209, %v1957
  %v1959 = vpop.f32.mrf.mxu0
  %v1960 = vadd.f32 %v209, %v1959
  %1961 = vmatmul.bf16.gmra.mxu0 %v680
  %v1962 = vpop.f32.mrf.mxu0
  %v1963 = vadd.f32 %v209, %v1962
  %v1964 = vpop.f32.mrf.mxu0
  %v1965 = vadd.f32 %v209, %v1964
  %1966 = vmatmul.bf16.gmra.mxu0 %v684
  %v1967 = vpop.f32.mrf.mxu0
  %v1968 = vadd.f32 %v209, %v1967
  %v1969 = vpop.f32.mrf.mxu0
  %v1970 = vadd.f32 %v209, %v1969
  %1971 = vmatmul.bf16.gmra.mxu0 %v688
  %v1972 = vpop.f32.mrf.mxu0
  %v1973 = vadd.f32 %v209, %v1972
  %v1974 = vpop.f32.mrf.mxu0
  %v1975 = vadd.f32 %v209, %v1974
  %1976 = vmatmul.bf16.gmra.mxu0 %v692
  %v1977 = vpop.f32.mrf.mxu0
  %v1978 = vadd.f32 %v209, %v1977
  %v1979 = vpop.f32.mrf.mxu0
  %v1980 = vadd.f32 %v209, %v1979
  %1981 = vmatmul.bf16.gmra.mxu0 %v696
  %v1982 = vpop.f32.mrf.mxu0
  %v1983 = vadd.f32 %v209, %v1982
  %v1984 = vpop.f32.mrf.mxu0
  %v1985 = vadd.f32 %v209, %v1984
  %1986 = vmatmul.bf16.gmra.mxu0 %v700
  %v1987 = vpop.f32.mrf.mxu0
  %v1988 = vadd.f32 %v209, %v1987
  %v1989 = vpop.f32.mrf.mxu0
  %v1990 = vadd.f32 %v209, %v1989
  %1991 = vmatmul.bf16.gmra.mxu0 %v704
  %v1992 = vpop.f32.mrf.mxu0
  %v1993 = vadd.f32 %v209, %v1992
  %v1994 = vpop.f32.mrf.mxu0
  %v1995 = vadd.f32 %v209, %v1994
  %1996 = vmatmul.bf16.gmra.mxu0 %v708
  %v1997 = vpop.f32.mrf.mxu0
  %v1998 = vadd.f32 %v209, %v1997
  %v1999 = vpop.f32.mrf.mxu0
  %v2000 = vadd.f32 %v209, %v1999
  %2001 = vmatmul.bf16.gmra.mxu0 %v712
  %v2002 = vpop.f32.mrf.mxu0
  %v2003 = vadd.f32 %v209, %v2002
  %v2004 = vpop.f32.mrf.mxu0
  %v2005 = vadd.f32 %v209, %v2004
  %2006 = vmatmul.bf16.gmra.mxu0 %v716
  %v2007 = vpop.f32.mrf.mxu0
  %v2008 = vadd.f32 %v209, %v2007
  %v2009 = vpop.f32.mrf.mxu0
  %v2010 = vadd.f32 %v209, %v2009
  %2011 = vmatmul.bf16.gmra.mxu0 %v720
  %v2012 = vpop.f32.mrf.mxu0
  %v2013 = vadd.f32 %v209, %v2012
  %v2014 = vpop.f32.mrf.mxu0
  %v2015 = vadd.f32 %v209, %v2014
  %2016 = vdwg.mxu0
  %2017 = vmatpush.bf16.msra.mxu0 %v1075
  %2018 = vmatpush.bf16.msra.mxu0 %v1073
  %2019 = vmatpush.bf16.msra.mxu0 %v1071
  %2020 = vmatpush.bf16.msra.mxu0 %v1069
  %2021 = vmatpush.bf16.msra.mxu0 %v1067
  %2022 = vmatpush.bf16.msra.mxu0 %v1065
  %2023 = vmatpush.bf16.msra.mxu0 %v1063
  %2024 = vmatpush.bf16.msra.mxu0 %v1061
  %2025 = vmatmul.bf16.gmra.mxu0 %v597
  %v2026 = vpop.f32.mrf.mxu0
  %v2027 = vadd.f32 %v1858, %v2026
  %v2028 = vpop.f32.mrf.mxu0
  %v2029 = vadd.f32 %v1860, %v2028
  %2030 = vmatmul.bf16.gmra.mxu0 %v601
  %v2031 = vpop.f32.mrf.mxu0
  %v2032 = vadd.f32 %v1863, %v2031
  %v2033 = vpop.f32.mrf.mxu0
  %v2034 = vadd.f32 %v1865, %v2033
  %2035 = vmatmul.bf16.gmra.mxu0 %v605
  %v2036 = vpop.f32.mrf.mxu0
  %v2037 = vadd.f32 %v1868, %v2036
  %v2038 = vpop.f32.mrf.mxu0
  %v2039 = vadd.f32 %v1870, %v2038
  %2040 = vmatmul.bf16.gmra.mxu0 %v609
  %v2041 = vpop.f32.mrf.mxu0
  %v2042 = vadd.f32 %v1873, %v2041
  %v2043 = vpop.f32.mrf.mxu0
  %v2044 = vadd.f32 %v1875, %v2043
  %2045 = vmatmul.bf16.gmra.mxu0 %v613
  %v2046 = vpop.f32.mrf.mxu0
  %v2047 = vadd.f32 %v1878, %v2046
  %v2048 = vpop.f32.mrf.mxu0
  %v2049 = vadd.f32 %v1880, %v2048
  %2050 = vmatmul.bf16.gmra.mxu0 %v617
  %v2051 = vpop.f32.mrf.mxu0
  %v2052 = vadd.f32 %v1883, %v2051
  %v2053 = vpop.f32.mrf.mxu0
  %v2054 = vadd.f32 %v1885, %v2053
  %2055 = vmatmul.bf16.gmra.mxu0 %v621
  %v2056 = vpop.f32.mrf.mxu0
  %v2057 = vadd.f32 %v1888, %v2056
  %v2058 = vpop.f32.mrf.mxu0
  %v2059 = vadd.f32 %v1890, %v2058
  %2060 = vmatmul.bf16.gmra.mxu0 %v625
  %v2061 = vpop.f32.mrf.mxu0
  %v2062 = vadd.f32 %v1893, %v2061
  %v2063 = vpop.f32.mrf.mxu0
  %v2064 = vadd.f32 %v1895, %v2063
  %2065 = vmatmul.bf16.gmra.mxu0 %v629
  %v2066 = vpop.f32.mrf.mxu0
  %v2067 = vadd.f32 %v1898, %v2066
  %v2068 = vpop.f32.mrf.mxu0
  %v2069 = vadd.f32 %v1900, %v2068
  %2070 = vmatmul.bf16.gmra.mxu0 %v633
  %v2071 = vpop.f32.mrf.mxu0
  %v2072 = vadd.f32 %v1903, %v2071
  %v2073 = vpop.f32.mrf.mxu0
  %v2074 = vadd.f32 %v1905, %v2073
  %2075 = vmatmul.bf16.gmra.mxu0 %v637
  %v2076 = vpop.f32.mrf.mxu0
  %v2077 = vadd.f32 %v1908, %v2076
  %v2078 = vpop.f32.mrf.mxu0
  %v2079 = vadd.f32 %v1910, %v2078
  %2080 = vmatmul.bf16.gmra.mxu0 %v641
  %v2081 = vpop.f32.mrf.mxu0
  %v2082 = vadd.f32 %v1913, %v2081
  %v2083 = vpop.f32.mrf.mxu0
  %v2084 = vadd.f32 %v1915, %v2083
  %2085 = vmatmul.bf16.gmra.mxu0 %v645
  %v2086 = vpop.f32.mrf.mxu0
  %v2087 = vadd.f32 %v1918, %v2086
  %v2088 = vpop.f32.mrf.mxu0
  %v2089 = vadd.f32 %v1920, %v2088
  %2090 = vmatmul.bf16.gmra.mxu0 %v649
  %v2091 = vpop.f32.mrf.mxu0
  %v2092 = vadd.f32 %v1923, %v2091
  %v2093 = vpop.f32.mrf.mxu0
  %v2094 = vadd.f32 %v1925, %v2093
  %2095 = vmatmul.bf16.gmra.mxu0 %v653
  %v2096 = vpop.f32.mrf.mxu0
  %v2097 = vadd.f32 %v1928, %v2096
  %v2098 = vpop.f32.mrf.mxu0
  %v2099 = vadd.f32 %v1930, %v2098
  %2100 = vmatmul.bf16.gmra.mxu0 %v657
  %v2101 = vpop.f32.mrf.mxu0
  %v2102 = vadd.f32 %v1933, %v2101
  %v2103 = vpop.f32.mrf.mxu0
  %v2104 = vadd.f32 %v1935, %v2103
  %2105 = vmatmul.bf16.gmra.mxu0 %v661
  %v2106 = vpop.f32.mrf.mxu0
  %v2107 = vadd.f32 %v1938, %v2106
  %v2108 = vpop.f32.mrf.mxu0
  %v2109 = vadd.f32 %v1940, %v2108
  %2110 = vmatmul.bf16.gmra.mxu0 %v665
  %v2111 = vpop.f32.mrf.mxu0
  %v2112 = vadd.f32 %v1943, %v2111
  %v2113 = vpop.f32.mrf.mxu0
  %v2114 = vadd.f32 %v1945, %v2113
  %2115 = vmatmul.bf16.gmra.mxu0 %v669
  %v2116 = vpop.f32.mrf.mxu0
  %v2117 = vadd.f32 %v1948, %v2116
  %v2118 = vpop.f32.mrf.mxu0
  %v2119 = vadd.f32 %v1950, %v2118
  %2120 = vmatmul.bf16.gmra.mxu0 %v673
  %v2121 = vpop.f32.mrf.mxu0
  %v2122 = vadd.f32 %v1953, %v2121
  %v2123 = vpop.f32.mrf.mxu0
  %v2124 = vadd.f32 %v1955, %v2123
  %2125 = vmatmul.bf16.gmra.mxu0 %v677
  %v2126 = vpop.f32.mrf.mxu0
  %v2127 = vadd.f32 %v1958, %v2126
  %v2128 = vpop.f32.mrf.mxu0
  %v2129 = vadd.f32 %v1960, %v2128
  %2130 = vmatmul.bf16.gmra.mxu0 %v681
  %v2131 = vpop.f32.mrf.mxu0
  %v2132 = vadd.f32 %v1963, %v2131
  %v2133 = vpop.f32.mrf.mxu0
  %v2134 = vadd.f32 %v1965, %v2133
  %2135 = vmatmul.bf16.gmra.mxu0 %v685
  %v2136 = vpop.f32.mrf.mxu0
  %v2137 = vadd.f32 %v1968, %v2136
  %v2138 = vpop.f32.mrf.mxu0
  %v2139 = vadd.f32 %v1970, %v2138
  %2140 = vmatmul.bf16.gmra.mxu0 %v689
  %v2141 = vpop.f32.mrf.mxu0
  %v2142 = vadd.f32 %v1973, %v2141
  %v2143 = vpop.f32.mrf.mxu0
  %v2144 = vadd.f32 %v1975, %v2143
  %2145 = vmatmul.bf16.gmra.mxu0 %v693
  %v2146 = vpop.f32.mrf.mxu0
  %v2147 = vadd.f32 %v1978, %v2146
  %v2148 = vpop.f32.mrf.mxu0
  %v2149 = vadd.f32 %v1980, %v2148
  %2150 = vmatmul.bf16.gmra.mxu0 %v697
  %v2151 = vpop.f32.mrf.mxu0
  %v2152 = vadd.f32 %v1983, %v2151
  %v2153 = vpop.f32.mrf.mxu0
  %v2154 = vadd.f32 %v1985, %v2153
  %2155 = vmatmul.bf16.gmra.mxu0 %v701
  %v2156 = vpop.f32.mrf.mxu0
  %v2157 = vadd.f32 %v1988, %v2156
  %v2158 = vpop.f32.mrf.mxu0
  %v2159 = vadd.f32 %v1990, %v2158
  %2160 = vmatmul.bf16.gmra.mxu0 %v705
  %v2161 = vpop.f32.mrf.mxu0
  %v2162 = vadd.f32 %v1993, %v2161
  %v2163 = vpop.f32.mrf.mxu0
  %v2164 = vadd.f32 %v1995, %v2163
  %2165 = vmatmul.bf16.gmra.mxu0 %v709
  %v2166 = vpop.f32.mrf.mxu0
  %v2167 = vadd.f32 %v1998, %v2166
  %v2168 = vpop.f32.mrf.mxu0
  %v2169 = vadd.f32 %v2000, %v2168
  %2170 = vmatmul.bf16.gmra.mxu0 %v713
  %v2171 = vpop.f32.mrf.mxu0
  %v2172 = vadd.f32 %v2003, %v2171
  %v2173 = vpop.f32.mrf.mxu0
  %v2174 = vadd.f32 %v2005, %v2173
  %2175 = vmatmul.bf16.gmra.mxu0 %v717
  %v2176 = vpop.f32.mrf.mxu0
  %v2177 = vadd.f32 %v2008, %v2176
  %v2178 = vpop.f32.mrf.mxu0
  %v2179 = vadd.f32 %v2010, %v2178
  %2180 = vmatmul.bf16.gmra.mxu0 %v721
  %v2181 = vpop.f32.mrf.mxu0
  %v2182 = vadd.f32 %v2013, %v2181
  %v2183 = vpop.f32.mrf.mxu0
  %v2184 = vadd.f32 %v2015, %v2183
  %2185 = vdwg.mxu0
  %2186 = vmatpush.bf16.msra.mxu0 %v1091
  %2187 = vmatpush.bf16.msra.mxu0 %v1089
  %2188 = vmatpush.bf16.msra.mxu0 %v1087
  %2189 = vmatpush.bf16.msra.mxu0 %v1085
  %2190 = vmatpush.bf16.msra.mxu0 %v1083
  %2191 = vmatpush.bf16.msra.mxu0 %v1081
  %2192 = vmatpush.bf16.msra.mxu0 %v1079
  %2193 = vmatpush.bf16.msra.mxu0 %v1077
  %2194 = vmatmul.bf16.gmra.mxu0 %v598
  %v2195 = vpop.f32.mrf.mxu0
  %v2196 = vadd.f32 %v2027, %v2195
  %v2197 = vpop.f32.mrf.mxu0
  %v2198 = vadd.f32 %v2029, %v2197
  %2199 = vmatmul.bf16.gmra.mxu0 %v602
  %v2200 = vpop.f32.mrf.mxu0
  %v2201 = vadd.f32 %v2032, %v2200
  %v2202 = vpop.f32.mrf.mxu0
  %v2203 = vadd.f32 %v2034, %v2202
  %2204 = vmatmul.bf16.gmra.mxu0 %v606
  %v2205 = vpop.f32.mrf.mxu0
  %v2206 = vadd.f32 %v2037, %v2205
  %v2207 = vpop.f32.mrf.mxu0
  %v2208 = vadd.f32 %v2039, %v2207
  %2209 = vmatmul.bf16.gmra.mxu0 %v610
  %v2210 = vpop.f32.mrf.mxu0
  %v2211 = vadd.f32 %v2042, %v2210
  %v2212 = vpop.f32.mrf.mxu0
  %v2213 = vadd.f32 %v2044, %v2212
  %2214 = vmatmul.bf16.gmra.mxu0 %v614
  %v2215 = vpop.f32.mrf.mxu0
  %v2216 = vadd.f32 %v2047, %v2215
  %v2217 = vpop.f32.mrf.mxu0
  %v2218 = vadd.f32 %v2049, %v2217
  %2219 = vmatmul.bf16.gmra.mxu0 %v618
  %v2220 = vpop.f32.mrf.mxu0
  %v2221 = vadd.f32 %v2052, %v2220
  %v2222 = vpop.f32.mrf.mxu0
  %v2223 = vadd.f32 %v2054, %v2222
  %2224 = vmatmul.bf16.gmra.mxu0 %v622
  %v2225 = vpop.f32.mrf.mxu0
  %v2226 = vadd.f32 %v2057, %v2225
  %v2227 = vpop.f32.mrf.mxu0
  %v2228 = vadd.f32 %v2059, %v2227
  %2229 = vmatmul.bf16.gmra.mxu0 %v626
  %v2230 = vpop.f32.mrf.mxu0
  %v2231 = vadd.f32 %v2062, %v2230
  %v2232 = vpop.f32.mrf.mxu0
  %v2233 = vadd.f32 %v2064, %v2232
  %2234 = vmatmul.bf16.gmra.mxu0 %v630
  %v2235 = vpop.f32.mrf.mxu0
  %v2236 = vadd.f32 %v2067, %v2235
  %v2237 = vpop.f32.mrf.mxu0
  %v2238 = vadd.f32 %v2069, %v2237
  %2239 = vmatmul.bf16.gmra.mxu0 %v634
  %v2240 = vpop.f32.mrf.mxu0
  %v2241 = vadd.f32 %v2072, %v2240
  %v2242 = vpop.f32.mrf.mxu0
  %v2243 = vadd.f32 %v2074, %v2242
  %2244 = vmatmul.bf16.gmra.mxu0 %v638
  %v2245 = vpop.f32.mrf.mxu0
  %v2246 = vadd.f32 %v2077, %v2245
  %v2247 = vpop.f32.mrf.mxu0
  %v2248 = vadd.f32 %v2079, %v2247
  %2249 = vmatmul.bf16.gmra.mxu0 %v642
  %v2250 = vpop.f32.mrf.mxu0
  %v2251 = vadd.f32 %v2082, %v2250
  %v2252 = vpop.f32.mrf.mxu0
  %v2253 = vadd.f32 %v2084, %v2252
  %2254 = vmatmul.bf16.gmra.mxu0 %v646
  %v2255 = vpop.f32.mrf.mxu0
  %v2256 = vadd.f32 %v2087, %v2255
  %v2257 = vpop.f32.mrf.mxu0
  %v2258 = vadd.f32 %v2089, %v2257
  %2259 = vmatmul.bf16.gmra.mxu0 %v650
  %v2260 = vpop.f32.mrf.mxu0
  %v2261 = vadd.f32 %v2092, %v2260
  %v2262 = vpop.f32.mrf.mxu0
  %v2263 = vadd.f32 %v2094, %v2262
  %2264 = vmatmul.bf16.gmra.mxu0 %v654
  %v2265 = vpop.f32.mrf.mxu0
  %v2266 = vadd.f32 %v2097, %v2265
  %v2267 = vpop.f32.mrf.mxu0
  %v2268 = vadd.f32 %v2099, %v2267
  %2269 = vmatmul.bf16.gmra.mxu0 %v658
  %v2270 = vpop.f32.mrf.mxu0
  %v2271 = vadd.f32 %v2102, %v2270
  %v2272 = vpop.f32.mrf.mxu0
  %v2273 = vadd.f32 %v2104, %v2272
  %2274 = vmatmul.bf16.gmra.mxu0 %v662
  %v2275 = vpop.f32.mrf.mxu0
  %v2276 = vadd.f32 %v2107, %v2275
  %v2277 = vpop.f32.mrf.mxu0
  %v2278 = vadd.f32 %v2109, %v2277
  %2279 = vmatmul.bf16.gmra.mxu0 %v666
  %v2280 = vpop.f32.mrf.mxu0
  %v2281 = vadd.f32 %v2112, %v2280
  %v2282 = vpop.f32.mrf.mxu0
  %v2283 = vadd.f32 %v2114, %v2282
  %2284 = vmatmul.bf16.gmra.mxu0 %v670
  %v2285 = vpop.f32.mrf.mxu0
  %v2286 = vadd.f32 %v2117, %v2285
  %v2287 = vpop.f32.mrf.mxu0
  %v2288 = vadd.f32 %v2119, %v2287
  %2289 = vmatmul.bf16.gmra.mxu0 %v674
  %v2290 = vpop.f32.mrf.mxu0
  %v2291 = vadd.f32 %v2122, %v2290
  %v2292 = vpop.f32.mrf.mxu0
  %v2293 = vadd.f32 %v2124, %v2292
  %2294 = vmatmul.bf16.gmra.mxu0 %v678
  %v2295 = vpop.f32.mrf.mxu0
  %v2296 = vadd.f32 %v2127, %v2295
  %v2297 = vpop.f32.mrf.mxu0
  %v2298 = vadd.f32 %v2129, %v2297
  %2299 = vmatmul.bf16.gmra.mxu0 %v682
  %v2300 = vpop.f32.mrf.mxu0
  %v2301 = vadd.f32 %v2132, %v2300
  %v2302 = vpop.f32.mrf.mxu0
  %v2303 = vadd.f32 %v2134, %v2302
  %2304 = vmatmul.bf16.gmra.mxu0 %v686
  %v2305 = vpop.f32.mrf.mxu0
  %v2306 = vadd.f32 %v2137, %v2305
  %v2307 = vpop.f32.mrf.mxu0
  %v2308 = vadd.f32 %v2139, %v2307
  %2309 = vmatmul.bf16.gmra.mxu0 %v690
  %v2310 = vpop.f32.mrf.mxu0
  %v2311 = vadd.f32 %v2142, %v2310
  %v2312 = vpop.f32.mrf.mxu0
  %v2313 = vadd.f32 %v2144, %v2312
  %2314 = vmatmul.bf16.gmra.mxu0 %v694
  %v2315 = vpop.f32.mrf.mxu0
  %v2316 = vadd.f32 %v2147, %v2315
  %v2317 = vpop.f32.mrf.mxu0
  %v2318 = vadd.f32 %v2149, %v2317
  %2319 = vmatmul.bf16.gmra.mxu0 %v698
  %v2320 = vpop.f32.mrf.mxu0
  %v2321 = vadd.f32 %v2152, %v2320
  %v2322 = vpop.f32.mrf.mxu0
  %v2323 = vadd.f32 %v2154, %v2322
  %2324 = vmatmul.bf16.gmra.mxu0 %v702
  %v2325 = vpop.f32.mrf.mxu0
  %v2326 = vadd.f32 %v2157, %v2325
  %v2327 = vpop.f32.mrf.mxu0
  %v2328 = vadd.f32 %v2159, %v2327
  %2329 = vmatmul.bf16.gmra.mxu0 %v706
  %v2330 = vpop.f32.mrf.mxu0
  %v2331 = vadd.f32 %v2162, %v2330
  %v2332 = vpop.f32.mrf.mxu0
  %v2333 = vadd.f32 %v2164, %v2332
  %2334 = vmatmul.bf16.gmra.mxu0 %v710
  %v2335 = vpop.f32.mrf.mxu0
  %v2336 = vadd.f32 %v2167, %v2335
  %v2337 = vpop.f32.mrf.mxu0
  %v2338 = vadd.f32 %v2169, %v2337
  %2339 = vmatmul.bf16.gmra.mxu0 %v714
  %v2340 = vpop.f32.mrf.mxu0
  %v2341 = vadd.f32 %v2172, %v2340
  %v2342 = vpop.f32.mrf.mxu0
  %v2343 = vadd.f32 %v2174, %v2342
  %2344 = vmatmul.bf16.gmra.mxu0 %v718
  %v2345 = vpop.f32.mrf.mxu0
  %v2346 = vadd.f32 %v2177, %v2345
  %v2347 = vpop.f32.mrf.mxu0
  %v2348 = vadd.f32 %v2179, %v2347
  %2349 = vmatmul.bf16.gmra.mxu0 %v722
  %v2350 = vpop.f32.mrf.mxu0
  %v2351 = vadd.f32 %v2182, %v2350
  %v2352 = vpop.f32.mrf.mxu0
  %v2353 = vadd.f32 %v2184, %v2352
  %2354 = vdwg.mxu0
  %2355 = vmatpush.bf16.msra.mxu0 %v1107
  %2356 = vmatpush.bf16.msra.mxu0 %v1105
  %2357 = vmatpush.bf16.msra.mxu0 %v1103
  %2358 = vmatpush.bf16.msra.mxu0 %v1101
  %2359 = vmatpush.bf16.msra.mxu0 %v1099
  %2360 = vmatpush.bf16.msra.mxu0 %v1097
  %2361 = vmatpush.bf16.msra.mxu0 %v1095
  %2362 = vmatpush.bf16.msra.mxu0 %v1093
  %2363 = vmatmul.bf16.gmra.mxu0 %v599
  %v2364 = vpop.f32.mrf.mxu0
  %v2365 = vadd.f32 %v2196, %v2364
  %v2366 = vpop.f32.mrf.mxu0
  %v2367 = vadd.f32 %v2198, %v2366
  %2368 = vmatmul.bf16.gmra.mxu0 %v603
  %v2369 = vpop.f32.mrf.mxu0
  %v2370 = vadd.f32 %v2201, %v2369
  %v2371 = vpop.f32.mrf.mxu0
  %v2372 = vadd.f32 %v2203, %v2371
  %2373 = vmatmul.bf16.gmra.mxu0 %v607
  %v2374 = vpop.f32.mrf.mxu0
  %v2375 = vadd.f32 %v2206, %v2374
  %v2376 = vpop.f32.mrf.mxu0
  %v2377 = vadd.f32 %v2208, %v2376
  %2378 = vmatmul.bf16.gmra.mxu0 %v611
  %v2379 = vpop.f32.mrf.mxu0
  %v2380 = vadd.f32 %v2211, %v2379
  %v2381 = vpop.f32.mrf.mxu0
  %v2382 = vadd.f32 %v2213, %v2381
  %2383 = vmatmul.bf16.gmra.mxu0 %v615
  %v2384 = vpop.f32.mrf.mxu0
  %v2385 = vadd.f32 %v2216, %v2384
  %v2386 = vpop.f32.mrf.mxu0
  %v2387 = vadd.f32 %v2218, %v2386
  %2388 = vmatmul.bf16.gmra.mxu0 %v619
  %v2389 = vpop.f32.mrf.mxu0
  %v2390 = vadd.f32 %v2221, %v2389
  %v2391 = vpop.f32.mrf.mxu0
  %v2392 = vadd.f32 %v2223, %v2391
  %2393 = vmatmul.bf16.gmra.mxu0 %v623
  %v2394 = vpop.f32.mrf.mxu0
  %v2395 = vadd.f32 %v2226, %v2394
  %v2396 = vpop.f32.mrf.mxu0
  %v2397 = vadd.f32 %v2228, %v2396
  %2398 = vmatmul.bf16.gmra.mxu0 %v627
  %v2399 = vpop.f32.mrf.mxu0
  %v2400 = vadd.f32 %v2231, %v2399
  %v2401 = vpop.f32.mrf.mxu0
  %v2402 = vadd.f32 %v2233, %v2401
  %2403 = vmatmul.bf16.gmra.mxu0 %v631
  %v2404 = vpop.f32.mrf.mxu0
  %v2405 = vadd.f32 %v2236, %v2404
  %v2406 = vpop.f32.mrf.mxu0
  %v2407 = vadd.f32 %v2238, %v2406
  %2408 = vmatmul.bf16.gmra.mxu0 %v635
  %v2409 = vpop.f32.mrf.mxu0
  %v2410 = vadd.f32 %v2241, %v2409
  %v2411 = vpop.f32.mrf.mxu0
  %v2412 = vadd.f32 %v2243, %v2411
  %2413 = vmatmul.bf16.gmra.mxu0 %v639
  %v2414 = vpop.f32.mrf.mxu0
  %v2415 = vadd.f32 %v2246, %v2414
  %v2416 = vpop.f32.mrf.mxu0
  %v2417 = vadd.f32 %v2248, %v2416
  %2418 = vmatmul.bf16.gmra.mxu0 %v643
  %v2419 = vpop.f32.mrf.mxu0
  %v2420 = vadd.f32 %v2251, %v2419
  %v2421 = vpop.f32.mrf.mxu0
  %v2422 = vadd.f32 %v2253, %v2421
  %2423 = vmatmul.bf16.gmra.mxu0 %v647
  %v2424 = vpop.f32.mrf.mxu0
  %v2425 = vadd.f32 %v2256, %v2424
  %v2426 = vpop.f32.mrf.mxu0
  %v2427 = vadd.f32 %v2258, %v2426
  %2428 = vmatmul.bf16.gmra.mxu0 %v651
  %v2429 = vpop.f32.mrf.mxu0
  %v2430 = vadd.f32 %v2261, %v2429
  %v2431 = vpop.f32.mrf.mxu0
  %v2432 = vadd.f32 %v2263, %v2431
  %2433 = vmatmul.bf16.gmra.mxu0 %v655
  %v2434 = vpop.f32.mrf.mxu0
  %v2435 = vadd.f32 %v2266, %v2434
  %v2436 = vpop.f32.mrf.mxu0
  %v2437 = vadd.f32 %v2268, %v2436
  %2438 = vmatmul.bf16.gmra.mxu0 %v659
  %v2439 = vpop.f32.mrf.mxu0
  %v2440 = vadd.f32 %v2271, %v2439
  %v2441 = vpop.f32.mrf.mxu0
  %v2442 = vadd.f32 %v2273, %v2441
  %2443 = vmatmul.bf16.gmra.mxu0 %v663
  %v2444 = vpop.f32.mrf.mxu0
  %v2445 = vadd.f32 %v2276, %v2444
  %v2446 = vpop.f32.mrf.mxu0
  %v2447 = vadd.f32 %v2278, %v2446
  %2448 = vmatmul.bf16.gmra.mxu0 %v667
  %v2449 = vpop.f32.mrf.mxu0
  %v2450 = vadd.f32 %v2281, %v2449
  %v2451 = vpop.f32.mrf.mxu0
  %v2452 = vadd.f32 %v2283, %v2451
  %2453 = vmatmul.bf16.gmra.mxu0 %v671
  %v2454 = vpop.f32.mrf.mxu0
  %v2455 = vadd.f32 %v2286, %v2454
  %v2456 = vpop.f32.mrf.mxu0
  %v2457 = vadd.f32 %v2288, %v2456
  %2458 = vmatmul.bf16.gmra.mxu0 %v675
  %v2459 = vpop.f32.mrf.mxu0
  %v2460 = vadd.f32 %v2291, %v2459
  %v2461 = vpop.f32.mrf.mxu0
  %v2462 = vadd.f32 %v2293, %v2461
  %2463 = vmatmul.bf16.gmra.mxu0 %v679
  %v2464 = vpop.f32.mrf.mxu0
  %v2465 = vadd.f32 %v2296, %v2464
  %v2466 = vpop.f32.mrf.mxu0
  %v2467 = vadd.f32 %v2298, %v2466
  %2468 = vmatmul.bf16.gmra.mxu0 %v683
  %v2469 = vpop.f32.mrf.mxu0
  %v2470 = vadd.f32 %v2301, %v2469
  %v2471 = vpop.f32.mrf.mxu0
  %v2472 = vadd.f32 %v2303, %v2471
  %2473 = vmatmul.bf16.gmra.mxu0 %v687
  %v2474 = vpop.f32.mrf.mxu0
  %v2475 = vadd.f32 %v2306, %v2474
  %v2476 = vpop.f32.mrf.mxu0
  %v2477 = vadd.f32 %v2308, %v2476
  %2478 = vmatmul.bf16.gmra.mxu0 %v691
  %v2479 = vpop.f32.mrf.mxu0
  %v2480 = vadd.f32 %v2311, %v2479
  %v2481 = vpop.f32.mrf.mxu0
  %v2482 = vadd.f32 %v2313, %v2481
  %2483 = vmatmul.bf16.gmra.mxu0 %v695
  %v2484 = vpop.f32.mrf.mxu0
  %v2485 = vadd.f32 %v2316, %v2484
  %v2486 = vpop.f32.mrf.mxu0
  %v2487 = vadd.f32 %v2318, %v2486
  %2488 = vmatmul.bf16.gmra.mxu0 %v699
  %v2489 = vpop.f32.mrf.mxu0
  %v2490 = vadd.f32 %v2321, %v2489
  %v2491 = vpop.f32.mrf.mxu0
  %v2492 = vadd.f32 %v2323, %v2491
  %2493 = vmatmul.bf16.gmra.mxu0 %v703
  %v2494 = vpop.f32.mrf.mxu0
  %v2495 = vadd.f32 %v2326, %v2494
  %v2496 = vpop.f32.mrf.mxu0
  %v2497 = vadd.f32 %v2328, %v2496
  %2498 = vmatmul.bf16.gmra.mxu0 %v707
  %v2499 = vpop.f32.mrf.mxu0
  %v2500 = vadd.f32 %v2331, %v2499
  %v2501 = vpop.f32.mrf.mxu0
  %v2502 = vadd.f32 %v2333, %v2501
  %2503 = vmatmul.bf16.gmra.mxu0 %v711
  %v2504 = vpop.f32.mrf.mxu0
  %v2505 = vadd.f32 %v2336, %v2504
  %v2506 = vpop.f32.mrf.mxu0
  %v2507 = vadd.f32 %v2338, %v2506
  %2508 = vmatmul.bf16.gmra.mxu0 %v715
  %v2509 = vpop.f32.mrf.mxu0
  %v2510 = vadd.f32 %v2341, %v2509
  %v2511 = vpop.f32.mrf.mxu0
  %v2512 = vadd.f32 %v2343, %v2511
  %2513 = vmatmul.bf16.gmra.mxu0 %v719
  %v2514 = vpop.f32.mrf.mxu0
  %v2515 = vadd.f32 %v2346, %v2514
  %v2516 = vpop.f32.mrf.mxu0
  %v2517 = vadd.f32 %v2348, %v2516
  %2518 = vmatmul.bf16.gmra.mxu0 %v723
  %v2519 = vpop.f32.mrf.mxu0
  %v2520 = vadd.f32 %v2351, %v2519
  %v2521 = vpop.f32.mrf.mxu0
  %v2522 = vadd.f32 %v2353, %v2521
  %2523 = vdwg.mxu0
  %v2524 = vtanh.pop %v1689
  %v2525 = vtanh.pop %v1691
  %v2526 = vtanh.pop %v1694
  %v2527 = vtanh.pop %v1696
  %v2528 = vtanh.pop %v1699
  %v2529 = vtanh.pop %v1701
  %v2530 = vtanh.pop %v1704
  %v2531 = vtanh.pop %v1706
  %v2532 = vtanh.pop %v1709
  %v2533 = vtanh.pop %v1711
  %v2534 = vtanh.pop %v1714
  %v2535 = vtanh.pop %v1716
  %v2536 = vtanh.pop %v1719
  %v2537 = vtanh.pop %v1721
  %v2538 = vtanh.pop %v1724
  %v2539 = vtanh.pop %v1726
  %v2540 = vtanh.pop %v1729
  %v2541 = vtanh.pop %v1731
  %v2542 = vtanh.pop %v1734
  %v2543 = vtanh.pop %v1736
  %v2544 = vtanh.pop %v1739
  %v2545 = vtanh.pop %v1741
  %v2546 = vtanh.pop %v1744
  %v2547 = vtanh.pop %v1746
  %v2548 = vtanh.pop %v1749
  %v2549 = vtanh.pop %v1751
  %v2550 = vtanh.pop %v1754
  %v2551 = vtanh.pop %v1756
  %v2552 = vtanh.pop %v1759
  %v2553 = vtanh.pop %v1761
  %v2554 = vtanh.pop %v1764
  %v2555 = vtanh.pop %v1766
  %v2556 = vtanh.pop %v1769
  %v2557 = vtanh.pop %v1771
  %v2558 = vtanh.pop %v1774
  %v2559 = vtanh.pop %v1776
  %v2560 = vtanh.pop %v1779
  %v2561 = vtanh.pop %v1781
  %v2562 = vtanh.pop %v1784
  %v2563 = vtanh.pop %v1786
  %v2564 = vtanh.pop %v1789
  %v2565 = vtanh.pop %v1791
  %v2566 = vtanh.pop %v1794
  %v2567 = vtanh.pop %v1796
  %v2568 = vtanh.pop %v1799
  %v2569 = vtanh.pop %v1801
  %v2570 = vtanh.pop %v1804
  %v2571 = vtanh.pop %v1806
  %v2572 = vtanh.pop %v1809
  %v2573 = vtanh.pop %v1811
  %v2574 = vtanh.pop %v1814
  %v2575 = vtanh.pop %v1816
  %v2576 = vtanh.pop %v1819
  %v2577 = vtanh.pop %v1821
  %v2578 = vtanh.pop %v1824
  %v2579 = vtanh.pop %v1826
  %v2580 = vtanh.pop %v1829
  %v2581 = vtanh.pop %v1831
  %v2582 = vtanh.pop %v1834
  %v2583 = vtanh.pop %v1836
  %v2584 = vtanh.pop %v1839
  %v2585 = vtanh.pop %v1841
  %v2586 = vtanh.pop %v1844
  %v2587 = vtanh.pop %v1846
  %2588 = vst [vmem:[%s3] sm:$0xff] %v2524
  %2589 = vst [vmem:[%s3 + $0x10] sm:$0xff] %v2525
  %2590 = vst [vmem:[%s3 + $0x20] sm:$0xff] %v2526
  %2591 = vst [vmem:[%s3 + $0x30] sm:$0xff] %v2527
  %2592 = vst [vmem:[%s3 + $0x40] sm:$0xff] %v2528
  %2593 = vst [vmem:[%s3 + $0x50] sm:$0xff] %v2529
  %2594 = vst [vmem:[%s3 + $0x60] sm:$0xff] %v2530
  %2595 = vst [vmem:[%s3 + $0x70] sm:$0xff] %v2531
  %2596 = vst [vmem:[%s3 + $0x80] sm:$0xff] %v2532
  %2597 = vst [vmem:[%s3 + $0x90] sm:$0xff] %v2533
  %2598 = vst [vmem:[%s3 + $0xa0] sm:$0xff] %v2534
  %2599 = vst [vmem:[%s3 + $0xb0] sm:$0xff] %v2535
  %2600 = vst [vmem:[%s3 + $0xc0] sm:$0xff] %v2536
  %2601 = vst [vmem:[%s3 + $0xd0] sm:$0xff] %v2537
  %2602 = vst [vmem:[%s3 + $0xe0] sm:$0xff] %v2538
  %2603 = vst [vmem:[%s3 + $0xf0] sm:$0xff] %v2539
  %2604 = vst [vmem:[%s3 + $0x100] sm:$0xff] %v2540
  %2605 = vst [vmem:[%s3 + $0x110] sm:$0xff] %v2541
  %2606 = vst [vmem:[%s3 + $0x120] sm:$0xff] %v2542
  %2607 = vst [vmem:[%s3 + $0x130] sm:$0xff] %v2543
  %2608 = vst [vmem:[%s3 + $0x140] sm:$0xff] %v2544
  %2609 = vst [vmem:[%s3 + $0x150] sm:$0xff] %v2545
  %2610 = vst [vmem:[%s3 + $0x160] sm:$0xff] %v2546
  %2611 = vst [vmem:[%s3 + $0x170] sm:$0xff] %v2547
  %2612 = vst [vmem:[%s3 + $0x180] sm:$0xff] %v2548
  %2613 = vst [vmem:[%s3 + $0x190] sm:$0xff] %v2549
  %2614 = vst [vmem:[%s3 + $0x1a0] sm:$0xff] %v2550
  %2615 = vst [vmem:[%s3 + $0x1b0] sm:$0xff] %v2551
  %2616 = vst [vmem:[%s3 + $0x1c0] sm:$0xff] %v2552
  %2617 = vst [vmem:[%s3 + $0x1d0] sm:$0xff] %v2553
  %2618 = vst [vmem:[%s3 + $0x1e0] sm:$0xff] %v2554
  %2619 = vst [vmem:[%s3 + $0x1f0] sm:$0xff] %v2555
  %2620 = vst [vmem:[%s3 + $0x200] sm:$0xff] %v2556
  %2621 = vst [vmem:[%s3 + $0x210] sm:$0xff] %v2557
  %2622 = vst [vmem:[%s3 + $0x220] sm:$0xff] %v2558
  %2623 = vst [vmem:[%s3 + $0x230] sm:$0xff] %v2559
  %2624 = vst [vmem:[%s3 + $0x240] sm:$0xff] %v2560
  %2625 = vst [vmem:[%s3 + $0x250] sm:$0xff] %v2561
  %2626 = vst [vmem:[%s3 + $0x260] sm:$0xff] %v2562
  %2627 = vst [vmem:[%s3 + $0x270] sm:$0xff] %v2563
  %2628 = vst [vmem:[%s3 + $0x280] sm:$0xff] %v2564
  %2629 = vst [vmem:[%s3 + $0x290] sm:$0xff] %v2565
  %2630 = vst [vmem:[%s3 + $0x2a0] sm:$0xff] %v2566
  %2631 = vst [vmem:[%s3 + $0x2b0] sm:$0xff] %v2567
  %2632 = vst [vmem:[%s3 + $0x2c0] sm:$0xff] %v2568
  %2633 = vst [vmem:[%s3 + $0x2d0] sm:$0xff] %v2569
  %2634 = vst [vmem:[%s3 + $0x2e0] sm:$0xff] %v2570
  %2635 = vst [vmem:[%s3 + $0x2f0] sm:$0xff] %v2571
  %2636 = vst [vmem:[%s3 + $0x300] sm:$0xff] %v2572
  %2637 = vst [vmem:[%s3 + $0x310] sm:$0xff] %v2573
  %2638 = vst [vmem:[%s3 + $0x320] sm:$0xff] %v2574
  %2639 = vst [vmem:[%s3 + $0x330] sm:$0xff] %v2575
  %2640 = vst [vmem:[%s3 + $0x340] sm:$0xff] %v2576
  %2641 = vst [vmem:[%s3 + $0x350] sm:$0xff] %v2577
  %2642 = vst [vmem:[%s3 + $0x360] sm:$0xff] %v2578
  %2643 = vst [vmem:[%s3 + $0x370] sm:$0xff] %v2579
  %2644 = vst [vmem:[%s3 + $0x380] sm:$0xff] %v2580
  %2645 = vst [vmem:[%s3 + $0x390] sm:$0xff] %v2581
  %2646 = vst [vmem:[%s3 + $0x3a0] sm:$0xff] %v2582
  %2647 = vst [vmem:[%s3 + $0x3b0] sm:$0xff] %v2583
  %2648 = vst [vmem:[%s3 + $0x3c0] sm:$0xff] %v2584
  %2649 = vst [vmem:[%s3 + $0x3d0] sm:$0xff] %v2585
  %2650 = vst [vmem:[%s3 + $0x3e0] sm:$0xff] %v2586
  %2651 = vst [vmem:[%s3 + $0x3f0] sm:$0xff] %v2587
  %v2652 = vxor.u32 %v2365, 2147483648
  %v2653 = vxor.u32 %v2367, 2147483648
  %v2654 = vxor.u32 %v2370, 2147483648
  %v2655 = vxor.u32 %v2372, 2147483648
  %v2656 = vxor.u32 %v2375, 2147483648
  %v2657 = vxor.u32 %v2377, 2147483648
  %v2658 = vxor.u32 %v2380, 2147483648
  %v2659 = vxor.u32 %v2382, 2147483648
  %v2660 = vxor.u32 %v2385, 2147483648
  %v2661 = vxor.u32 %v2387, 2147483648
  %v2662 = vxor.u32 %v2390, 2147483648
  %v2663 = vxor.u32 %v2392, 2147483648
  %v2664 = vxor.u32 %v2395, 2147483648
  %v2665 = vxor.u32 %v2397, 2147483648
  %v2666 = vxor.u32 %v2400, 2147483648
  %v2667 = vxor.u32 %v2402, 2147483648
  %v2668 = vxor.u32 %v2405, 2147483648
  %v2669 = vxor.u32 %v2407, 2147483648
  %v2670 = vxor.u32 %v2410, 2147483648
  %v2671 = vxor.u32 %v2412, 2147483648
  %v2672 = vxor.u32 %v2415, 2147483648
  %v2673 = vxor.u32 %v2417, 2147483648
  %v2674 = vxor.u32 %v2420, 2147483648
  %v2675 = vxor.u32 %v2422, 2147483648
  %v2676 = vxor.u32 %v2425, 2147483648
  %v2677 = vxor.u32 %v2427, 2147483648
  %v2678 = vxor.u32 %v2430, 2147483648
  %v2679 = vxor.u32 %v2432, 2147483648
  %v2680 = vxor.u32 %v2435, 2147483648
  %v2681 = vxor.u32 %v2437, 2147483648
  %v2682 = vxor.u32 %v2440, 2147483648
  %v2683 = vxor.u32 %v2442, 2147483648
  %v2684 = vxor.u32 %v2445, 2147483648
  %v2685 = vxor.u32 %v2447, 2147483648
  %v2686 = vxor.u32 %v2450, 2147483648
  %v2687 = vxor.u32 %v2452, 2147483648
  %v2688 = vxor.u32 %v2455, 2147483648
  %v2689 = vxor.u32 %v2457, 2147483648
  %v2690 = vxor.u32 %v2460, 2147483648
  %v2691 = vxor.u32 %v2462, 2147483648
  %v2692 = vxor.u32 %v2465, 2147483648
  %v2693 = vxor.u32 %v2467, 2147483648
  %v2694 = vxor.u32 %v2470, 2147483648
  %v2695 = vxor.u32 %v2472, 2147483648
  %v2696 = vxor.u32 %v2475, 2147483648
  %v2697 = vxor.u32 %v2477, 2147483648
  %v2698 = vxor.u32 %v2480, 2147483648
  %v2699 = vxor.u32 %v2482, 2147483648
  %v2700 = vxor.u32 %v2485, 2147483648
  %v2701 = vxor.u32 %v2487, 2147483648
  %v2702 = vxor.u32 %v2490, 2147483648
  %v2703 = vxor.u32 %v2492, 2147483648
  %v2704 = vxor.u32 %v2495, 2147483648
  %v2705 = vxor.u32 %v2497, 2147483648
  %v2706 = vxor.u32 %v2500, 2147483648
  %v2707 = vxor.u32 %v2502, 2147483648
  %v2708 = vxor.u32 %v2505, 2147483648
  %v2709 = vxor.u32 %v2507, 2147483648
  %v2710 = vxor.u32 %v2510, 2147483648
  %v2711 = vxor.u32 %v2512, 2147483648
  %v2712 = vxor.u32 %v2515, 2147483648
  %v2713 = vxor.u32 %v2517, 2147483648
  %v2714 = vxor.u32 %v2520, 2147483648
  %v2715 = vxor.u32 %v2522, 2147483648
  %v2716 = vmul.f32 %v2652, 1.442695
  %v2717 = vpow.pop %v2716
  %v2718 = vmul.f32 %v2653, 1.442695
  %v2719 = vpow.pop %v2718
  %v2720 = vmul.f32 %v2654, 1.442695
  %v2721 = vpow.pop %v2720
  %v2722 = vmul.f32 %v2655, 1.442695
  %v2723 = vpow.pop %v2722
  %v2724 = vmul.f32 %v2656, 1.442695
  %v2725 = vpow.pop %v2724
  %v2726 = vmul.f32 %v2657, 1.442695
  %v2727 = vpow.pop %v2726
  %v2728 = vmul.f32 %v2658, 1.442695
  %v2729 = vpow.pop %v2728
  %v2730 = vmul.f32 %v2659, 1.442695
  %v2731 = vpow.pop %v2730
  %v2732 = vmul.f32 %v2660, 1.442695
  %v2733 = vpow.pop %v2732
  %v2734 = vmul.f32 %v2661, 1.442695
  %v2735 = vpow.pop %v2734
  %v2736 = vmul.f32 %v2662, 1.442695
  %v2737 = vpow.pop %v2736
  %v2738 = vmul.f32 %v2663, 1.442695
  %v2739 = vpow.pop %v2738
  %v2740 = vmul.f32 %v2664, 1.442695
  %v2741 = vpow.pop %v2740
  %v2742 = vmul.f32 %v2665, 1.442695
  %v2743 = vpow.pop %v2742
  %v2744 = vmul.f32 %v2666, 1.442695
  %v2745 = vpow.pop %v2744
  %v2746 = vmul.f32 %v2667, 1.442695
  %v2747 = vpow.pop %v2746
  %v2748 = vmul.f32 %v2668, 1.442695
  %v2749 = vpow.pop %v2748
  %v2750 = vmul.f32 %v2669, 1.442695
  %v2751 = vpow.pop %v2750
  %v2752 = vmul.f32 %v2670, 1.442695
  %v2753 = vpow.pop %v2752
  %v2754 = vmul.f32 %v2671, 1.442695
  %v2755 = vpow.pop %v2754
  %v2756 = vmul.f32 %v2672, 1.442695
  %v2757 = vpow.pop %v2756
  %v2758 = vmul.f32 %v2673, 1.442695
  %v2759 = vpow.pop %v2758
  %v2760 = vmul.f32 %v2674, 1.442695
  %v2761 = vpow.pop %v2760
  %v2762 = vmul.f32 %v2675, 1.442695
  %v2763 = vpow.pop %v2762
  %v2764 = vmul.f32 %v2676, 1.442695
  %v2765 = vpow.pop %v2764
  %v2766 = vmul.f32 %v2677, 1.442695
  %v2767 = vpow.pop %v2766
  %v2768 = vmul.f32 %v2678, 1.442695
  %v2769 = vpow.pop %v2768
  %v2770 = vmul.f32 %v2679, 1.442695
  %v2771 = vpow.pop %v2770
  %v2772 = vmul.f32 %v2680, 1.442695
  %v2773 = vpow.pop %v2772
  %v2774 = vmul.f32 %v2681, 1.442695
  %v2775 = vpow.pop %v2774
  %v2776 = vmul.f32 %v2682, 1.442695
  %v2777 = vpow.pop %v2776
  %v2778 = vmul.f32 %v2683, 1.442695
  %v2779 = vpow.pop %v2778
  %v2780 = vmul.f32 %v2684, 1.442695
  %v2781 = vpow.pop %v2780
  %v2782 = vmul.f32 %v2685, 1.442695
  %v2783 = vpow.pop %v2782
  %v2784 = vmul.f32 %v2686, 1.442695
  %v2785 = vpow.pop %v2784
  %v2786 = vmul.f32 %v2687, 1.442695
  %v2787 = vpow.pop %v2786
  %v2788 = vmul.f32 %v2688, 1.442695
  %v2789 = vpow.pop %v2788
  %v2790 = vmul.f32 %v2689, 1.442695
  %v2791 = vpow.pop %v2790
  %v2792 = vmul.f32 %v2690, 1.442695
  %v2793 = vpow.pop %v2792
  %v2794 = vmul.f32 %v2691, 1.442695
  %v2795 = vpow.pop %v2794
  %v2796 = vmul.f32 %v2692, 1.442695
  %v2797 = vpow.pop %v2796
  %v2798 = vmul.f32 %v2693, 1.442695
  %v2799 = vpow.pop %v2798
  %v2800 = vmul.f32 %v2694, 1.442695
  %v2801 = vpow.pop %v2800
  %v2802 = vmul.f32 %v2695, 1.442695
  %v2803 = vpow.pop %v2802
  %v2804 = vmul.f32 %v2696, 1.442695
  %v2805 = vpow.pop %v2804
  %v2806 = vmul.f32 %v2697, 1.442695
  %v2807 = vpow.pop %v2806
  %v2808 = vmul.f32 %v2698, 1.442695
  %v2809 = vpow.pop %v2808
  %v2810 = vmul.f32 %v2699, 1.442695
  %v2811 = vpow.pop %v2810
  %v2812 = vmul.f32 %v2700, 1.442695
  %v2813 = vpow.pop %v2812
  %v2814 = vmul.f32 %v2701, 1.442695
  %v2815 = vpow.pop %v2814
  %v2816 = vmul.f32 %v2702, 1.442695
  %v2817 = vpow.pop %v2816
  %v2818 = vmul.f32 %v2703, 1.442695
  %v2819 = vpow.pop %v2818
  %v2820 = vmul.f32 %v2704, 1.442695
  %v2821 = vpow.pop %v2820
  %v2822 = vmul.f32 %v2705, 1.442695
  %v2823 = vpow.pop %v2822
  %v2824 = vmul.f32 %v2706, 1.442695
  %v2825 = vpow.pop %v2824
  %v2826 = vmul.f32 %v2707, 1.442695
  %v2827 = vpow.pop %v2826
  %v2828 = vmul.f32 %v2708, 1.442695
  %v2829 = vpow.pop %v2828
  %v2830 = vmul.f32 %v2709, 1.442695
  %v2831 = vpow.pop %v2830
  %v2832 = vmul.f32 %v2710, 1.442695
  %v2833 = vpow.pop %v2832
  %v2834 = vmul.f32 %v2711, 1.442695
  %v2835 = vpow.pop %v2834
  %v2836 = vmul.f32 %v2712, 1.442695
  %v2837 = vpow.pop %v2836
  %v2838 = vmul.f32 %v2713, 1.442695
  %v2839 = vpow.pop %v2838
  %v2840 = vmul.f32 %v2714, 1.442695
  %v2841 = vpow.pop %v2840
  %v2842 = vmul.f32 %v2715, 1.442695
  %v2843 = vpow.pop %v2842
  %v2844 = vadd.f32 %v2717, 1.0
  %v2845 = vadd.f32 %v2719, 1.0
  %v2846 = vadd.f32 %v2721, 1.0
  %v2847 = vadd.f32 %v2723, 1.0
  %v2848 = vadd.f32 %v2725, 1.0
  %v2849 = vadd.f32 %v2727, 1.0
  %v2850 = vadd.f32 %v2729, 1.0
  %v2851 = vadd.f32 %v2731, 1.0
  %v2852 = vadd.f32 %v2733, 1.0
  %v2853 = vadd.f32 %v2735, 1.0
  %v2854 = vadd.f32 %v2737, 1.0
  %v2855 = vadd.f32 %v2739, 1.0
  %v2856 = vadd.f32 %v2741, 1.0
  %v2857 = vadd.f32 %v2743, 1.0
  %v2858 = vadd.f32 %v2745, 1.0
  %v2859 = vadd.f32 %v2747, 1.0
  %v2860 = vadd.f32 %v2749, 1.0
  %v2861 = vadd.f32 %v2751, 1.0
  %v2862 = vadd.f32 %v2753, 1.0
  %v2863 = vadd.f32 %v2755, 1.0
  %v2864 = vadd.f32 %v2757, 1.0
  %v2865 = vadd.f32 %v2759, 1.0
  %v2866 = vadd.f32 %v2761, 1.0
  %v2867 = vadd.f32 %v2763, 1.0
  %v2868 = vadd.f32 %v2765, 1.0
  %v2869 = vadd.f32 %v2767, 1.0
  %v2870 = vadd.f32 %v2769, 1.0
  %v2871 = vadd.f32 %v2771, 1.0
  %v2872 = vadd.f32 %v2773, 1.0
  %v2873 = vadd.f32 %v2775, 1.0
  %v2874 = vadd.f32 %v2777, 1.0
  %v2875 = vadd.f32 %v2779, 1.0
  %v2876 = vadd.f32 %v2781, 1.0
  %v2877 = vadd.f32 %v2783, 1.0
  %v2878 = vadd.f32 %v2785, 1.0
  %v2879 = vadd.f32 %v2787, 1.0
  %v2880 = vadd.f32 %v2789, 1.0
  %v2881 = vadd.f32 %v2791, 1.0
  %v2882 = vadd.f32 %v2793, 1.0
  %v2883 = vadd.f32 %v2795, 1.0
  %v2884 = vadd.f32 %v2797, 1.0
  %v2885 = vadd.f32 %v2799, 1.0
  %v2886 = vadd.f32 %v2801, 1.0
  %v2887 = vadd.f32 %v2803, 1.0
  %v2888 = vadd.f32 %v2805, 1.0
  %v2889 = vadd.f32 %v2807, 1.0
  %v2890 = vadd.f32 %v2809, 1.0
  %v2891 = vadd.f32 %v2811, 1.0
  %v2892 = vadd.f32 %v2813, 1.0
  %v2893 = vadd.f32 %v2815, 1.0
  %v2894 = vadd.f32 %v2817, 1.0
  %v2895 = vadd.f32 %v2819, 1.0
  %v2896 = vadd.f32 %v2821, 1.0
  %v2897 = vadd.f32 %v2823, 1.0
  %v2898 = vadd.f32 %v2825, 1.0
  %v2899 = vadd.f32 %v2827, 1.0
  %v2900 = vadd.f32 %v2829, 1.0
  %v2901 = vadd.f32 %v2831, 1.0
  %v2902 = vadd.f32 %v2833, 1.0
  %v2903 = vadd.f32 %v2835, 1.0
  %v2904 = vadd.f32 %v2837, 1.0
  %v2905 = vadd.f32 %v2839, 1.0
  %v2906 = vadd.f32 %v2841, 1.0
  %v2907 = vadd.f32 %v2843, 1.0
  %v2908 = vrcp.pop %v2844
  %v2909 = vmul.f32 %v2844, %v2908
  %v2910 = vsub.f32 1.0, %v2909
  %v2911 = vmul.f32 %v2908, %v2910
  %v2912 = vadd.f32 %v2908, %v2911
  %vm2913 = vweird.f32 %v2844
  %vm2914 = vweird.f32 %v2908
  %vm2915 = vmor %vm2913, %vm2914
  %v2916 = vsel %vm2915, %v2908, %v2912
  %v2917 = vand.u32 2147483647, %v2844
  %vm2918 = vcmp.eq.f32.partialorder %v2917, 8.507059e+37
  %v2919 = vand.u32 %v2844, 2147483648
  %v2920 = vor.u32 1.1754944e-38, %v2919
  %v2921 = vsel %vm2918, %v2920, %v2916
  %v2922 = vmul.f32 1.0, %v2921
  %v2923 = vrcp.pop %v2845
  %v2924 = vmul.f32 %v2845, %v2923
  %v2925 = vsub.f32 1.0, %v2924
  %v2926 = vmul.f32 %v2923, %v2925
  %v2927 = vadd.f32 %v2923, %v2926
  %vm2928 = vweird.f32 %v2845
  %vm2929 = vweird.f32 %v2923
  %vm2930 = vmor %vm2928, %vm2929
  %v2931 = vsel %vm2930, %v2923, %v2927
  %v2932 = vand.u32 2147483647, %v2845
  %vm2933 = vcmp.eq.f32.partialorder %v2932, 8.507059e+37
  %v2934 = vand.u32 %v2845, 2147483648
  %v2935 = vor.u32 1.1754944e-38, %v2934
  %v2936 = vsel %vm2933, %v2935, %v2931
  %v2937 = vmul.f32 1.0, %v2936
  %v2938 = vrcp.pop %v2846
  %v2939 = vmul.f32 %v2846, %v2938
  %v2940 = vsub.f32 1.0, %v2939
  %v2941 = vmul.f32 %v2938, %v2940
  %v2942 = vadd.f32 %v2938, %v2941
  %vm2943 = vweird.f32 %v2846
  %vm2944 = vweird.f32 %v2938
  %vm2945 = vmor %vm2943, %vm2944
  %v2946 = vsel %vm2945, %v2938, %v2942
  %v2947 = vand.u32 2147483647, %v2846
  %vm2948 = vcmp.eq.f32.partialorder %v2947, 8.507059e+37
  %v2949 = vand.u32 %v2846, 2147483648
  %v2950 = vor.u32 1.1754944e-38, %v2949
  %v2951 = vsel %vm2948, %v2950, %v2946
  %v2952 = vmul.f32 1.0, %v2951
  %v2953 = vrcp.pop %v2847
  %v2954 = vmul.f32 %v2847, %v2953
  %v2955 = vsub.f32 1.0, %v2954
  %v2956 = vmul.f32 %v2953, %v2955
  %v2957 = vadd.f32 %v2953, %v2956
  %vm2958 = vweird.f32 %v2847
  %vm2959 = vweird.f32 %v2953
  %vm2960 = vmor %vm2958, %vm2959
  %v2961 = vsel %vm2960, %v2953, %v2957
  %v2962 = vand.u32 2147483647, %v2847
  %vm2963 = vcmp.eq.f32.partialorder %v2962, 8.507059e+37
  %v2964 = vand.u32 %v2847, 2147483648
  %v2965 = vor.u32 1.1754944e-38, %v2964
  %v2966 = vsel %vm2963, %v2965, %v2961
  %v2967 = vmul.f32 1.0, %v2966
  %v2968 = vrcp.pop %v2848
  %v2969 = vmul.f32 %v2848, %v2968
  %v2970 = vsub.f32 1.0, %v2969
  %v2971 = vmul.f32 %v2968, %v2970
  %v2972 = vadd.f32 %v2968, %v2971
  %vm2973 = vweird.f32 %v2848
  %vm2974 = vweird.f32 %v2968
  %vm2975 = vmor %vm2973, %vm2974
  %v2976 = vsel %vm2975, %v2968, %v2972
  %v2977 = vand.u32 2147483647, %v2848
  %vm2978 = vcmp.eq.f32.partialorder %v2977, 8.507059e+37
  %v2979 = vand.u32 %v2848, 2147483648
  %v2980 = vor.u32 1.1754944e-38, %v2979
  %v2981 = vsel %vm2978, %v2980, %v2976
  %v2982 = vmul.f32 1.0, %v2981
  %v2983 = vrcp.pop %v2849
  %v2984 = vmul.f32 %v2849, %v2983
  %v2985 = vsub.f32 1.0, %v2984
  %v2986 = vmul.f32 %v2983, %v2985
  %v2987 = vadd.f32 %v2983, %v2986
  %vm2988 = vweird.f32 %v2849
  %vm2989 = vweird.f32 %v2983
  %vm2990 = vmor %vm2988, %vm2989
  %v2991 = vsel %vm2990, %v2983, %v2987
  %v2992 = vand.u32 2147483647, %v2849
  %vm2993 = vcmp.eq.f32.partialorder %v2992, 8.507059e+37
  %v2994 = vand.u32 %v2849, 2147483648
  %v2995 = vor.u32 1.1754944e-38, %v2994
  %v2996 = vsel %vm2993, %v2995, %v2991
  %v2997 = vmul.f32 1.0, %v2996
  %v2998 = vrcp.pop %v2850
  %v2999 = vmul.f32 %v2850, %v2998
  %v3000 = vsub.f32 1.0, %v2999
  %v3001 = vmul.f32 %v2998, %v3000
  %v3002 = vadd.f32 %v2998, %v3001
  %vm3003 = vweird.f32 %v2850
  %vm3004 = vweird.f32 %v2998
  %vm3005 = vmor %vm3003, %vm3004
  %v3006 = vsel %vm3005, %v2998, %v3002
  %v3007 = vand.u32 2147483647, %v2850
  %vm3008 = vcmp.eq.f32.partialorder %v3007, 8.507059e+37
  %v3009 = vand.u32 %v2850, 2147483648
  %v3010 = vor.u32 1.1754944e-38, %v3009
  %v3011 = vsel %vm3008, %v3010, %v3006
  %v3012 = vmul.f32 1.0, %v3011
  %v3013 = vrcp.pop %v2851
  %v3014 = vmul.f32 %v2851, %v3013
  %v3015 = vsub.f32 1.0, %v3014
  %v3016 = vmul.f32 %v3013, %v3015
  %v3017 = vadd.f32 %v3013, %v3016
  %vm3018 = vweird.f32 %v2851
  %vm3019 = vweird.f32 %v3013
  %vm3020 = vmor %vm3018, %vm3019
  %v3021 = vsel %vm3020, %v3013, %v3017
  %v3022 = vand.u32 2147483647, %v2851
  %vm3023 = vcmp.eq.f32.partialorder %v3022, 8.507059e+37
  %v3024 = vand.u32 %v2851, 2147483648
  %v3025 = vor.u32 1.1754944e-38, %v3024
  %v3026 = vsel %vm3023, %v3025, %v3021
  %v3027 = vmul.f32 1.0, %v3026
  %v3028 = vrcp.pop %v2852
  %v3029 = vmul.f32 %v2852, %v3028
  %v3030 = vsub.f32 1.0, %v3029
  %v3031 = vmul.f32 %v3028, %v3030
  %v3032 = vadd.f32 %v3028, %v3031
  %vm3033 = vweird.f32 %v2852
  %vm3034 = vweird.f32 %v3028
  %vm3035 = vmor %vm3033, %vm3034
  %v3036 = vsel %vm3035, %v3028, %v3032
  %v3037 = vand.u32 2147483647, %v2852
  %vm3038 = vcmp.eq.f32.partialorder %v3037, 8.507059e+37
  %v3039 = vand.u32 %v2852, 2147483648
  %v3040 = vor.u32 1.1754944e-38, %v3039
  %v3041 = vsel %vm3038, %v3040, %v3036
  %v3042 = vmul.f32 1.0, %v3041
  %v3043 = vrcp.pop %v2853
  %v3044 = vmul.f32 %v2853, %v3043
  %v3045 = vsub.f32 1.0, %v3044
  %v3046 = vmul.f32 %v3043, %v3045
  %v3047 = vadd.f32 %v3043, %v3046
  %vm3048 = vweird.f32 %v2853
  %vm3049 = vweird.f32 %v3043
  %vm3050 = vmor %vm3048, %vm3049
  %v3051 = vsel %vm3050, %v3043, %v3047
  %v3052 = vand.u32 2147483647, %v2853
  %vm3053 = vcmp.eq.f32.partialorder %v3052, 8.507059e+37
  %v3054 = vand.u32 %v2853, 2147483648
  %v3055 = vor.u32 1.1754944e-38, %v3054
  %v3056 = vsel %vm3053, %v3055, %v3051
  %v3057 = vmul.f32 1.0, %v3056
  %v3058 = vrcp.pop %v2854
  %v3059 = vmul.f32 %v2854, %v3058
  %v3060 = vsub.f32 1.0, %v3059
  %v3061 = vmul.f32 %v3058, %v3060
  %v3062 = vadd.f32 %v3058, %v3061
  %vm3063 = vweird.f32 %v2854
  %vm3064 = vweird.f32 %v3058
  %vm3065 = vmor %vm3063, %vm3064
  %v3066 = vsel %vm3065, %v3058, %v3062
  %v3067 = vand.u32 2147483647, %v2854
  %vm3068 = vcmp.eq.f32.partialorder %v3067, 8.507059e+37
  %v3069 = vand.u32 %v2854, 2147483648
  %v3070 = vor.u32 1.1754944e-38, %v3069
  %v3071 = vsel %vm3068, %v3070, %v3066
  %v3072 = vmul.f32 1.0, %v3071
  %v3073 = vrcp.pop %v2855
  %v3074 = vmul.f32 %v2855, %v3073
  %v3075 = vsub.f32 1.0, %v3074
  %v3076 = vmul.f32 %v3073, %v3075
  %v3077 = vadd.f32 %v3073, %v3076
  %vm3078 = vweird.f32 %v2855
  %vm3079 = vweird.f32 %v3073
  %vm3080 = vmor %vm3078, %vm3079
  %v3081 = vsel %vm3080, %v3073, %v3077
  %v3082 = vand.u32 2147483647, %v2855
  %vm3083 = vcmp.eq.f32.partialorder %v3082, 8.507059e+37
  %v3084 = vand.u32 %v2855, 2147483648
  %v3085 = vor.u32 1.1754944e-38, %v3084
  %v3086 = vsel %vm3083, %v3085, %v3081
  %v3087 = vmul.f32 1.0, %v3086
  %v3088 = vrcp.pop %v2856
  %v3089 = vmul.f32 %v2856, %v3088
  %v3090 = vsub.f32 1.0, %v3089
  %v3091 = vmul.f32 %v3088, %v3090
  %v3092 = vadd.f32 %v3088, %v3091
  %vm3093 = vweird.f32 %v2856
  %vm3094 = vweird.f32 %v3088
  %vm3095 = vmor %vm3093, %vm3094
  %v3096 = vsel %vm3095, %v3088, %v3092
  %v3097 = vand.u32 2147483647, %v2856
  %vm3098 = vcmp.eq.f32.partialorder %v3097, 8.507059e+37
  %v3099 = vand.u32 %v2856, 2147483648
  %v3100 = vor.u32 1.1754944e-38, %v3099
  %v3101 = vsel %vm3098, %v3100, %v3096
  %v3102 = vmul.f32 1.0, %v3101
  %v3103 = vrcp.pop %v2857
  %v3104 = vmul.f32 %v2857, %v3103
  %v3105 = vsub.f32 1.0, %v3104
  %v3106 = vmul.f32 %v3103, %v3105
  %v3107 = vadd.f32 %v3103, %v3106
  %vm3108 = vweird.f32 %v2857
  %vm3109 = vweird.f32 %v3103
  %vm3110 = vmor %vm3108, %vm3109
  %v3111 = vsel %vm3110, %v3103, %v3107
  %v3112 = vand.u32 2147483647, %v2857
  %vm3113 = vcmp.eq.f32.partialorder %v3112, 8.507059e+37
  %v3114 = vand.u32 %v2857, 2147483648
  %v3115 = vor.u32 1.1754944e-38, %v3114
  %v3116 = vsel %vm3113, %v3115, %v3111
  %v3117 = vmul.f32 1.0, %v3116
  %v3118 = vrcp.pop %v2858
  %v3119 = vmul.f32 %v2858, %v3118
  %v3120 = vsub.f32 1.0, %v3119
  %v3121 = vmul.f32 %v3118, %v3120
  %v3122 = vadd.f32 %v3118, %v3121
  %vm3123 = vweird.f32 %v2858
  %vm3124 = vweird.f32 %v3118
  %vm3125 = vmor %vm3123, %vm3124
  %v3126 = vsel %vm3125, %v3118, %v3122
  %v3127 = vand.u32 2147483647, %v2858
  %vm3128 = vcmp.eq.f32.partialorder %v3127, 8.507059e+37
  %v3129 = vand.u32 %v2858, 2147483648
  %v3130 = vor.u32 1.1754944e-38, %v3129
  %v3131 = vsel %vm3128, %v3130, %v3126
  %v3132 = vmul.f32 1.0, %v3131
  %v3133 = vrcp.pop %v2859
  %v3134 = vmul.f32 %v2859, %v3133
  %v3135 = vsub.f32 1.0, %v3134
  %v3136 = vmul.f32 %v3133, %v3135
  %v3137 = vadd.f32 %v3133, %v3136
  %vm3138 = vweird.f32 %v2859
  %vm3139 = vweird.f32 %v3133
  %vm3140 = vmor %vm3138, %vm3139
  %v3141 = vsel %vm3140, %v3133, %v3137
  %v3142 = vand.u32 2147483647, %v2859
  %vm3143 = vcmp.eq.f32.partialorder %v3142, 8.507059e+37
  %v3144 = vand.u32 %v2859, 2147483648
  %v3145 = vor.u32 1.1754944e-38, %v3144
  %v3146 = vsel %vm3143, %v3145, %v3141
  %v3147 = vmul.f32 1.0, %v3146
  %v3148 = vrcp.pop %v2860
  %v3149 = vmul.f32 %v2860, %v3148
  %v3150 = vsub.f32 1.0, %v3149
  %v3151 = vmul.f32 %v3148, %v3150
  %v3152 = vadd.f32 %v3148, %v3151
  %vm3153 = vweird.f32 %v2860
  %vm3154 = vweird.f32 %v3148
  %vm3155 = vmor %vm3153, %vm3154
  %v3156 = vsel %vm3155, %v3148, %v3152
  %v3157 = vand.u32 2147483647, %v2860
  %vm3158 = vcmp.eq.f32.partialorder %v3157, 8.507059e+37
  %v3159 = vand.u32 %v2860, 2147483648
  %v3160 = vor.u32 1.1754944e-38, %v3159
  %v3161 = vsel %vm3158, %v3160, %v3156
  %v3162 = vmul.f32 1.0, %v3161
  %v3163 = vrcp.pop %v2861
  %v3164 = vmul.f32 %v2861, %v3163
  %v3165 = vsub.f32 1.0, %v3164
  %v3166 = vmul.f32 %v3163, %v3165
  %v3167 = vadd.f32 %v3163, %v3166
  %vm3168 = vweird.f32 %v2861
  %vm3169 = vweird.f32 %v3163
  %vm3170 = vmor %vm3168, %vm3169
  %v3171 = vsel %vm3170, %v3163, %v3167
  %v3172 = vand.u32 2147483647, %v2861
  %vm3173 = vcmp.eq.f32.partialorder %v3172, 8.507059e+37
  %v3174 = vand.u32 %v2861, 2147483648
  %v3175 = vor.u32 1.1754944e-38, %v3174
  %v3176 = vsel %vm3173, %v3175, %v3171
  %v3177 = vmul.f32 1.0, %v3176
  %v3178 = vrcp.pop %v2862
  %v3179 = vmul.f32 %v2862, %v3178
  %v3180 = vsub.f32 1.0, %v3179
  %v3181 = vmul.f32 %v3178, %v3180
  %v3182 = vadd.f32 %v3178, %v3181
  %vm3183 = vweird.f32 %v2862
  %vm3184 = vweird.f32 %v3178
  %vm3185 = vmor %vm3183, %vm3184
  %v3186 = vsel %vm3185, %v3178, %v3182
  %v3187 = vand.u32 2147483647, %v2862
  %vm3188 = vcmp.eq.f32.partialorder %v3187, 8.507059e+37
  %v3189 = vand.u32 %v2862, 2147483648
  %v3190 = vor.u32 1.1754944e-38, %v3189
  %v3191 = vsel %vm3188, %v3190, %v3186
  %v3192 = vmul.f32 1.0, %v3191
  %v3193 = vrcp.pop %v2863
  %v3194 = vmul.f32 %v2863, %v3193
  %v3195 = vsub.f32 1.0, %v3194
  %v3196 = vmul.f32 %v3193, %v3195
  %v3197 = vadd.f32 %v3193, %v3196
  %vm3198 = vweird.f32 %v2863
  %vm3199 = vweird.f32 %v3193
  %vm3200 = vmor %vm3198, %vm3199
  %v3201 = vsel %vm3200, %v3193, %v3197
  %v3202 = vand.u32 2147483647, %v2863
  %vm3203 = vcmp.eq.f32.partialorder %v3202, 8.507059e+37
  %v3204 = vand.u32 %v2863, 2147483648
  %v3205 = vor.u32 1.1754944e-38, %v3204
  %v3206 = vsel %vm3203, %v3205, %v3201
  %v3207 = vmul.f32 1.0, %v3206
  %v3208 = vrcp.pop %v2864
  %v3209 = vmul.f32 %v2864, %v3208
  %v3210 = vsub.f32 1.0, %v3209
  %v3211 = vmul.f32 %v3208, %v3210
  %v3212 = vadd.f32 %v3208, %v3211
  %vm3213 = vweird.f32 %v2864
  %vm3214 = vweird.f32 %v3208
  %vm3215 = vmor %vm3213, %vm3214
  %v3216 = vsel %vm3215, %v3208, %v3212
  %v3217 = vand.u32 2147483647, %v2864
  %vm3218 = vcmp.eq.f32.partialorder %v3217, 8.507059e+37
  %v3219 = vand.u32 %v2864, 2147483648
  %v3220 = vor.u32 1.1754944e-38, %v3219
  %v3221 = vsel %vm3218, %v3220, %v3216
  %v3222 = vmul.f32 1.0, %v3221
  %v3223 = vrcp.pop %v2865
  %v3224 = vmul.f32 %v2865, %v3223
  %v3225 = vsub.f32 1.0, %v3224
  %v3226 = vmul.f32 %v3223, %v3225
  %v3227 = vadd.f32 %v3223, %v3226
  %vm3228 = vweird.f32 %v2865
  %vm3229 = vweird.f32 %v3223
  %vm3230 = vmor %vm3228, %vm3229
  %v3231 = vsel %vm3230, %v3223, %v3227
  %v3232 = vand.u32 2147483647, %v2865
  %vm3233 = vcmp.eq.f32.partialorder %v3232, 8.507059e+37
  %v3234 = vand.u32 %v2865, 2147483648
  %v3235 = vor.u32 1.1754944e-38, %v3234
  %v3236 = vsel %vm3233, %v3235, %v3231
  %v3237 = vmul.f32 1.0, %v3236
  %v3238 = vrcp.pop %v2866
  %v3239 = vmul.f32 %v2866, %v3238
  %v3240 = vsub.f32 1.0, %v3239
  %v3241 = vmul.f32 %v3238, %v3240
  %v3242 = vadd.f32 %v3238, %v3241
  %vm3243 = vweird.f32 %v2866
  %vm3244 = vweird.f32 %v3238
  %vm3245 = vmor %vm3243, %vm3244
  %v3246 = vsel %vm3245, %v3238, %v3242
  %v3247 = vand.u32 2147483647, %v2866
  %vm3248 = vcmp.eq.f32.partialorder %v3247, 8.507059e+37
  %v3249 = vand.u32 %v2866, 2147483648
  %v3250 = vor.u32 1.1754944e-38, %v3249
  %v3251 = vsel %vm3248, %v3250, %v3246
  %v3252 = vmul.f32 1.0, %v3251
  %v3253 = vrcp.pop %v2867
  %v3254 = vmul.f32 %v2867, %v3253
  %v3255 = vsub.f32 1.0, %v3254
  %v3256 = vmul.f32 %v3253, %v3255
  %v3257 = vadd.f32 %v3253, %v3256
  %vm3258 = vweird.f32 %v2867
  %vm3259 = vweird.f32 %v3253
  %vm3260 = vmor %vm3258, %vm3259
  %v3261 = vsel %vm3260, %v3253, %v3257
  %v3262 = vand.u32 2147483647, %v2867
  %vm3263 = vcmp.eq.f32.partialorder %v3262, 8.507059e+37
  %v3264 = vand.u32 %v2867, 2147483648
  %v3265 = vor.u32 1.1754944e-38, %v3264
  %v3266 = vsel %vm3263, %v3265, %v3261
  %v3267 = vmul.f32 1.0, %v3266
  %v3268 = vrcp.pop %v2868
  %v3269 = vmul.f32 %v2868, %v3268
  %v3270 = vsub.f32 1.0, %v3269
  %v3271 = vmul.f32 %v3268, %v3270
  %v3272 = vadd.f32 %v3268, %v3271
  %vm3273 = vweird.f32 %v2868
  %vm3274 = vweird.f32 %v3268
  %vm3275 = vmor %vm3273, %vm3274
  %v3276 = vsel %vm3275, %v3268, %v3272
  %v3277 = vand.u32 2147483647, %v2868
  %vm3278 = vcmp.eq.f32.partialorder %v3277, 8.507059e+37
  %v3279 = vand.u32 %v2868, 2147483648
  %v3280 = vor.u32 1.1754944e-38, %v3279
  %v3281 = vsel %vm3278, %v3280, %v3276
  %v3282 = vmul.f32 1.0, %v3281
  %v3283 = vrcp.pop %v2869
  %v3284 = vmul.f32 %v2869, %v3283
  %v3285 = vsub.f32 1.0, %v3284
  %v3286 = vmul.f32 %v3283, %v3285
  %v3287 = vadd.f32 %v3283, %v3286
  %vm3288 = vweird.f32 %v2869
  %vm3289 = vweird.f32 %v3283
  %vm3290 = vmor %vm3288, %vm3289
  %v3291 = vsel %vm3290, %v3283, %v3287
  %v3292 = vand.u32 2147483647, %v2869
  %vm3293 = vcmp.eq.f32.partialorder %v3292, 8.507059e+37
  %v3294 = vand.u32 %v2869, 2147483648
  %v3295 = vor.u32 1.1754944e-38, %v3294
  %v3296 = vsel %vm3293, %v3295, %v3291
  %v3297 = vmul.f32 1.0, %v3296
  %v3298 = vrcp.pop %v2870
  %v3299 = vmul.f32 %v2870, %v3298
  %v3300 = vsub.f32 1.0, %v3299
  %v3301 = vmul.f32 %v3298, %v3300
  %v3302 = vadd.f32 %v3298, %v3301
  %vm3303 = vweird.f32 %v2870
  %vm3304 = vweird.f32 %v3298
  %vm3305 = vmor %vm3303, %vm3304
  %v3306 = vsel %vm3305, %v3298, %v3302
  %v3307 = vand.u32 2147483647, %v2870
  %vm3308 = vcmp.eq.f32.partialorder %v3307, 8.507059e+37
  %v3309 = vand.u32 %v2870, 2147483648
  %v3310 = vor.u32 1.1754944e-38, %v3309
  %v3311 = vsel %vm3308, %v3310, %v3306
  %v3312 = vmul.f32 1.0, %v3311
  %v3313 = vrcp.pop %v2871
  %v3314 = vmul.f32 %v2871, %v3313
  %v3315 = vsub.f32 1.0, %v3314
  %v3316 = vmul.f32 %v3313, %v3315
  %v3317 = vadd.f32 %v3313, %v3316
  %vm3318 = vweird.f32 %v2871
  %vm3319 = vweird.f32 %v3313
  %vm3320 = vmor %vm3318, %vm3319
  %v3321 = vsel %vm3320, %v3313, %v3317
  %v3322 = vand.u32 2147483647, %v2871
  %vm3323 = vcmp.eq.f32.partialorder %v3322, 8.507059e+37
  %v3324 = vand.u32 %v2871, 2147483648
  %v3325 = vor.u32 1.1754944e-38, %v3324
  %v3326 = vsel %vm3323, %v3325, %v3321
  %v3327 = vmul.f32 1.0, %v3326
  %v3328 = vrcp.pop %v2872
  %v3329 = vmul.f32 %v2872, %v3328
  %v3330 = vsub.f32 1.0, %v3329
  %v3331 = vmul.f32 %v3328, %v3330
  %v3332 = vadd.f32 %v3328, %v3331
  %vm3333 = vweird.f32 %v2872
  %vm3334 = vweird.f32 %v3328
  %vm3335 = vmor %vm3333, %vm3334
  %v3336 = vsel %vm3335, %v3328, %v3332
  %v3337 = vand.u32 2147483647, %v2872
  %vm3338 = vcmp.eq.f32.partialorder %v3337, 8.507059e+37
  %v3339 = vand.u32 %v2872, 2147483648
  %v3340 = vor.u32 1.1754944e-38, %v3339
  %v3341 = vsel %vm3338, %v3340, %v3336
  %v3342 = vmul.f32 1.0, %v3341
  %v3343 = vrcp.pop %v2873
  %v3344 = vmul.f32 %v2873, %v3343
  %v3345 = vsub.f32 1.0, %v3344
  %v3346 = vmul.f32 %v3343, %v3345
  %v3347 = vadd.f32 %v3343, %v3346
  %vm3348 = vweird.f32 %v2873
  %vm3349 = vweird.f32 %v3343
  %vm3350 = vmor %vm3348, %vm3349
  %v3351 = vsel %vm3350, %v3343, %v3347
  %v3352 = vand.u32 2147483647, %v2873
  %vm3353 = vcmp.eq.f32.partialorder %v3352, 8.507059e+37
  %v3354 = vand.u32 %v2873, 2147483648
  %v3355 = vor.u32 1.1754944e-38, %v3354
  %v3356 = vsel %vm3353, %v3355, %v3351
  %v3357 = vmul.f32 1.0, %v3356
  %v3358 = vrcp.pop %v2874
  %v3359 = vmul.f32 %v2874, %v3358
  %v3360 = vsub.f32 1.0, %v3359
  %v3361 = vmul.f32 %v3358, %v3360
  %v3362 = vadd.f32 %v3358, %v3361
  %vm3363 = vweird.f32 %v2874
  %vm3364 = vweird.f32 %v3358
  %vm3365 = vmor %vm3363, %vm3364
  %v3366 = vsel %vm3365, %v3358, %v3362
  %v3367 = vand.u32 2147483647, %v2874
  %vm3368 = vcmp.eq.f32.partialorder %v3367, 8.507059e+37
  %v3369 = vand.u32 %v2874, 2147483648
  %v3370 = vor.u32 1.1754944e-38, %v3369
  %v3371 = vsel %vm3368, %v3370, %v3366
  %v3372 = vmul.f32 1.0, %v3371
  %v3373 = vrcp.pop %v2875
  %v3374 = vmul.f32 %v2875, %v3373
  %v3375 = vsub.f32 1.0, %v3374
  %v3376 = vmul.f32 %v3373, %v3375
  %v3377 = vadd.f32 %v3373, %v3376
  %vm3378 = vweird.f32 %v2875
  %vm3379 = vweird.f32 %v3373
  %vm3380 = vmor %vm3378, %vm3379
  %v3381 = vsel %vm3380, %v3373, %v3377
  %v3382 = vand.u32 2147483647, %v2875
  %vm3383 = vcmp.eq.f32.partialorder %v3382, 8.507059e+37
  %v3384 = vand.u32 %v2875, 2147483648
  %v3385 = vor.u32 1.1754944e-38, %v3384
  %v3386 = vsel %vm3383, %v3385, %v3381
  %v3387 = vmul.f32 1.0, %v3386
  %v3388 = vrcp.pop %v2876
  %v3389 = vmul.f32 %v2876, %v3388
  %v3390 = vsub.f32 1.0, %v3389
  %v3391 = vmul.f32 %v3388, %v3390
  %v3392 = vadd.f32 %v3388, %v3391
  %vm3393 = vweird.f32 %v2876
  %vm3394 = vweird.f32 %v3388
  %vm3395 = vmor %vm3393, %vm3394
  %v3396 = vsel %vm3395, %v3388, %v3392
  %v3397 = vand.u32 2147483647, %v2876
  %vm3398 = vcmp.eq.f32.partialorder %v3397, 8.507059e+37
  %v3399 = vand.u32 %v2876, 2147483648
  %v3400 = vor.u32 1.1754944e-38, %v3399
  %v3401 = vsel %vm3398, %v3400, %v3396
  %v3402 = vmul.f32 1.0, %v3401
  %v3403 = vrcp.pop %v2877
  %v3404 = vmul.f32 %v2877, %v3403
  %v3405 = vsub.f32 1.0, %v3404
  %v3406 = vmul.f32 %v3403, %v3405
  %v3407 = vadd.f32 %v3403, %v3406
  %vm3408 = vweird.f32 %v2877
  %vm3409 = vweird.f32 %v3403
  %vm3410 = vmor %vm3408, %vm3409
  %v3411 = vsel %vm3410, %v3403, %v3407
  %v3412 = vand.u32 2147483647, %v2877
  %vm3413 = vcmp.eq.f32.partialorder %v3412, 8.507059e+37
  %v3414 = vand.u32 %v2877, 2147483648
  %v3415 = vor.u32 1.1754944e-38, %v3414
  %v3416 = vsel %vm3413, %v3415, %v3411
  %v3417 = vmul.f32 1.0, %v3416
  %v3418 = vrcp.pop %v2878
  %v3419 = vmul.f32 %v2878, %v3418
  %v3420 = vsub.f32 1.0, %v3419
  %v3421 = vmul.f32 %v3418, %v3420
  %v3422 = vadd.f32 %v3418, %v3421
  %vm3423 = vweird.f32 %v2878
  %vm3424 = vweird.f32 %v3418
  %vm3425 = vmor %vm3423, %vm3424
  %v3426 = vsel %vm3425, %v3418, %v3422
  %v3427 = vand.u32 2147483647, %v2878
  %vm3428 = vcmp.eq.f32.partialorder %v3427, 8.507059e+37
  %v3429 = vand.u32 %v2878, 2147483648
  %v3430 = vor.u32 1.1754944e-38, %v3429
  %v3431 = vsel %vm3428, %v3430, %v3426
  %v3432 = vmul.f32 1.0, %v3431
  %v3433 = vrcp.pop %v2879
  %v3434 = vmul.f32 %v2879, %v3433
  %v3435 = vsub.f32 1.0, %v3434
  %v3436 = vmul.f32 %v3433, %v3435
  %v3437 = vadd.f32 %v3433, %v3436
  %vm3438 = vweird.f32 %v2879
  %vm3439 = vweird.f32 %v3433
  %vm3440 = vmor %vm3438, %vm3439
  %v3441 = vsel %vm3440, %v3433, %v3437
  %v3442 = vand.u32 2147483647, %v2879
  %vm3443 = vcmp.eq.f32.partialorder %v3442, 8.507059e+37
  %v3444 = vand.u32 %v2879, 2147483648
  %v3445 = vor.u32 1.1754944e-38, %v3444
  %v3446 = vsel %vm3443, %v3445, %v3441
  %v3447 = vmul.f32 1.0, %v3446
  %v3448 = vrcp.pop %v2880
  %v3449 = vmul.f32 %v2880, %v3448
  %v3450 = vsub.f32 1.0, %v3449
  %v3451 = vmul.f32 %v3448, %v3450
  %v3452 = vadd.f32 %v3448, %v3451
  %vm3453 = vweird.f32 %v2880
  %vm3454 = vweird.f32 %v3448
  %vm3455 = vmor %vm3453, %vm3454
  %v3456 = vsel %vm3455, %v3448, %v3452
  %v3457 = vand.u32 2147483647, %v2880
  %vm3458 = vcmp.eq.f32.partialorder %v3457, 8.507059e+37
  %v3459 = vand.u32 %v2880, 2147483648
  %v3460 = vor.u32 1.1754944e-38, %v3459
  %v3461 = vsel %vm3458, %v3460, %v3456
  %v3462 = vmul.f32 1.0, %v3461
  %v3463 = vrcp.pop %v2881
  %v3464 = vmul.f32 %v2881, %v3463
  %v3465 = vsub.f32 1.0, %v3464
  %v3466 = vmul.f32 %v3463, %v3465
  %v3467 = vadd.f32 %v3463, %v3466
  %vm3468 = vweird.f32 %v2881
  %vm3469 = vweird.f32 %v3463
  %vm3470 = vmor %vm3468, %vm3469
  %v3471 = vsel %vm3470, %v3463, %v3467
  %v3472 = vand.u32 2147483647, %v2881
  %vm3473 = vcmp.eq.f32.partialorder %v3472, 8.507059e+37
  %v3474 = vand.u32 %v2881, 2147483648
  %v3475 = vor.u32 1.1754944e-38, %v3474
  %v3476 = vsel %vm3473, %v3475, %v3471
  %v3477 = vmul.f32 1.0, %v3476
  %v3478 = vrcp.pop %v2882
  %v3479 = vmul.f32 %v2882, %v3478
  %v3480 = vsub.f32 1.0, %v3479
  %v3481 = vmul.f32 %v3478, %v3480
  %v3482 = vadd.f32 %v3478, %v3481
  %vm3483 = vweird.f32 %v2882
  %vm3484 = vweird.f32 %v3478
  %vm3485 = vmor %vm3483, %vm3484
  %v3486 = vsel %vm3485, %v3478, %v3482
  %v3487 = vand.u32 2147483647, %v2882
  %vm3488 = vcmp.eq.f32.partialorder %v3487, 8.507059e+37
  %v3489 = vand.u32 %v2882, 2147483648
  %v3490 = vor.u32 1.1754944e-38, %v3489
  %v3491 = vsel %vm3488, %v3490, %v3486
  %v3492 = vmul.f32 1.0, %v3491
  %v3493 = vrcp.pop %v2883
  %v3494 = vmul.f32 %v2883, %v3493
  %v3495 = vsub.f32 1.0, %v3494
  %v3496 = vmul.f32 %v3493, %v3495
  %v3497 = vadd.f32 %v3493, %v3496
  %vm3498 = vweird.f32 %v2883
  %vm3499 = vweird.f32 %v3493
  %vm3500 = vmor %vm3498, %vm3499
  %v3501 = vsel %vm3500, %v3493, %v3497
  %v3502 = vand.u32 2147483647, %v2883
  %vm3503 = vcmp.eq.f32.partialorder %v3502, 8.507059e+37
  %v3504 = vand.u32 %v2883, 2147483648
  %v3505 = vor.u32 1.1754944e-38, %v3504
  %v3506 = vsel %vm3503, %v3505, %v3501
  %v3507 = vmul.f32 1.0, %v3506
  %v3508 = vrcp.pop %v2884
  %v3509 = vmul.f32 %v2884, %v3508
  %v3510 = vsub.f32 1.0, %v3509
  %v3511 = vmul.f32 %v3508, %v3510
  %v3512 = vadd.f32 %v3508, %v3511
  %vm3513 = vweird.f32 %v2884
  %vm3514 = vweird.f32 %v3508
  %vm3515 = vmor %vm3513, %vm3514
  %v3516 = vsel %vm3515, %v3508, %v3512
  %v3517 = vand.u32 2147483647, %v2884
  %vm3518 = vcmp.eq.f32.partialorder %v3517, 8.507059e+37
  %v3519 = vand.u32 %v2884, 2147483648
  %v3520 = vor.u32 1.1754944e-38, %v3519
  %v3521 = vsel %vm3518, %v3520, %v3516
  %v3522 = vmul.f32 1.0, %v3521
  %v3523 = vrcp.pop %v2885
  %v3524 = vmul.f32 %v2885, %v3523
  %v3525 = vsub.f32 1.0, %v3524
  %v3526 = vmul.f32 %v3523, %v3525
  %v3527 = vadd.f32 %v3523, %v3526
  %vm3528 = vweird.f32 %v2885
  %vm3529 = vweird.f32 %v3523
  %vm3530 = vmor %vm3528, %vm3529
  %v3531 = vsel %vm3530, %v3523, %v3527
  %v3532 = vand.u32 2147483647, %v2885
  %vm3533 = vcmp.eq.f32.partialorder %v3532, 8.507059e+37
  %v3534 = vand.u32 %v2885, 2147483648
  %v3535 = vor.u32 1.1754944e-38, %v3534
  %v3536 = vsel %vm3533, %v3535, %v3531
  %v3537 = vmul.f32 1.0, %v3536
  %v3538 = vrcp.pop %v2886
  %v3539 = vmul.f32 %v2886, %v3538
  %v3540 = vsub.f32 1.0, %v3539
  %v3541 = vmul.f32 %v3538, %v3540
  %v3542 = vadd.f32 %v3538, %v3541
  %vm3543 = vweird.f32 %v2886
  %vm3544 = vweird.f32 %v3538
  %vm3545 = vmor %vm3543, %vm3544
  %v3546 = vsel %vm3545, %v3538, %v3542
  %v3547 = vand.u32 2147483647, %v2886
  %vm3548 = vcmp.eq.f32.partialorder %v3547, 8.507059e+37
  %v3549 = vand.u32 %v2886, 2147483648
  %v3550 = vor.u32 1.1754944e-38, %v3549
  %v3551 = vsel %vm3548, %v3550, %v3546
  %v3552 = vmul.f32 1.0, %v3551
  %v3553 = vrcp.pop %v2887
  %v3554 = vmul.f32 %v2887, %v3553
  %v3555 = vsub.f32 1.0, %v3554
  %v3556 = vmul.f32 %v3553, %v3555
  %v3557 = vadd.f32 %v3553, %v3556
  %vm3558 = vweird.f32 %v2887
  %vm3559 = vweird.f32 %v3553
  %vm3560 = vmor %vm3558, %vm3559
  %v3561 = vsel %vm3560, %v3553, %v3557
  %v3562 = vand.u32 2147483647, %v2887
  %vm3563 = vcmp.eq.f32.partialorder %v3562, 8.507059e+37
  %v3564 = vand.u32 %v2887, 2147483648
  %v3565 = vor.u32 1.1754944e-38, %v3564
  %v3566 = vsel %vm3563, %v3565, %v3561
  %v3567 = vmul.f32 1.0, %v3566
  %v3568 = vrcp.pop %v2888
  %v3569 = vmul.f32 %v2888, %v3568
  %v3570 = vsub.f32 1.0, %v3569
  %v3571 = vmul.f32 %v3568, %v3570
  %v3572 = vadd.f32 %v3568, %v3571
  %vm3573 = vweird.f32 %v2888
  %vm3574 = vweird.f32 %v3568
  %vm3575 = vmor %vm3573, %vm3574
  %v3576 = vsel %vm3575, %v3568, %v3572
  %v3577 = vand.u32 2147483647, %v2888
  %vm3578 = vcmp.eq.f32.partialorder %v3577, 8.507059e+37
  %v3579 = vand.u32 %v2888, 2147483648
  %v3580 = vor.u32 1.1754944e-38, %v3579
  %v3581 = vsel %vm3578, %v3580, %v3576
  %v3582 = vmul.f32 1.0, %v3581
  %v3583 = vrcp.pop %v2889
  %v3584 = vmul.f32 %v2889, %v3583
  %v3585 = vsub.f32 1.0, %v3584
  %v3586 = vmul.f32 %v3583, %v3585
  %v3587 = vadd.f32 %v3583, %v3586
  %vm3588 = vweird.f32 %v2889
  %vm3589 = vweird.f32 %v3583
  %vm3590 = vmor %vm3588, %vm3589
  %v3591 = vsel %vm3590, %v3583, %v3587
  %v3592 = vand.u32 2147483647, %v2889
  %vm3593 = vcmp.eq.f32.partialorder %v3592, 8.507059e+37
  %v3594 = vand.u32 %v2889, 2147483648
  %v3595 = vor.u32 1.1754944e-38, %v3594
  %v3596 = vsel %vm3593, %v3595, %v3591
  %v3597 = vmul.f32 1.0, %v3596
  %v3598 = vrcp.pop %v2890
  %v3599 = vmul.f32 %v2890, %v3598
  %v3600 = vsub.f32 1.0, %v3599
  %v3601 = vmul.f32 %v3598, %v3600
  %v3602 = vadd.f32 %v3598, %v3601
  %vm3603 = vweird.f32 %v2890
  %vm3604 = vweird.f32 %v3598
  %vm3605 = vmor %vm3603, %vm3604
  %v3606 = vsel %vm3605, %v3598, %v3602
  %v3607 = vand.u32 2147483647, %v2890
  %vm3608 = vcmp.eq.f32.partialorder %v3607, 8.507059e+37
  %v3609 = vand.u32 %v2890, 2147483648
  %v3610 = vor.u32 1.1754944e-38, %v3609
  %v3611 = vsel %vm3608, %v3610, %v3606
  %v3612 = vmul.f32 1.0, %v3611
  %v3613 = vrcp.pop %v2891
  %v3614 = vmul.f32 %v2891, %v3613
  %v3615 = vsub.f32 1.0, %v3614
  %v3616 = vmul.f32 %v3613, %v3615
  %v3617 = vadd.f32 %v3613, %v3616
  %vm3618 = vweird.f32 %v2891
  %vm3619 = vweird.f32 %v3613
  %vm3620 = vmor %vm3618, %vm3619
  %v3621 = vsel %vm3620, %v3613, %v3617
  %v3622 = vand.u32 2147483647, %v2891
  %vm3623 = vcmp.eq.f32.partialorder %v3622, 8.507059e+37
  %v3624 = vand.u32 %v2891, 2147483648
  %v3625 = vor.u32 1.1754944e-38, %v3624
  %v3626 = vsel %vm3623, %v3625, %v3621
  %v3627 = vmul.f32 1.0, %v3626
  %v3628 = vrcp.pop %v2892
  %v3629 = vmul.f32 %v2892, %v3628
  %v3630 = vsub.f32 1.0, %v3629
  %v3631 = vmul.f32 %v3628, %v3630
  %v3632 = vadd.f32 %v3628, %v3631
  %vm3633 = vweird.f32 %v2892
  %vm3634 = vweird.f32 %v3628
  %vm3635 = vmor %vm3633, %vm3634
  %v3636 = vsel %vm3635, %v3628, %v3632
  %v3637 = vand.u32 2147483647, %v2892
  %vm3638 = vcmp.eq.f32.partialorder %v3637, 8.507059e+37
  %v3639 = vand.u32 %v2892, 2147483648
  %v3640 = vor.u32 1.1754944e-38, %v3639
  %v3641 = vsel %vm3638, %v3640, %v3636
  %v3642 = vmul.f32 1.0, %v3641
  %v3643 = vrcp.pop %v2893
  %v3644 = vmul.f32 %v2893, %v3643
  %v3645 = vsub.f32 1.0, %v3644
  %v3646 = vmul.f32 %v3643, %v3645
  %v3647 = vadd.f32 %v3643, %v3646
  %vm3648 = vweird.f32 %v2893
  %vm3649 = vweird.f32 %v3643
  %vm3650 = vmor %vm3648, %vm3649
  %v3651 = vsel %vm3650, %v3643, %v3647
  %v3652 = vand.u32 2147483647, %v2893
  %vm3653 = vcmp.eq.f32.partialorder %v3652, 8.507059e+37
  %v3654 = vand.u32 %v2893, 2147483648
  %v3655 = vor.u32 1.1754944e-38, %v3654
  %v3656 = vsel %vm3653, %v3655, %v3651
  %v3657 = vmul.f32 1.0, %v3656
  %v3658 = vrcp.pop %v2894
  %v3659 = vmul.f32 %v2894, %v3658
  %v3660 = vsub.f32 1.0, %v3659
  %v3661 = vmul.f32 %v3658, %v3660
  %v3662 = vadd.f32 %v3658, %v3661
  %vm3663 = vweird.f32 %v2894
  %vm3664 = vweird.f32 %v3658
  %vm3665 = vmor %vm3663, %vm3664
  %v3666 = vsel %vm3665, %v3658, %v3662
  %v3667 = vand.u32 2147483647, %v2894
  %vm3668 = vcmp.eq.f32.partialorder %v3667, 8.507059e+37
  %v3669 = vand.u32 %v2894, 2147483648
  %v3670 = vor.u32 1.1754944e-38, %v3669
  %v3671 = vsel %vm3668, %v3670, %v3666
  %v3672 = vmul.f32 1.0, %v3671
  %v3673 = vrcp.pop %v2895
  %v3674 = vmul.f32 %v2895, %v3673
  %v3675 = vsub.f32 1.0, %v3674
  %v3676 = vmul.f32 %v3673, %v3675
  %v3677 = vadd.f32 %v3673, %v3676
  %vm3678 = vweird.f32 %v2895
  %vm3679 = vweird.f32 %v3673
  %vm3680 = vmor %vm3678, %vm3679
  %v3681 = vsel %vm3680, %v3673, %v3677
  %v3682 = vand.u32 2147483647, %v2895
  %vm3683 = vcmp.eq.f32.partialorder %v3682, 8.507059e+37
  %v3684 = vand.u32 %v2895, 2147483648
  %v3685 = vor.u32 1.1754944e-38, %v3684
  %v3686 = vsel %vm3683, %v3685, %v3681
  %v3687 = vmul.f32 1.0, %v3686
  %v3688 = vrcp.pop %v2896
  %v3689 = vmul.f32 %v2896, %v3688
  %v3690 = vsub.f32 1.0, %v3689
  %v3691 = vmul.f32 %v3688, %v3690
  %v3692 = vadd.f32 %v3688, %v3691
  %vm3693 = vweird.f32 %v2896
  %vm3694 = vweird.f32 %v3688
  %vm3695 = vmor %vm3693, %vm3694
  %v3696 = vsel %vm3695, %v3688, %v3692
  %v3697 = vand.u32 2147483647, %v2896
  %vm3698 = vcmp.eq.f32.partialorder %v3697, 8.507059e+37
  %v3699 = vand.u32 %v2896, 2147483648
  %v3700 = vor.u32 1.1754944e-38, %v3699
  %v3701 = vsel %vm3698, %v3700, %v3696
  %v3702 = vmul.f32 1.0, %v3701
  %v3703 = vrcp.pop %v2897
  %v3704 = vmul.f32 %v2897, %v3703
  %v3705 = vsub.f32 1.0, %v3704
  %v3706 = vmul.f32 %v3703, %v3705
  %v3707 = vadd.f32 %v3703, %v3706
  %vm3708 = vweird.f32 %v2897
  %vm3709 = vweird.f32 %v3703
  %vm3710 = vmor %vm3708, %vm3709
  %v3711 = vsel %vm3710, %v3703, %v3707
  %v3712 = vand.u32 2147483647, %v2897
  %vm3713 = vcmp.eq.f32.partialorder %v3712, 8.507059e+37
  %v3714 = vand.u32 %v2897, 2147483648
  %v3715 = vor.u32 1.1754944e-38, %v3714
  %v3716 = vsel %vm3713, %v3715, %v3711
  %v3717 = vmul.f32 1.0, %v3716
  %v3718 = vrcp.pop %v2898
  %v3719 = vmul.f32 %v2898, %v3718
  %v3720 = vsub.f32 1.0, %v3719
  %v3721 = vmul.f32 %v3718, %v3720
  %v3722 = vadd.f32 %v3718, %v3721
  %vm3723 = vweird.f32 %v2898
  %vm3724 = vweird.f32 %v3718
  %vm3725 = vmor %vm3723, %vm3724
  %v3726 = vsel %vm3725, %v3718, %v3722
  %v3727 = vand.u32 2147483647, %v2898
  %vm3728 = vcmp.eq.f32.partialorder %v3727, 8.507059e+37
  %v3729 = vand.u32 %v2898, 2147483648
  %v3730 = vor.u32 1.1754944e-38, %v3729
  %v3731 = vsel %vm3728, %v3730, %v3726
  %v3732 = vmul.f32 1.0, %v3731
  %v3733 = vrcp.pop %v2899
  %v3734 = vmul.f32 %v2899, %v3733
  %v3735 = vsub.f32 1.0, %v3734
  %v3736 = vmul.f32 %v3733, %v3735
  %v3737 = vadd.f32 %v3733, %v3736
  %vm3738 = vweird.f32 %v2899
  %vm3739 = vweird.f32 %v3733
  %vm3740 = vmor %vm3738, %vm3739
  %v3741 = vsel %vm3740, %v3733, %v3737
  %v3742 = vand.u32 2147483647, %v2899
  %vm3743 = vcmp.eq.f32.partialorder %v3742, 8.507059e+37
  %v3744 = vand.u32 %v2899, 2147483648
  %v3745 = vor.u32 1.1754944e-38, %v3744
  %v3746 = vsel %vm3743, %v3745, %v3741
  %v3747 = vmul.f32 1.0, %v3746
  %v3748 = vrcp.pop %v2900
  %v3749 = vmul.f32 %v2900, %v3748
  %v3750 = vsub.f32 1.0, %v3749
  %v3751 = vmul.f32 %v3748, %v3750
  %v3752 = vadd.f32 %v3748, %v3751
  %vm3753 = vweird.f32 %v2900
  %vm3754 = vweird.f32 %v3748
  %vm3755 = vmor %vm3753, %vm3754
  %v3756 = vsel %vm3755, %v3748, %v3752
  %v3757 = vand.u32 2147483647, %v2900
  %vm3758 = vcmp.eq.f32.partialorder %v3757, 8.507059e+37
  %v3759 = vand.u32 %v2900, 2147483648
  %v3760 = vor.u32 1.1754944e-38, %v3759
  %v3761 = vsel %vm3758, %v3760, %v3756
  %v3762 = vmul.f32 1.0, %v3761
  %v3763 = vrcp.pop %v2901
  %v3764 = vmul.f32 %v2901, %v3763
  %v3765 = vsub.f32 1.0, %v3764
  %v3766 = vmul.f32 %v3763, %v3765
  %v3767 = vadd.f32 %v3763, %v3766
  %vm3768 = vweird.f32 %v2901
  %vm3769 = vweird.f32 %v3763
  %vm3770 = vmor %vm3768, %vm3769
  %v3771 = vsel %vm3770, %v3763, %v3767
  %v3772 = vand.u32 2147483647, %v2901
  %vm3773 = vcmp.eq.f32.partialorder %v3772, 8.507059e+37
  %v3774 = vand.u32 %v2901, 2147483648
  %v3775 = vor.u32 1.1754944e-38, %v3774
  %v3776 = vsel %vm3773, %v3775, %v3771
  %v3777 = vmul.f32 1.0, %v3776
  %v3778 = vrcp.pop %v2902
  %v3779 = vmul.f32 %v2902, %v3778
  %v3780 = vsub.f32 1.0, %v3779
  %v3781 = vmul.f32 %v3778, %v3780
  %v3782 = vadd.f32 %v3778, %v3781
  %vm3783 = vweird.f32 %v2902
  %vm3784 = vweird.f32 %v3778
  %vm3785 = vmor %vm3783, %vm3784
  %v3786 = vsel %vm3785, %v3778, %v3782
  %v3787 = vand.u32 2147483647, %v2902
  %vm3788 = vcmp.eq.f32.partialorder %v3787, 8.507059e+37
  %v3789 = vand.u32 %v2902, 2147483648
  %v3790 = vor.u32 1.1754944e-38, %v3789
  %v3791 = vsel %vm3788, %v3790, %v3786
  %v3792 = vmul.f32 1.0, %v3791
  %v3793 = vrcp.pop %v2903
  %v3794 = vmul.f32 %v2903, %v3793
  %v3795 = vsub.f32 1.0, %v3794
  %v3796 = vmul.f32 %v3793, %v3795
  %v3797 = vadd.f32 %v3793, %v3796
  %vm3798 = vweird.f32 %v2903
  %vm3799 = vweird.f32 %v3793
  %vm3800 = vmor %vm3798, %vm3799
  %v3801 = vsel %vm3800, %v3793, %v3797
  %v3802 = vand.u32 2147483647, %v2903
  %vm3803 = vcmp.eq.f32.partialorder %v3802, 8.507059e+37
  %v3804 = vand.u32 %v2903, 2147483648
  %v3805 = vor.u32 1.1754944e-38, %v3804
  %v3806 = vsel %vm3803, %v3805, %v3801
  %v3807 = vmul.f32 1.0, %v3806
  %v3808 = vrcp.pop %v2904
  %v3809 = vmul.f32 %v2904, %v3808
  %v3810 = vsub.f32 1.0, %v3809
  %v3811 = vmul.f32 %v3808, %v3810
  %v3812 = vadd.f32 %v3808, %v3811
  %vm3813 = vweird.f32 %v2904
  %vm3814 = vweird.f32 %v3808
  %vm3815 = vmor %vm3813, %vm3814
  %v3816 = vsel %vm3815, %v3808, %v3812
  %v3817 = vand.u32 2147483647, %v2904
  %vm3818 = vcmp.eq.f32.partialorder %v3817, 8.507059e+37
  %v3819 = vand.u32 %v2904, 2147483648
  %v3820 = vor.u32 1.1754944e-38, %v3819
  %v3821 = vsel %vm3818, %v3820, %v3816
  %v3822 = vmul.f32 1.0, %v3821
  %v3823 = vrcp.pop %v2905
  %v3824 = vmul.f32 %v2905, %v3823
  %v3825 = vsub.f32 1.0, %v3824
  %v3826 = vmul.f32 %v3823, %v3825
  %v3827 = vadd.f32 %v3823, %v3826
  %vm3828 = vweird.f32 %v2905
  %vm3829 = vweird.f32 %v3823
  %vm3830 = vmor %vm3828, %vm3829
  %v3831 = vsel %vm3830, %v3823, %v3827
  %v3832 = vand.u32 2147483647, %v2905
  %vm3833 = vcmp.eq.f32.partialorder %v3832, 8.507059e+37
  %v3834 = vand.u32 %v2905, 2147483648
  %v3835 = vor.u32 1.1754944e-38, %v3834
  %v3836 = vsel %vm3833, %v3835, %v3831
  %v3837 = vmul.f32 1.0, %v3836
  %v3838 = vrcp.pop %v2906
  %v3839 = vmul.f32 %v2906, %v3838
  %v3840 = vsub.f32 1.0, %v3839
  %v3841 = vmul.f32 %v3838, %v3840
  %v3842 = vadd.f32 %v3838, %v3841
  %vm3843 = vweird.f32 %v2906
  %vm3844 = vweird.f32 %v3838
  %vm3845 = vmor %vm3843, %vm3844
  %v3846 = vsel %vm3845, %v3838, %v3842
  %v3847 = vand.u32 2147483647, %v2906
  %vm3848 = vcmp.eq.f32.partialorder %v3847, 8.507059e+37
  %v3849 = vand.u32 %v2906, 2147483648
  %v3850 = vor.u32 1.1754944e-38, %v3849
  %v3851 = vsel %vm3848, %v3850, %v3846
  %v3852 = vmul.f32 1.0, %v3851
  %v3853 = vrcp.pop %v2907
  %v3854 = vmul.f32 %v2907, %v3853
  %v3855 = vsub.f32 1.0, %v3854
  %v3856 = vmul.f32 %v3853, %v3855
  %v3857 = vadd.f32 %v3853, %v3856
  %vm3858 = vweird.f32 %v2907
  %vm3859 = vweird.f32 %v3853
  %vm3860 = vmor %vm3858, %vm3859
  %v3861 = vsel %vm3860, %v3853, %v3857
  %v3862 = vand.u32 2147483647, %v2907
  %vm3863 = vcmp.eq.f32.partialorder %v3862, 8.507059e+37
  %v3864 = vand.u32 %v2907, 2147483648
  %v3865 = vor.u32 1.1754944e-38, %v3864
  %v3866 = vsel %vm3863, %v3865, %v3861
  %v3867 = vmul.f32 1.0, %v3866
  %3868 = vst [vmem:[%s3 + $0x8] sm:$0xff] %v2922
  %3869 = vst [vmem:[%s3 + $0x18] sm:$0xff] %v2937
  %3870 = vst [vmem:[%s3 + $0x28] sm:$0xff] %v2952
  %3871 = vst [vmem:[%s3 + $0x38] sm:$0xff] %v2967
  %3872 = vst [vmem:[%s3 + $0x48] sm:$0xff] %v2982
  %3873 = vst [vmem:[%s3 + $0x58] sm:$0xff] %v2997
  %3874 = vst [vmem:[%s3 + $0x68] sm:$0xff] %v3012
  %3875 = vst [vmem:[%s3 + $0x78] sm:$0xff] %v3027
  %3876 = vst [vmem:[%s3 + $0x88] sm:$0xff] %v3042
  %3877 = vst [vmem:[%s3 + $0x98] sm:$0xff] %v3057
  %3878 = vst [vmem:[%s3 + $0xa8] sm:$0xff] %v3072
  %3879 = vst [vmem:[%s3 + $0xb8] sm:$0xff] %v3087
  %3880 = vst [vmem:[%s3 + $0xc8] sm:$0xff] %v3102
  %3881 = vst [vmem:[%s3 + $0xd8] sm:$0xff] %v3117
  %3882 = vst [vmem:[%s3 + $0xe8] sm:$0xff] %v3132
  %3883 = vst [vmem:[%s3 + $0xf8] sm:$0xff] %v3147
  %3884 = vst [vmem:[%s3 + $0x108] sm:$0xff] %v3162
  %3885 = vst [vmem:[%s3 + $0x118] sm:$0xff] %v3177
  %3886 = vst [vmem:[%s3 + $0x128] sm:$0xff] %v3192
  %3887 = vst [vmem:[%s3 + $0x138] sm:$0xff] %v3207
  %3888 = vst [vmem:[%s3 + $0x148] sm:$0xff] %v3222
  %3889 = vst [vmem:[%s3 + $0x158] sm:$0xff] %v3237
  %3890 = vst [vmem:[%s3 + $0x168] sm:$0xff] %v3252
  %3891 = vst [vmem:[%s3 + $0x178] sm:$0xff] %v3267
  %3892 = vst [vmem:[%s3 + $0x188] sm:$0xff] %v3282
  %3893 = vst [vmem:[%s3 + $0x198] sm:$0xff] %v3297
  %3894 = vst [vmem:[%s3 + $0x1a8] sm:$0xff] %v3312
  %3895 = vst [vmem:[%s3 + $0x1b8] sm:$0xff] %v3327
  %3896 = vst [vmem:[%s3 + $0x1c8] sm:$0xff] %v3342
  %3897 = vst [vmem:[%s3 + $0x1d8] sm:$0xff] %v3357
  %3898 = vst [vmem:[%s3 + $0x1e8] sm:$0xff] %v3372
  %3899 = vst [vmem:[%s3 + $0x1f8] sm:$0xff] %v3387
  %3900 = vst [vmem:[%s3 + $0x208] sm:$0xff] %v3402
  %3901 = vst [vmem:[%s3 + $0x218] sm:$0xff] %v3417
  %3902 = vst [vmem:[%s3 + $0x228] sm:$0xff] %v3432
  %3903 = vst [vmem:[%s3 + $0x238] sm:$0xff] %v3447
  %3904 = vst [vmem:[%s3 + $0x248] sm:$0xff] %v3462
  %3905 = vst [vmem:[%s3 + $0x258] sm:$0xff] %v3477
  %3906 = vst [vmem:[%s3 + $0x268] sm:$0xff] %v3492
  %3907 = vst [vmem:[%s3 + $0x278] sm:$0xff] %v3507
  %3908 = vst [vmem:[%s3 + $0x288] sm:$0xff] %v3522
  %3909 = vst [vmem:[%s3 + $0x298] sm:$0xff] %v3537
  %3910 = vst [vmem:[%s3 + $0x2a8] sm:$0xff] %v3552
  %3911 = vst [vmem:[%s3 + $0x2b8] sm:$0xff] %v3567
  %3912 = vst [vmem:[%s3 + $0x2c8] sm:$0xff] %v3582
  %3913 = vst [vmem:[%s3 + $0x2d8] sm:$0xff] %v3597
  %3914 = vst [vmem:[%s3 + $0x2e8] sm:$0xff] %v3612
  %3915 = vst [vmem:[%s3 + $0x2f8] sm:$0xff] %v3627
  %3916 = vst [vmem:[%s3 + $0x308] sm:$0xff] %v3642
  %3917 = vst [vmem:[%s3 + $0x318] sm:$0xff] %v3657
  %3918 = vst [vmem:[%s3 + $0x328] sm:$0xff] %v3672
  %3919 = vst [vmem:[%s3 + $0x338] sm:$0xff] %v3687
  %3920 = vst [vmem:[%s3 + $0x348] sm:$0xff] %v3702
  %3921 = vst [vmem:[%s3 + $0x358] sm:$0xff] %v3717
  %3922 = vst [vmem:[%s3 + $0x368] sm:$0xff] %v3732
  %3923 = vst [vmem:[%s3 + $0x378] sm:$0xff] %v3747
  %3924 = vst [vmem:[%s3 + $0x388] sm:$0xff] %v3762
  %3925 = vst [vmem:[%s3 + $0x398] sm:$0xff] %v3777
  %3926 = vst [vmem:[%s3 + $0x3a8] sm:$0xff] %v3792
  %3927 = vst [vmem:[%s3 + $0x3b8] sm:$0xff] %v3807
  %3928 = vst [vmem:[%s3 + $0x3c8] sm:$0xff] %v3822
  %3929 = vst [vmem:[%s3 + $0x3d8] sm:$0xff] %v3837
  %3930 = vst [vmem:[%s3 + $0x3e8] sm:$0xff] %v3852
  %3931 = vst [vmem:[%s3 + $0x3f8] sm:$0xff] %v3867
  // Predicated region
  $region14: #{multi_generator_forward.37} parent=0 // pred_check
    _
  $region15: #{multi_generator_forward.37} parent=0 // pred_check_branch
    %3933 = sbr.rel (0) target = $region17
  $region16: #{multi_generator_forward.37} parent=0 // pred_region
    _
  $region17: #{multi_generator_forward.37} parent=0 // pred_fallthru
    _
  // Predicated region
  $region18: #{multi_generator_forward.37} parent=0 // pred_check
    _
  $region19: #{multi_generator_forward.37} parent=0 // pred_check_branch
    %3935 = sbr.rel (0) target = $region21
  $region20: #{multi_generator_forward.37} parent=0 // pred_region
    _
  $region21: #{multi_generator_forward.37} parent=0 // pred_fallthru
    _

</llo_original>
